<compile_context>
chip_gen: v5e
topology: v5e:2x2
jax: 0.10.0
libtpu: 0.0.40
codegen_flags: <defaults>
</compile_context>

<pallas_src>
import numpy as np
import jax
import jax.numpy as jnp
from jax.experimental import pallas as pl
from jax.experimental.pallas import tpu as pltpu

C_IN, C_OUT, K = 43, 47, 4
STRIDE, PADDING, OUT_PADDING, DILATION = 1, 1, 0, 2
PAD_EQ = DILATION * (K - 1) - PADDING          # = 5
KKC = K * K * C_IN                             # = 688: folded (kh, kw, ci) contraction


def _pick_td(do, howo, n_batch, max_rows=512):
    """Largest divisor TD of `do` with TD*howo a multiple of 128 and <= max_rows.

    For N==1 workloads, prefer TD with do//TD >= 2 so the 'parallel' grid still
    has >= 2 steps to shard across v7x's two TensorCores.
    """
    cands = [td for td in range(1, do + 1)
             if do % td == 0
             and (td * howo) % 128 == 0
             and td * howo <= max(max_rows, 128)]
    if not cands:
        # TODO(synk): lane-sparse fallback (masked vst + big accumulator); re-tile
        # along Ho instead for odd Ho*Wo.
        return do
    if n_batch == 1:
        two_plus = [td for td in cands if do // td >= 2]
        if two_plus:
            return max(two_plus)
    return max(cands)


def conv_transpose3d_leaky(x_nchw, w, b):
    """x_nchw: (N, Cin, D, H, W) f32; w: (Cin, Cout, K, K, K) f32; b: (Cout,) f32."""
    N, cin, D, H, W = x_nchw.shape
    assert cin == C_IN
    Do = (D - 1) * STRIDE - 2 * PADDING + DILATION * (K - 1) + OUT_PADDING + 1
    Ho = (H - 1) * STRIDE - 2 * PADDING + DILATION * (K - 1) + OUT_PADDING + 1
    Wo = (W - 1) * STRIDE - 2 * PADDING + DILATION * (K - 1) + OUT_PADDING + 1
    Dp = D + 2 * PAD_EQ
    HOWO = Ho * Wo
    S_total = Do * HOWO

    TD = _pick_td(Do, HOWO, N)                 # output-D rows per grid step
    CHUNK = TD * HOWO                          # lane-dense output chunk
    N_CHUNKS = Do // TD

    # ---------------- wrapper-side prep (cheap XLA glue) -------------------
    # NCDHW -> NDHWC (bf16), zero-pad, unfold W then H so the 16 (kh, kw) taps sit
    # next to the channels:
    #   x_unf[n, d, oh*Wo+ow, kh*K*Cin + kw*Cin + ci]
    #     = x_pad[n, d, oh + 2*kh, ow + 2*kw, ci]
    # TODO(synk): for large D*H*W, fuse pad + (kh, kw) unfold into the kernel with
    # haloed-D tiles (memory_space=pl.ANY on x + manual make_async_copy of
    # [od0, od0+TD+(K-1)*DILATION) slabs) instead of materializing the ~5x-larger
    # x_unf in HBM — required anyway to stay inside v7x's 64 MiB VMEM at scale.
    x_ndhwc = jnp.transpose(x_nchw, (0, 2, 3, 4, 1)).astype(jnp.bfloat16)
    xp = jnp.pad(x_ndhwc, ((0, 0), (PAD_EQ, PAD_EQ), (PAD_EQ, PAD_EQ),
                           (PAD_EQ, PAD_EQ), (0, 0)))
    x_kw = jnp.concatenate(
        [xp[:, :, :, kw * DILATION:kw * DILATION + Wo, :] for kw in range(K)],
        axis=-1)                                        # (N, Dp, Hp, Wo, K*Cin)
    x_khkw = jnp.concatenate(
        [x_kw[:, :, kh * DILATION:kh * DILATION + Ho, :, :] for kh in range(K)],
        axis=-1)                                        # (N, Dp, Ho, Wo, KKC)
    x_unf = x_khkw.reshape(N, Dp, HOWO, KKC)            # (N, Dp, Ho*Wo, 688) bf16

    # Weights: (Cin,Cout,K,K,K) -> flip taps -> [kd,kh,kw,ci,co] -> fold (kh,kw,ci)
    # -> pre-transpose to the (Cout, KKC) orientation the matmul wants (no per-tap
    # XLU transposes inside the kernel).
    w_prep = jnp.transpose(jnp.flip(w, axis=(2, 3, 4)), (2, 3, 4, 0, 1))
    w_fold = w_prep.reshape(K, KKC, C_OUT)
    w2t = jnp.transpose(w_fold, (0, 2, 1)).astype(jnp.bfloat16)   # (K, Cout, KKC)
    b2 = b.reshape(C_OUT, 1).astype(jnp.float32)

    # ---------------- Pallas kernel ----------------------------------------
    def kernel(x_ref, w_ref, b_ref, o_ref):
        # x_ref: (Dp, HOWO, KKC) bf16 -- whole padded+unfolded volume of one batch
        #        element; block index only changes with n (resident across t).
        # w_ref: (K, Cout, KKC) bf16 -- grid-invariant (resident).
        # b_ref: (Cout, 1) f32;  o_ref: (Cout, CHUNK) f32 (lane-dense store).
        od0 = pl.multiple_of(pl.program_id(1) * TD, TD)     # first output-D row
        acc = jnp.zeros((C_OUT, CHUNK), jnp.float32)        # register resident
        for kd in range(K):
            # leading-dim slice only; the reshape merges leading dims over a
            # (HOWO, KKC) slab whose sublane extent (HOWO) is tile-aligned -> free.
            xs = x_ref[pl.ds(od0 + kd * DILATION, TD), :, :]  # (TD, HOWO, KKC)
            patch = xs.reshape(CHUNK, KKC)
            # (Cout, KKC) x (CHUNK, KKC)^T -> (Cout, CHUNK), f32 accumulate.
            acc = acc + jax.lax.dot_general(
                w_ref[kd], patch,
                dimension_numbers=(((1,), (1,)), ((), ())),
                preferred_element_type=jnp.float32)
        y = acc + b_ref[...]                                 # bias (Cout,1) broadcast
        o_ref[...] = jnp.where(y > 0.0, y, 0.4 * y)          # leaky "where" epilogue

    # VMEM budget: double-buffered x block + weights + output block, with headroom;
    # clamped to be safe on all generations (v5e default scoped is only 16 MiB,
    # v7x physical is 64 MiB).
    x_block_bytes = Dp * HOWO * KKC * 2
    w_bytes = K * C_OUT * KKC * 2
    out_block_bytes = C_OUT * CHUNK * 4
    vmem_limit = int(min(max(2 * (x_block_bytes + w_bytes + out_block_bytes)
                             + (4 << 20), 16 << 20), 48 << 20))

    cost = pl.CostEstimate(
        flops=2 * N * S_total * C_OUT * C_IN * (K ** 3),
        transcendentals=0,
        bytes_accessed=(x_unf.size * 2 + w2t.size * 2 + b2.size * 4
                        + N * C_OUT * S_total * 4))

    out_flat = pl.pallas_call(
        kernel,
        out_shape=jax.ShapeDtypeStruct((N, C_OUT, S_total), jnp.float32),
        grid=(N, N_CHUNKS),
        in_specs=[
            pl.BlockSpec((None, Dp, HOWO, KKC), lambda n, t: (n, 0, 0, 0)),
            pl.BlockSpec((K, C_OUT, KKC), lambda n, t: (0, 0, 0)),
            pl.BlockSpec((C_OUT, 1), lambda n, t: (0, 0)),
        ],
        out_specs=pl.BlockSpec((None, C_OUT, CHUNK), lambda n, t: (n, 0, t)),
        compiler_params=pltpu.CompilerParams(
            dimension_semantics=("parallel", "parallel"),
            vmem_limit_bytes=vmem_limit),
        cost_estimate=cost,
    )(x_unf, w2t, b2)

    # (N, Cout, Do*Ho*Wo) -> NCDHW is a pure reshape: no output transpose pass.
    return out_flat.reshape(N, C_OUT, Do, Ho, Wo)


if __name__ == "__main__":
    key = jax.random.PRNGKey(0)
    k1, k2, k3 = jax.random.split(key, 3)

    N, D, H, W = 2, 4, 4, 4                     # output: (2, 47, 8, 8, 8)
    x = jax.random.normal(k1, (N, C_IN, D, H, W), dtype=jnp.float32)
    scale = float((C_IN * K ** 3) ** -0.5)
    w = jax.random.uniform(k2, (C_IN, C_OUT, K, K, K), jnp.float32, -scale, scale)
    b = jax.random.uniform(k3, (C_OUT,), jnp.float32, -scale, scale)

    out = jax.block_until_ready(conv_transpose3d_leaky(x, w, b))
    assert out.shape == (N, C_OUT, D + 4, H + 4, W + 4)

    # Reference: same bf16-rounded operands through lax.conv_general_dilated so the
    # products match the kernel's bf16*bf16->f32 MXU path; only the f32 summation
    # order differs.
    xr = x.astype(jnp.bfloat16).astype(jnp.float32)
    wr = w.astype(jnp.bfloat16).astype(jnp.float32)
    w_fwd = jnp.transpose(jnp.flip(wr, axis=(2, 3, 4)), (1, 0, 2, 3, 4))  # (Cout,Cin,K,K,K)
    ref = jax.lax.conv_general_dilated(
        xr, w_fwd, window_strides=(1, 1, 1),
        padding=[(PAD_EQ, PAD_EQ)] * 3, rhs_dilation=(DILATION,) * 3,
        dimension_numbers=("NCDHW", "OIDHW", "NCDHW"))
    ref = ref + b[None, :, None, None, None]
    ref = jnp.where(ref > 0, ref, ref * 0.4)

    np.testing.assert_allclose(np.asarray(out), np.asarray(ref), atol=2e-3, rtol=2e-3)
    print("KERNEL_OK")
</pallas_src>

<mosaic_0001>
module attributes {stable_mosaic.version = 11 : i64} {
  func.func @kernel(%arg0: i32, %arg1: i32, %arg2: memref<1x14x64x688xbf16, #tpu.memory_space<vmem>>, %arg3: memref<4x47x688xbf16, #tpu.memory_space<vmem>>, %arg4: memref<47x1xf32, #tpu.memory_space<vmem>>, %arg5: memref<1x47x512xf32, #tpu.memory_space<vmem>>) attributes {dimension_semantics = [#tpu.dimension_semantics<parallel>, #tpu.dimension_semantics<parallel>], iteration_bounds = array<i64: 2, 1>, scalar_prefetch = 0 : i64, scratch_operands = 0 : i64, tpu.core_type = #tpu.core_type<tc>, window_params = [{transform_indices = @transform_0, window_bounds = array<i64: 1, 14, 64, 688>}, {pipeline_mode = #tpu.pipeline_mode<synchronous>, transform_indices = @transform_1, window_bounds = array<i64: 4, 47, 688>}, {pipeline_mode = #tpu.pipeline_mode<synchronous>, transform_indices = @transform_2, window_bounds = array<i64: 47, 1>}, {transform_indices = @transform_3, window_bounds = array<i64: 1, 47, 512>}]} {
    %c8_i32 = arith.constant 8 : i32
    %0 = arith.muli %arg1, %c8_i32 : i32
    %1 = tpu.assume_multiple %0, 8 : i32
    %cst = arith.constant 0.000000e+00 : f32
    %2 = vector.broadcast %cst : f32 to vector<47x512xf32>
    %c0_i32 = arith.constant 0 : i32
    %3 = arith.addi %1, %c0_i32 : i32
    %c0 = arith.constant 0 : index
    %4 = arith.index_cast %3 : i32 to index
    %c0_0 = arith.constant 0 : index
    %c0_1 = arith.constant 0 : index
    %5 = vector.load %arg2[%c0, %4, %c0_0, %c0_1] : memref<1x14x64x688xbf16, #tpu.memory_space<vmem>>, vector<1x8x64x688xbf16>
    %6 = vector.shape_cast %5 : vector<1x8x64x688xbf16> to vector<8x64x688xbf16>
    %7 = vector.shape_cast %6 : vector<8x64x688xbf16> to vector<512x688xbf16>
    %c0_2 = arith.constant 0 : index
    %c0_3 = arith.constant 0 : index
    %c0_4 = arith.constant 0 : index
    %8 = vector.load %arg3[%c0_2, %c0_3, %c0_4] : memref<4x47x688xbf16, #tpu.memory_space<vmem>>, vector<1x47x688xbf16>
    %9 = vector.shape_cast %8 : vector<1x47x688xbf16> to vector<47x688xbf16>
    %cst_5 = arith.constant dense<0.000000e+00> : vector<47x512xf32>
    %10 = tpu.matmul %9, %7, %cst_5 {dimension_numbers = #tpu.dot_dimension_numbers<[1], [1], [0], [0], [0, 0, 1, 0], [], []>} : vector<47x688xbf16>, vector<512x688xbf16>, vector<47x512xf32> -> vector<47x512xf32>
    %11 = arith.addf %2, %10 : vector<47x512xf32>
    %c2_i32 = arith.constant 2 : i32
    %12 = arith.addi %1, %c2_i32 : i32
    %c0_6 = arith.constant 0 : index
    %13 = arith.index_cast %12 : i32 to index
    %c0_7 = arith.constant 0 : index
    %c0_8 = arith.constant 0 : index
    %14 = vector.load %arg2[%c0_6, %13, %c0_7, %c0_8] : memref<1x14x64x688xbf16, #tpu.memory_space<vmem>>, vector<1x8x64x688xbf16>
    %15 = vector.shape_cast %14 : vector<1x8x64x688xbf16> to vector<8x64x688xbf16>
    %16 = vector.shape_cast %15 : vector<8x64x688xbf16> to vector<512x688xbf16>
    %c1 = arith.constant 1 : index
    %c0_9 = arith.constant 0 : index
    %c0_10 = arith.constant 0 : index
    %17 = vector.load %arg3[%c1, %c0_9, %c0_10] : memref<4x47x688xbf16, #tpu.memory_space<vmem>>, vector<1x47x688xbf16>
    %18 = vector.shape_cast %17 : vector<1x47x688xbf16> to vector<47x688xbf16>
    %cst_11 = arith.constant dense<0.000000e+00> : vector<47x512xf32>
    %19 = tpu.matmul %18, %16, %cst_11 {dimension_numbers = #tpu.dot_dimension_numbers<[1], [1], [0], [0], [0, 0, 1, 0], [], []>} : vector<47x688xbf16>, vector<512x688xbf16>, vector<47x512xf32> -> vector<47x512xf32>
    %20 = arith.addf %11, %19 : vector<47x512xf32>
    %c4_i32 = arith.constant 4 : i32
    %21 = arith.addi %1, %c4_i32 : i32
    %c0_12 = arith.constant 0 : index
    %22 = arith.index_cast %21 : i32 to index
    %c0_13 = arith.constant 0 : index
    %c0_14 = arith.constant 0 : index
    %23 = vector.load %arg2[%c0_12, %22, %c0_13, %c0_14] : memref<1x14x64x688xbf16, #tpu.memory_space<vmem>>, vector<1x8x64x688xbf16>
    %24 = vector.shape_cast %23 : vector<1x8x64x688xbf16> to vector<8x64x688xbf16>
    %25 = vector.shape_cast %24 : vector<8x64x688xbf16> to vector<512x688xbf16>
    %c2 = arith.constant 2 : index
    %c0_15 = arith.constant 0 : index
    %c0_16 = arith.constant 0 : index
    %26 = vector.load %arg3[%c2, %c0_15, %c0_16] : memref<4x47x688xbf16, #tpu.memory_space<vmem>>, vector<1x47x688xbf16>
    %27 = vector.shape_cast %26 : vector<1x47x688xbf16> to vector<47x688xbf16>
    %cst_17 = arith.constant dense<0.000000e+00> : vector<47x512xf32>
    %28 = tpu.matmul %27, %25, %cst_17 {dimension_numbers = #tpu.dot_dimension_numbers<[1], [1], [0], [0], [0, 0, 1, 0], [], []>} : vector<47x688xbf16>, vector<512x688xbf16>, vector<47x512xf32> -> vector<47x512xf32>
    %29 = arith.addf %20, %28 : vector<47x512xf32>
    %c6_i32 = arith.constant 6 : i32
    %30 = arith.addi %1, %c6_i32 : i32
    %c0_18 = arith.constant 0 : index
    %31 = arith.index_cast %30 : i32 to index
    %c0_19 = arith.constant 0 : index
    %c0_20 = arith.constant 0 : index
    %32 = vector.load %arg2[%c0_18, %31, %c0_19, %c0_20] : memref<1x14x64x688xbf16, #tpu.memory_space<vmem>>, vector<1x8x64x688xbf16>
    %33 = vector.shape_cast %32 : vector<1x8x64x688xbf16> to vector<8x64x688xbf16>
    %34 = vector.shape_cast %33 : vector<8x64x688xbf16> to vector<512x688xbf16>
    %c3 = arith.constant 3 : index
    %c0_21 = arith.constant 0 : index
    %c0_22 = arith.constant 0 : index
    %35 = vector.load %arg3[%c3, %c0_21, %c0_22] : memref<4x47x688xbf16, #tpu.memory_space<vmem>>, vector<1x47x688xbf16>
    %36 = vector.shape_cast %35 : vector<1x47x688xbf16> to vector<47x688xbf16>
    %cst_23 = arith.constant dense<0.000000e+00> : vector<47x512xf32>
    %37 = tpu.matmul %36, %34, %cst_23 {dimension_numbers = #tpu.dot_dimension_numbers<[1], [1], [0], [0], [0, 0, 1, 0], [], []>} : vector<47x688xbf16>, vector<512x688xbf16>, vector<47x512xf32> -> vector<47x512xf32>
    %38 = arith.addf %29, %37 : vector<47x512xf32>
    %c0_24 = arith.constant 0 : index
    %c0_25 = arith.constant 0 : index
    %39 = vector.load %arg4[%c0_24, %c0_25] : memref<47x1xf32, #tpu.memory_space<vmem>>, vector<47x1xf32>
    %40 = vector.broadcast %39 : vector<47x1xf32> to vector<47x512xf32>
    %41 = arith.addf %38, %40 : vector<47x512xf32>
    %cst_26 = arith.constant 0.000000e+00 : f32
    %42 = vector.broadcast %cst_26 : f32 to vector<47x512xf32>
    %43 = arith.cmpf ogt, %41, %42 : vector<47x512xf32>
    %cst_27 = arith.constant 4.000000e-01 : f32
    %44 = vector.broadcast %cst_27 : f32 to vector<47x512xf32>
    %45 = arith.mulf %44, %41 : vector<47x512xf32>
    %46 = arith.select %43, %41, %45 : vector<47x512xi1>, vector<47x512xf32>
    %c0_28 = arith.constant 0 : index
    %c0_29 = arith.constant 0 : index
    %c0_30 = arith.constant 0 : index
    %47 = vector.load %arg5[%c0_28, %c0_29, %c0_30] : memref<1x47x512xf32, #tpu.memory_space<vmem>>, vector<1x47x512xf32>
    %48 = vector.shape_cast %47 : vector<1x47x512xf32> to vector<47x512xf32>
    %49 = vector.shape_cast %46 : vector<47x512xf32> to vector<1x47x512xf32>
    tpu.vector_store %arg5[%c0_28, %c0_29, %c0_30], %49 {strides = array<i32>} : memref<1x47x512xf32, #tpu.memory_space<vmem>>, vector<1x47x512xf32>,
    return
  }
  func.func @transform_0(%arg0: i32, %arg1: i32) -> (i32, i32, i32, i32) {
    %c0_i32 = arith.constant 0 : i32
    %c0_i32_0 = arith.constant 0 : i32
    %c0_i32_1 = arith.constant 0 : i32
    %c0_i32_2 = arith.constant 0 : i32
    return %arg0, %c0_i32, %c0_i32_0, %c0_i32_1 : i32, i32, i32, i32
  }
  func.func @transform_1(%arg0: i32, %arg1: i32) -> (i32, i32, i32) {
    %c0_i32 = arith.constant 0 : i32
    %c0_i32_0 = arith.constant 0 : i32
    %c0_i32_1 = arith.constant 0 : i32
    %c0_i32_2 = arith.constant 0 : i32
    return %c0_i32, %c0_i32_0, %c0_i32_1 : i32, i32, i32
  }
  func.func @transform_2(%arg0: i32, %arg1: i32) -> (i32, i32) {
    %c0_i32 = arith.constant 0 : i32
    %c0_i32_0 = arith.constant 0 : i32
    %c0_i32_1 = arith.constant 0 : i32
    return %c0_i32, %c0_i32_0 : i32, i32
  }
  func.func @transform_3(%arg0: i32, %arg1: i32) -> (i32, i32, i32) {
    %c0_i32 = arith.constant 0 : i32
    %c0_i32_0 = arith.constant 0 : i32
    return %arg0, %c0_i32, %arg1 : i32, i32, i32
  }
}

</mosaic_0001>

<llo_original>
// kernel: tpu_custom_call.1
$region0: #{tpu_custom_call.1}
  #allocation0 [shape = 'u32[]', space=smem, size = 0x4, offset = 0x4, fixed_abs, tag = 'smem constant byte address 0x4 - core index']
  #allocation1 [shape = 'u32[72,128]{1,0:T(1,128)}', space=vmem, size = 0x9000, scoped, tag = 'internal scratch']
  %s0 = inlined_call_operand.hbm [shape: bf16[2,14,64,688], index: 0, kind: input, shape index: {}]
  %s1 = inlined_call_operand.vmem [shape: bf16[4,47,688], index: 1, kind: input, shape index: {}]
  %s2 = inlined_call_operand.vmem [shape: f32[47,1], index: 2, kind: input, shape index: {}]
  %s3 = inlined_call_operand.vmem [shape: f32[2,47,512], index: 3, kind: output, shape index: {}]
  %s4 = sld [smem:[#allocation0]]
  $region49: #{tpu_custom_call.1} parent=0
    _
  %s6 = ssub.s32 1, %s4
  %s7 = scalar_select 0, %s6, %s4
  $region1: #{tpu_custom_call.1} parent=0
    #allocation2 [shape = 'u8[2752512]{0}', space=vmem, size = 0x2a0000, scoped, tag = 'input window, operand 0']
    #allocation3 [shape = 's32[2]{0}', space=sflag, size = 0x8, scoped, tag = 'scoped memory for tpu_custom_call.1']
    %8 = vsyncpa [#allocation3], 0
    %s9 = scalar_lea.sflag [#allocation3], 1
    %10 = vsyncpa %s9, 0
    loop: start=0, step=1, limit=4
    $region2: #{tpu_custom_call.1} parent=1 // loop_pre_header
      _
    $region3: #{tpu_custom_call.1} parent=1 // loop_header
      %s12 = sphi 0, %s16
      %p13 = scmp.ge.s32.totalorder %s12, 4
      %s19 = sphi 0, %s31
      %s20 = sphi 0, %s27
      %s21 = sphi 0, %s19
      %s22 = sphi 0, %s20
      %s23 = sphi 0, %s21
      %s24 = sphi 0, %s22
      %s34 = sphi 0, %s36
      %s37 = sphi 0, %s34
      %s38 = sphi 0, %s37
      %s54 = sphi 0, %s38
      %s58 = sphi 0, %s58
      %s60 = sphi 0, %s58
      %s61 = sphi 0, %s60
      %s75 = sphi 0, %s61
      %s79 = sphi 0, %s79
      %s81 = sphi 0, %s79
      %s82 = sphi 0, %s81
      %s96 = sphi 0, %s82
      %s104 = sphi 0, %s106
      %s107 = sphi 0, %s104
      %s108 = sphi 0, %s107
      %s124 = sphi 0, %s108
    $region4: #{tpu_custom_call.1} parent=1 // loop_header_branch
      %15 = sbr.rel (%p13) target = $region8
    $region5: #{tpu_custom_call.1} parent=1 // loop_body
      %s17 = ssub.s32 %s12, 1
      %s18 = ssub.s32 %s12, 2
      %s25 = sadd.s32 1, %s20
      %p26 = scmp.ge.s32.totalorder %s25, 1
      %s27 = scalar_select %p26, 0, %s25
      %s28 = sadd.s32 1, %s19
      %s29 = scalar_select %p26, %s28, %s19
      %p30 = scmp.ge.s32.totalorder %s29, 2
      %s31 = scalar_select %p30, 0, %s29
      %s32 = ssub.s32 %s19, %s31
      %p33 = scmp.eq.s32.totalorder %s32, 0
      %s35 = sadd.s32 %s34, 1
      %s36 = scalar_select %p33, %s34, %s35
      %p39 = pneg %p33
      %p40 = scmp.eq.s32.totalorder %s12, 1
      %p41 = por %p39, %p40
      %p42 = scmp.ne.s32.totalorder %s34, %s37
      %p43 = scmp.eq.s32.totalorder %s12, 0
      %p44 = por %p42, %p43
      %p45 = scmp.ne.s32.totalorder %s34, %s37
      %p46 = scmp.eq.s32.totalorder %s17, 1
      %p47 = por %p45, %p46
      %p48 = scmp.ne.s32.totalorder %s37, %s38
      %p49 = scmp.eq.s32.totalorder %s17, 0
      %p50 = por %p48, %p49
      %p51 = scmp.ne.s32.totalorder %s37, %s38
      %p52 = scmp.eq.s32.totalorder %s18, 1
      %p53 = por %p51, %p52
      %p55 = scmp.ne.s32.totalorder %s38, %s54
      %p56 = scmp.eq.s32.totalorder %s18, 0
      %p57 = por %p55, %p56
      %s59 = sadd.s32 %s58, 1
      %p62 = scmp.eq.s32.totalorder %s12, 1
      %p63 = scmp.ne.s32.totalorder %s58, %s60
      %p64 = scmp.eq.s32.totalorder %s12, 0
      %p65 = por %p63, %p64
      %p66 = scmp.ne.s32.totalorder %s58, %s60
      %p67 = scmp.eq.s32.totalorder %s17, 1
      %p68 = por %p66, %p67
      %p69 = scmp.ne.s32.totalorder %s60, %s61
      %p70 = scmp.eq.s32.totalorder %s17, 0
      %p71 = por %p69, %p70
      %p72 = scmp.ne.s32.totalorder %s60, %s61
      %p73 = scmp.eq.s32.totalorder %s18, 1
      %p74 = por %p72, %p73
      %p76 = scmp.ne.s32.totalorder %s61, %s75
      %p77 = scmp.eq.s32.totalorder %s18, 0
      %p78 = por %p76, %p77
      %s80 = sadd.s32 %s79, 1
      %p83 = scmp.eq.s32.totalorder %s12, 1
      %p84 = scmp.ne.s32.totalorder %s79, %s81
      %p85 = scmp.eq.s32.totalorder %s12, 0
      %p86 = por %p84, %p85
      %p87 = scmp.ne.s32.totalorder %s79, %s81
      %p88 = scmp.eq.s32.totalorder %s17, 1
      %p89 = por %p87, %p88
      %p90 = scmp.ne.s32.totalorder %s81, %s82
      %p91 = scmp.eq.s32.totalorder %s17, 0
      %p92 = por %p90, %p91
      %p93 = scmp.ne.s32.totalorder %s81, %s82
      %p94 = scmp.eq.s32.totalorder %s18, 1
      %p95 = por %p93, %p94
      %p97 = scmp.ne.s32.totalorder %s82, %s96
      %p98 = scmp.eq.s32.totalorder %s18, 0
      %p99 = por %p97, %p98
      %s100 = ssub.s32 %s19, %s31
      %s101 = ssub.s32 %s20, %s27
      %s102 = sor.u32 %s100, %s101
      %p103 = scmp.eq.s32.totalorder %s102, 0
      %s105 = sadd.s32 %s104, 1
      %s106 = scalar_select %p103, %s104, %s105
      %p109 = pneg %p103
      %p110 = scmp.eq.s32.totalorder %s12, 1
      %p111 = por %p109, %p110
      %p112 = scmp.ne.s32.totalorder %s104, %s107
      %p113 = scmp.eq.s32.totalorder %s12, 0
      %p114 = por %p112, %p113
      %p115 = scmp.ne.s32.totalorder %s104, %s107
      %p116 = scmp.eq.s32.totalorder %s17, 1
      %p117 = por %p115, %p116
      %p118 = scmp.ne.s32.totalorder %s107, %s108
      %p119 = scmp.eq.s32.totalorder %s17, 0
      %p120 = por %p118, %p119
      %p121 = scmp.ne.s32.totalorder %s107, %s108
      %p122 = scmp.eq.s32.totalorder %s18, 1
      %p123 = por %p121, %p122
      %p125 = scmp.ne.s32.totalorder %s108, %s124
      %p126 = scmp.eq.s32.totalorder %s18, 0
      %p127 = por %p125, %p126
      %p128 = scmp.le.s32.totalorder 1, %s12
      %p129 = scmp.lt.s32.totalorder %s12, 3
      %p130 = pnand %p128, %p129
      %p131 = pneg %p130
      // Predicated region
      $region9: #{tpu_custom_call.1} parent=5 // pred_check
        _
      $region10: #{tpu_custom_call.1} parent=5 // pred_check_branch
        %133 = sbr.rel (%p130) target = $region12
      $region11: #{tpu_custom_call.1} parent=5 // pred_region
        %s134 = ssub.s32 %s12, 1
        // Predicated region
        $region13: #{tpu_custom_call.1} parent=11 // pred_check
          %p135 = pneg %p71
        $region14: #{tpu_custom_call.1} parent=11 // pred_check_branch
          %137 = sbr.rel (%p135) target = $region16
        $region15: #{tpu_custom_call.1} parent=11 // pred_region
          _
        $region16: #{tpu_custom_call.1} parent=11 // pred_fallthru
          _
        // Predicated region
        $region17: #{tpu_custom_call.1} parent=11 // pred_check
          %p138 = pneg %p92
        $region18: #{tpu_custom_call.1} parent=11 // pred_check_branch
          %140 = sbr.rel (%p138) target = $region20
        $region19: #{tpu_custom_call.1} parent=11 // pred_region
          _
        $region20: #{tpu_custom_call.1} parent=11 // pred_fallthru
          _
      $region12: #{tpu_custom_call.1} parent=5 // pred_fallthru
        _
      %p141 = scmp.lt.s32.totalorder %s12, 2
      // Predicated region
      $region21: #{tpu_custom_call.1} parent=5 // pred_check
        %p142 = pneg %p141
      $region22: #{tpu_custom_call.1} parent=5 // pred_check_branch
        %144 = sbr.rel (%p142) target = $region24
      $region23: #{tpu_custom_call.1} parent=5 // pred_region
        // Predicated region
        $region25: #{tpu_custom_call.1} parent=23 // pred_check
          %p145 = pneg %p44
        $region26: #{tpu_custom_call.1} parent=23 // pred_check_branch
          %147 = sbr.rel (%p145) target = $region28
        $region27: #{tpu_custom_call.1} parent=23 // pred_region
          %s148 = sand.u32 %s34, 1
          %s149 = scalar_lea.sflag [#allocation3], %s148
          %s150 = sand.u32 %s34, 1
          %s151 = smul.addr %s150, 2688
          %s152 = scalar_lea.vmem [#allocation2], %s151
          %154 = vsyncadd %s149, 0
          %s155 = smul.addr %s19, 672
          %s156 = smul.addr %s155, 4
          %s157 = scalar_lea.hbm %s0, %s156
          %s158 = sshll.u32 %s157, 4
          %s159 = int_to_ptr.hbm [resolvable:$true] %s158
          %s160 = sshll.u32 %s152, 4
          %s161 = int_to_ptr.vmem [resolvable:$true] %s160
          %166 = dma.hbm_to_vmem [thread:$0]  %s159, 43008, %s161, %s149, 384, 384, 24
        $region28: #{tpu_custom_call.1} parent=23 // pred_fallthru
          _
      $region24: #{tpu_custom_call.1} parent=5 // pred_fallthru
        _
      %p167 = scmp.le.s32.totalorder 1, %s12
      %p168 = scmp.lt.s32.totalorder %s12, 3
      %p169 = pnand %p167, %p168
      %p170 = pneg %p169
      // Predicated region
      $region29: #{tpu_custom_call.1} parent=5 // pred_check
        _
      $region30: #{tpu_custom_call.1} parent=5 // pred_check_branch
        %172 = sbr.rel (%p169) target = $region32
      $region31: #{tpu_custom_call.1} parent=5 // pred_region
        %s173 = ssub.s32 %s12, 1
        %s174 = sand.u32 %s37, 1
        %s175 = scalar_lea.sflag [#allocation3], %s174
        %s176 = sand.u32 %s37, 1
        %s177 = smul.addr %s176, 2688
        %s178 = scalar_lea.vmem [#allocation2], %s177
        // Predicated region
        $region33: #{tpu_custom_call.1} parent=31 // pred_check
          %p179 = pneg %p50
        $region34: #{tpu_custom_call.1} parent=31 // pred_check_branch
          %181 = sbr.rel (%p179) target = $region36
        $region35: #{tpu_custom_call.1} parent=31 // pred_region
          %183 = dma.done %s175, 43008
        $region36: #{tpu_custom_call.1} parent=31 // pred_fallthru
          _
        %s184 = sand.u32 %s37, 1
        %s185 = scalar_lea.sflag [#allocation3], %s184
        %s186 = sand.u32 %s37, 1
        %s187 = smul.addr %s186, 2688
        %s188 = scalar_lea.vmem [#allocation2], %s187
        %p189 = pneg %p50
        %p190 = pneg %p47
        %p191 = pneg %p71
        %p192 = pneg %p68
        %p193 = pneg %p92
        %p194 = pneg %p89
        %p195 = pneg %p120
        %p196 = pneg %p117
        %s197 = smul.u32 4, %s22
        %p198 = scmp.lt.s32.totalorder %s21, 1
        %s199 = scalar_select %p198, %s21, 1
        %p200 = scmp.lt.s32.totalorder %s197, 3
        %s201 = scalar_select %p200, %s197, 3
        %s202 = smul.addr %s199, 24
        %s203 = sadd.s32 %s201, %s202
        %s204 = smul.addr %s203, 8
        %s205 = scalar_lea.vmem %s3, %s204
        %s206 = smul.u32 4, %s22
        %p207 = scmp.lt.s32.totalorder %s21, 1
        %s208 = scalar_select %p207, %s21, 1
        %p209 = scmp.lt.s32.totalorder %s206, 3
        %s210 = scalar_select %p209, %s206, 3
        %s211 = smul.addr %s208, 24
        %s212 = sadd.s32 %s210, %s211
        %s213 = smul.addr %s212, 8
        %s214 = scalar_lea.vmem %s3, %s213
        %s215 = smul.u32 4, %s22
        %s216 = smul.u32 %s22, 8
        %s217 = smul.u32 %s216, 48
        %s218 = smul.addr %s217, 4
        %s219 = scalar_lea.vmem %s178, %s218 [#allocation2]
        %v220 = vld [vmem:[%s219] sm:$0xff]
        %v221 = vld [vmem:[%s219 + $0x8] sm:$0xff]
        %v222 = vld [vmem:[%s219 + $0x10] sm:$0xff]
        %v223 = vld [vmem:[%s219 + $0x18] sm:$0xff]
        %v224 = vld [vmem:[%s219 + $0x20] sm:$0xff]
        %v225 = vld [vmem:[%s219 + $0x28] sm:$0xff]
        %v226 = vld [vmem:[%s219 + $0x30] sm:$0xff]
        %v227 = vld [vmem:[%s219 + $0x38] sm:$0xff]
        %v228 = vld [vmem:[%s219 + $0x40] sm:$0xff]
        %v229 = vld [vmem:[%s219 + $0x48] sm:$0xff]
        %v230 = vld [vmem:[%s219 + $0x50] sm:$0xff]
        %v231 = vld [vmem:[%s219 + $0x58] sm:$0xff]
        %v232 = vld [vmem:[%s219 + $0x60] sm:$0xff]
        %v233 = vld [vmem:[%s219 + $0x68] sm:$0xff]
        %v234 = vld [vmem:[%s219 + $0x70] sm:$0xff]
        %v235 = vld [vmem:[%s219 + $0x78] sm:$0xff]
        %v236 = vld [vmem:[%s219 + $0x80] sm:$0xff]
        %v237 = vld [vmem:[%s219 + $0x88] sm:$0xff]
        %v238 = vld [vmem:[%s219 + $0x90] sm:$0xff]
        %v239 = vld [vmem:[%s219 + $0x98] sm:$0xff]
        %v240 = vld [vmem:[%s219 + $0xa0] sm:$0xff]
        %v241 = vld [vmem:[%s219 + $0xa8] sm:$0xff]
        %v242 = vld [vmem:[%s219 + $0xb0] sm:$0xff]
        %v243 = vld [vmem:[%s219 + $0xb8] sm:$0xff]
        %v244 = vld [vmem:[%s219 + $0xc0] sm:$0xff]
        %v245 = vld [vmem:[%s219 + $0xc8] sm:$0xff]
        %v246 = vld [vmem:[%s219 + $0xd0] sm:$0xff]
        %v247 = vld [vmem:[%s219 + $0xd8] sm:$0xff]
        %v248 = vld [vmem:[%s219 + $0xe0] sm:$0xff]
        %v249 = vld [vmem:[%s219 + $0xe8] sm:$0xff]
        %v250 = vld [vmem:[%s219 + $0xf0] sm:$0xff]
        %v251 = vld [vmem:[%s219 + $0xf8] sm:$0xff]
        %v252 = vld [vmem:[%s219 + $0x100] sm:$0xff]
        %v253 = vld [vmem:[%s219 + $0x108] sm:$0xff]
        %v254 = vld [vmem:[%s219 + $0x110] sm:$0xff]
        %v255 = vld [vmem:[%s219 + $0x118] sm:$0xff]
        %v256 = vld [vmem:[%s219 + $0x120] sm:$0xff]
        %v257 = vld [vmem:[%s219 + $0x128] sm:$0xff]
        %v258 = vld [vmem:[%s219 + $0x130] sm:$0xff]
        %v259 = vld [vmem:[%s219 + $0x138] sm:$0xff]
        %v260 = vld [vmem:[%s219 + $0x140] sm:$0xff]
        %v261 = vld [vmem:[%s219 + $0x148] sm:$0xff]
        %v262 = vld [vmem:[%s219 + $0x150] sm:$0xff]
        %v263 = vld [vmem:[%s219 + $0x158] sm:$0xff]
        %v264 = vld [vmem:[%s219 + $0x160] sm:$0xff]
        %v265 = vld [vmem:[%s219 + $0x168] sm:$0xff]
        %v266 = vld [vmem:[%s219 + $0x170] sm:$0xff]
        %v267 = vld [vmem:[%s219 + $0x178] sm:$0xff]
        %v268 = vld [vmem:[%s219 + $0x180] sm:$0xff]
        %v269 = vld [vmem:[%s219 + $0x188] sm:$0xff]
        %v270 = vld [vmem:[%s219 + $0x190] sm:$0xff]
        %v271 = vld [vmem:[%s219 + $0x198] sm:$0xff]
        %v272 = vld [vmem:[%s219 + $0x1a0] sm:$0xff]
        %v273 = vld [vmem:[%s219 + $0x1a8] sm:$0xff]
        %v274 = vld [vmem:[%s219 + $0x1b0] sm:$0xff]
        %v275 = vld [vmem:[%s219 + $0x1b8] sm:$0xff]
        %v276 = vld [vmem:[%s219 + $0x1c0] sm:$0xff]
        %v277 = vld [vmem:[%s219 + $0x1c8] sm:$0xff]
        %v278 = vld [vmem:[%s219 + $0x1d0] sm:$0xff]
        %v279 = vld [vmem:[%s219 + $0x1d8] sm:$0xff]
        %v280 = vld [vmem:[%s219 + $0x1e0] sm:$0xff]
        %v281 = vld [vmem:[%s219 + $0x1e8] sm:$0xff]
        %v282 = vld [vmem:[%s219 + $0x1f0] sm:$0xff]
        %v283 = vld [vmem:[%s219 + $0x1f8] sm:$0xff]
        %v284 = vld [vmem:[%s219 + $0x200] sm:$0xff]
        %v285 = vld [vmem:[%s219 + $0x208] sm:$0xff]
        %v286 = vld [vmem:[%s219 + $0x210] sm:$0xff]
        %v287 = vld [vmem:[%s219 + $0x218] sm:$0xff]
        %v288 = vld [vmem:[%s219 + $0x220] sm:$0xff]
        %v289 = vld [vmem:[%s219 + $0x228] sm:$0xff]
        %v290 = vld [vmem:[%s219 + $0x230] sm:$0xff]
        %v291 = vld [vmem:[%s219 + $0x238] sm:$0xff]
        %v292 = vld [vmem:[%s219 + $0x240] sm:$0xff]
        %v293 = vld [vmem:[%s219 + $0x248] sm:$0xff]
        %v294 = vld [vmem:[%s219 + $0x250] sm:$0xff]
        %v295 = vld [vmem:[%s219 + $0x258] sm:$0xff]
        %v296 = vld [vmem:[%s219 + $0x260] sm:$0xff]
        %v297 = vld [vmem:[%s219 + $0x268] sm:$0xff]
        %v298 = vld [vmem:[%s219 + $0x270] sm:$0xff]
        %v299 = vld [vmem:[%s219 + $0x278] sm:$0xff]
        %v300 = vld [vmem:[%s219 + $0x280] sm:$0xff]
        %v301 = vld [vmem:[%s219 + $0x288] sm:$0xff]
        %v302 = vld [vmem:[%s219 + $0x290] sm:$0xff]
        %v303 = vld [vmem:[%s219 + $0x298] sm:$0xff]
        %v304 = vld [vmem:[%s219 + $0x2a0] sm:$0xff]
        %v305 = vld [vmem:[%s219 + $0x2a8] sm:$0xff]
        %v306 = vld [vmem:[%s219 + $0x2b0] sm:$0xff]
        %v307 = vld [vmem:[%s219 + $0x2b8] sm:$0xff]
        %v308 = vld [vmem:[%s219 + $0x2c0] sm:$0xff]
        %v309 = vld [vmem:[%s219 + $0x2c8] sm:$0xff]
        %v310 = vld [vmem:[%s219 + $0x2d0] sm:$0xff]
        %v311 = vld [vmem:[%s219 + $0x2d8] sm:$0xff]
        %v312 = vld [vmem:[%s219 + $0x2e0] sm:$0xff]
        %v313 = vld [vmem:[%s219 + $0x2e8] sm:$0xff]
        %v314 = vld [vmem:[%s219 + $0x2f0] sm:$0xff]
        %v315 = vld [vmem:[%s219 + $0x2f8] sm:$0xff]
        %v316 = vld [vmem:[%s219 + $0x300] sm:$0xff]
        %v317 = vld [vmem:[%s219 + $0x308] sm:$0xff]
        %v318 = vld [vmem:[%s219 + $0x310] sm:$0xff]
        %v319 = vld [vmem:[%s219 + $0x318] sm:$0xff]
        %v320 = vld [vmem:[%s219 + $0x320] sm:$0xff]
        %v321 = vld [vmem:[%s219 + $0x328] sm:$0xff]
        %v322 = vld [vmem:[%s219 + $0x330] sm:$0xff]
        %v323 = vld [vmem:[%s219 + $0x338] sm:$0xff]
        %v324 = vld [vmem:[%s219 + $0x340] sm:$0xff]
        %v325 = vld [vmem:[%s219 + $0x348] sm:$0xff]
        %v326 = vld [vmem:[%s219 + $0x350] sm:$0xff]
        %v327 = vld [vmem:[%s219 + $0x358] sm:$0xff]
        %v328 = vld [vmem:[%s219 + $0x360] sm:$0xff]
        %v329 = vld [vmem:[%s219 + $0x368] sm:$0xff]
        %v330 = vld [vmem:[%s219 + $0x370] sm:$0xff]
        %v331 = vld [vmem:[%s219 + $0x378] sm:$0xff]
        %v332 = vld [vmem:[%s219 + $0x380] sm:$0xff]
        %v333 = vld [vmem:[%s219 + $0x388] sm:$0xff]
        %v334 = vld [vmem:[%s219 + $0x390] sm:$0xff]
        %v335 = vld [vmem:[%s219 + $0x398] sm:$0xff]
        %v336 = vld [vmem:[%s219 + $0x3a0] sm:$0xff]
        %v337 = vld [vmem:[%s219 + $0x3a8] sm:$0xff]
        %v338 = vld [vmem:[%s219 + $0x3b0] sm:$0xff]
        %v339 = vld [vmem:[%s219 + $0x3b8] sm:$0xff]
        %v340 = vld [vmem:[%s219 + $0x3c0] sm:$0xff]
        %v341 = vld [vmem:[%s219 + $0x3c8] sm:$0xff]
        %v342 = vld [vmem:[%s219 + $0x3d0] sm:$0xff]
        %v343 = vld [vmem:[%s219 + $0x3d8] sm:$0xff]
        %v344 = vld [vmem:[%s219 + $0x3e0] sm:$0xff]
        %v345 = vld [vmem:[%s219 + $0x3e8] sm:$0xff]
        %v346 = vld [vmem:[%s219 + $0x3f0] sm:$0xff]
        %v347 = vld [vmem:[%s219 + $0x3f8] sm:$0xff]
        %v348 = vld [vmem:[%s219 + $0x400] sm:$0xff]
        %v349 = vld [vmem:[%s219 + $0x408] sm:$0xff]
        %v350 = vld [vmem:[%s219 + $0x410] sm:$0xff]
        %v351 = vld [vmem:[%s219 + $0x418] sm:$0xff]
        %v352 = vld [vmem:[%s219 + $0x420] sm:$0xff]
        %v353 = vld [vmem:[%s219 + $0x428] sm:$0xff]
        %v354 = vld [vmem:[%s219 + $0x430] sm:$0xff]
        %v355 = vld [vmem:[%s219 + $0x438] sm:$0xff]
        %v356 = vld [vmem:[%s219 + $0x440] sm:$0xff]
        %v357 = vld [vmem:[%s219 + $0x448] sm:$0xff]
        %v358 = vld [vmem:[%s219 + $0x450] sm:$0xff]
        %v359 = vld [vmem:[%s219 + $0x458] sm:$0xff]
        %v360 = vld [vmem:[%s219 + $0x460] sm:$0xff]
        %v361 = vld [vmem:[%s219 + $0x468] sm:$0xff]
        %v362 = vld [vmem:[%s219 + $0x470] sm:$0xff]
        %v363 = vld [vmem:[%s219 + $0x478] sm:$0xff]
        %v364 = vld [vmem:[%s219 + $0x480] sm:$0xff]
        %v365 = vld [vmem:[%s219 + $0x488] sm:$0xff]
        %v366 = vld [vmem:[%s219 + $0x490] sm:$0xff]
        %v367 = vld [vmem:[%s219 + $0x498] sm:$0xff]
        %v368 = vld [vmem:[%s219 + $0x4a0] sm:$0xff]
        %v369 = vld [vmem:[%s219 + $0x4a8] sm:$0xff]
        %v370 = vld [vmem:[%s219 + $0x4b0] sm:$0xff]
        %v371 = vld [vmem:[%s219 + $0x4b8] sm:$0xff]
        %v372 = vld [vmem:[%s219 + $0x4c0] sm:$0xff]
        %v373 = vld [vmem:[%s219 + $0x4c8] sm:$0xff]
        %v374 = vld [vmem:[%s219 + $0x4d0] sm:$0xff]
        %v375 = vld [vmem:[%s219 + $0x4d8] sm:$0xff]
        %v376 = vld [vmem:[%s219 + $0x4e0] sm:$0xff]
        %v377 = vld [vmem:[%s219 + $0x4e8] sm:$0xff]
        %v378 = vld [vmem:[%s219 + $0x4f0] sm:$0xff]
        %v379 = vld [vmem:[%s219 + $0x4f8] sm:$0xff]
        %v380 = vld [vmem:[%s219 + $0x500] sm:$0xff]
        %v381 = vld [vmem:[%s219 + $0x508] sm:$0xff]
        %v382 = vld [vmem:[%s219 + $0x510] sm:$0xff]
        %v383 = vld [vmem:[%s219 + $0x518] sm:$0xff]
        %v384 = vld [vmem:[%s219 + $0x520] sm:$0xff]
        %v385 = vld [vmem:[%s219 + $0x528] sm:$0xff]
        %v386 = vld [vmem:[%s219 + $0x530] sm:$0xff]
        %v387 = vld [vmem:[%s219 + $0x538] sm:$0xff]
        %v388 = vld [vmem:[%s219 + $0x540] sm:$0xff]
        %v389 = vld [vmem:[%s219 + $0x548] sm:$0xff]
        %v390 = vld [vmem:[%s219 + $0x550] sm:$0xff]
        %v391 = vld [vmem:[%s219 + $0x558] sm:$0xff]
        %v392 = vld [vmem:[%s219 + $0x560] sm:$0xff]
        %v393 = vld [vmem:[%s219 + $0x568] sm:$0xff]
        %v394 = vld [vmem:[%s219 + $0x570] sm:$0xff]
        %v395 = vld [vmem:[%s219 + $0x578] sm:$0xff]
        %v396 = vld [vmem:[%s219 + $0x580] sm:$0xff]
        %v397 = vld [vmem:[%s219 + $0x588] sm:$0xff]
        %v398 = vld [vmem:[%s219 + $0x590] sm:$0xff]
        %v399 = vld [vmem:[%s219 + $0x598] sm:$0xff]
        %v400 = vld [vmem:[%s219 + $0x5a0] sm:$0xff]
        %v401 = vld [vmem:[%s219 + $0x5a8] sm:$0xff]
        %v402 = vld [vmem:[%s219 + $0x5b0] sm:$0xff]
        %v403 = vld [vmem:[%s219 + $0x5b8] sm:$0xff]
        %v404 = vld [vmem:[%s219 + $0x5c0] sm:$0xff]
        %v405 = vld [vmem:[%s219 + $0x5c8] sm:$0xff]
        %v406 = vld [vmem:[%s219 + $0x5d0] sm:$0xff]
        %v407 = vld [vmem:[%s219 + $0x5d8] sm:$0xff]
        %v408 = vld [vmem:[%s219 + $0x5e0] sm:$0xff]
        %v409 = vld [vmem:[%s219 + $0x5e8] sm:$0xff]
        %v410 = vld [vmem:[%s219 + $0x5f0] sm:$0xff]
        %v411 = vld [vmem:[%s219 + $0x5f8] sm:$0xff]
        %v412 = vld [vmem:[%s1] sm:$0xff]
        %v413 = vld [vmem:[%s1 + $0x8] sm:$0xff]
        %v414 = vld [vmem:[%s1 + $0x10] sm:$0xff]
        %v415 = vld [vmem:[%s1 + $0x18] sm:$0xff]
        %v416 = vld [vmem:[%s1 + $0x20] sm:$0xff]
        %v417 = vld [vmem:[%s1 + $0x28] sm:$0xff]
        %v418 = vld [vmem:[%s1 + $0x30] sm:$0xff]
        %v419 = vld [vmem:[%s1 + $0x38] sm:$0xff]
        %v420 = vld [vmem:[%s1 + $0x40] sm:$0xff]
        %v421 = vld [vmem:[%s1 + $0x48] sm:$0xff]
        %v422 = vld [vmem:[%s1 + $0x50] sm:$0xff]
        %v423 = vld [vmem:[%s1 + $0x58] sm:$0xff]
        %v424 = vld [vmem:[%s1 + $0x60] sm:$0xff]
        %v425 = vld [vmem:[%s1 + $0x68] sm:$0xff]
        %v426 = vld [vmem:[%s1 + $0x70] sm:$0xff]
        %v427 = vld [vmem:[%s1 + $0x78] sm:$0xff]
        %v428 = vld [vmem:[%s1 + $0x80] sm:$0xff]
        %v429 = vld [vmem:[%s1 + $0x88] sm:$0xff]
        %s430 = sadd.s32 %s216, 2
        %s431 = smul.u32 %s430, 48
        %s432 = smul.addr %s431, 4
        %s433 = scalar_lea.vmem %s178, %s432 [#allocation2]
        %v434 = vld [vmem:[%s433] sm:$0xff]
        %v435 = vld [vmem:[%s433 + $0x8] sm:$0xff]
        %v436 = vld [vmem:[%s433 + $0x10] sm:$0xff]
        %v437 = vld [vmem:[%s433 + $0x18] sm:$0xff]
        %v438 = vld [vmem:[%s433 + $0x20] sm:$0xff]
        %v439 = vld [vmem:[%s433 + $0x28] sm:$0xff]
        %v440 = vld [vmem:[%s433 + $0x30] sm:$0xff]
        %v441 = vld [vmem:[%s433 + $0x38] sm:$0xff]
        %v442 = vld [vmem:[%s433 + $0x40] sm:$0xff]
        %v443 = vld [vmem:[%s433 + $0x48] sm:$0xff]
        %v444 = vld [vmem:[%s433 + $0x50] sm:$0xff]
        %v445 = vld [vmem:[%s433 + $0x58] sm:$0xff]
        %v446 = vld [vmem:[%s433 + $0x60] sm:$0xff]
        %v447 = vld [vmem:[%s433 + $0x68] sm:$0xff]
        %v448 = vld [vmem:[%s433 + $0x70] sm:$0xff]
        %v449 = vld [vmem:[%s433 + $0x78] sm:$0xff]
        %v450 = vld [vmem:[%s433 + $0x80] sm:$0xff]
        %v451 = vld [vmem:[%s433 + $0x88] sm:$0xff]
        %v452 = vld [vmem:[%s433 + $0x90] sm:$0xff]
        %v453 = vld [vmem:[%s433 + $0x98] sm:$0xff]
        %v454 = vld [vmem:[%s433 + $0xa0] sm:$0xff]
        %v455 = vld [vmem:[%s433 + $0xa8] sm:$0xff]
        %v456 = vld [vmem:[%s433 + $0xb0] sm:$0xff]
        %v457 = vld [vmem:[%s433 + $0xb8] sm:$0xff]
        %v458 = vld [vmem:[%s433 + $0xc0] sm:$0xff]
        %v459 = vld [vmem:[%s433 + $0xc8] sm:$0xff]
        %v460 = vld [vmem:[%s433 + $0xd0] sm:$0xff]
        %v461 = vld [vmem:[%s433 + $0xd8] sm:$0xff]
        %v462 = vld [vmem:[%s433 + $0xe0] sm:$0xff]
        %v463 = vld [vmem:[%s433 + $0xe8] sm:$0xff]
        %v464 = vld [vmem:[%s433 + $0xf0] sm:$0xff]
        %v465 = vld [vmem:[%s433 + $0xf8] sm:$0xff]
        %v466 = vld [vmem:[%s433 + $0x100] sm:$0xff]
        %v467 = vld [vmem:[%s433 + $0x108] sm:$0xff]
        %v468 = vld [vmem:[%s433 + $0x110] sm:$0xff]
        %v469 = vld [vmem:[%s433 + $0x118] sm:$0xff]
        %v470 = vld [vmem:[%s433 + $0x120] sm:$0xff]
        %v471 = vld [vmem:[%s433 + $0x128] sm:$0xff]
        %v472 = vld [vmem:[%s433 + $0x130] sm:$0xff]
        %v473 = vld [vmem:[%s433 + $0x138] sm:$0xff]
        %v474 = vld [vmem:[%s433 + $0x140] sm:$0xff]
        %v475 = vld [vmem:[%s433 + $0x148] sm:$0xff]
        %v476 = vld [vmem:[%s433 + $0x150] sm:$0xff]
        %v477 = vld [vmem:[%s433 + $0x158] sm:$0xff]
        %v478 = vld [vmem:[%s433 + $0x160] sm:$0xff]
        %v479 = vld [vmem:[%s433 + $0x168] sm:$0xff]
        %v480 = vld [vmem:[%s433 + $0x170] sm:$0xff]
        %v481 = vld [vmem:[%s433 + $0x178] sm:$0xff]
        %v482 = vld [vmem:[%s433 + $0x180] sm:$0xff]
        %v483 = vld [vmem:[%s433 + $0x188] sm:$0xff]
        %v484 = vld [vmem:[%s433 + $0x190] sm:$0xff]
        %v485 = vld [vmem:[%s433 + $0x198] sm:$0xff]
        %v486 = vld [vmem:[%s433 + $0x1a0] sm:$0xff]
        %v487 = vld [vmem:[%s433 + $0x1a8] sm:$0xff]
        %v488 = vld [vmem:[%s433 + $0x1b0] sm:$0xff]
        %v489 = vld [vmem:[%s433 + $0x1b8] sm:$0xff]
        %v490 = vld [vmem:[%s433 + $0x1c0] sm:$0xff]
        %v491 = vld [vmem:[%s433 + $0x1c8] sm:$0xff]
        %v492 = vld [vmem:[%s433 + $0x1d0] sm:$0xff]
        %v493 = vld [vmem:[%s433 + $0x1d8] sm:$0xff]
        %v494 = vld [vmem:[%s433 + $0x1e0] sm:$0xff]
        %v495 = vld [vmem:[%s433 + $0x1e8] sm:$0xff]
        %v496 = vld [vmem:[%s433 + $0x1f0] sm:$0xff]
        %v497 = vld [vmem:[%s433 + $0x1f8] sm:$0xff]
        %v498 = vld [vmem:[%s433 + $0x200] sm:$0xff]
        %v499 = vld [vmem:[%s433 + $0x208] sm:$0xff]
        %v500 = vld [vmem:[%s433 + $0x210] sm:$0xff]
        %v501 = vld [vmem:[%s433 + $0x218] sm:$0xff]
        %v502 = vld [vmem:[%s433 + $0x220] sm:$0xff]
        %v503 = vld [vmem:[%s433 + $0x228] sm:$0xff]
        %v504 = vld [vmem:[%s433 + $0x230] sm:$0xff]
        %v505 = vld [vmem:[%s433 + $0x238] sm:$0xff]
        %v506 = vld [vmem:[%s433 + $0x240] sm:$0xff]
        %v507 = vld [vmem:[%s433 + $0x248] sm:$0xff]
        %v508 = vld [vmem:[%s433 + $0x250] sm:$0xff]
        %v509 = vld [vmem:[%s433 + $0x258] sm:$0xff]
        %v510 = vld [vmem:[%s433 + $0x260] sm:$0xff]
        %v511 = vld [vmem:[%s433 + $0x268] sm:$0xff]
        %v512 = vld [vmem:[%s433 + $0x270] sm:$0xff]
        %v513 = vld [vmem:[%s433 + $0x278] sm:$0xff]
        %v514 = vld [vmem:[%s433 + $0x280] sm:$0xff]
        %v515 = vld [vmem:[%s433 + $0x288] sm:$0xff]
        %v516 = vld [vmem:[%s433 + $0x290] sm:$0xff]
        %v517 = vld [vmem:[%s433 + $0x298] sm:$0xff]
        %v518 = vld [vmem:[%s433 + $0x2a0] sm:$0xff]
        %v519 = vld [vmem:[%s433 + $0x2a8] sm:$0xff]
        %v520 = vld [vmem:[%s433 + $0x2b0] sm:$0xff]
        %v521 = vld [vmem:[%s433 + $0x2b8] sm:$0xff]
        %v522 = vld [vmem:[%s433 + $0x2c0] sm:$0xff]
        %v523 = vld [vmem:[%s433 + $0x2c8] sm:$0xff]
        %v524 = vld [vmem:[%s433 + $0x2d0] sm:$0xff]
        %v525 = vld [vmem:[%s433 + $0x2d8] sm:$0xff]
        %v526 = vld [vmem:[%s433 + $0x2e0] sm:$0xff]
        %v527 = vld [vmem:[%s433 + $0x2e8] sm:$0xff]
        %v528 = vld [vmem:[%s433 + $0x2f0] sm:$0xff]
        %v529 = vld [vmem:[%s433 + $0x2f8] sm:$0xff]
        %v530 = vld [vmem:[%s433 + $0x300] sm:$0xff]
        %v531 = vld [vmem:[%s433 + $0x308] sm:$0xff]
        %v532 = vld [vmem:[%s433 + $0x310] sm:$0xff]
        %v533 = vld [vmem:[%s433 + $0x318] sm:$0xff]
        %v534 = vld [vmem:[%s433 + $0x320] sm:$0xff]
        %v535 = vld [vmem:[%s433 + $0x328] sm:$0xff]
        %v536 = vld [vmem:[%s433 + $0x330] sm:$0xff]
        %v537 = vld [vmem:[%s433 + $0x338] sm:$0xff]
        %v538 = vld [vmem:[%s433 + $0x340] sm:$0xff]
        %v539 = vld [vmem:[%s433 + $0x348] sm:$0xff]
        %v540 = vld [vmem:[%s433 + $0x350] sm:$0xff]
        %v541 = vld [vmem:[%s433 + $0x358] sm:$0xff]
        %v542 = vld [vmem:[%s433 + $0x360] sm:$0xff]
        %v543 = vld [vmem:[%s433 + $0x368] sm:$0xff]
        %v544 = vld [vmem:[%s433 + $0x370] sm:$0xff]
        %v545 = vld [vmem:[%s433 + $0x378] sm:$0xff]
        %v546 = vld [vmem:[%s433 + $0x380] sm:$0xff]
        %v547 = vld [vmem:[%s433 + $0x388] sm:$0xff]
        %v548 = vld [vmem:[%s433 + $0x390] sm:$0xff]
        %v549 = vld [vmem:[%s433 + $0x398] sm:$0xff]
        %v550 = vld [vmem:[%s433 + $0x3a0] sm:$0xff]
        %v551 = vld [vmem:[%s433 + $0x3a8] sm:$0xff]
        %v552 = vld [vmem:[%s433 + $0x3b0] sm:$0xff]
        %v553 = vld [vmem:[%s433 + $0x3b8] sm:$0xff]
        %v554 = vld [vmem:[%s433 + $0x3c0] sm:$0xff]
        %v555 = vld [vmem:[%s433 + $0x3c8] sm:$0xff]
        %v556 = vld [vmem:[%s433 + $0x3d0] sm:$0xff]
        %v557 = vld [vmem:[%s433 + $0x3d8] sm:$0xff]
        %v558 = vld [vmem:[%s433 + $0x3e0] sm:$0xff]
        %v559 = vld [vmem:[%s433 + $0x3e8] sm:$0xff]
        %v560 = vld [vmem:[%s433 + $0x3f0] sm:$0xff]
        %v561 = vld [vmem:[%s433 + $0x3f8] sm:$0xff]
        %v562 = vld [vmem:[%s433 + $0x400] sm:$0xff]
        %v563 = vld [vmem:[%s433 + $0x408] sm:$0xff]
        %v564 = vld [vmem:[%s433 + $0x410] sm:$0xff]
        %v565 = vld [vmem:[%s433 + $0x418] sm:$0xff]
        %v566 = vld [vmem:[%s433 + $0x420] sm:$0xff]
        %v567 = vld [vmem:[%s433 + $0x428] sm:$0xff]
        %v568 = vld [vmem:[%s433 + $0x430] sm:$0xff]
        %v569 = vld [vmem:[%s433 + $0x438] sm:$0xff]
        %v570 = vld [vmem:[%s433 + $0x440] sm:$0xff]
        %v571 = vld [vmem:[%s433 + $0x448] sm:$0xff]
        %v572 = vld [vmem:[%s433 + $0x450] sm:$0xff]
        %v573 = vld [vmem:[%s433 + $0x458] sm:$0xff]
        %v574 = vld [vmem:[%s433 + $0x460] sm:$0xff]
        %v575 = vld [vmem:[%s433 + $0x468] sm:$0xff]
        %v576 = vld [vmem:[%s433 + $0x470] sm:$0xff]
        %v577 = vld [vmem:[%s433 + $0x478] sm:$0xff]
        %v578 = vld [vmem:[%s433 + $0x480] sm:$0xff]
        %v579 = vld [vmem:[%s433 + $0x488] sm:$0xff]
        %v580 = vld [vmem:[%s433 + $0x490] sm:$0xff]
        %v581 = vld [vmem:[%s433 + $0x498] sm:$0xff]
        %v582 = vld [vmem:[%s433 + $0x4a0] sm:$0xff]
        %v583 = vld [vmem:[%s433 + $0x4a8] sm:$0xff]
        %v584 = vld [vmem:[%s433 + $0x4b0] sm:$0xff]
        %v585 = vld [vmem:[%s433 + $0x4b8] sm:$0xff]
        %v586 = vld [vmem:[%s433 + $0x4c0] sm:$0xff]
        %v587 = vld [vmem:[%s433 + $0x4c8] sm:$0xff]
        %v588 = vld [vmem:[%s433 + $0x4d0] sm:$0xff]
        %v589 = vld [vmem:[%s433 + $0x4d8] sm:$0xff]
        %v590 = vld [vmem:[%s433 + $0x4e0] sm:$0xff]
        %v591 = vld [vmem:[%s433 + $0x4e8] sm:$0xff]
        %v592 = vld [vmem:[%s433 + $0x4f0] sm:$0xff]
        %v593 = vld [vmem:[%s433 + $0x4f8] sm:$0xff]
        %v594 = vld [vmem:[%s433 + $0x500] sm:$0xff]
        %v595 = vld [vmem:[%s433 + $0x508] sm:$0xff]
        %v596 = vld [vmem:[%s433 + $0x510] sm:$0xff]
        %v597 = vld [vmem:[%s433 + $0x518] sm:$0xff]
        %v598 = vld [vmem:[%s433 + $0x520] sm:$0xff]
        %v599 = vld [vmem:[%s433 + $0x528] sm:$0xff]
        %v600 = vld [vmem:[%s433 + $0x530] sm:$0xff]
        %v601 = vld [vmem:[%s433 + $0x538] sm:$0xff]
        %v602 = vld [vmem:[%s433 + $0x540] sm:$0xff]
        %v603 = vld [vmem:[%s433 + $0x548] sm:$0xff]
        %v604 = vld [vmem:[%s433 + $0x550] sm:$0xff]
        %v605 = vld [vmem:[%s433 + $0x558] sm:$0xff]
        %v606 = vld [vmem:[%s433 + $0x560] sm:$0xff]
        %v607 = vld [vmem:[%s433 + $0x568] sm:$0xff]
        %v608 = vld [vmem:[%s433 + $0x570] sm:$0xff]
        %v609 = vld [vmem:[%s433 + $0x578] sm:$0xff]
        %v610 = vld [vmem:[%s433 + $0x580] sm:$0xff]
        %v611 = vld [vmem:[%s433 + $0x588] sm:$0xff]
        %v612 = vld [vmem:[%s433 + $0x590] sm:$0xff]
        %v613 = vld [vmem:[%s433 + $0x598] sm:$0xff]
        %v614 = vld [vmem:[%s433 + $0x5a0] sm:$0xff]
        %v615 = vld [vmem:[%s433 + $0x5a8] sm:$0xff]
        %v616 = vld [vmem:[%s433 + $0x5b0] sm:$0xff]
        %v617 = vld [vmem:[%s433 + $0x5b8] sm:$0xff]
        %v618 = vld [vmem:[%s433 + $0x5c0] sm:$0xff]
        %v619 = vld [vmem:[%s433 + $0x5c8] sm:$0xff]
        %v620 = vld [vmem:[%s433 + $0x5d0] sm:$0xff]
        %v621 = vld [vmem:[%s433 + $0x5d8] sm:$0xff]
        %v622 = vld [vmem:[%s433 + $0x5e0] sm:$0xff]
        %v623 = vld [vmem:[%s433 + $0x5e8] sm:$0xff]
        %v624 = vld [vmem:[%s433 + $0x5f0] sm:$0xff]
        %v625 = vld [vmem:[%s433 + $0x5f8] sm:$0xff]
        %s626 = scalar_lea.vmem %s1, 144
        %v627 = vld [vmem:[%s626] sm:$0xff]
        %v628 = vld [vmem:[%s626 + $0x8] sm:$0xff]
        %v629 = vld [vmem:[%s626 + $0x10] sm:$0xff]
        %v630 = vld [vmem:[%s626 + $0x18] sm:$0xff]
        %v631 = vld [vmem:[%s626 + $0x20] sm:$0xff]
        %v632 = vld [vmem:[%s626 + $0x28] sm:$0xff]
        %v633 = vld [vmem:[%s626 + $0x30] sm:$0xff]
        %v634 = vld [vmem:[%s626 + $0x38] sm:$0xff]
        %v635 = vld [vmem:[%s626 + $0x40] sm:$0xff]
        %v636 = vld [vmem:[%s626 + $0x48] sm:$0xff]
        %v637 = vld [vmem:[%s626 + $0x50] sm:$0xff]
        %v638 = vld [vmem:[%s626 + $0x58] sm:$0xff]
        %v639 = vld [vmem:[%s626 + $0x60] sm:$0xff]
        %v640 = vld [vmem:[%s626 + $0x68] sm:$0xff]
        %v641 = vld [vmem:[%s626 + $0x70] sm:$0xff]
        %v642 = vld [vmem:[%s626 + $0x78] sm:$0xff]
        %v643 = vld [vmem:[%s626 + $0x80] sm:$0xff]
        %v644 = vld [vmem:[%s626 + $0x88] sm:$0xff]
        %v663 = vunpack.c.l.b16 %v627
        %v664 = vunpack.c.h.b16 %v627
        %v665 = vunpack.c.l.b16 %v628
        %v666 = vunpack.c.h.b16 %v628
        %v667 = vunpack.c.l.b16 %v629
        %v668 = vunpack.c.h.b16 %v629
        %v669 = vunpack.c.l.b16 %v630
        %v670 = vunpack.c.h.b16 %v630
        %v671 = vunpack.c.l.b16 %v631
        %v672 = vunpack.c.h.b16 %v631
        %v673 = vunpack.c.l.b16 %v632
        %v674 = vunpack.c.h.b16 %v632
        %v675 = vunpack.c.l.b16 %v633
        %v676 = vunpack.c.h.b16 %v633
        %v677 = vunpack.c.l.b16 %v634
        %v678 = vunpack.c.h.b16 %v634
        %v679 = vunpack.c.l.b16 %v635
        %v680 = vunpack.c.h.b16 %v635
        %v681 = vunpack.c.l.b16 %v636
        %v682 = vunpack.c.h.b16 %v636
        %v683 = vunpack.c.l.b16 %v637
        %v684 = vunpack.c.h.b16 %v637
        %v685 = vunpack.c.l.b16 %v638
        %v686 = vunpack.c.h.b16 %v638
        %v687 = vunpack.c.l.b16 %v639
        %v688 = vunpack.c.h.b16 %v639
        %v689 = vunpack.c.l.b16 %v640
        %v690 = vunpack.c.h.b16 %v640
        %v691 = vunpack.c.l.b16 %v641
        %v692 = vunpack.c.h.b16 %v641
        %v693 = vunpack.c.l.b16 %v642
        %v694 = vunpack.c.h.b16 %v642
        %v695 = vunpack.c.l.b16 %v643
        %v696 = vunpack.c.h.b16 %v643
        %v697 = vunpack.c.l.b16 %v644
        %v698 = vunpack.c.h.b16 %v644
        %v699 = vpack.c.b16 %v669, %v663
        %v700 = vpack.c.b16 %v670, %v664
        %v701 = vpack.c.b16 %v671, %v665
        %v702 = vpack.c.b16 %v672, %v666
        %v703 = vpack.c.b16 %v673, %v667
        %v704 = vpack.c.b16 %v674, %v668
        %v705 = vpack.c.b16 %v681, %v675
        %v706 = vpack.c.b16 %v682, %v676
        %v707 = vpack.c.b16 %v683, %v677
        %v708 = vpack.c.b16 %v684, %v678
        %v709 = vpack.c.b16 %v685, %v679
        %v710 = vpack.c.b16 %v686, %v680
        %v711 = vpack.c.b16 %v693, %v687
        %v712 = vpack.c.b16 %v694, %v688
        %v713 = vpack.c.b16 %v695, %v689
        %v714 = vpack.c.b16 %v696, %v690
        %v715 = vpack.c.b16 %v697, %v691
        %v716 = vpack.c.b16 %v698, %v692
        %v924 = vunpack.c.l.b16 %v434
        %v925 = vunpack.c.h.b16 %v434
        %v926 = vunpack.c.l.b16 %v435
        %v927 = vunpack.c.h.b16 %v435
        %v928 = vunpack.c.l.b16 %v436
        %v929 = vunpack.c.h.b16 %v436
        %v930 = vunpack.c.l.b16 %v437
        %v931 = vunpack.c.h.b16 %v437
        %v932 = vunpack.c.l.b16 %v438
        %v933 = vunpack.c.h.b16 %v438
        %v934 = vunpack.c.l.b16 %v439
        %v935 = vunpack.c.h.b16 %v439
        %v936 = vunpack.c.l.b16 %v440
        %v937 = vunpack.c.h.b16 %v440
        %v938 = vunpack.c.l.b16 %v441
        %v939 = vunpack.c.h.b16 %v441
        %v940 = vunpack.c.l.b16 %v442
        %v941 = vunpack.c.h.b16 %v442
        %v942 = vunpack.c.l.b16 %v443
        %v943 = vunpack.c.h.b16 %v443
        %v944 = vunpack.c.l.b16 %v444
        %v945 = vunpack.c.h.b16 %v444
        %v946 = vunpack.c.l.b16 %v445
        %v947 = vunpack.c.h.b16 %v445
        %v948 = vunpack.c.l.b16 %v446
        %v949 = vunpack.c.h.b16 %v446
        %v950 = vunpack.c.l.b16 %v447
        %v951 = vunpack.c.h.b16 %v447
        %v952 = vunpack.c.l.b16 %v448
        %v953 = vunpack.c.h.b16 %v448
        %v954 = vunpack.c.l.b16 %v449
        %v955 = vunpack.c.h.b16 %v449
        %v956 = vunpack.c.l.b16 %v450
        %v957 = vunpack.c.h.b16 %v450
        %v958 = vunpack.c.l.b16 %v451
        %v959 = vunpack.c.h.b16 %v451
        %v960 = vunpack.c.l.b16 %v452
        %v961 = vunpack.c.h.b16 %v452
        %v962 = vunpack.c.l.b16 %v453
        %v963 = vunpack.c.h.b16 %v453
        %v964 = vunpack.c.l.b16 %v454
        %v965 = vunpack.c.h.b16 %v454
        %v966 = vunpack.c.l.b16 %v455
        %v967 = vunpack.c.h.b16 %v455
        %v968 = vunpack.c.l.b16 %v456
        %v969 = vunpack.c.h.b16 %v456
        %v970 = vunpack.c.l.b16 %v457
        %v971 = vunpack.c.h.b16 %v457
        %v972 = vunpack.c.l.b16 %v458
        %v973 = vunpack.c.h.b16 %v458
        %v974 = vunpack.c.l.b16 %v459
        %v975 = vunpack.c.h.b16 %v459
        %v976 = vunpack.c.l.b16 %v460
        %v977 = vunpack.c.h.b16 %v460
        %v978 = vunpack.c.l.b16 %v461
        %v979 = vunpack.c.h.b16 %v461
        %v980 = vunpack.c.l.b16 %v462
        %v981 = vunpack.c.h.b16 %v462
        %v982 = vunpack.c.l.b16 %v463
        %v983 = vunpack.c.h.b16 %v463
        %v984 = vunpack.c.l.b16 %v464
        %v985 = vunpack.c.h.b16 %v464
        %v986 = vunpack.c.l.b16 %v465
        %v987 = vunpack.c.h.b16 %v465
        %v988 = vunpack.c.l.b16 %v466
        %v989 = vunpack.c.h.b16 %v466
        %v990 = vunpack.c.l.b16 %v467
        %v991 = vunpack.c.h.b16 %v467
        %v992 = vunpack.c.l.b16 %v468
        %v993 = vunpack.c.h.b16 %v468
        %v994 = vunpack.c.l.b16 %v469
        %v995 = vunpack.c.h.b16 %v469
        %v996 = vunpack.c.l.b16 %v470
        %v997 = vunpack.c.h.b16 %v470
        %v998 = vunpack.c.l.b16 %v471
        %v999 = vunpack.c.h.b16 %v471
        %v1000 = vunpack.c.l.b16 %v472
        %v1001 = vunpack.c.h.b16 %v472
        %v1002 = vunpack.c.l.b16 %v473
        %v1003 = vunpack.c.h.b16 %v473
        %v1004 = vunpack.c.l.b16 %v474
        %v1005 = vunpack.c.h.b16 %v474
        %v1006 = vunpack.c.l.b16 %v475
        %v1007 = vunpack.c.h.b16 %v475
        %v1008 = vunpack.c.l.b16 %v476
        %v1009 = vunpack.c.h.b16 %v476
        %v1010 = vunpack.c.l.b16 %v477
        %v1011 = vunpack.c.h.b16 %v477
        %v1012 = vunpack.c.l.b16 %v478
        %v1013 = vunpack.c.h.b16 %v478
        %v1014 = vunpack.c.l.b16 %v479
        %v1015 = vunpack.c.h.b16 %v479
        %v1016 = vunpack.c.l.b16 %v480
        %v1017 = vunpack.c.h.b16 %v480
        %v1018 = vunpack.c.l.b16 %v481
        %v1019 = vunpack.c.h.b16 %v481
        %v1020 = vunpack.c.l.b16 %v482
        %v1021 = vunpack.c.h.b16 %v482
        %v1022 = vunpack.c.l.b16 %v483
        %v1023 = vunpack.c.h.b16 %v483
        %v1024 = vunpack.c.l.b16 %v484
        %v1025 = vunpack.c.h.b16 %v484
        %v1026 = vunpack.c.l.b16 %v485
        %v1027 = vunpack.c.h.b16 %v485
        %v1028 = vunpack.c.l.b16 %v486
        %v1029 = vunpack.c.h.b16 %v486
        %v1030 = vunpack.c.l.b16 %v487
        %v1031 = vunpack.c.h.b16 %v487
        %v1032 = vunpack.c.l.b16 %v488
        %v1033 = vunpack.c.h.b16 %v488
        %v1034 = vunpack.c.l.b16 %v489
        %v1035 = vunpack.c.h.b16 %v489
        %v1036 = vunpack.c.l.b16 %v490
        %v1037 = vunpack.c.h.b16 %v490
        %v1038 = vunpack.c.l.b16 %v491
        %v1039 = vunpack.c.h.b16 %v491
        %v1040 = vunpack.c.l.b16 %v492
        %v1041 = vunpack.c.h.b16 %v492
        %v1042 = vunpack.c.l.b16 %v493
        %v1043 = vunpack.c.h.b16 %v493
        %v1044 = vunpack.c.l.b16 %v494
        %v1045 = vunpack.c.h.b16 %v494
        %v1046 = vunpack.c.l.b16 %v495
        %v1047 = vunpack.c.h.b16 %v495
        %v1048 = vunpack.c.l.b16 %v496
        %v1049 = vunpack.c.h.b16 %v496
        %v1050 = vunpack.c.l.b16 %v497
        %v1051 = vunpack.c.h.b16 %v497
        %v1052 = vunpack.c.l.b16 %v498
        %v1053 = vunpack.c.h.b16 %v498
        %v1054 = vunpack.c.l.b16 %v499
        %v1055 = vunpack.c.h.b16 %v499
        %v1056 = vunpack.c.l.b16 %v500
        %v1057 = vunpack.c.h.b16 %v500
        %v1058 = vunpack.c.l.b16 %v501
        %v1059 = vunpack.c.h.b16 %v501
        %v1060 = vunpack.c.l.b16 %v502
        %v1061 = vunpack.c.h.b16 %v502
        %v1062 = vunpack.c.l.b16 %v503
        %v1063 = vunpack.c.h.b16 %v503
        %v1064 = vunpack.c.l.b16 %v504
        %v1065 = vunpack.c.h.b16 %v504
        %v1066 = vunpack.c.l.b16 %v505
        %v1067 = vunpack.c.h.b16 %v505
        %v1068 = vunpack.c.l.b16 %v506
        %v1069 = vunpack.c.h.b16 %v506
        %v1070 = vunpack.c.l.b16 %v507
        %v1071 = vunpack.c.h.b16 %v507
        %v1072 = vunpack.c.l.b16 %v508
        %v1073 = vunpack.c.h.b16 %v508
        %v1074 = vunpack.c.l.b16 %v509
        %v1075 = vunpack.c.h.b16 %v509
        %v1076 = vunpack.c.l.b16 %v510
        %v1077 = vunpack.c.h.b16 %v510
        %v1078 = vunpack.c.l.b16 %v511
        %v1079 = vunpack.c.h.b16 %v511
        %v1080 = vunpack.c.l.b16 %v512
        %v1081 = vunpack.c.h.b16 %v512
        %v1082 = vunpack.c.l.b16 %v513
        %v1083 = vunpack.c.h.b16 %v513
        %v1084 = vunpack.c.l.b16 %v514
        %v1085 = vunpack.c.h.b16 %v514
        %v1086 = vunpack.c.l.b16 %v515
        %v1087 = vunpack.c.h.b16 %v515
        %v1088 = vunpack.c.l.b16 %v516
        %v1089 = vunpack.c.h.b16 %v516
        %v1090 = vunpack.c.l.b16 %v517
        %v1091 = vunpack.c.h.b16 %v517
        %v1092 = vunpack.c.l.b16 %v518
        %v1093 = vunpack.c.h.b16 %v518
        %v1094 = vunpack.c.l.b16 %v519
        %v1095 = vunpack.c.h.b16 %v519
        %v1096 = vunpack.c.l.b16 %v520
        %v1097 = vunpack.c.h.b16 %v520
        %v1098 = vunpack.c.l.b16 %v521
        %v1099 = vunpack.c.h.b16 %v521
        %v1100 = vunpack.c.l.b16 %v522
        %v1101 = vunpack.c.h.b16 %v522
        %v1102 = vunpack.c.l.b16 %v523
        %v1103 = vunpack.c.h.b16 %v523
        %v1104 = vunpack.c.l.b16 %v524
        %v1105 = vunpack.c.h.b16 %v524
        %v1106 = vunpack.c.l.b16 %v525
        %v1107 = vunpack.c.h.b16 %v525
        %v1108 = vunpack.c.l.b16 %v526
        %v1109 = vunpack.c.h.b16 %v526
        %v1110 = vunpack.c.l.b16 %v527
        %v1111 = vunpack.c.h.b16 %v527
        %v1112 = vunpack.c.l.b16 %v528
        %v1113 = vunpack.c.h.b16 %v528
        %v1114 = vunpack.c.l.b16 %v529
        %v1115 = vunpack.c.h.b16 %v529
        %v1116 = vunpack.c.l.b16 %v530
        %v1117 = vunpack.c.h.b16 %v530
        %v1118 = vunpack.c.l.b16 %v531
        %v1119 = vunpack.c.h.b16 %v531
        %v1120 = vunpack.c.l.b16 %v532
        %v1121 = vunpack.c.h.b16 %v532
        %v1122 = vunpack.c.l.b16 %v533
        %v1123 = vunpack.c.h.b16 %v533
        %v1124 = vunpack.c.l.b16 %v534
        %v1125 = vunpack.c.h.b16 %v534
        %v1126 = vunpack.c.l.b16 %v535
        %v1127 = vunpack.c.h.b16 %v535
        %v1128 = vunpack.c.l.b16 %v536
        %v1129 = vunpack.c.h.b16 %v536
        %v1130 = vunpack.c.l.b16 %v537
        %v1131 = vunpack.c.h.b16 %v537
        %v1132 = vunpack.c.l.b16 %v538
        %v1133 = vunpack.c.h.b16 %v538
        %v1134 = vunpack.c.l.b16 %v539
        %v1135 = vunpack.c.h.b16 %v539
        %v1136 = vunpack.c.l.b16 %v540
        %v1137 = vunpack.c.h.b16 %v540
        %v1138 = vunpack.c.l.b16 %v541
        %v1139 = vunpack.c.h.b16 %v541
        %v1140 = vunpack.c.l.b16 %v542
        %v1141 = vunpack.c.h.b16 %v542
        %v1142 = vunpack.c.l.b16 %v543
        %v1143 = vunpack.c.h.b16 %v543
        %v1144 = vunpack.c.l.b16 %v544
        %v1145 = vunpack.c.h.b16 %v544
        %v1146 = vunpack.c.l.b16 %v545
        %v1147 = vunpack.c.h.b16 %v545
        %v1148 = vunpack.c.l.b16 %v546
        %v1149 = vunpack.c.h.b16 %v546
        %v1150 = vunpack.c.l.b16 %v547
        %v1151 = vunpack.c.h.b16 %v547
        %v1152 = vunpack.c.l.b16 %v548
        %v1153 = vunpack.c.h.b16 %v548
        %v1154 = vunpack.c.l.b16 %v549
        %v1155 = vunpack.c.h.b16 %v549
        %v1156 = vunpack.c.l.b16 %v550
        %v1157 = vunpack.c.h.b16 %v550
        %v1158 = vunpack.c.l.b16 %v551
        %v1159 = vunpack.c.h.b16 %v551
        %v1160 = vunpack.c.l.b16 %v552
        %v1161 = vunpack.c.h.b16 %v552
        %v1162 = vunpack.c.l.b16 %v553
        %v1163 = vunpack.c.h.b16 %v553
        %v1164 = vunpack.c.l.b16 %v554
        %v1165 = vunpack.c.h.b16 %v554
        %v1166 = vunpack.c.l.b16 %v555
        %v1167 = vunpack.c.h.b16 %v555
        %v1168 = vunpack.c.l.b16 %v556
        %v1169 = vunpack.c.h.b16 %v556
        %v1170 = vunpack.c.l.b16 %v557
        %v1171 = vunpack.c.h.b16 %v557
        %v1172 = vunpack.c.l.b16 %v558
        %v1173 = vunpack.c.h.b16 %v558
        %v1174 = vunpack.c.l.b16 %v559
        %v1175 = vunpack.c.h.b16 %v559
        %v1176 = vunpack.c.l.b16 %v560
        %v1177 = vunpack.c.h.b16 %v560
        %v1178 = vunpack.c.l.b16 %v561
        %v1179 = vunpack.c.h.b16 %v561
        %v1180 = vunpack.c.l.b16 %v562
        %v1181 = vunpack.c.h.b16 %v562
        %v1182 = vunpack.c.l.b16 %v563
        %v1183 = vunpack.c.h.b16 %v563
        %v1184 = vunpack.c.l.b16 %v564
        %v1185 = vunpack.c.h.b16 %v564
        %v1186 = vunpack.c.l.b16 %v565
        %v1187 = vunpack.c.h.b16 %v565
        %v1188 = vunpack.c.l.b16 %v566
        %v1189 = vunpack.c.h.b16 %v566
        %v1190 = vunpack.c.l.b16 %v567
        %v1191 = vunpack.c.h.b16 %v567
        %v1192 = vunpack.c.l.b16 %v568
        %v1193 = vunpack.c.h.b16 %v568
        %v1194 = vunpack.c.l.b16 %v569
        %v1195 = vunpack.c.h.b16 %v569
        %v1196 = vunpack.c.l.b16 %v570
        %v1197 = vunpack.c.h.b16 %v570
        %v1198 = vunpack.c.l.b16 %v571
        %v1199 = vunpack.c.h.b16 %v571
        %v1200 = vunpack.c.l.b16 %v572
        %v1201 = vunpack.c.h.b16 %v572
        %v1202 = vunpack.c.l.b16 %v573
        %v1203 = vunpack.c.h.b16 %v573
        %v1204 = vunpack.c.l.b16 %v574
        %v1205 = vunpack.c.h.b16 %v574
        %v1206 = vunpack.c.l.b16 %v575
        %v1207 = vunpack.c.h.b16 %v575
        %v1208 = vunpack.c.l.b16 %v576
        %v1209 = vunpack.c.h.b16 %v576
        %v1210 = vunpack.c.l.b16 %v577
        %v1211 = vunpack.c.h.b16 %v577
        %v1212 = vunpack.c.l.b16 %v578
        %v1213 = vunpack.c.h.b16 %v578
        %v1214 = vunpack.c.l.b16 %v579
        %v1215 = vunpack.c.h.b16 %v579
        %v1216 = vunpack.c.l.b16 %v580
        %v1217 = vunpack.c.h.b16 %v580
        %v1218 = vunpack.c.l.b16 %v581
        %v1219 = vunpack.c.h.b16 %v581
        %v1220 = vunpack.c.l.b16 %v582
        %v1221 = vunpack.c.h.b16 %v582
        %v1222 = vunpack.c.l.b16 %v583
        %v1223 = vunpack.c.h.b16 %v583
        %v1224 = vunpack.c.l.b16 %v584
        %v1225 = vunpack.c.h.b16 %v584
        %v1226 = vunpack.c.l.b16 %v585
        %v1227 = vunpack.c.h.b16 %v585
        %v1228 = vunpack.c.l.b16 %v586
        %v1229 = vunpack.c.h.b16 %v586
        %v1230 = vunpack.c.l.b16 %v587
        %v1231 = vunpack.c.h.b16 %v587
        %v1232 = vunpack.c.l.b16 %v588
        %v1233 = vunpack.c.h.b16 %v588
        %v1234 = vunpack.c.l.b16 %v589
        %v1235 = vunpack.c.h.b16 %v589
        %v1236 = vunpack.c.l.b16 %v590
        %v1237 = vunpack.c.h.b16 %v590
        %v1238 = vunpack.c.l.b16 %v591
        %v1239 = vunpack.c.h.b16 %v591
        %v1240 = vunpack.c.l.b16 %v592
        %v1241 = vunpack.c.h.b16 %v592
        %v1242 = vunpack.c.l.b16 %v593
        %v1243 = vunpack.c.h.b16 %v593
        %v1244 = vunpack.c.l.b16 %v594
        %v1245 = vunpack.c.h.b16 %v594
        %v1246 = vunpack.c.l.b16 %v595
        %v1247 = vunpack.c.h.b16 %v595
        %v1248 = vunpack.c.l.b16 %v596
        %v1249 = vunpack.c.h.b16 %v596
        %v1250 = vunpack.c.l.b16 %v597
        %v1251 = vunpack.c.h.b16 %v597
        %v1252 = vunpack.c.l.b16 %v598
        %v1253 = vunpack.c.h.b16 %v598
        %v1254 = vunpack.c.l.b16 %v599
        %v1255 = vunpack.c.h.b16 %v599
        %v1256 = vunpack.c.l.b16 %v600
        %v1257 = vunpack.c.h.b16 %v600
        %v1258 = vunpack.c.l.b16 %v601
        %v1259 = vunpack.c.h.b16 %v601
        %v1260 = vunpack.c.l.b16 %v602
        %v1261 = vunpack.c.h.b16 %v602
        %v1262 = vunpack.c.l.b16 %v603
        %v1263 = vunpack.c.h.b16 %v603
        %v1264 = vunpack.c.l.b16 %v604
        %v1265 = vunpack.c.h.b16 %v604
        %v1266 = vunpack.c.l.b16 %v605
        %v1267 = vunpack.c.h.b16 %v605
        %v1268 = vunpack.c.l.b16 %v606
        %v1269 = vunpack.c.h.b16 %v606
        %v1270 = vunpack.c.l.b16 %v607
        %v1271 = vunpack.c.h.b16 %v607
        %v1272 = vunpack.c.l.b16 %v608
        %v1273 = vunpack.c.h.b16 %v608
        %v1274 = vunpack.c.l.b16 %v609
        %v1275 = vunpack.c.h.b16 %v609
        %v1276 = vunpack.c.l.b16 %v610
        %v1277 = vunpack.c.h.b16 %v610
        %v1278 = vunpack.c.l.b16 %v611
        %v1279 = vunpack.c.h.b16 %v611
        %v1280 = vunpack.c.l.b16 %v612
        %v1281 = vunpack.c.h.b16 %v612
        %v1282 = vunpack.c.l.b16 %v613
        %v1283 = vunpack.c.h.b16 %v613
        %v1284 = vunpack.c.l.b16 %v614
        %v1285 = vunpack.c.h.b16 %v614
        %v1286 = vunpack.c.l.b16 %v615
        %v1287 = vunpack.c.h.b16 %v615
        %v1288 = vunpack.c.l.b16 %v616
        %v1289 = vunpack.c.h.b16 %v616
        %v1290 = vunpack.c.l.b16 %v617
        %v1291 = vunpack.c.h.b16 %v617
        %v1292 = vunpack.c.l.b16 %v618
        %v1293 = vunpack.c.h.b16 %v618
        %v1294 = vunpack.c.l.b16 %v619
        %v1295 = vunpack.c.h.b16 %v619
        %v1296 = vunpack.c.l.b16 %v620
        %v1297 = vunpack.c.h.b16 %v620
        %v1298 = vunpack.c.l.b16 %v621
        %v1299 = vunpack.c.h.b16 %v621
        %v1300 = vunpack.c.l.b16 %v622
        %v1301 = vunpack.c.h.b16 %v622
        %v1302 = vunpack.c.l.b16 %v623
        %v1303 = vunpack.c.h.b16 %v623
        %v1304 = vunpack.c.l.b16 %v624
        %v1305 = vunpack.c.h.b16 %v624
        %v1306 = vunpack.c.l.b16 %v625
        %v1307 = vunpack.c.h.b16 %v625
        %v1308 = vpack.c.b16 %v930, %v924
        %v1309 = vpack.c.b16 %v931, %v925
        %v1310 = vpack.c.b16 %v932, %v926
        %v1311 = vpack.c.b16 %v933, %v927
        %v1312 = vpack.c.b16 %v934, %v928
        %v1313 = vpack.c.b16 %v935, %v929
        %v1314 = vpack.c.b16 %v942, %v936
        %v1315 = vpack.c.b16 %v943, %v937
        %v1316 = vpack.c.b16 %v944, %v938
        %v1317 = vpack.c.b16 %v945, %v939
        %v1318 = vpack.c.b16 %v946, %v940
        %v1319 = vpack.c.b16 %v947, %v941
        %v1320 = vpack.c.b16 %v954, %v948
        %v1321 = vpack.c.b16 %v955, %v949
        %v1322 = vpack.c.b16 %v956, %v950
        %v1323 = vpack.c.b16 %v957, %v951
        %v1324 = vpack.c.b16 %v958, %v952
        %v1325 = vpack.c.b16 %v959, %v953
        %v1326 = vpack.c.b16 %v966, %v960
        %v1327 = vpack.c.b16 %v967, %v961
        %v1328 = vpack.c.b16 %v968, %v962
        %v1329 = vpack.c.b16 %v969, %v963
        %v1330 = vpack.c.b16 %v970, %v964
        %v1331 = vpack.c.b16 %v971, %v965
        %v1332 = vpack.c.b16 %v978, %v972
        %v1333 = vpack.c.b16 %v979, %v973
        %v1334 = vpack.c.b16 %v980, %v974
        %v1335 = vpack.c.b16 %v981, %v975
        %v1336 = vpack.c.b16 %v982, %v976
        %v1337 = vpack.c.b16 %v983, %v977
        %v1338 = vpack.c.b16 %v990, %v984
        %v1339 = vpack.c.b16 %v991, %v985
        %v1340 = vpack.c.b16 %v992, %v986
        %v1341 = vpack.c.b16 %v993, %v987
        %v1342 = vpack.c.b16 %v994, %v988
        %v1343 = vpack.c.b16 %v995, %v989
        %v1344 = vpack.c.b16 %v1002, %v996
        %v1345 = vpack.c.b16 %v1003, %v997
        %v1346 = vpack.c.b16 %v1004, %v998
        %v1347 = vpack.c.b16 %v1005, %v999
        %v1348 = vpack.c.b16 %v1006, %v1000
        %v1349 = vpack.c.b16 %v1007, %v1001
        %v1350 = vpack.c.b16 %v1014, %v1008
        %v1351 = vpack.c.b16 %v1015, %v1009
        %v1352 = vpack.c.b16 %v1016, %v1010
        %v1353 = vpack.c.b16 %v1017, %v1011
        %v1354 = vpack.c.b16 %v1018, %v1012
        %v1355 = vpack.c.b16 %v1019, %v1013
        %v1356 = vpack.c.b16 %v1026, %v1020
        %v1357 = vpack.c.b16 %v1027, %v1021
        %v1358 = vpack.c.b16 %v1028, %v1022
        %v1359 = vpack.c.b16 %v1029, %v1023
        %v1360 = vpack.c.b16 %v1030, %v1024
        %v1361 = vpack.c.b16 %v1031, %v1025
        %v1362 = vpack.c.b16 %v1038, %v1032
        %v1363 = vpack.c.b16 %v1039, %v1033
        %v1364 = vpack.c.b16 %v1040, %v1034
        %v1365 = vpack.c.b16 %v1041, %v1035
        %v1366 = vpack.c.b16 %v1042, %v1036
        %v1367 = vpack.c.b16 %v1043, %v1037
        %v1368 = vpack.c.b16 %v1050, %v1044
        %v1369 = vpack.c.b16 %v1051, %v1045
        %v1370 = vpack.c.b16 %v1052, %v1046
        %v1371 = vpack.c.b16 %v1053, %v1047
        %v1372 = vpack.c.b16 %v1054, %v1048
        %v1373 = vpack.c.b16 %v1055, %v1049
        %v1374 = vpack.c.b16 %v1062, %v1056
        %v1375 = vpack.c.b16 %v1063, %v1057
        %v1376 = vpack.c.b16 %v1064, %v1058
        %v1377 = vpack.c.b16 %v1065, %v1059
        %v1378 = vpack.c.b16 %v1066, %v1060
        %v1379 = vpack.c.b16 %v1067, %v1061
        %v1380 = vpack.c.b16 %v1074, %v1068
        %v1381 = vpack.c.b16 %v1075, %v1069
        %v1382 = vpack.c.b16 %v1076, %v1070
        %v1383 = vpack.c.b16 %v1077, %v1071
        %v1384 = vpack.c.b16 %v1078, %v1072
        %v1385 = vpack.c.b16 %v1079, %v1073
        %v1386 = vpack.c.b16 %v1086, %v1080
        %v1387 = vpack.c.b16 %v1087, %v1081
        %v1388 = vpack.c.b16 %v1088, %v1082
        %v1389 = vpack.c.b16 %v1089, %v1083
        %v1390 = vpack.c.b16 %v1090, %v1084
        %v1391 = vpack.c.b16 %v1091, %v1085
        %v1392 = vpack.c.b16 %v1098, %v1092
        %v1393 = vpack.c.b16 %v1099, %v1093
        %v1394 = vpack.c.b16 %v1100, %v1094
        %v1395 = vpack.c.b16 %v1101, %v1095
        %v1396 = vpack.c.b16 %v1102, %v1096
        %v1397 = vpack.c.b16 %v1103, %v1097
        %v1398 = vpack.c.b16 %v1110, %v1104
        %v1399 = vpack.c.b16 %v1111, %v1105
        %v1400 = vpack.c.b16 %v1112, %v1106
        %v1401 = vpack.c.b16 %v1113, %v1107
        %v1402 = vpack.c.b16 %v1114, %v1108
        %v1403 = vpack.c.b16 %v1115, %v1109
        %v1404 = vpack.c.b16 %v1122, %v1116
        %v1405 = vpack.c.b16 %v1123, %v1117
        %v1406 = vpack.c.b16 %v1124, %v1118
        %v1407 = vpack.c.b16 %v1125, %v1119
        %v1408 = vpack.c.b16 %v1126, %v1120
        %v1409 = vpack.c.b16 %v1127, %v1121
        %v1410 = vpack.c.b16 %v1134, %v1128
        %v1411 = vpack.c.b16 %v1135, %v1129
        %v1412 = vpack.c.b16 %v1136, %v1130
        %v1413 = vpack.c.b16 %v1137, %v1131
        %v1414 = vpack.c.b16 %v1138, %v1132
        %v1415 = vpack.c.b16 %v1139, %v1133
        %v1416 = vpack.c.b16 %v1146, %v1140
        %v1417 = vpack.c.b16 %v1147, %v1141
        %v1418 = vpack.c.b16 %v1148, %v1142
        %v1419 = vpack.c.b16 %v1149, %v1143
        %v1420 = vpack.c.b16 %v1150, %v1144
        %v1421 = vpack.c.b16 %v1151, %v1145
        %v1422 = vpack.c.b16 %v1158, %v1152
        %v1423 = vpack.c.b16 %v1159, %v1153
        %v1424 = vpack.c.b16 %v1160, %v1154
        %v1425 = vpack.c.b16 %v1161, %v1155
        %v1426 = vpack.c.b16 %v1162, %v1156
        %v1427 = vpack.c.b16 %v1163, %v1157
        %v1428 = vpack.c.b16 %v1170, %v1164
        %v1429 = vpack.c.b16 %v1171, %v1165
        %v1430 = vpack.c.b16 %v1172, %v1166
        %v1431 = vpack.c.b16 %v1173, %v1167
        %v1432 = vpack.c.b16 %v1174, %v1168
        %v1433 = vpack.c.b16 %v1175, %v1169
        %v1434 = vpack.c.b16 %v1182, %v1176
        %v1435 = vpack.c.b16 %v1183, %v1177
        %v1436 = vpack.c.b16 %v1184, %v1178
        %v1437 = vpack.c.b16 %v1185, %v1179
        %v1438 = vpack.c.b16 %v1186, %v1180
        %v1439 = vpack.c.b16 %v1187, %v1181
        %v1440 = vpack.c.b16 %v1194, %v1188
        %v1441 = vpack.c.b16 %v1195, %v1189
        %v1442 = vpack.c.b16 %v1196, %v1190
        %v1443 = vpack.c.b16 %v1197, %v1191
        %v1444 = vpack.c.b16 %v1198, %v1192
        %v1445 = vpack.c.b16 %v1199, %v1193
        %v1446 = vpack.c.b16 %v1206, %v1200
        %v1447 = vpack.c.b16 %v1207, %v1201
        %v1448 = vpack.c.b16 %v1208, %v1202
        %v1449 = vpack.c.b16 %v1209, %v1203
        %v1450 = vpack.c.b16 %v1210, %v1204
        %v1451 = vpack.c.b16 %v1211, %v1205
        %v1452 = vpack.c.b16 %v1218, %v1212
        %v1453 = vpack.c.b16 %v1219, %v1213
        %v1454 = vpack.c.b16 %v1220, %v1214
        %v1455 = vpack.c.b16 %v1221, %v1215
        %v1456 = vpack.c.b16 %v1222, %v1216
        %v1457 = vpack.c.b16 %v1223, %v1217
        %v1458 = vpack.c.b16 %v1230, %v1224
        %v1459 = vpack.c.b16 %v1231, %v1225
        %v1460 = vpack.c.b16 %v1232, %v1226
        %v1461 = vpack.c.b16 %v1233, %v1227
        %v1462 = vpack.c.b16 %v1234, %v1228
        %v1463 = vpack.c.b16 %v1235, %v1229
        %v1464 = vpack.c.b16 %v1242, %v1236
        %v1465 = vpack.c.b16 %v1243, %v1237
        %v1466 = vpack.c.b16 %v1244, %v1238
        %v1467 = vpack.c.b16 %v1245, %v1239
        %v1468 = vpack.c.b16 %v1246, %v1240
        %v1469 = vpack.c.b16 %v1247, %v1241
        %v1470 = vpack.c.b16 %v1254, %v1248
        %v1471 = vpack.c.b16 %v1255, %v1249
        %v1472 = vpack.c.b16 %v1256, %v1250
        %v1473 = vpack.c.b16 %v1257, %v1251
        %v1474 = vpack.c.b16 %v1258, %v1252
        %v1475 = vpack.c.b16 %v1259, %v1253
        %v1476 = vpack.c.b16 %v1266, %v1260
        %v1477 = vpack.c.b16 %v1267, %v1261
        %v1478 = vpack.c.b16 %v1268, %v1262
        %v1479 = vpack.c.b16 %v1269, %v1263
        %v1480 = vpack.c.b16 %v1270, %v1264
        %v1481 = vpack.c.b16 %v1271, %v1265
        %v1482 = vpack.c.b16 %v1278, %v1272
        %v1483 = vpack.c.b16 %v1279, %v1273
        %v1484 = vpack.c.b16 %v1280, %v1274
        %v1485 = vpack.c.b16 %v1281, %v1275
        %v1486 = vpack.c.b16 %v1282, %v1276
        %v1487 = vpack.c.b16 %v1283, %v1277
        %v1488 = vpack.c.b16 %v1290, %v1284
        %v1489 = vpack.c.b16 %v1291, %v1285
        %v1490 = vpack.c.b16 %v1292, %v1286
        %v1491 = vpack.c.b16 %v1293, %v1287
        %v1492 = vpack.c.b16 %v1294, %v1288
        %v1493 = vpack.c.b16 %v1295, %v1289
        %v1494 = vpack.c.b16 %v1302, %v1296
        %v1495 = vpack.c.b16 %v1303, %v1297
        %v1496 = vpack.c.b16 %v1304, %v1298
        %v1497 = vpack.c.b16 %v1305, %v1299
        %v1498 = vpack.c.b16 %v1306, %v1300
        %v1499 = vpack.c.b16 %v1307, %v1301
        %vm1660 = vcmask 392192
        %v1662 = vsel %vm1660, %v704, 0
        %v1665 = vsel %vm1660, %v710, 0
        %v1668 = vsel %vm1660, %v716, 0
        %v1671 = vsel %vm1660, %v1313, 0
        %v1674 = vsel %vm1660, %v1319, 0
        %v1677 = vsel %vm1660, %v1325, 0
        %v1680 = vsel %vm1660, %v1331, 0
        %v1683 = vsel %vm1660, %v1337, 0
        %v1686 = vsel %vm1660, %v1343, 0
        %v1689 = vsel %vm1660, %v1349, 0
        %v1692 = vsel %vm1660, %v1355, 0
        %v1695 = vsel %vm1660, %v1361, 0
        %v1698 = vsel %vm1660, %v1367, 0
        %v1701 = vsel %vm1660, %v1373, 0
        %v1704 = vsel %vm1660, %v1379, 0
        %v1707 = vsel %vm1660, %v1385, 0
        %v1710 = vsel %vm1660, %v1391, 0
        %v1713 = vsel %vm1660, %v1397, 0
        %v1716 = vsel %vm1660, %v1403, 0
        %v1719 = vsel %vm1660, %v1409, 0
        %v1722 = vsel %vm1660, %v1415, 0
        %v1725 = vsel %vm1660, %v1421, 0
        %v1728 = vsel %vm1660, %v1427, 0
        %v1731 = vsel %vm1660, %v1433, 0
        %v1734 = vsel %vm1660, %v1439, 0
        %v1737 = vsel %vm1660, %v1445, 0
        %v1740 = vsel %vm1660, %v1451, 0
        %v1743 = vsel %vm1660, %v1457, 0
        %v1746 = vsel %vm1660, %v1463, 0
        %v1749 = vsel %vm1660, %v1469, 0
        %v1752 = vsel %vm1660, %v1475, 0
        %v1755 = vsel %vm1660, %v1481, 0
        %v1758 = vsel %vm1660, %v1487, 0
        %v1761 = vsel %vm1660, %v1493, 0
        %v1764 = vsel %vm1660, %v1499, 0
        %1766 = vmatpush.bf16.xpose.msra.mxu0 %v1350
        %1767 = vmatpush.bf16.xpose.msra.mxu0 %v1344
        %1768 = vmatpush.bf16.xpose.msra.mxu0 %v1338
        %1769 = vmatpush.bf16.xpose.msra.mxu0 %v1332
        %1770 = vmatpush.bf16.xpose.msra.mxu0 %v1326
        %1771 = vmatpush.bf16.xpose.msra.mxu0 %v1320
        %1772 = vmatpush.bf16.xpose.msra.mxu0 %v1314
        %1773 = vmatpush.bf16.xpose.msra.mxu0 %v1308
        %1774 = vmatmul.bf16.gmra.mxu0 %v699
        %v1775 = vpop.f32.mrf.mxu0
        %v1776 = vadd.f32 0.0, %v1775
        %v1777 = vpop.f32.mrf.mxu0
        %v1778 = vadd.f32 0.0, %v1777
        %1779 = vmatmul.bf16.gmra.mxu0 %v705
        %v1780 = vpop.f32.mrf.mxu0
        %v1781 = vadd.f32 0.0, %v1780
        %v1782 = vpop.f32.mrf.mxu0
        %v1783 = vadd.f32 0.0, %v1782
        %1784 = vmatmul.bf16.gmra.mxu0 %v711
        %v1785 = vpop.f32.mrf.mxu0
        %v1786 = vadd.f32 0.0, %v1785
        %v1787 = vpop.f32.mrf.mxu0
        %v1788 = vadd.f32 0.0, %v1787
        %1789 = vdwg.mxu0
        %1790 = vmatpush.bf16.xpose.msra.mxu0 %v1351
        %1791 = vmatpush.bf16.xpose.msra.mxu0 %v1345
        %1792 = vmatpush.bf16.xpose.msra.mxu0 %v1339
        %1793 = vmatpush.bf16.xpose.msra.mxu0 %v1333
        %1794 = vmatpush.bf16.xpose.msra.mxu0 %v1327
        %1795 = vmatpush.bf16.xpose.msra.mxu0 %v1321
        %1796 = vmatpush.bf16.xpose.msra.mxu0 %v1315
        %1797 = vmatpush.bf16.xpose.msra.mxu0 %v1309
        %1798 = vmatmul.bf16.gmra.mxu0 %v700
        %v1799 = vpop.f32.mrf.mxu0
        %v1800 = vadd.f32 %v1776, %v1799
        %v1801 = vpop.f32.mrf.mxu0
        %v1802 = vadd.f32 %v1778, %v1801
        %1803 = vmatmul.bf16.gmra.mxu0 %v706
        %v1804 = vpop.f32.mrf.mxu0
        %v1805 = vadd.f32 %v1781, %v1804
        %v1806 = vpop.f32.mrf.mxu0
        %v1807 = vadd.f32 %v1783, %v1806
        %1808 = vmatmul.bf16.gmra.mxu0 %v712
        %v1809 = vpop.f32.mrf.mxu0
        %v1810 = vadd.f32 %v1786, %v1809
        %v1811 = vpop.f32.mrf.mxu0
        %v1812 = vadd.f32 %v1788, %v1811
        %1813 = vdwg.mxu0
        %1814 = vmatpush.bf16.xpose.msra.mxu0 %v1352
        %1815 = vmatpush.bf16.xpose.msra.mxu0 %v1346
        %1816 = vmatpush.bf16.xpose.msra.mxu0 %v1340
        %1817 = vmatpush.bf16.xpose.msra.mxu0 %v1334
        %1818 = vmatpush.bf16.xpose.msra.mxu0 %v1328
        %1819 = vmatpush.bf16.xpose.msra.mxu0 %v1322
        %1820 = vmatpush.bf16.xpose.msra.mxu0 %v1316
        %1821 = vmatpush.bf16.xpose.msra.mxu0 %v1310
        %1822 = vmatmul.bf16.gmra.mxu0 %v701
        %v1823 = vpop.f32.mrf.mxu0
        %v1824 = vadd.f32 %v1800, %v1823
        %v1825 = vpop.f32.mrf.mxu0
        %v1826 = vadd.f32 %v1802, %v1825
        %1827 = vmatmul.bf16.gmra.mxu0 %v707
        %v1828 = vpop.f32.mrf.mxu0
        %v1829 = vadd.f32 %v1805, %v1828
        %v1830 = vpop.f32.mrf.mxu0
        %v1831 = vadd.f32 %v1807, %v1830
        %1832 = vmatmul.bf16.gmra.mxu0 %v713
        %v1833 = vpop.f32.mrf.mxu0
        %v1834 = vadd.f32 %v1810, %v1833
        %v1835 = vpop.f32.mrf.mxu0
        %v1836 = vadd.f32 %v1812, %v1835
        %1837 = vdwg.mxu0
        %1838 = vmatpush.bf16.xpose.msra.mxu0 %v1353
        %1839 = vmatpush.bf16.xpose.msra.mxu0 %v1347
        %1840 = vmatpush.bf16.xpose.msra.mxu0 %v1341
        %1841 = vmatpush.bf16.xpose.msra.mxu0 %v1335
        %1842 = vmatpush.bf16.xpose.msra.mxu0 %v1329
        %1843 = vmatpush.bf16.xpose.msra.mxu0 %v1323
        %1844 = vmatpush.bf16.xpose.msra.mxu0 %v1317
        %1845 = vmatpush.bf16.xpose.msra.mxu0 %v1311
        %1846 = vmatmul.bf16.gmra.mxu0 %v702
        %v1847 = vpop.f32.mrf.mxu0
        %v1848 = vadd.f32 %v1824, %v1847
        %v1849 = vpop.f32.mrf.mxu0
        %v1850 = vadd.f32 %v1826, %v1849
        %1851 = vmatmul.bf16.gmra.mxu0 %v708
        %v1852 = vpop.f32.mrf.mxu0
        %v1853 = vadd.f32 %v1829, %v1852
        %v1854 = vpop.f32.mrf.mxu0
        %v1855 = vadd.f32 %v1831, %v1854
        %1856 = vmatmul.bf16.gmra.mxu0 %v714
        %v1857 = vpop.f32.mrf.mxu0
        %v1858 = vadd.f32 %v1834, %v1857
        %v1859 = vpop.f32.mrf.mxu0
        %v1860 = vadd.f32 %v1836, %v1859
        %1861 = vdwg.mxu0
        %1862 = vmatpush.bf16.xpose.msra.mxu0 %v1354
        %1863 = vmatpush.bf16.xpose.msra.mxu0 %v1348
        %1864 = vmatpush.bf16.xpose.msra.mxu0 %v1342
        %1865 = vmatpush.bf16.xpose.msra.mxu0 %v1336
        %1866 = vmatpush.bf16.xpose.msra.mxu0 %v1330
        %1867 = vmatpush.bf16.xpose.msra.mxu0 %v1324
        %1868 = vmatpush.bf16.xpose.msra.mxu0 %v1318
        %1869 = vmatpush.bf16.xpose.msra.mxu0 %v1312
        %1870 = vmatmul.bf16.gmra.mxu0 %v703
        %v1871 = vpop.f32.mrf.mxu0
        %v1872 = vadd.f32 %v1848, %v1871
        %v1873 = vpop.f32.mrf.mxu0
        %v1874 = vadd.f32 %v1850, %v1873
        %1875 = vmatmul.bf16.gmra.mxu0 %v709
        %v1876 = vpop.f32.mrf.mxu0
        %v1877 = vadd.f32 %v1853, %v1876
        %v1878 = vpop.f32.mrf.mxu0
        %v1879 = vadd.f32 %v1855, %v1878
        %1880 = vmatmul.bf16.gmra.mxu0 %v715
        %v1881 = vpop.f32.mrf.mxu0
        %v1882 = vadd.f32 %v1858, %v1881
        %v1883 = vpop.f32.mrf.mxu0
        %v1884 = vadd.f32 %v1860, %v1883
        %1885 = vdwg.mxu0
        %1886 = vmatpush.bf16.xpose.msra.mxu0 %v1692
        %1887 = vmatpush.bf16.xpose.msra.mxu0 %v1689
        %1888 = vmatpush.bf16.xpose.msra.mxu0 %v1686
        %1889 = vmatpush.bf16.xpose.msra.mxu0 %v1683
        %1890 = vmatpush.bf16.xpose.msra.mxu0 %v1680
        %1891 = vmatpush.bf16.xpose.msra.mxu0 %v1677
        %1892 = vmatpush.bf16.xpose.msra.mxu0 %v1674
        %1893 = vmatpush.bf16.xpose.msra.mxu0 %v1671
        %1894 = vmatmul.bf16.gmra.mxu0 %v1662
        %v1895 = vpop.f32.mrf.mxu0
        %v1896 = vadd.f32 %v1872, %v1895
        %v1897 = vpop.f32.mrf.mxu0
        %v1898 = vadd.f32 %v1874, %v1897
        %1899 = vmatmul.bf16.gmra.mxu0 %v1665
        %v1900 = vpop.f32.mrf.mxu0
        %v1901 = vadd.f32 %v1877, %v1900
        %v1902 = vpop.f32.mrf.mxu0
        %v1903 = vadd.f32 %v1879, %v1902
        %1904 = vmatmul.bf16.gmra.mxu0 %v1668
        %v1905 = vpop.f32.mrf.mxu0
        %v1906 = vadd.f32 %v1882, %v1905
        %v1907 = vpop.f32.mrf.mxu0
        %v1908 = vadd.f32 %v1884, %v1907
        %1909 = vdwg.mxu0
        %1910 = vmatpush.bf16.xpose.msra.mxu0 %v1398
        %1911 = vmatpush.bf16.xpose.msra.mxu0 %v1392
        %1912 = vmatpush.bf16.xpose.msra.mxu0 %v1386
        %1913 = vmatpush.bf16.xpose.msra.mxu0 %v1380
        %1914 = vmatpush.bf16.xpose.msra.mxu0 %v1374
        %1915 = vmatpush.bf16.xpose.msra.mxu0 %v1368
        %1916 = vmatpush.bf16.xpose.msra.mxu0 %v1362
        %1917 = vmatpush.bf16.xpose.msra.mxu0 %v1356
        %1918 = vmatmul.bf16.gmra.mxu0 %v699
        %v1919 = vpop.f32.mrf.mxu0
        %v1920 = vadd.f32 0.0, %v1919
        %v1921 = vpop.f32.mrf.mxu0
        %v1922 = vadd.f32 0.0, %v1921
        %1923 = vmatmul.bf16.gmra.mxu0 %v705
        %v1924 = vpop.f32.mrf.mxu0
        %v1925 = vadd.f32 0.0, %v1924
        %v1926 = vpop.f32.mrf.mxu0
        %v1927 = vadd.f32 0.0, %v1926
        %1928 = vmatmul.bf16.gmra.mxu0 %v711
        %v1929 = vpop.f32.mrf.mxu0
        %v1930 = vadd.f32 0.0, %v1929
        %v1931 = vpop.f32.mrf.mxu0
        %v1932 = vadd.f32 0.0, %v1931
        %1933 = vdwg.mxu0
        %1934 = vmatpush.bf16.xpose.msra.mxu0 %v1399
        %1935 = vmatpush.bf16.xpose.msra.mxu0 %v1393
        %1936 = vmatpush.bf16.xpose.msra.mxu0 %v1387
        %1937 = vmatpush.bf16.xpose.msra.mxu0 %v1381
        %1938 = vmatpush.bf16.xpose.msra.mxu0 %v1375
        %1939 = vmatpush.bf16.xpose.msra.mxu0 %v1369
        %1940 = vmatpush.bf16.xpose.msra.mxu0 %v1363
        %1941 = vmatpush.bf16.xpose.msra.mxu0 %v1357
        %1942 = vmatmul.bf16.gmra.mxu0 %v700
        %v1943 = vpop.f32.mrf.mxu0
        %v1944 = vadd.f32 %v1920, %v1943
        %v1945 = vpop.f32.mrf.mxu0
        %v1946 = vadd.f32 %v1922, %v1945
        %1947 = vmatmul.bf16.gmra.mxu0 %v706
        %v1948 = vpop.f32.mrf.mxu0
        %v1949 = vadd.f32 %v1925, %v1948
        %v1950 = vpop.f32.mrf.mxu0
        %v1951 = vadd.f32 %v1927, %v1950
        %1952 = vmatmul.bf16.gmra.mxu0 %v712
        %v1953 = vpop.f32.mrf.mxu0
        %v1954 = vadd.f32 %v1930, %v1953
        %v1955 = vpop.f32.mrf.mxu0
        %v1956 = vadd.f32 %v1932, %v1955
        %1957 = vdwg.mxu0
        %1958 = vmatpush.bf16.xpose.msra.mxu0 %v1400
        %1959 = vmatpush.bf16.xpose.msra.mxu0 %v1394
        %1960 = vmatpush.bf16.xpose.msra.mxu0 %v1388
        %1961 = vmatpush.bf16.xpose.msra.mxu0 %v1382
        %1962 = vmatpush.bf16.xpose.msra.mxu0 %v1376
        %1963 = vmatpush.bf16.xpose.msra.mxu0 %v1370
        %1964 = vmatpush.bf16.xpose.msra.mxu0 %v1364
        %1965 = vmatpush.bf16.xpose.msra.mxu0 %v1358
        %1966 = vmatmul.bf16.gmra.mxu0 %v701
        %v1967 = vpop.f32.mrf.mxu0
        %v1968 = vadd.f32 %v1944, %v1967
        %v1969 = vpop.f32.mrf.mxu0
        %v1970 = vadd.f32 %v1946, %v1969
        %1971 = vmatmul.bf16.gmra.mxu0 %v707
        %v1972 = vpop.f32.mrf.mxu0
        %v1973 = vadd.f32 %v1949, %v1972
        %v1974 = vpop.f32.mrf.mxu0
        %v1975 = vadd.f32 %v1951, %v1974
        %1976 = vmatmul.bf16.gmra.mxu0 %v713
        %v1977 = vpop.f32.mrf.mxu0
        %v1978 = vadd.f32 %v1954, %v1977
        %v1979 = vpop.f32.mrf.mxu0
        %v1980 = vadd.f32 %v1956, %v1979
        %1981 = vdwg.mxu0
        %1982 = vmatpush.bf16.xpose.msra.mxu0 %v1401
        %1983 = vmatpush.bf16.xpose.msra.mxu0 %v1395
        %1984 = vmatpush.bf16.xpose.msra.mxu0 %v1389
        %1985 = vmatpush.bf16.xpose.msra.mxu0 %v1383
        %1986 = vmatpush.bf16.xpose.msra.mxu0 %v1377
        %1987 = vmatpush.bf16.xpose.msra.mxu0 %v1371
        %1988 = vmatpush.bf16.xpose.msra.mxu0 %v1365
        %1989 = vmatpush.bf16.xpose.msra.mxu0 %v1359
        %1990 = vmatmul.bf16.gmra.mxu0 %v702
        %v1991 = vpop.f32.mrf.mxu0
        %v1992 = vadd.f32 %v1968, %v1991
        %v1993 = vpop.f32.mrf.mxu0
        %v1994 = vadd.f32 %v1970, %v1993
        %1995 = vmatmul.bf16.gmra.mxu0 %v708
        %v1996 = vpop.f32.mrf.mxu0
        %v1997 = vadd.f32 %v1973, %v1996
        %v1998 = vpop.f32.mrf.mxu0
        %v1999 = vadd.f32 %v1975, %v1998
        %2000 = vmatmul.bf16.gmra.mxu0 %v714
        %v2001 = vpop.f32.mrf.mxu0
        %v2002 = vadd.f32 %v1978, %v2001
        %v2003 = vpop.f32.mrf.mxu0
        %v2004 = vadd.f32 %v1980, %v2003
        %2005 = vdwg.mxu0
        %2006 = vmatpush.bf16.xpose.msra.mxu0 %v1402
        %2007 = vmatpush.bf16.xpose.msra.mxu0 %v1396
        %2008 = vmatpush.bf16.xpose.msra.mxu0 %v1390
        %2009 = vmatpush.bf16.xpose.msra.mxu0 %v1384
        %2010 = vmatpush.bf16.xpose.msra.mxu0 %v1378
        %2011 = vmatpush.bf16.xpose.msra.mxu0 %v1372
        %2012 = vmatpush.bf16.xpose.msra.mxu0 %v1366
        %2013 = vmatpush.bf16.xpose.msra.mxu0 %v1360
        %2014 = vmatmul.bf16.gmra.mxu0 %v703
        %v2015 = vpop.f32.mrf.mxu0
        %v2016 = vadd.f32 %v1992, %v2015
        %v2017 = vpop.f32.mrf.mxu0
        %v2018 = vadd.f32 %v1994, %v2017
        %2019 = vmatmul.bf16.gmra.mxu0 %v709
        %v2020 = vpop.f32.mrf.mxu0
        %v2021 = vadd.f32 %v1997, %v2020
        %v2022 = vpop.f32.mrf.mxu0
        %v2023 = vadd.f32 %v1999, %v2022
        %2024 = vmatmul.bf16.gmra.mxu0 %v715
        %v2025 = vpop.f32.mrf.mxu0
        %v2026 = vadd.f32 %v2002, %v2025
        %v2027 = vpop.f32.mrf.mxu0
        %v2028 = vadd.f32 %v2004, %v2027
        %2029 = vdwg.mxu0
        %2030 = vmatpush.bf16.xpose.msra.mxu0 %v1716
        %2031 = vmatpush.bf16.xpose.msra.mxu0 %v1713
        %2032 = vmatpush.bf16.xpose.msra.mxu0 %v1710
        %2033 = vmatpush.bf16.xpose.msra.mxu0 %v1707
        %2034 = vmatpush.bf16.xpose.msra.mxu0 %v1704
        %2035 = vmatpush.bf16.xpose.msra.mxu0 %v1701
        %2036 = vmatpush.bf16.xpose.msra.mxu0 %v1698
        %2037 = vmatpush.bf16.xpose.msra.mxu0 %v1695
        %2038 = vmatmul.bf16.gmra.mxu0 %v1662
        %v2039 = vpop.f32.mrf.mxu0
        %v2040 = vadd.f32 %v2016, %v2039
        %v2041 = vpop.f32.mrf.mxu0
        %v2042 = vadd.f32 %v2018, %v2041
        %2043 = vmatmul.bf16.gmra.mxu0 %v1665
        %v2044 = vpop.f32.mrf.mxu0
        %v2045 = vadd.f32 %v2021, %v2044
        %v2046 = vpop.f32.mrf.mxu0
        %v2047 = vadd.f32 %v2023, %v2046
        %2048 = vmatmul.bf16.gmra.mxu0 %v1668
        %v2049 = vpop.f32.mrf.mxu0
        %v2050 = vadd.f32 %v2026, %v2049
        %v2051 = vpop.f32.mrf.mxu0
        %v2052 = vadd.f32 %v2028, %v2051
        %2053 = vdwg.mxu0
        %2054 = vmatpush.bf16.xpose.msra.mxu0 %v1446
        %2055 = vmatpush.bf16.xpose.msra.mxu0 %v1440
        %2056 = vmatpush.bf16.xpose.msra.mxu0 %v1434
        %2057 = vmatpush.bf16.xpose.msra.mxu0 %v1428
        %2058 = vmatpush.bf16.xpose.msra.mxu0 %v1422
        %2059 = vmatpush.bf16.xpose.msra.mxu0 %v1416
        %2060 = vmatpush.bf16.xpose.msra.mxu0 %v1410
        %2061 = vmatpush.bf16.xpose.msra.mxu0 %v1404
        %2062 = vmatmul.bf16.gmra.mxu0 %v699
        %v2063 = vpop.f32.mrf.mxu0
        %v2064 = vadd.f32 0.0, %v2063
        %v2065 = vpop.f32.mrf.mxu0
        %v2066 = vadd.f32 0.0, %v2065
        %2067 = vmatmul.bf16.gmra.mxu0 %v705
        %v2068 = vpop.f32.mrf.mxu0
        %v2069 = vadd.f32 0.0, %v2068
        %v2070 = vpop.f32.mrf.mxu0
        %v2071 = vadd.f32 0.0, %v2070
        %2072 = vmatmul.bf16.gmra.mxu0 %v711
        %v2073 = vpop.f32.mrf.mxu0
        %v2074 = vadd.f32 0.0, %v2073
        %v2075 = vpop.f32.mrf.mxu0
        %v2076 = vadd.f32 0.0, %v2075
        %2077 = vdwg.mxu0
        %2078 = vmatpush.bf16.xpose.msra.mxu0 %v1447
        %2079 = vmatpush.bf16.xpose.msra.mxu0 %v1441
        %2080 = vmatpush.bf16.xpose.msra.mxu0 %v1435
        %2081 = vmatpush.bf16.xpose.msra.mxu0 %v1429
        %2082 = vmatpush.bf16.xpose.msra.mxu0 %v1423
        %2083 = vmatpush.bf16.xpose.msra.mxu0 %v1417
        %2084 = vmatpush.bf16.xpose.msra.mxu0 %v1411
        %2085 = vmatpush.bf16.xpose.msra.mxu0 %v1405
        %2086 = vmatmul.bf16.gmra.mxu0 %v700
        %v2087 = vpop.f32.mrf.mxu0
        %v2088 = vadd.f32 %v2064, %v2087
        %v2089 = vpop.f32.mrf.mxu0
        %v2090 = vadd.f32 %v2066, %v2089
        %2091 = vmatmul.bf16.gmra.mxu0 %v706
        %v2092 = vpop.f32.mrf.mxu0
        %v2093 = vadd.f32 %v2069, %v2092
        %v2094 = vpop.f32.mrf.mxu0
        %v2095 = vadd.f32 %v2071, %v2094
        %2096 = vmatmul.bf16.gmra.mxu0 %v712
        %v2097 = vpop.f32.mrf.mxu0
        %v2098 = vadd.f32 %v2074, %v2097
        %v2099 = vpop.f32.mrf.mxu0
        %v2100 = vadd.f32 %v2076, %v2099
        %2101 = vdwg.mxu0
        %2102 = vmatpush.bf16.xpose.msra.mxu0 %v1448
        %2103 = vmatpush.bf16.xpose.msra.mxu0 %v1442
        %2104 = vmatpush.bf16.xpose.msra.mxu0 %v1436
        %2105 = vmatpush.bf16.xpose.msra.mxu0 %v1430
        %2106 = vmatpush.bf16.xpose.msra.mxu0 %v1424
        %2107 = vmatpush.bf16.xpose.msra.mxu0 %v1418
        %2108 = vmatpush.bf16.xpose.msra.mxu0 %v1412
        %2109 = vmatpush.bf16.xpose.msra.mxu0 %v1406
        %2110 = vmatmul.bf16.gmra.mxu0 %v701
        %v2111 = vpop.f32.mrf.mxu0
        %v2112 = vadd.f32 %v2088, %v2111
        %v2113 = vpop.f32.mrf.mxu0
        %v2114 = vadd.f32 %v2090, %v2113
        %2115 = vmatmul.bf16.gmra.mxu0 %v707
        %v2116 = vpop.f32.mrf.mxu0
        %v2117 = vadd.f32 %v2093, %v2116
        %v2118 = vpop.f32.mrf.mxu0
        %v2119 = vadd.f32 %v2095, %v2118
        %2120 = vmatmul.bf16.gmra.mxu0 %v713
        %v2121 = vpop.f32.mrf.mxu0
        %v2122 = vadd.f32 %v2098, %v2121
        %v2123 = vpop.f32.mrf.mxu0
        %v2124 = vadd.f32 %v2100, %v2123
        %2125 = vdwg.mxu0
        %2126 = vmatpush.bf16.xpose.msra.mxu0 %v1449
        %2127 = vmatpush.bf16.xpose.msra.mxu0 %v1443
        %2128 = vmatpush.bf16.xpose.msra.mxu0 %v1437
        %2129 = vmatpush.bf16.xpose.msra.mxu0 %v1431
        %2130 = vmatpush.bf16.xpose.msra.mxu0 %v1425
        %2131 = vmatpush.bf16.xpose.msra.mxu0 %v1419
        %2132 = vmatpush.bf16.xpose.msra.mxu0 %v1413
        %2133 = vmatpush.bf16.xpose.msra.mxu0 %v1407
        %2134 = vmatmul.bf16.gmra.mxu0 %v702
        %v2135 = vpop.f32.mrf.mxu0
        %v2136 = vadd.f32 %v2112, %v2135
        %v2137 = vpop.f32.mrf.mxu0
        %v2138 = vadd.f32 %v2114, %v2137
        %2139 = vmatmul.bf16.gmra.mxu0 %v708
        %v2140 = vpop.f32.mrf.mxu0
        %v2141 = vadd.f32 %v2117, %v2140
        %v2142 = vpop.f32.mrf.mxu0
        %v2143 = vadd.f32 %v2119, %v2142
        %2144 = vmatmul.bf16.gmra.mxu0 %v714
        %v2145 = vpop.f32.mrf.mxu0
        %v2146 = vadd.f32 %v2122, %v2145
        %v2147 = vpop.f32.mrf.mxu0
        %v2148 = vadd.f32 %v2124, %v2147
        %2149 = vdwg.mxu0
        %2150 = vmatpush.bf16.xpose.msra.mxu0 %v1450
        %2151 = vmatpush.bf16.xpose.msra.mxu0 %v1444
        %2152 = vmatpush.bf16.xpose.msra.mxu0 %v1438
        %2153 = vmatpush.bf16.xpose.msra.mxu0 %v1432
        %2154 = vmatpush.bf16.xpose.msra.mxu0 %v1426
        %2155 = vmatpush.bf16.xpose.msra.mxu0 %v1420
        %2156 = vmatpush.bf16.xpose.msra.mxu0 %v1414
        %2157 = vmatpush.bf16.xpose.msra.mxu0 %v1408
        %2158 = vmatmul.bf16.gmra.mxu0 %v703
        %v2159 = vpop.f32.mrf.mxu0
        %v2160 = vadd.f32 %v2136, %v2159
        %v2161 = vpop.f32.mrf.mxu0
        %v2162 = vadd.f32 %v2138, %v2161
        %2163 = vmatmul.bf16.gmra.mxu0 %v709
        %v2164 = vpop.f32.mrf.mxu0
        %v2165 = vadd.f32 %v2141, %v2164
        %v2166 = vpop.f32.mrf.mxu0
        %v2167 = vadd.f32 %v2143, %v2166
        %2168 = vmatmul.bf16.gmra.mxu0 %v715
        %v2169 = vpop.f32.mrf.mxu0
        %v2170 = vadd.f32 %v2146, %v2169
        %v2171 = vpop.f32.mrf.mxu0
        %v2172 = vadd.f32 %v2148, %v2171
        %2173 = vdwg.mxu0
        %2174 = vmatpush.bf16.xpose.msra.mxu0 %v1740
        %2175 = vmatpush.bf16.xpose.msra.mxu0 %v1737
        %2176 = vmatpush.bf16.xpose.msra.mxu0 %v1734
        %2177 = vmatpush.bf16.xpose.msra.mxu0 %v1731
        %2178 = vmatpush.bf16.xpose.msra.mxu0 %v1728
        %2179 = vmatpush.bf16.xpose.msra.mxu0 %v1725
        %2180 = vmatpush.bf16.xpose.msra.mxu0 %v1722
        %2181 = vmatpush.bf16.xpose.msra.mxu0 %v1719
        %2182 = vmatmul.bf16.gmra.mxu0 %v1662
        %v2183 = vpop.f32.mrf.mxu0
        %v2184 = vadd.f32 %v2160, %v2183
        %v2185 = vpop.f32.mrf.mxu0
        %v2186 = vadd.f32 %v2162, %v2185
        %2187 = vmatmul.bf16.gmra.mxu0 %v1665
        %v2188 = vpop.f32.mrf.mxu0
        %v2189 = vadd.f32 %v2165, %v2188
        %v2190 = vpop.f32.mrf.mxu0
        %v2191 = vadd.f32 %v2167, %v2190
        %2192 = vmatmul.bf16.gmra.mxu0 %v1668
        %v2193 = vpop.f32.mrf.mxu0
        %v2194 = vadd.f32 %v2170, %v2193
        %v2195 = vpop.f32.mrf.mxu0
        %v2196 = vadd.f32 %v2172, %v2195
        %2197 = vdwg.mxu0
        %2198 = vmatpush.bf16.xpose.msra.mxu0 %v1494
        %2199 = vmatpush.bf16.xpose.msra.mxu0 %v1488
        %2200 = vmatpush.bf16.xpose.msra.mxu0 %v1482
        %2201 = vmatpush.bf16.xpose.msra.mxu0 %v1476
        %2202 = vmatpush.bf16.xpose.msra.mxu0 %v1470
        %2203 = vmatpush.bf16.xpose.msra.mxu0 %v1464
        %2204 = vmatpush.bf16.xpose.msra.mxu0 %v1458
        %2205 = vmatpush.bf16.xpose.msra.mxu0 %v1452
        %2206 = vmatmul.bf16.gmra.mxu0 %v699
        %v2207 = vpop.f32.mrf.mxu0
        %v2208 = vadd.f32 0.0, %v2207
        %v2209 = vpop.f32.mrf.mxu0
        %v2210 = vadd.f32 0.0, %v2209
        %2211 = vmatmul.bf16.gmra.mxu0 %v705
        %v2212 = vpop.f32.mrf.mxu0
        %v2213 = vadd.f32 0.0, %v2212
        %v2214 = vpop.f32.mrf.mxu0
        %v2215 = vadd.f32 0.0, %v2214
        %2216 = vmatmul.bf16.gmra.mxu0 %v711
        %v2217 = vpop.f32.mrf.mxu0
        %v2218 = vadd.f32 0.0, %v2217
        %v2219 = vpop.f32.mrf.mxu0
        %v2220 = vadd.f32 0.0, %v2219
        %2221 = vdwg.mxu0
        %2222 = vmatpush.bf16.xpose.msra.mxu0 %v1495
        %2223 = vmatpush.bf16.xpose.msra.mxu0 %v1489
        %2224 = vmatpush.bf16.xpose.msra.mxu0 %v1483
        %2225 = vmatpush.bf16.xpose.msra.mxu0 %v1477
        %2226 = vmatpush.bf16.xpose.msra.mxu0 %v1471
        %2227 = vmatpush.bf16.xpose.msra.mxu0 %v1465
        %2228 = vmatpush.bf16.xpose.msra.mxu0 %v1459
        %2229 = vmatpush.bf16.xpose.msra.mxu0 %v1453
        %2230 = vmatmul.bf16.gmra.mxu0 %v700
        %v2231 = vpop.f32.mrf.mxu0
        %v2232 = vadd.f32 %v2208, %v2231
        %v2233 = vpop.f32.mrf.mxu0
        %v2234 = vadd.f32 %v2210, %v2233
        %2235 = vmatmul.bf16.gmra.mxu0 %v706
        %v2236 = vpop.f32.mrf.mxu0
        %v2237 = vadd.f32 %v2213, %v2236
        %v2238 = vpop.f32.mrf.mxu0
        %v2239 = vadd.f32 %v2215, %v2238
        %2240 = vmatmul.bf16.gmra.mxu0 %v712
        %v2241 = vpop.f32.mrf.mxu0
        %v2242 = vadd.f32 %v2218, %v2241
        %v2243 = vpop.f32.mrf.mxu0
        %v2244 = vadd.f32 %v2220, %v2243
        %2245 = vdwg.mxu0
        %2246 = vmatpush.bf16.xpose.msra.mxu0 %v1496
        %2247 = vmatpush.bf16.xpose.msra.mxu0 %v1490
        %2248 = vmatpush.bf16.xpose.msra.mxu0 %v1484
        %2249 = vmatpush.bf16.xpose.msra.mxu0 %v1478
        %2250 = vmatpush.bf16.xpose.msra.mxu0 %v1472
        %2251 = vmatpush.bf16.xpose.msra.mxu0 %v1466
        %2252 = vmatpush.bf16.xpose.msra.mxu0 %v1460
        %2253 = vmatpush.bf16.xpose.msra.mxu0 %v1454
        %2254 = vmatmul.bf16.gmra.mxu0 %v701
        %v2255 = vpop.f32.mrf.mxu0
        %v2256 = vadd.f32 %v2232, %v2255
        %v2257 = vpop.f32.mrf.mxu0
        %v2258 = vadd.f32 %v2234, %v2257
        %2259 = vmatmul.bf16.gmra.mxu0 %v707
        %v2260 = vpop.f32.mrf.mxu0
        %v2261 = vadd.f32 %v2237, %v2260
        %v2262 = vpop.f32.mrf.mxu0
        %v2263 = vadd.f32 %v2239, %v2262
        %2264 = vmatmul.bf16.gmra.mxu0 %v713
        %v2265 = vpop.f32.mrf.mxu0
        %v2266 = vadd.f32 %v2242, %v2265
        %v2267 = vpop.f32.mrf.mxu0
        %v2268 = vadd.f32 %v2244, %v2267
        %2269 = vdwg.mxu0
        %2270 = vmatpush.bf16.xpose.msra.mxu0 %v1497
        %2271 = vmatpush.bf16.xpose.msra.mxu0 %v1491
        %2272 = vmatpush.bf16.xpose.msra.mxu0 %v1485
        %2273 = vmatpush.bf16.xpose.msra.mxu0 %v1479
        %2274 = vmatpush.bf16.xpose.msra.mxu0 %v1473
        %2275 = vmatpush.bf16.xpose.msra.mxu0 %v1467
        %2276 = vmatpush.bf16.xpose.msra.mxu0 %v1461
        %2277 = vmatpush.bf16.xpose.msra.mxu0 %v1455
        %2278 = vmatmul.bf16.gmra.mxu0 %v702
        %v2279 = vpop.f32.mrf.mxu0
        %v2280 = vadd.f32 %v2256, %v2279
        %v2281 = vpop.f32.mrf.mxu0
        %v2282 = vadd.f32 %v2258, %v2281
        %2283 = vmatmul.bf16.gmra.mxu0 %v708
        %v2284 = vpop.f32.mrf.mxu0
        %v2285 = vadd.f32 %v2261, %v2284
        %v2286 = vpop.f32.mrf.mxu0
        %v2287 = vadd.f32 %v2263, %v2286
        %2288 = vmatmul.bf16.gmra.mxu0 %v714
        %v2289 = vpop.f32.mrf.mxu0
        %v2290 = vadd.f32 %v2266, %v2289
        %v2291 = vpop.f32.mrf.mxu0
        %v2292 = vadd.f32 %v2268, %v2291
        %2293 = vdwg.mxu0
        %2294 = vmatpush.bf16.xpose.msra.mxu0 %v1498
        %2295 = vmatpush.bf16.xpose.msra.mxu0 %v1492
        %2296 = vmatpush.bf16.xpose.msra.mxu0 %v1486
        %2297 = vmatpush.bf16.xpose.msra.mxu0 %v1480
        %2298 = vmatpush.bf16.xpose.msra.mxu0 %v1474
        %2299 = vmatpush.bf16.xpose.msra.mxu0 %v1468
        %2300 = vmatpush.bf16.xpose.msra.mxu0 %v1462
        %2301 = vmatpush.bf16.xpose.msra.mxu0 %v1456
        %2302 = vmatmul.bf16.gmra.mxu0 %v703
        %v2303 = vpop.f32.mrf.mxu0
        %v2304 = vadd.f32 %v2280, %v2303
        %v2305 = vpop.f32.mrf.mxu0
        %v2306 = vadd.f32 %v2282, %v2305
        %2307 = vmatmul.bf16.gmra.mxu0 %v709
        %v2308 = vpop.f32.mrf.mxu0
        %v2309 = vadd.f32 %v2285, %v2308
        %v2310 = vpop.f32.mrf.mxu0
        %v2311 = vadd.f32 %v2287, %v2310
        %2312 = vmatmul.bf16.gmra.mxu0 %v715
        %v2313 = vpop.f32.mrf.mxu0
        %v2314 = vadd.f32 %v2290, %v2313
        %v2315 = vpop.f32.mrf.mxu0
        %v2316 = vadd.f32 %v2292, %v2315
        %2317 = vdwg.mxu0
        %2318 = vmatpush.bf16.xpose.msra.mxu0 %v1764
        %2319 = vmatpush.bf16.xpose.msra.mxu0 %v1761
        %2320 = vmatpush.bf16.xpose.msra.mxu0 %v1758
        %2321 = vmatpush.bf16.xpose.msra.mxu0 %v1755
        %2322 = vmatpush.bf16.xpose.msra.mxu0 %v1752
        %2323 = vmatpush.bf16.xpose.msra.mxu0 %v1749
        %2324 = vmatpush.bf16.xpose.msra.mxu0 %v1746
        %2325 = vmatpush.bf16.xpose.msra.mxu0 %v1743
        %2326 = vmatmul.bf16.gmra.mxu0 %v1662
        %v2327 = vpop.f32.mrf.mxu0
        %v2328 = vadd.f32 %v2304, %v2327
        %v2329 = vpop.f32.mrf.mxu0
        %v2330 = vadd.f32 %v2306, %v2329
        %2331 = vmatmul.bf16.gmra.mxu0 %v1665
        %v2332 = vpop.f32.mrf.mxu0
        %v2333 = vadd.f32 %v2309, %v2332
        %v2334 = vpop.f32.mrf.mxu0
        %v2335 = vadd.f32 %v2311, %v2334
        %2336 = vmatmul.bf16.gmra.mxu0 %v1668
        %v2337 = vpop.f32.mrf.mxu0
        %v2338 = vadd.f32 %v2314, %v2337
        %v2339 = vpop.f32.mrf.mxu0
        %v2340 = vadd.f32 %v2316, %v2339
        %2341 = vdwg.mxu0
        %v2360 = vunpack.c.l.b16 %v412
        %v2361 = vunpack.c.h.b16 %v412
        %v2362 = vunpack.c.l.b16 %v413
        %v2363 = vunpack.c.h.b16 %v413
        %v2364 = vunpack.c.l.b16 %v414
        %v2365 = vunpack.c.h.b16 %v414
        %v2366 = vunpack.c.l.b16 %v415
        %v2367 = vunpack.c.h.b16 %v415
        %v2368 = vunpack.c.l.b16 %v416
        %v2369 = vunpack.c.h.b16 %v416
        %v2370 = vunpack.c.l.b16 %v417
        %v2371 = vunpack.c.h.b16 %v417
        %v2372 = vunpack.c.l.b16 %v418
        %v2373 = vunpack.c.h.b16 %v418
        %v2374 = vunpack.c.l.b16 %v419
        %v2375 = vunpack.c.h.b16 %v419
        %v2376 = vunpack.c.l.b16 %v420
        %v2377 = vunpack.c.h.b16 %v420
        %v2378 = vunpack.c.l.b16 %v421
        %v2379 = vunpack.c.h.b16 %v421
        %v2380 = vunpack.c.l.b16 %v422
        %v2381 = vunpack.c.h.b16 %v422
        %v2382 = vunpack.c.l.b16 %v423
        %v2383 = vunpack.c.h.b16 %v423
        %v2384 = vunpack.c.l.b16 %v424
        %v2385 = vunpack.c.h.b16 %v424
        %v2386 = vunpack.c.l.b16 %v425
        %v2387 = vunpack.c.h.b16 %v425
        %v2388 = vunpack.c.l.b16 %v426
        %v2389 = vunpack.c.h.b16 %v426
        %v2390 = vunpack.c.l.b16 %v427
        %v2391 = vunpack.c.h.b16 %v427
        %v2392 = vunpack.c.l.b16 %v428
        %v2393 = vunpack.c.h.b16 %v428
        %v2394 = vunpack.c.l.b16 %v429
        %v2395 = vunpack.c.h.b16 %v429
        %v2396 = vpack.c.b16 %v2366, %v2360
        %v2397 = vpack.c.b16 %v2367, %v2361
        %v2398 = vpack.c.b16 %v2368, %v2362
        %v2399 = vpack.c.b16 %v2369, %v2363
        %v2400 = vpack.c.b16 %v2370, %v2364
        %v2401 = vpack.c.b16 %v2371, %v2365
        %v2402 = vpack.c.b16 %v2378, %v2372
        %v2403 = vpack.c.b16 %v2379, %v2373
        %v2404 = vpack.c.b16 %v2380, %v2374
        %v2405 = vpack.c.b16 %v2381, %v2375
        %v2406 = vpack.c.b16 %v2382, %v2376
        %v2407 = vpack.c.b16 %v2383, %v2377
        %v2408 = vpack.c.b16 %v2390, %v2384
        %v2409 = vpack.c.b16 %v2391, %v2385
        %v2410 = vpack.c.b16 %v2392, %v2386
        %v2411 = vpack.c.b16 %v2393, %v2387
        %v2412 = vpack.c.b16 %v2394, %v2388
        %v2413 = vpack.c.b16 %v2395, %v2389
        %v2621 = vunpack.c.l.b16 %v220
        %v2622 = vunpack.c.h.b16 %v220
        %v2623 = vunpack.c.l.b16 %v221
        %v2624 = vunpack.c.h.b16 %v221
        %v2625 = vunpack.c.l.b16 %v222
        %v2626 = vunpack.c.h.b16 %v222
        %v2627 = vunpack.c.l.b16 %v223
        %v2628 = vunpack.c.h.b16 %v223
        %v2629 = vunpack.c.l.b16 %v224
        %v2630 = vunpack.c.h.b16 %v224
        %v2631 = vunpack.c.l.b16 %v225
        %v2632 = vunpack.c.h.b16 %v225
        %v2633 = vunpack.c.l.b16 %v226
        %v2634 = vunpack.c.h.b16 %v226
        %v2635 = vunpack.c.l.b16 %v227
        %v2636 = vunpack.c.h.b16 %v227
        %v2637 = vunpack.c.l.b16 %v228
        %v2638 = vunpack.c.h.b16 %v228
        %v2639 = vunpack.c.l.b16 %v229
        %v2640 = vunpack.c.h.b16 %v229
        %v2641 = vunpack.c.l.b16 %v230
        %v2642 = vunpack.c.h.b16 %v230
        %v2643 = vunpack.c.l.b16 %v231
        %v2644 = vunpack.c.h.b16 %v231
        %v2645 = vunpack.c.l.b16 %v232
        %v2646 = vunpack.c.h.b16 %v232
        %v2647 = vunpack.c.l.b16 %v233
        %v2648 = vunpack.c.h.b16 %v233
        %v2649 = vunpack.c.l.b16 %v234
        %v2650 = vunpack.c.h.b16 %v234
        %v2651 = vunpack.c.l.b16 %v235
        %v2652 = vunpack.c.h.b16 %v235
        %v2653 = vunpack.c.l.b16 %v236
        %v2654 = vunpack.c.h.b16 %v236
        %v2655 = vunpack.c.l.b16 %v237
        %v2656 = vunpack.c.h.b16 %v237
        %v2657 = vunpack.c.l.b16 %v238
        %v2658 = vunpack.c.h.b16 %v238
        %v2659 = vunpack.c.l.b16 %v239
        %v2660 = vunpack.c.h.b16 %v239
        %v2661 = vunpack.c.l.b16 %v240
        %v2662 = vunpack.c.h.b16 %v240
        %v2663 = vunpack.c.l.b16 %v241
        %v2664 = vunpack.c.h.b16 %v241
        %v2665 = vunpack.c.l.b16 %v242
        %v2666 = vunpack.c.h.b16 %v242
        %v2667 = vunpack.c.l.b16 %v243
        %v2668 = vunpack.c.h.b16 %v243
        %v2669 = vunpack.c.l.b16 %v244
        %v2670 = vunpack.c.h.b16 %v244
        %v2671 = vunpack.c.l.b16 %v245
        %v2672 = vunpack.c.h.b16 %v245
        %v2673 = vunpack.c.l.b16 %v246
        %v2674 = vunpack.c.h.b16 %v246
        %v2675 = vunpack.c.l.b16 %v247
        %v2676 = vunpack.c.h.b16 %v247
        %v2677 = vunpack.c.l.b16 %v248
        %v2678 = vunpack.c.h.b16 %v248
        %v2679 = vunpack.c.l.b16 %v249
        %v2680 = vunpack.c.h.b16 %v249
        %v2681 = vunpack.c.l.b16 %v250
        %v2682 = vunpack.c.h.b16 %v250
        %v2683 = vunpack.c.l.b16 %v251
        %v2684 = vunpack.c.h.b16 %v251
        %v2685 = vunpack.c.l.b16 %v252
        %v2686 = vunpack.c.h.b16 %v252
        %v2687 = vunpack.c.l.b16 %v253
        %v2688 = vunpack.c.h.b16 %v253
        %v2689 = vunpack.c.l.b16 %v254
        %v2690 = vunpack.c.h.b16 %v254
        %v2691 = vunpack.c.l.b16 %v255
        %v2692 = vunpack.c.h.b16 %v255
        %v2693 = vunpack.c.l.b16 %v256
        %v2694 = vunpack.c.h.b16 %v256
        %v2695 = vunpack.c.l.b16 %v257
        %v2696 = vunpack.c.h.b16 %v257
        %v2697 = vunpack.c.l.b16 %v258
        %v2698 = vunpack.c.h.b16 %v258
        %v2699 = vunpack.c.l.b16 %v259
        %v2700 = vunpack.c.h.b16 %v259
        %v2701 = vunpack.c.l.b16 %v260
        %v2702 = vunpack.c.h.b16 %v260
        %v2703 = vunpack.c.l.b16 %v261
        %v2704 = vunpack.c.h.b16 %v261
        %v2705 = vunpack.c.l.b16 %v262
        %v2706 = vunpack.c.h.b16 %v262
        %v2707 = vunpack.c.l.b16 %v263
        %v2708 = vunpack.c.h.b16 %v263
        %v2709 = vunpack.c.l.b16 %v264
        %v2710 = vunpack.c.h.b16 %v264
        %v2711 = vunpack.c.l.b16 %v265
        %v2712 = vunpack.c.h.b16 %v265
        %v2713 = vunpack.c.l.b16 %v266
        %v2714 = vunpack.c.h.b16 %v266
        %v2715 = vunpack.c.l.b16 %v267
        %v2716 = vunpack.c.h.b16 %v267
        %v2717 = vunpack.c.l.b16 %v268
        %v2718 = vunpack.c.h.b16 %v268
        %v2719 = vunpack.c.l.b16 %v269
        %v2720 = vunpack.c.h.b16 %v269
        %v2721 = vunpack.c.l.b16 %v270
        %v2722 = vunpack.c.h.b16 %v270
        %v2723 = vunpack.c.l.b16 %v271
        %v2724 = vunpack.c.h.b16 %v271
        %v2725 = vunpack.c.l.b16 %v272
        %v2726 = vunpack.c.h.b16 %v272
        %v2727 = vunpack.c.l.b16 %v273
        %v2728 = vunpack.c.h.b16 %v273
        %v2729 = vunpack.c.l.b16 %v274
        %v2730 = vunpack.c.h.b16 %v274
        %v2731 = vunpack.c.l.b16 %v275
        %v2732 = vunpack.c.h.b16 %v275
        %v2733 = vunpack.c.l.b16 %v276
        %v2734 = vunpack.c.h.b16 %v276
        %v2735 = vunpack.c.l.b16 %v277
        %v2736 = vunpack.c.h.b16 %v277
        %v2737 = vunpack.c.l.b16 %v278
        %v2738 = vunpack.c.h.b16 %v278
        %v2739 = vunpack.c.l.b16 %v279
        %v2740 = vunpack.c.h.b16 %v279
        %v2741 = vunpack.c.l.b16 %v280
        %v2742 = vunpack.c.h.b16 %v280
        %v2743 = vunpack.c.l.b16 %v281
        %v2744 = vunpack.c.h.b16 %v281
        %v2745 = vunpack.c.l.b16 %v282
        %v2746 = vunpack.c.h.b16 %v282
        %v2747 = vunpack.c.l.b16 %v283
        %v2748 = vunpack.c.h.b16 %v283
        %v2749 = vunpack.c.l.b16 %v284
        %v2750 = vunpack.c.h.b16 %v284
        %v2751 = vunpack.c.l.b16 %v285
        %v2752 = vunpack.c.h.b16 %v285
        %v2753 = vunpack.c.l.b16 %v286
        %v2754 = vunpack.c.h.b16 %v286
        %v2755 = vunpack.c.l.b16 %v287
        %v2756 = vunpack.c.h.b16 %v287
        %v2757 = vunpack.c.l.b16 %v288
        %v2758 = vunpack.c.h.b16 %v288
        %v2759 = vunpack.c.l.b16 %v289
        %v2760 = vunpack.c.h.b16 %v289
        %v2761 = vunpack.c.l.b16 %v290
        %v2762 = vunpack.c.h.b16 %v290
        %v2763 = vunpack.c.l.b16 %v291
        %v2764 = vunpack.c.h.b16 %v291
        %v2765 = vunpack.c.l.b16 %v292
        %v2766 = vunpack.c.h.b16 %v292
        %v2767 = vunpack.c.l.b16 %v293
        %v2768 = vunpack.c.h.b16 %v293
        %v2769 = vunpack.c.l.b16 %v294
        %v2770 = vunpack.c.h.b16 %v294
        %v2771 = vunpack.c.l.b16 %v295
        %v2772 = vunpack.c.h.b16 %v295
        %v2773 = vunpack.c.l.b16 %v296
        %v2774 = vunpack.c.h.b16 %v296
        %v2775 = vunpack.c.l.b16 %v297
        %v2776 = vunpack.c.h.b16 %v297
        %v2777 = vunpack.c.l.b16 %v298
        %v2778 = vunpack.c.h.b16 %v298
        %v2779 = vunpack.c.l.b16 %v299
        %v2780 = vunpack.c.h.b16 %v299
        %v2781 = vunpack.c.l.b16 %v300
        %v2782 = vunpack.c.h.b16 %v300
        %v2783 = vunpack.c.l.b16 %v301
        %v2784 = vunpack.c.h.b16 %v301
        %v2785 = vunpack.c.l.b16 %v302
        %v2786 = vunpack.c.h.b16 %v302
        %v2787 = vunpack.c.l.b16 %v303
        %v2788 = vunpack.c.h.b16 %v303
        %v2789 = vunpack.c.l.b16 %v304
        %v2790 = vunpack.c.h.b16 %v304
        %v2791 = vunpack.c.l.b16 %v305
        %v2792 = vunpack.c.h.b16 %v305
        %v2793 = vunpack.c.l.b16 %v306
        %v2794 = vunpack.c.h.b16 %v306
        %v2795 = vunpack.c.l.b16 %v307
        %v2796 = vunpack.c.h.b16 %v307
        %v2797 = vunpack.c.l.b16 %v308
        %v2798 = vunpack.c.h.b16 %v308
        %v2799 = vunpack.c.l.b16 %v309
        %v2800 = vunpack.c.h.b16 %v309
        %v2801 = vunpack.c.l.b16 %v310
        %v2802 = vunpack.c.h.b16 %v310
        %v2803 = vunpack.c.l.b16 %v311
        %v2804 = vunpack.c.h.b16 %v311
        %v2805 = vunpack.c.l.b16 %v312
        %v2806 = vunpack.c.h.b16 %v312
        %v2807 = vunpack.c.l.b16 %v313
        %v2808 = vunpack.c.h.b16 %v313
        %v2809 = vunpack.c.l.b16 %v314
        %v2810 = vunpack.c.h.b16 %v314
        %v2811 = vunpack.c.l.b16 %v315
        %v2812 = vunpack.c.h.b16 %v315
        %v2813 = vunpack.c.l.b16 %v316
        %v2814 = vunpack.c.h.b16 %v316
        %v2815 = vunpack.c.l.b16 %v317
        %v2816 = vunpack.c.h.b16 %v317
        %v2817 = vunpack.c.l.b16 %v318
        %v2818 = vunpack.c.h.b16 %v318
        %v2819 = vunpack.c.l.b16 %v319
        %v2820 = vunpack.c.h.b16 %v319
        %v2821 = vunpack.c.l.b16 %v320
        %v2822 = vunpack.c.h.b16 %v320
        %v2823 = vunpack.c.l.b16 %v321
        %v2824 = vunpack.c.h.b16 %v321
        %v2825 = vunpack.c.l.b16 %v322
        %v2826 = vunpack.c.h.b16 %v322
        %v2827 = vunpack.c.l.b16 %v323
        %v2828 = vunpack.c.h.b16 %v323
        %v2829 = vunpack.c.l.b16 %v324
        %v2830 = vunpack.c.h.b16 %v324
        %v2831 = vunpack.c.l.b16 %v325
        %v2832 = vunpack.c.h.b16 %v325
        %v2833 = vunpack.c.l.b16 %v326
        %v2834 = vunpack.c.h.b16 %v326
        %v2835 = vunpack.c.l.b16 %v327
        %v2836 = vunpack.c.h.b16 %v327
        %v2837 = vunpack.c.l.b16 %v328
        %v2838 = vunpack.c.h.b16 %v328
        %v2839 = vunpack.c.l.b16 %v329
        %v2840 = vunpack.c.h.b16 %v329
        %v2841 = vunpack.c.l.b16 %v330
        %v2842 = vunpack.c.h.b16 %v330
        %v2843 = vunpack.c.l.b16 %v331
        %v2844 = vunpack.c.h.b16 %v331
        %v2845 = vunpack.c.l.b16 %v332
        %v2846 = vunpack.c.h.b16 %v332
        %v2847 = vunpack.c.l.b16 %v333
        %v2848 = vunpack.c.h.b16 %v333
        %v2849 = vunpack.c.l.b16 %v334
        %v2850 = vunpack.c.h.b16 %v334
        %v2851 = vunpack.c.l.b16 %v335
        %v2852 = vunpack.c.h.b16 %v335
        %v2853 = vunpack.c.l.b16 %v336
        %v2854 = vunpack.c.h.b16 %v336
        %v2855 = vunpack.c.l.b16 %v337
        %v2856 = vunpack.c.h.b16 %v337
        %v2857 = vunpack.c.l.b16 %v338
        %v2858 = vunpack.c.h.b16 %v338
        %v2859 = vunpack.c.l.b16 %v339
        %v2860 = vunpack.c.h.b16 %v339
        %v2861 = vunpack.c.l.b16 %v340
        %v2862 = vunpack.c.h.b16 %v340
        %v2863 = vunpack.c.l.b16 %v341
        %v2864 = vunpack.c.h.b16 %v341
        %v2865 = vunpack.c.l.b16 %v342
        %v2866 = vunpack.c.h.b16 %v342
        %v2867 = vunpack.c.l.b16 %v343
        %v2868 = vunpack.c.h.b16 %v343
        %v2869 = vunpack.c.l.b16 %v344
        %v2870 = vunpack.c.h.b16 %v344
        %v2871 = vunpack.c.l.b16 %v345
        %v2872 = vunpack.c.h.b16 %v345
        %v2873 = vunpack.c.l.b16 %v346
        %v2874 = vunpack.c.h.b16 %v346
        %v2875 = vunpack.c.l.b16 %v347
        %v2876 = vunpack.c.h.b16 %v347
        %v2877 = vunpack.c.l.b16 %v348
        %v2878 = vunpack.c.h.b16 %v348
        %v2879 = vunpack.c.l.b16 %v349
        %v2880 = vunpack.c.h.b16 %v349
        %v2881 = vunpack.c.l.b16 %v350
        %v2882 = vunpack.c.h.b16 %v350
        %v2883 = vunpack.c.l.b16 %v351
        %v2884 = vunpack.c.h.b16 %v351
        %v2885 = vunpack.c.l.b16 %v352
        %v2886 = vunpack.c.h.b16 %v352
        %v2887 = vunpack.c.l.b16 %v353
        %v2888 = vunpack.c.h.b16 %v353
        %v2889 = vunpack.c.l.b16 %v354
        %v2890 = vunpack.c.h.b16 %v354
        %v2891 = vunpack.c.l.b16 %v355
        %v2892 = vunpack.c.h.b16 %v355
        %v2893 = vunpack.c.l.b16 %v356
        %v2894 = vunpack.c.h.b16 %v356
        %v2895 = vunpack.c.l.b16 %v357
        %v2896 = vunpack.c.h.b16 %v357
        %v2897 = vunpack.c.l.b16 %v358
        %v2898 = vunpack.c.h.b16 %v358
        %v2899 = vunpack.c.l.b16 %v359
        %v2900 = vunpack.c.h.b16 %v359
        %v2901 = vunpack.c.l.b16 %v360
        %v2902 = vunpack.c.h.b16 %v360
        %v2903 = vunpack.c.l.b16 %v361
        %v2904 = vunpack.c.h.b16 %v361
        %v2905 = vunpack.c.l.b16 %v362
        %v2906 = vunpack.c.h.b16 %v362
        %v2907 = vunpack.c.l.b16 %v363
        %v2908 = vunpack.c.h.b16 %v363
        %v2909 = vunpack.c.l.b16 %v364
        %v2910 = vunpack.c.h.b16 %v364
        %v2911 = vunpack.c.l.b16 %v365
        %v2912 = vunpack.c.h.b16 %v365
        %v2913 = vunpack.c.l.b16 %v366
        %v2914 = vunpack.c.h.b16 %v366
        %v2915 = vunpack.c.l.b16 %v367
        %v2916 = vunpack.c.h.b16 %v367
        %v2917 = vunpack.c.l.b16 %v368
        %v2918 = vunpack.c.h.b16 %v368
        %v2919 = vunpack.c.l.b16 %v369
        %v2920 = vunpack.c.h.b16 %v369
        %v2921 = vunpack.c.l.b16 %v370
        %v2922 = vunpack.c.h.b16 %v370
        %v2923 = vunpack.c.l.b16 %v371
        %v2924 = vunpack.c.h.b16 %v371
        %v2925 = vunpack.c.l.b16 %v372
        %v2926 = vunpack.c.h.b16 %v372
        %v2927 = vunpack.c.l.b16 %v373
        %v2928 = vunpack.c.h.b16 %v373
        %v2929 = vunpack.c.l.b16 %v374
        %v2930 = vunpack.c.h.b16 %v374
        %v2931 = vunpack.c.l.b16 %v375
        %v2932 = vunpack.c.h.b16 %v375
        %v2933 = vunpack.c.l.b16 %v376
        %v2934 = vunpack.c.h.b16 %v376
        %v2935 = vunpack.c.l.b16 %v377
        %v2936 = vunpack.c.h.b16 %v377
        %v2937 = vunpack.c.l.b16 %v378
        %v2938 = vunpack.c.h.b16 %v378
        %v2939 = vunpack.c.l.b16 %v379
        %v2940 = vunpack.c.h.b16 %v379
        %v2941 = vunpack.c.l.b16 %v380
        %v2942 = vunpack.c.h.b16 %v380
        %v2943 = vunpack.c.l.b16 %v381
        %v2944 = vunpack.c.h.b16 %v381
        %v2945 = vunpack.c.l.b16 %v382
        %v2946 = vunpack.c.h.b16 %v382
        %v2947 = vunpack.c.l.b16 %v383
        %v2948 = vunpack.c.h.b16 %v383
        %v2949 = vunpack.c.l.b16 %v384
        %v2950 = vunpack.c.h.b16 %v384
        %v2951 = vunpack.c.l.b16 %v385
        %v2952 = vunpack.c.h.b16 %v385
        %v2953 = vunpack.c.l.b16 %v386
        %v2954 = vunpack.c.h.b16 %v386
        %v2955 = vunpack.c.l.b16 %v387
        %v2956 = vunpack.c.h.b16 %v387
        %v2957 = vunpack.c.l.b16 %v388
        %v2958 = vunpack.c.h.b16 %v388
        %v2959 = vunpack.c.l.b16 %v389
        %v2960 = vunpack.c.h.b16 %v389
        %v2961 = vunpack.c.l.b16 %v390
        %v2962 = vunpack.c.h.b16 %v390
        %v2963 = vunpack.c.l.b16 %v391
        %v2964 = vunpack.c.h.b16 %v391
        %v2965 = vunpack.c.l.b16 %v392
        %v2966 = vunpack.c.h.b16 %v392
        %v2967 = vunpack.c.l.b16 %v393
        %v2968 = vunpack.c.h.b16 %v393
        %v2969 = vunpack.c.l.b16 %v394
        %v2970 = vunpack.c.h.b16 %v394
        %v2971 = vunpack.c.l.b16 %v395
        %v2972 = vunpack.c.h.b16 %v395
        %v2973 = vunpack.c.l.b16 %v396
        %v2974 = vunpack.c.h.b16 %v396
        %v2975 = vunpack.c.l.b16 %v397
        %v2976 = vunpack.c.h.b16 %v397
        %v2977 = vunpack.c.l.b16 %v398
        %v2978 = vunpack.c.h.b16 %v398
        %v2979 = vunpack.c.l.b16 %v399
        %v2980 = vunpack.c.h.b16 %v399
        %v2981 = vunpack.c.l.b16 %v400
        %v2982 = vunpack.c.h.b16 %v400
        %v2983 = vunpack.c.l.b16 %v401
        %v2984 = vunpack.c.h.b16 %v401
        %v2985 = vunpack.c.l.b16 %v402
        %v2986 = vunpack.c.h.b16 %v402
        %v2987 = vunpack.c.l.b16 %v403
        %v2988 = vunpack.c.h.b16 %v403
        %v2989 = vunpack.c.l.b16 %v404
        %v2990 = vunpack.c.h.b16 %v404
        %v2991 = vunpack.c.l.b16 %v405
        %v2992 = vunpack.c.h.b16 %v405
        %v2993 = vunpack.c.l.b16 %v406
        %v2994 = vunpack.c.h.b16 %v406
        %v2995 = vunpack.c.l.b16 %v407
        %v2996 = vunpack.c.h.b16 %v407
        %v2997 = vunpack.c.l.b16 %v408
        %v2998 = vunpack.c.h.b16 %v408
        %v2999 = vunpack.c.l.b16 %v409
        %v3000 = vunpack.c.h.b16 %v409
        %v3001 = vunpack.c.l.b16 %v410
        %v3002 = vunpack.c.h.b16 %v410
        %v3003 = vunpack.c.l.b16 %v411
        %v3004 = vunpack.c.h.b16 %v411
        %v3005 = vpack.c.b16 %v2627, %v2621
        %v3006 = vpack.c.b16 %v2628, %v2622
        %v3007 = vpack.c.b16 %v2629, %v2623
        %v3008 = vpack.c.b16 %v2630, %v2624
        %v3009 = vpack.c.b16 %v2631, %v2625
        %v3010 = vpack.c.b16 %v2632, %v2626
        %v3011 = vpack.c.b16 %v2639, %v2633
        %v3012 = vpack.c.b16 %v2640, %v2634
        %v3013 = vpack.c.b16 %v2641, %v2635
        %v3014 = vpack.c.b16 %v2642, %v2636
        %v3015 = vpack.c.b16 %v2643, %v2637
        %v3016 = vpack.c.b16 %v2644, %v2638
        %v3017 = vpack.c.b16 %v2651, %v2645
        %v3018 = vpack.c.b16 %v2652, %v2646
        %v3019 = vpack.c.b16 %v2653, %v2647
        %v3020 = vpack.c.b16 %v2654, %v2648
        %v3021 = vpack.c.b16 %v2655, %v2649
        %v3022 = vpack.c.b16 %v2656, %v2650
        %v3023 = vpack.c.b16 %v2663, %v2657
        %v3024 = vpack.c.b16 %v2664, %v2658
        %v3025 = vpack.c.b16 %v2665, %v2659
        %v3026 = vpack.c.b16 %v2666, %v2660
        %v3027 = vpack.c.b16 %v2667, %v2661
        %v3028 = vpack.c.b16 %v2668, %v2662
        %v3029 = vpack.c.b16 %v2675, %v2669
        %v3030 = vpack.c.b16 %v2676, %v2670
        %v3031 = vpack.c.b16 %v2677, %v2671
        %v3032 = vpack.c.b16 %v2678, %v2672
        %v3033 = vpack.c.b16 %v2679, %v2673
        %v3034 = vpack.c.b16 %v2680, %v2674
        %v3035 = vpack.c.b16 %v2687, %v2681
        %v3036 = vpack.c.b16 %v2688, %v2682
        %v3037 = vpack.c.b16 %v2689, %v2683
        %v3038 = vpack.c.b16 %v2690, %v2684
        %v3039 = vpack.c.b16 %v2691, %v2685
        %v3040 = vpack.c.b16 %v2692, %v2686
        %v3041 = vpack.c.b16 %v2699, %v2693
        %v3042 = vpack.c.b16 %v2700, %v2694
        %v3043 = vpack.c.b16 %v2701, %v2695
        %v3044 = vpack.c.b16 %v2702, %v2696
        %v3045 = vpack.c.b16 %v2703, %v2697
        %v3046 = vpack.c.b16 %v2704, %v2698
        %v3047 = vpack.c.b16 %v2711, %v2705
        %v3048 = vpack.c.b16 %v2712, %v2706
        %v3049 = vpack.c.b16 %v2713, %v2707
        %v3050 = vpack.c.b16 %v2714, %v2708
        %v3051 = vpack.c.b16 %v2715, %v2709
        %v3052 = vpack.c.b16 %v2716, %v2710
        %v3053 = vpack.c.b16 %v2723, %v2717
        %v3054 = vpack.c.b16 %v2724, %v2718
        %v3055 = vpack.c.b16 %v2725, %v2719
        %v3056 = vpack.c.b16 %v2726, %v2720
        %v3057 = vpack.c.b16 %v2727, %v2721
        %v3058 = vpack.c.b16 %v2728, %v2722
        %v3059 = vpack.c.b16 %v2735, %v2729
        %v3060 = vpack.c.b16 %v2736, %v2730
        %v3061 = vpack.c.b16 %v2737, %v2731
        %v3062 = vpack.c.b16 %v2738, %v2732
        %v3063 = vpack.c.b16 %v2739, %v2733
        %v3064 = vpack.c.b16 %v2740, %v2734
        %v3065 = vpack.c.b16 %v2747, %v2741
        %v3066 = vpack.c.b16 %v2748, %v2742
        %v3067 = vpack.c.b16 %v2749, %v2743
        %v3068 = vpack.c.b16 %v2750, %v2744
        %v3069 = vpack.c.b16 %v2751, %v2745
        %v3070 = vpack.c.b16 %v2752, %v2746
        %v3071 = vpack.c.b16 %v2759, %v2753
        %v3072 = vpack.c.b16 %v2760, %v2754
        %v3073 = vpack.c.b16 %v2761, %v2755
        %v3074 = vpack.c.b16 %v2762, %v2756
        %v3075 = vpack.c.b16 %v2763, %v2757
        %v3076 = vpack.c.b16 %v2764, %v2758
        %v3077 = vpack.c.b16 %v2771, %v2765
        %v3078 = vpack.c.b16 %v2772, %v2766
        %v3079 = vpack.c.b16 %v2773, %v2767
        %v3080 = vpack.c.b16 %v2774, %v2768
        %v3081 = vpack.c.b16 %v2775, %v2769
        %v3082 = vpack.c.b16 %v2776, %v2770
        %v3083 = vpack.c.b16 %v2783, %v2777
        %v3084 = vpack.c.b16 %v2784, %v2778
        %v3085 = vpack.c.b16 %v2785, %v2779
        %v3086 = vpack.c.b16 %v2786, %v2780
        %v3087 = vpack.c.b16 %v2787, %v2781
        %v3088 = vpack.c.b16 %v2788, %v2782
        %v3089 = vpack.c.b16 %v2795, %v2789
        %v3090 = vpack.c.b16 %v2796, %v2790
        %v3091 = vpack.c.b16 %v2797, %v2791
        %v3092 = vpack.c.b16 %v2798, %v2792
        %v3093 = vpack.c.b16 %v2799, %v2793
        %v3094 = vpack.c.b16 %v2800, %v2794
        %v3095 = vpack.c.b16 %v2807, %v2801
        %v3096 = vpack.c.b16 %v2808, %v2802
        %v3097 = vpack.c.b16 %v2809, %v2803
        %v3098 = vpack.c.b16 %v2810, %v2804
        %v3099 = vpack.c.b16 %v2811, %v2805
        %v3100 = vpack.c.b16 %v2812, %v2806
        %v3101 = vpack.c.b16 %v2819, %v2813
        %v3102 = vpack.c.b16 %v2820, %v2814
        %v3103 = vpack.c.b16 %v2821, %v2815
        %v3104 = vpack.c.b16 %v2822, %v2816
        %v3105 = vpack.c.b16 %v2823, %v2817
        %v3106 = vpack.c.b16 %v2824, %v2818
        %v3107 = vpack.c.b16 %v2831, %v2825
        %v3108 = vpack.c.b16 %v2832, %v2826
        %v3109 = vpack.c.b16 %v2833, %v2827
        %v3110 = vpack.c.b16 %v2834, %v2828
        %v3111 = vpack.c.b16 %v2835, %v2829
        %v3112 = vpack.c.b16 %v2836, %v2830
        %v3113 = vpack.c.b16 %v2843, %v2837
        %v3114 = vpack.c.b16 %v2844, %v2838
        %v3115 = vpack.c.b16 %v2845, %v2839
        %v3116 = vpack.c.b16 %v2846, %v2840
        %v3117 = vpack.c.b16 %v2847, %v2841
        %v3118 = vpack.c.b16 %v2848, %v2842
        %v3119 = vpack.c.b16 %v2855, %v2849
        %v3120 = vpack.c.b16 %v2856, %v2850
        %v3121 = vpack.c.b16 %v2857, %v2851
        %v3122 = vpack.c.b16 %v2858, %v2852
        %v3123 = vpack.c.b16 %v2859, %v2853
        %v3124 = vpack.c.b16 %v2860, %v2854
        %v3125 = vpack.c.b16 %v2867, %v2861
        %v3126 = vpack.c.b16 %v2868, %v2862
        %v3127 = vpack.c.b16 %v2869, %v2863
        %v3128 = vpack.c.b16 %v2870, %v2864
        %v3129 = vpack.c.b16 %v2871, %v2865
        %v3130 = vpack.c.b16 %v2872, %v2866
        %v3131 = vpack.c.b16 %v2879, %v2873
        %v3132 = vpack.c.b16 %v2880, %v2874
        %v3133 = vpack.c.b16 %v2881, %v2875
        %v3134 = vpack.c.b16 %v2882, %v2876
        %v3135 = vpack.c.b16 %v2883, %v2877
        %v3136 = vpack.c.b16 %v2884, %v2878
        %v3137 = vpack.c.b16 %v2891, %v2885
        %v3138 = vpack.c.b16 %v2892, %v2886
        %v3139 = vpack.c.b16 %v2893, %v2887
        %v3140 = vpack.c.b16 %v2894, %v2888
        %v3141 = vpack.c.b16 %v2895, %v2889
        %v3142 = vpack.c.b16 %v2896, %v2890
        %v3143 = vpack.c.b16 %v2903, %v2897
        %v3144 = vpack.c.b16 %v2904, %v2898
        %v3145 = vpack.c.b16 %v2905, %v2899
        %v3146 = vpack.c.b16 %v2906, %v2900
        %v3147 = vpack.c.b16 %v2907, %v2901
        %v3148 = vpack.c.b16 %v2908, %v2902
        %v3149 = vpack.c.b16 %v2915, %v2909
        %v3150 = vpack.c.b16 %v2916, %v2910
        %v3151 = vpack.c.b16 %v2917, %v2911
        %v3152 = vpack.c.b16 %v2918, %v2912
        %v3153 = vpack.c.b16 %v2919, %v2913
        %v3154 = vpack.c.b16 %v2920, %v2914
        %v3155 = vpack.c.b16 %v2927, %v2921
        %v3156 = vpack.c.b16 %v2928, %v2922
        %v3157 = vpack.c.b16 %v2929, %v2923
        %v3158 = vpack.c.b16 %v2930, %v2924
        %v3159 = vpack.c.b16 %v2931, %v2925
        %v3160 = vpack.c.b16 %v2932, %v2926
        %v3161 = vpack.c.b16 %v2939, %v2933
        %v3162 = vpack.c.b16 %v2940, %v2934
        %v3163 = vpack.c.b16 %v2941, %v2935
        %v3164 = vpack.c.b16 %v2942, %v2936
        %v3165 = vpack.c.b16 %v2943, %v2937
        %v3166 = vpack.c.b16 %v2944, %v2938
        %v3167 = vpack.c.b16 %v2951, %v2945
        %v3168 = vpack.c.b16 %v2952, %v2946
        %v3169 = vpack.c.b16 %v2953, %v2947
        %v3170 = vpack.c.b16 %v2954, %v2948
        %v3171 = vpack.c.b16 %v2955, %v2949
        %v3172 = vpack.c.b16 %v2956, %v2950
        %v3173 = vpack.c.b16 %v2963, %v2957
        %v3174 = vpack.c.b16 %v2964, %v2958
        %v3175 = vpack.c.b16 %v2965, %v2959
        %v3176 = vpack.c.b16 %v2966, %v2960
        %v3177 = vpack.c.b16 %v2967, %v2961
        %v3178 = vpack.c.b16 %v2968, %v2962
        %v3179 = vpack.c.b16 %v2975, %v2969
        %v3180 = vpack.c.b16 %v2976, %v2970
        %v3181 = vpack.c.b16 %v2977, %v2971
        %v3182 = vpack.c.b16 %v2978, %v2972
        %v3183 = vpack.c.b16 %v2979, %v2973
        %v3184 = vpack.c.b16 %v2980, %v2974
        %v3185 = vpack.c.b16 %v2987, %v2981
        %v3186 = vpack.c.b16 %v2988, %v2982
        %v3187 = vpack.c.b16 %v2989, %v2983
        %v3188 = vpack.c.b16 %v2990, %v2984
        %v3189 = vpack.c.b16 %v2991, %v2985
        %v3190 = vpack.c.b16 %v2992, %v2986
        %v3191 = vpack.c.b16 %v2999, %v2993
        %v3192 = vpack.c.b16 %v3000, %v2994
        %v3193 = vpack.c.b16 %v3001, %v2995
        %v3194 = vpack.c.b16 %v3002, %v2996
        %v3195 = vpack.c.b16 %v3003, %v2997
        %v3196 = vpack.c.b16 %v3004, %v2998
        %v3358 = vsel %vm1660, %v2401, 0
        %v3361 = vsel %vm1660, %v2407, 0
        %v3364 = vsel %vm1660, %v2413, 0
        %v3367 = vsel %vm1660, %v3010, 0
        %v3370 = vsel %vm1660, %v3016, 0
        %v3373 = vsel %vm1660, %v3022, 0
        %v3376 = vsel %vm1660, %v3028, 0
        %v3379 = vsel %vm1660, %v3034, 0
        %v3382 = vsel %vm1660, %v3040, 0
        %v3385 = vsel %vm1660, %v3046, 0
        %v3388 = vsel %vm1660, %v3052, 0
        %v3391 = vsel %vm1660, %v3058, 0
        %v3394 = vsel %vm1660, %v3064, 0
        %v3397 = vsel %vm1660, %v3070, 0
        %v3400 = vsel %vm1660, %v3076, 0
        %v3403 = vsel %vm1660, %v3082, 0
        %v3406 = vsel %vm1660, %v3088, 0
        %v3409 = vsel %vm1660, %v3094, 0
        %v3412 = vsel %vm1660, %v3100, 0
        %v3415 = vsel %vm1660, %v3106, 0
        %v3418 = vsel %vm1660, %v3112, 0
        %v3421 = vsel %vm1660, %v3118, 0
        %v3424 = vsel %vm1660, %v3124, 0
        %v3427 = vsel %vm1660, %v3130, 0
        %v3430 = vsel %vm1660, %v3136, 0
        %v3433 = vsel %vm1660, %v3142, 0
        %v3436 = vsel %vm1660, %v3148, 0
        %v3439 = vsel %vm1660, %v3154, 0
        %v3442 = vsel %vm1660, %v3160, 0
        %v3445 = vsel %vm1660, %v3166, 0
        %v3448 = vsel %vm1660, %v3172, 0
        %v3451 = vsel %vm1660, %v3178, 0
        %v3454 = vsel %vm1660, %v3184, 0
        %v3457 = vsel %vm1660, %v3190, 0
        %v3460 = vsel %vm1660, %v3196, 0
        %3462 = vmatpush.bf16.xpose.msra.mxu0 %v3047
        %3463 = vmatpush.bf16.xpose.msra.mxu0 %v3041
        %3464 = vmatpush.bf16.xpose.msra.mxu0 %v3035
        %3465 = vmatpush.bf16.xpose.msra.mxu0 %v3029
        %3466 = vmatpush.bf16.xpose.msra.mxu0 %v3023
        %3467 = vmatpush.bf16.xpose.msra.mxu0 %v3017
        %3468 = vmatpush.bf16.xpose.msra.mxu0 %v3011
        %3469 = vmatpush.bf16.xpose.msra.mxu0 %v3005
        %3470 = vmatmul.bf16.gmra.mxu0 %v2396
        %v3471 = vpop.f32.mrf.mxu0
        %v3472 = vadd.f32 %v1896, %v3471
        %v3473 = vpop.f32.mrf.mxu0
        %v3474 = vadd.f32 %v1898, %v3473
        %3475 = vmatmul.bf16.gmra.mxu0 %v2402
        %v3476 = vpop.f32.mrf.mxu0
        %v3477 = vadd.f32 %v1901, %v3476
        %v3478 = vpop.f32.mrf.mxu0
        %v3479 = vadd.f32 %v1903, %v3478
        %3480 = vmatmul.bf16.gmra.mxu0 %v2408
        %v3481 = vpop.f32.mrf.mxu0
        %v3482 = vadd.f32 %v1906, %v3481
        %v3483 = vpop.f32.mrf.mxu0
        %v3484 = vadd.f32 %v1908, %v3483
        %3485 = vdwg.mxu0
        %3486 = vmatpush.bf16.xpose.msra.mxu0 %v3048
        %3487 = vmatpush.bf16.xpose.msra.mxu0 %v3042
        %3488 = vmatpush.bf16.xpose.msra.mxu0 %v3036
        %3489 = vmatpush.bf16.xpose.msra.mxu0 %v3030
        %3490 = vmatpush.bf16.xpose.msra.mxu0 %v3024
        %3491 = vmatpush.bf16.xpose.msra.mxu0 %v3018
        %3492 = vmatpush.bf16.xpose.msra.mxu0 %v3012
        %3493 = vmatpush.bf16.xpose.msra.mxu0 %v3006
        %3494 = vmatmul.bf16.gmra.mxu0 %v2397
        %v3495 = vpop.f32.mrf.mxu0
        %v3496 = vadd.f32 %v3472, %v3495
        %v3497 = vpop.f32.mrf.mxu0
        %v3498 = vadd.f32 %v3474, %v3497
        %3499 = vmatmul.bf16.gmra.mxu0 %v2403
        %v3500 = vpop.f32.mrf.mxu0
        %v3501 = vadd.f32 %v3477, %v3500
        %v3502 = vpop.f32.mrf.mxu0
        %v3503 = vadd.f32 %v3479, %v3502
        %3504 = vmatmul.bf16.gmra.mxu0 %v2409
        %v3505 = vpop.f32.mrf.mxu0
        %v3506 = vadd.f32 %v3482, %v3505
        %v3507 = vpop.f32.mrf.mxu0
        %v3508 = vadd.f32 %v3484, %v3507
        %3509 = vdwg.mxu0
        %3510 = vmatpush.bf16.xpose.msra.mxu0 %v3049
        %3511 = vmatpush.bf16.xpose.msra.mxu0 %v3043
        %3512 = vmatpush.bf16.xpose.msra.mxu0 %v3037
        %3513 = vmatpush.bf16.xpose.msra.mxu0 %v3031
        %3514 = vmatpush.bf16.xpose.msra.mxu0 %v3025
        %3515 = vmatpush.bf16.xpose.msra.mxu0 %v3019
        %3516 = vmatpush.bf16.xpose.msra.mxu0 %v3013
        %3517 = vmatpush.bf16.xpose.msra.mxu0 %v3007
        %3518 = vmatmul.bf16.gmra.mxu0 %v2398
        %v3519 = vpop.f32.mrf.mxu0
        %v3520 = vadd.f32 %v3496, %v3519
        %v3521 = vpop.f32.mrf.mxu0
        %v3522 = vadd.f32 %v3498, %v3521
        %3523 = vmatmul.bf16.gmra.mxu0 %v2404
        %v3524 = vpop.f32.mrf.mxu0
        %v3525 = vadd.f32 %v3501, %v3524
        %v3526 = vpop.f32.mrf.mxu0
        %v3527 = vadd.f32 %v3503, %v3526
        %3528 = vmatmul.bf16.gmra.mxu0 %v2410
        %v3529 = vpop.f32.mrf.mxu0
        %v3530 = vadd.f32 %v3506, %v3529
        %v3531 = vpop.f32.mrf.mxu0
        %v3532 = vadd.f32 %v3508, %v3531
        %3533 = vdwg.mxu0
        %3534 = vmatpush.bf16.xpose.msra.mxu0 %v3050
        %3535 = vmatpush.bf16.xpose.msra.mxu0 %v3044
        %3536 = vmatpush.bf16.xpose.msra.mxu0 %v3038
        %3537 = vmatpush.bf16.xpose.msra.mxu0 %v3032
        %3538 = vmatpush.bf16.xpose.msra.mxu0 %v3026
        %3539 = vmatpush.bf16.xpose.msra.mxu0 %v3020
        %3540 = vmatpush.bf16.xpose.msra.mxu0 %v3014
        %3541 = vmatpush.bf16.xpose.msra.mxu0 %v3008
        %3542 = vmatmul.bf16.gmra.mxu0 %v2399
        %v3543 = vpop.f32.mrf.mxu0
        %v3544 = vadd.f32 %v3520, %v3543
        %v3545 = vpop.f32.mrf.mxu0
        %v3546 = vadd.f32 %v3522, %v3545
        %3547 = vmatmul.bf16.gmra.mxu0 %v2405
        %v3548 = vpop.f32.mrf.mxu0
        %v3549 = vadd.f32 %v3525, %v3548
        %v3550 = vpop.f32.mrf.mxu0
        %v3551 = vadd.f32 %v3527, %v3550
        %3552 = vmatmul.bf16.gmra.mxu0 %v2411
        %v3553 = vpop.f32.mrf.mxu0
        %v3554 = vadd.f32 %v3530, %v3553
        %v3555 = vpop.f32.mrf.mxu0
        %v3556 = vadd.f32 %v3532, %v3555
        %3557 = vdwg.mxu0
        %3558 = vmatpush.bf16.xpose.msra.mxu0 %v3051
        %3559 = vmatpush.bf16.xpose.msra.mxu0 %v3045
        %3560 = vmatpush.bf16.xpose.msra.mxu0 %v3039
        %3561 = vmatpush.bf16.xpose.msra.mxu0 %v3033
        %3562 = vmatpush.bf16.xpose.msra.mxu0 %v3027
        %3563 = vmatpush.bf16.xpose.msra.mxu0 %v3021
        %3564 = vmatpush.bf16.xpose.msra.mxu0 %v3015
        %3565 = vmatpush.bf16.xpose.msra.mxu0 %v3009
        %3566 = vmatmul.bf16.gmra.mxu0 %v2400
        %v3567 = vpop.f32.mrf.mxu0
        %v3568 = vadd.f32 %v3544, %v3567
        %v3569 = vpop.f32.mrf.mxu0
        %v3570 = vadd.f32 %v3546, %v3569
        %3571 = vmatmul.bf16.gmra.mxu0 %v2406
        %v3572 = vpop.f32.mrf.mxu0
        %v3573 = vadd.f32 %v3549, %v3572
        %v3574 = vpop.f32.mrf.mxu0
        %v3575 = vadd.f32 %v3551, %v3574
        %3576 = vmatmul.bf16.gmra.mxu0 %v2412
        %v3577 = vpop.f32.mrf.mxu0
        %v3578 = vadd.f32 %v3554, %v3577
        %v3579 = vpop.f32.mrf.mxu0
        %v3580 = vadd.f32 %v3556, %v3579
        %3581 = vdwg.mxu0
        %3582 = vmatpush.bf16.xpose.msra.mxu0 %v3388
        %3583 = vmatpush.bf16.xpose.msra.mxu0 %v3385
        %3584 = vmatpush.bf16.xpose.msra.mxu0 %v3382
        %3585 = vmatpush.bf16.xpose.msra.mxu0 %v3379
        %3586 = vmatpush.bf16.xpose.msra.mxu0 %v3376
        %3587 = vmatpush.bf16.xpose.msra.mxu0 %v3373
        %3588 = vmatpush.bf16.xpose.msra.mxu0 %v3370
        %3589 = vmatpush.bf16.xpose.msra.mxu0 %v3367
        %3590 = vmatmul.bf16.gmra.mxu0 %v3358
        %v3591 = vpop.f32.mrf.mxu0
        %v3592 = vadd.f32 %v3568, %v3591
        %v3593 = vpop.f32.mrf.mxu0
        %v3594 = vadd.f32 %v3570, %v3593
        %3595 = vmatmul.bf16.gmra.mxu0 %v3361
        %v3596 = vpop.f32.mrf.mxu0
        %v3597 = vadd.f32 %v3573, %v3596
        %v3598 = vpop.f32.mrf.mxu0
        %v3599 = vadd.f32 %v3575, %v3598
        %3600 = vmatmul.bf16.gmra.mxu0 %v3364
        %v3601 = vpop.f32.mrf.mxu0
        %v3602 = vadd.f32 %v3578, %v3601
        %v3603 = vpop.f32.mrf.mxu0
        %v3604 = vadd.f32 %v3580, %v3603
        %3605 = vdwg.mxu0
        %3606 = vmatpush.bf16.xpose.msra.mxu0 %v3095
        %3607 = vmatpush.bf16.xpose.msra.mxu0 %v3089
        %3608 = vmatpush.bf16.xpose.msra.mxu0 %v3083
        %3609 = vmatpush.bf16.xpose.msra.mxu0 %v3077
        %3610 = vmatpush.bf16.xpose.msra.mxu0 %v3071
        %3611 = vmatpush.bf16.xpose.msra.mxu0 %v3065
        %3612 = vmatpush.bf16.xpose.msra.mxu0 %v3059
        %3613 = vmatpush.bf16.xpose.msra.mxu0 %v3053
        %3614 = vmatmul.bf16.gmra.mxu0 %v2396
        %v3615 = vpop.f32.mrf.mxu0
        %v3616 = vadd.f32 %v2040, %v3615
        %v3617 = vpop.f32.mrf.mxu0
        %v3618 = vadd.f32 %v2042, %v3617
        %3619 = vmatmul.bf16.gmra.mxu0 %v2402
        %v3620 = vpop.f32.mrf.mxu0
        %v3621 = vadd.f32 %v2045, %v3620
        %v3622 = vpop.f32.mrf.mxu0
        %v3623 = vadd.f32 %v2047, %v3622
        %3624 = vmatmul.bf16.gmra.mxu0 %v2408
        %v3625 = vpop.f32.mrf.mxu0
        %v3626 = vadd.f32 %v2050, %v3625
        %v3627 = vpop.f32.mrf.mxu0
        %v3628 = vadd.f32 %v2052, %v3627
        %3629 = vdwg.mxu0
        %3630 = vmatpush.bf16.xpose.msra.mxu0 %v3096
        %3631 = vmatpush.bf16.xpose.msra.mxu0 %v3090
        %3632 = vmatpush.bf16.xpose.msra.mxu0 %v3084
        %3633 = vmatpush.bf16.xpose.msra.mxu0 %v3078
        %3634 = vmatpush.bf16.xpose.msra.mxu0 %v3072
        %3635 = vmatpush.bf16.xpose.msra.mxu0 %v3066
        %3636 = vmatpush.bf16.xpose.msra.mxu0 %v3060
        %3637 = vmatpush.bf16.xpose.msra.mxu0 %v3054
        %3638 = vmatmul.bf16.gmra.mxu0 %v2397
        %v3639 = vpop.f32.mrf.mxu0
        %v3640 = vadd.f32 %v3616, %v3639
        %v3641 = vpop.f32.mrf.mxu0
        %v3642 = vadd.f32 %v3618, %v3641
        %3643 = vmatmul.bf16.gmra.mxu0 %v2403
        %v3644 = vpop.f32.mrf.mxu0
        %v3645 = vadd.f32 %v3621, %v3644
        %v3646 = vpop.f32.mrf.mxu0
        %v3647 = vadd.f32 %v3623, %v3646
        %3648 = vmatmul.bf16.gmra.mxu0 %v2409
        %v3649 = vpop.f32.mrf.mxu0
        %v3650 = vadd.f32 %v3626, %v3649
        %v3651 = vpop.f32.mrf.mxu0
        %v3652 = vadd.f32 %v3628, %v3651
        %3653 = vdwg.mxu0
        %3654 = vmatpush.bf16.xpose.msra.mxu0 %v3097
        %3655 = vmatpush.bf16.xpose.msra.mxu0 %v3091
        %3656 = vmatpush.bf16.xpose.msra.mxu0 %v3085
        %3657 = vmatpush.bf16.xpose.msra.mxu0 %v3079
        %3658 = vmatpush.bf16.xpose.msra.mxu0 %v3073
        %3659 = vmatpush.bf16.xpose.msra.mxu0 %v3067
        %3660 = vmatpush.bf16.xpose.msra.mxu0 %v3061
        %3661 = vmatpush.bf16.xpose.msra.mxu0 %v3055
        %3662 = vmatmul.bf16.gmra.mxu0 %v2398
        %v3663 = vpop.f32.mrf.mxu0
        %v3664 = vadd.f32 %v3640, %v3663
        %v3665 = vpop.f32.mrf.mxu0
        %v3666 = vadd.f32 %v3642, %v3665
        %3667 = vmatmul.bf16.gmra.mxu0 %v2404
        %v3668 = vpop.f32.mrf.mxu0
        %v3669 = vadd.f32 %v3645, %v3668
        %v3670 = vpop.f32.mrf.mxu0
        %v3671 = vadd.f32 %v3647, %v3670
        %3672 = vmatmul.bf16.gmra.mxu0 %v2410
        %v3673 = vpop.f32.mrf.mxu0
        %v3674 = vadd.f32 %v3650, %v3673
        %v3675 = vpop.f32.mrf.mxu0
        %v3676 = vadd.f32 %v3652, %v3675
        %3677 = vdwg.mxu0
        %3678 = vmatpush.bf16.xpose.msra.mxu0 %v3098
        %3679 = vmatpush.bf16.xpose.msra.mxu0 %v3092
        %3680 = vmatpush.bf16.xpose.msra.mxu0 %v3086
        %3681 = vmatpush.bf16.xpose.msra.mxu0 %v3080
        %3682 = vmatpush.bf16.xpose.msra.mxu0 %v3074
        %3683 = vmatpush.bf16.xpose.msra.mxu0 %v3068
        %3684 = vmatpush.bf16.xpose.msra.mxu0 %v3062
        %3685 = vmatpush.bf16.xpose.msra.mxu0 %v3056
        %3686 = vmatmul.bf16.gmra.mxu0 %v2399
        %v3687 = vpop.f32.mrf.mxu0
        %v3688 = vadd.f32 %v3664, %v3687
        %v3689 = vpop.f32.mrf.mxu0
        %v3690 = vadd.f32 %v3666, %v3689
        %3691 = vmatmul.bf16.gmra.mxu0 %v2405
        %v3692 = vpop.f32.mrf.mxu0
        %v3693 = vadd.f32 %v3669, %v3692
        %v3694 = vpop.f32.mrf.mxu0
        %v3695 = vadd.f32 %v3671, %v3694
        %3696 = vmatmul.bf16.gmra.mxu0 %v2411
        %v3697 = vpop.f32.mrf.mxu0
        %v3698 = vadd.f32 %v3674, %v3697
        %v3699 = vpop.f32.mrf.mxu0
        %v3700 = vadd.f32 %v3676, %v3699
        %3701 = vdwg.mxu0
        %3702 = vmatpush.bf16.xpose.msra.mxu0 %v3099
        %3703 = vmatpush.bf16.xpose.msra.mxu0 %v3093
        %3704 = vmatpush.bf16.xpose.msra.mxu0 %v3087
        %3705 = vmatpush.bf16.xpose.msra.mxu0 %v3081
        %3706 = vmatpush.bf16.xpose.msra.mxu0 %v3075
        %3707 = vmatpush.bf16.xpose.msra.mxu0 %v3069
        %3708 = vmatpush.bf16.xpose.msra.mxu0 %v3063
        %3709 = vmatpush.bf16.xpose.msra.mxu0 %v3057
        %3710 = vmatmul.bf16.gmra.mxu0 %v2400
        %v3711 = vpop.f32.mrf.mxu0
        %v3712 = vadd.f32 %v3688, %v3711
        %v3713 = vpop.f32.mrf.mxu0
        %v3714 = vadd.f32 %v3690, %v3713
        %3715 = vmatmul.bf16.gmra.mxu0 %v2406
        %v3716 = vpop.f32.mrf.mxu0
        %v3717 = vadd.f32 %v3693, %v3716
        %v3718 = vpop.f32.mrf.mxu0
        %v3719 = vadd.f32 %v3695, %v3718
        %3720 = vmatmul.bf16.gmra.mxu0 %v2412
        %v3721 = vpop.f32.mrf.mxu0
        %v3722 = vadd.f32 %v3698, %v3721
        %v3723 = vpop.f32.mrf.mxu0
        %v3724 = vadd.f32 %v3700, %v3723
        %3725 = vdwg.mxu0
        %3726 = vmatpush.bf16.xpose.msra.mxu0 %v3412
        %3727 = vmatpush.bf16.xpose.msra.mxu0 %v3409
        %3728 = vmatpush.bf16.xpose.msra.mxu0 %v3406
        %3729 = vmatpush.bf16.xpose.msra.mxu0 %v3403
        %3730 = vmatpush.bf16.xpose.msra.mxu0 %v3400
        %3731 = vmatpush.bf16.xpose.msra.mxu0 %v3397
        %3732 = vmatpush.bf16.xpose.msra.mxu0 %v3394
        %3733 = vmatpush.bf16.xpose.msra.mxu0 %v3391
        %3734 = vmatmul.bf16.gmra.mxu0 %v3358
        %v3735 = vpop.f32.mrf.mxu0
        %v3736 = vadd.f32 %v3712, %v3735
        %v3737 = vpop.f32.mrf.mxu0
        %v3738 = vadd.f32 %v3714, %v3737
        %3739 = vmatmul.bf16.gmra.mxu0 %v3361
        %v3740 = vpop.f32.mrf.mxu0
        %v3741 = vadd.f32 %v3717, %v3740
        %v3742 = vpop.f32.mrf.mxu0
        %v3743 = vadd.f32 %v3719, %v3742
        %3744 = vmatmul.bf16.gmra.mxu0 %v3364
        %v3745 = vpop.f32.mrf.mxu0
        %v3746 = vadd.f32 %v3722, %v3745
        %v3747 = vpop.f32.mrf.mxu0
        %v3748 = vadd.f32 %v3724, %v3747
        %3749 = vdwg.mxu0
        %3750 = vmatpush.bf16.xpose.msra.mxu0 %v3143
        %3751 = vmatpush.bf16.xpose.msra.mxu0 %v3137
        %3752 = vmatpush.bf16.xpose.msra.mxu0 %v3131
        %3753 = vmatpush.bf16.xpose.msra.mxu0 %v3125
        %3754 = vmatpush.bf16.xpose.msra.mxu0 %v3119
        %3755 = vmatpush.bf16.xpose.msra.mxu0 %v3113
        %3756 = vmatpush.bf16.xpose.msra.mxu0 %v3107
        %3757 = vmatpush.bf16.xpose.msra.mxu0 %v3101
        %3758 = vmatmul.bf16.gmra.mxu0 %v2396
        %v3759 = vpop.f32.mrf.mxu0
        %v3760 = vadd.f32 %v2184, %v3759
        %v3761 = vpop.f32.mrf.mxu0
        %v3762 = vadd.f32 %v2186, %v3761
        %3763 = vmatmul.bf16.gmra.mxu0 %v2402
        %v3764 = vpop.f32.mrf.mxu0
        %v3765 = vadd.f32 %v2189, %v3764
        %v3766 = vpop.f32.mrf.mxu0
        %v3767 = vadd.f32 %v2191, %v3766
        %3768 = vmatmul.bf16.gmra.mxu0 %v2408
        %v3769 = vpop.f32.mrf.mxu0
        %v3770 = vadd.f32 %v2194, %v3769
        %v3771 = vpop.f32.mrf.mxu0
        %v3772 = vadd.f32 %v2196, %v3771
        %3773 = vdwg.mxu0
        %3774 = vmatpush.bf16.xpose.msra.mxu0 %v3144
        %3775 = vmatpush.bf16.xpose.msra.mxu0 %v3138
        %3776 = vmatpush.bf16.xpose.msra.mxu0 %v3132
        %3777 = vmatpush.bf16.xpose.msra.mxu0 %v3126
        %3778 = vmatpush.bf16.xpose.msra.mxu0 %v3120
        %3779 = vmatpush.bf16.xpose.msra.mxu0 %v3114
        %3780 = vmatpush.bf16.xpose.msra.mxu0 %v3108
        %3781 = vmatpush.bf16.xpose.msra.mxu0 %v3102
        %3782 = vmatmul.bf16.gmra.mxu0 %v2397
        %v3783 = vpop.f32.mrf.mxu0
        %v3784 = vadd.f32 %v3760, %v3783
        %v3785 = vpop.f32.mrf.mxu0
        %v3786 = vadd.f32 %v3762, %v3785
        %3787 = vmatmul.bf16.gmra.mxu0 %v2403
        %v3788 = vpop.f32.mrf.mxu0
        %v3789 = vadd.f32 %v3765, %v3788
        %v3790 = vpop.f32.mrf.mxu0
        %v3791 = vadd.f32 %v3767, %v3790
        %3792 = vmatmul.bf16.gmra.mxu0 %v2409
        %v3793 = vpop.f32.mrf.mxu0
        %v3794 = vadd.f32 %v3770, %v3793
        %v3795 = vpop.f32.mrf.mxu0
        %v3796 = vadd.f32 %v3772, %v3795
        %3797 = vdwg.mxu0
        %3798 = vmatpush.bf16.xpose.msra.mxu0 %v3145
        %3799 = vmatpush.bf16.xpose.msra.mxu0 %v3139
        %3800 = vmatpush.bf16.xpose.msra.mxu0 %v3133
        %3801 = vmatpush.bf16.xpose.msra.mxu0 %v3127
        %3802 = vmatpush.bf16.xpose.msra.mxu0 %v3121
        %3803 = vmatpush.bf16.xpose.msra.mxu0 %v3115
        %3804 = vmatpush.bf16.xpose.msra.mxu0 %v3109
        %3805 = vmatpush.bf16.xpose.msra.mxu0 %v3103
        %3806 = vmatmul.bf16.gmra.mxu0 %v2398
        %v3807 = vpop.f32.mrf.mxu0
        %v3808 = vadd.f32 %v3784, %v3807
        %v3809 = vpop.f32.mrf.mxu0
        %v3810 = vadd.f32 %v3786, %v3809
        %3811 = vmatmul.bf16.gmra.mxu0 %v2404
        %v3812 = vpop.f32.mrf.mxu0
        %v3813 = vadd.f32 %v3789, %v3812
        %v3814 = vpop.f32.mrf.mxu0
        %v3815 = vadd.f32 %v3791, %v3814
        %3816 = vmatmul.bf16.gmra.mxu0 %v2410
        %v3817 = vpop.f32.mrf.mxu0
        %v3818 = vadd.f32 %v3794, %v3817
        %v3819 = vpop.f32.mrf.mxu0
        %v3820 = vadd.f32 %v3796, %v3819
        %3821 = vdwg.mxu0
        %3822 = vmatpush.bf16.xpose.msra.mxu0 %v3146
        %3823 = vmatpush.bf16.xpose.msra.mxu0 %v3140
        %3824 = vmatpush.bf16.xpose.msra.mxu0 %v3134
        %3825 = vmatpush.bf16.xpose.msra.mxu0 %v3128
        %3826 = vmatpush.bf16.xpose.msra.mxu0 %v3122
        %3827 = vmatpush.bf16.xpose.msra.mxu0 %v3116
        %3828 = vmatpush.bf16.xpose.msra.mxu0 %v3110
        %3829 = vmatpush.bf16.xpose.msra.mxu0 %v3104
        %3830 = vmatmul.bf16.gmra.mxu0 %v2399
        %v3831 = vpop.f32.mrf.mxu0
        %v3832 = vadd.f32 %v3808, %v3831
        %v3833 = vpop.f32.mrf.mxu0
        %v3834 = vadd.f32 %v3810, %v3833
        %3835 = vmatmul.bf16.gmra.mxu0 %v2405
        %v3836 = vpop.f32.mrf.mxu0
        %v3837 = vadd.f32 %v3813, %v3836
        %v3838 = vpop.f32.mrf.mxu0
        %v3839 = vadd.f32 %v3815, %v3838
        %3840 = vmatmul.bf16.gmra.mxu0 %v2411
        %v3841 = vpop.f32.mrf.mxu0
        %v3842 = vadd.f32 %v3818, %v3841
        %v3843 = vpop.f32.mrf.mxu0
        %v3844 = vadd.f32 %v3820, %v3843
        %3845 = vdwg.mxu0
        %3846 = vmatpush.bf16.xpose.msra.mxu0 %v3147
        %3847 = vmatpush.bf16.xpose.msra.mxu0 %v3141
        %3848 = vmatpush.bf16.xpose.msra.mxu0 %v3135
        %3849 = vmatpush.bf16.xpose.msra.mxu0 %v3129
        %3850 = vmatpush.bf16.xpose.msra.mxu0 %v3123
        %3851 = vmatpush.bf16.xpose.msra.mxu0 %v3117
        %3852 = vmatpush.bf16.xpose.msra.mxu0 %v3111
        %3853 = vmatpush.bf16.xpose.msra.mxu0 %v3105
        %3854 = vmatmul.bf16.gmra.mxu0 %v2400
        %v3855 = vpop.f32.mrf.mxu0
        %v3856 = vadd.f32 %v3832, %v3855
        %v3857 = vpop.f32.mrf.mxu0
        %v3858 = vadd.f32 %v3834, %v3857
        %3859 = vmatmul.bf16.gmra.mxu0 %v2406
        %v3860 = vpop.f32.mrf.mxu0
        %v3861 = vadd.f32 %v3837, %v3860
        %v3862 = vpop.f32.mrf.mxu0
        %v3863 = vadd.f32 %v3839, %v3862
        %3864 = vmatmul.bf16.gmra.mxu0 %v2412
        %v3865 = vpop.f32.mrf.mxu0
        %v3866 = vadd.f32 %v3842, %v3865
        %v3867 = vpop.f32.mrf.mxu0
        %v3868 = vadd.f32 %v3844, %v3867
        %3869 = vdwg.mxu0
        %3870 = vmatpush.bf16.xpose.msra.mxu0 %v3436
        %3871 = vmatpush.bf16.xpose.msra.mxu0 %v3433
        %3872 = vmatpush.bf16.xpose.msra.mxu0 %v3430
        %3873 = vmatpush.bf16.xpose.msra.mxu0 %v3427
        %3874 = vmatpush.bf16.xpose.msra.mxu0 %v3424
        %3875 = vmatpush.bf16.xpose.msra.mxu0 %v3421
        %3876 = vmatpush.bf16.xpose.msra.mxu0 %v3418
        %3877 = vmatpush.bf16.xpose.msra.mxu0 %v3415
        %3878 = vmatmul.bf16.gmra.mxu0 %v3358
        %v3879 = vpop.f32.mrf.mxu0
        %v3880 = vadd.f32 %v3856, %v3879
        %v3881 = vpop.f32.mrf.mxu0
        %v3882 = vadd.f32 %v3858, %v3881
        %3883 = vmatmul.bf16.gmra.mxu0 %v3361
        %v3884 = vpop.f32.mrf.mxu0
        %v3885 = vadd.f32 %v3861, %v3884
        %v3886 = vpop.f32.mrf.mxu0
        %v3887 = vadd.f32 %v3863, %v3886
        %3888 = vmatmul.bf16.gmra.mxu0 %v3364
        %v3889 = vpop.f32.mrf.mxu0
        %v3890 = vadd.f32 %v3866, %v3889
        %v3891 = vpop.f32.mrf.mxu0
        %v3892 = vadd.f32 %v3868, %v3891
        %3893 = vdwg.mxu0
        %3894 = vmatpush.bf16.xpose.msra.mxu0 %v3191
        %3895 = vmatpush.bf16.xpose.msra.mxu0 %v3185
        %3896 = vmatpush.bf16.xpose.msra.mxu0 %v3179
        %3897 = vmatpush.bf16.xpose.msra.mxu0 %v3173
        %3898 = vmatpush.bf16.xpose.msra.mxu0 %v3167
        %3899 = vmatpush.bf16.xpose.msra.mxu0 %v3161
        %3900 = vmatpush.bf16.xpose.msra.mxu0 %v3155
        %3901 = vmatpush.bf16.xpose.msra.mxu0 %v3149
        %3902 = vmatmul.bf16.gmra.mxu0 %v2396
        %v3903 = vpop.f32.mrf.mxu0
        %v3904 = vadd.f32 %v2328, %v3903
        %v3905 = vpop.f32.mrf.mxu0
        %v3906 = vadd.f32 %v2330, %v3905
        %3907 = vmatmul.bf16.gmra.mxu0 %v2402
        %v3908 = vpop.f32.mrf.mxu0
        %v3909 = vadd.f32 %v2333, %v3908
        %v3910 = vpop.f32.mrf.mxu0
        %v3911 = vadd.f32 %v2335, %v3910
        %3912 = vmatmul.bf16.gmra.mxu0 %v2408
        %v3913 = vpop.f32.mrf.mxu0
        %v3914 = vadd.f32 %v2338, %v3913
        %v3915 = vpop.f32.mrf.mxu0
        %v3916 = vadd.f32 %v2340, %v3915
        %3917 = vdwg.mxu0
        %3918 = vmatpush.bf16.xpose.msra.mxu0 %v3192
        %3919 = vmatpush.bf16.xpose.msra.mxu0 %v3186
        %3920 = vmatpush.bf16.xpose.msra.mxu0 %v3180
        %3921 = vmatpush.bf16.xpose.msra.mxu0 %v3174
        %3922 = vmatpush.bf16.xpose.msra.mxu0 %v3168
        %3923 = vmatpush.bf16.xpose.msra.mxu0 %v3162
        %3924 = vmatpush.bf16.xpose.msra.mxu0 %v3156
        %3925 = vmatpush.bf16.xpose.msra.mxu0 %v3150
        %3926 = vmatmul.bf16.gmra.mxu0 %v2397
        %v3927 = vpop.f32.mrf.mxu0
        %v3928 = vadd.f32 %v3904, %v3927
        %v3929 = vpop.f32.mrf.mxu0
        %v3930 = vadd.f32 %v3906, %v3929
        %3931 = vmatmul.bf16.gmra.mxu0 %v2403
        %v3932 = vpop.f32.mrf.mxu0
        %v3933 = vadd.f32 %v3909, %v3932
        %v3934 = vpop.f32.mrf.mxu0
        %v3935 = vadd.f32 %v3911, %v3934
        %3936 = vmatmul.bf16.gmra.mxu0 %v2409
        %v3937 = vpop.f32.mrf.mxu0
        %v3938 = vadd.f32 %v3914, %v3937
        %v3939 = vpop.f32.mrf.mxu0
        %v3940 = vadd.f32 %v3916, %v3939
        %3941 = vdwg.mxu0
        %3942 = vmatpush.bf16.xpose.msra.mxu0 %v3193
        %3943 = vmatpush.bf16.xpose.msra.mxu0 %v3187
        %3944 = vmatpush.bf16.xpose.msra.mxu0 %v3181
        %3945 = vmatpush.bf16.xpose.msra.mxu0 %v3175
        %3946 = vmatpush.bf16.xpose.msra.mxu0 %v3169
        %3947 = vmatpush.bf16.xpose.msra.mxu0 %v3163
        %3948 = vmatpush.bf16.xpose.msra.mxu0 %v3157
        %3949 = vmatpush.bf16.xpose.msra.mxu0 %v3151
        %3950 = vmatmul.bf16.gmra.mxu0 %v2398
        %v3951 = vpop.f32.mrf.mxu0
        %v3952 = vadd.f32 %v3928, %v3951
        %v3953 = vpop.f32.mrf.mxu0
        %v3954 = vadd.f32 %v3930, %v3953
        %3955 = vmatmul.bf16.gmra.mxu0 %v2404
        %v3956 = vpop.f32.mrf.mxu0
        %v3957 = vadd.f32 %v3933, %v3956
        %v3958 = vpop.f32.mrf.mxu0
        %v3959 = vadd.f32 %v3935, %v3958
        %3960 = vmatmul.bf16.gmra.mxu0 %v2410
        %v3961 = vpop.f32.mrf.mxu0
        %v3962 = vadd.f32 %v3938, %v3961
        %v3963 = vpop.f32.mrf.mxu0
        %v3964 = vadd.f32 %v3940, %v3963
        %3965 = vdwg.mxu0
        %3966 = vmatpush.bf16.xpose.msra.mxu0 %v3194
        %3967 = vmatpush.bf16.xpose.msra.mxu0 %v3188
        %3968 = vmatpush.bf16.xpose.msra.mxu0 %v3182
        %3969 = vmatpush.bf16.xpose.msra.mxu0 %v3176
        %3970 = vmatpush.bf16.xpose.msra.mxu0 %v3170
        %3971 = vmatpush.bf16.xpose.msra.mxu0 %v3164
        %3972 = vmatpush.bf16.xpose.msra.mxu0 %v3158
        %3973 = vmatpush.bf16.xpose.msra.mxu0 %v3152
        %3974 = vmatmul.bf16.gmra.mxu0 %v2399
        %v3975 = vpop.f32.mrf.mxu0
        %v3976 = vadd.f32 %v3952, %v3975
        %v3977 = vpop.f32.mrf.mxu0
        %v3978 = vadd.f32 %v3954, %v3977
        %3979 = vmatmul.bf16.gmra.mxu0 %v2405
        %v3980 = vpop.f32.mrf.mxu0
        %v3981 = vadd.f32 %v3957, %v3980
        %v3982 = vpop.f32.mrf.mxu0
        %v3983 = vadd.f32 %v3959, %v3982
        %3984 = vmatmul.bf16.gmra.mxu0 %v2411
        %v3985 = vpop.f32.mrf.mxu0
        %v3986 = vadd.f32 %v3962, %v3985
        %v3987 = vpop.f32.mrf.mxu0
        %v3988 = vadd.f32 %v3964, %v3987
        %3989 = vdwg.mxu0
        %3990 = vmatpush.bf16.xpose.msra.mxu0 %v3195
        %3991 = vmatpush.bf16.xpose.msra.mxu0 %v3189
        %3992 = vmatpush.bf16.xpose.msra.mxu0 %v3183
        %3993 = vmatpush.bf16.xpose.msra.mxu0 %v3177
        %3994 = vmatpush.bf16.xpose.msra.mxu0 %v3171
        %3995 = vmatpush.bf16.xpose.msra.mxu0 %v3165
        %3996 = vmatpush.bf16.xpose.msra.mxu0 %v3159
        %3997 = vmatpush.bf16.xpose.msra.mxu0 %v3153
        %3998 = vmatmul.bf16.gmra.mxu0 %v2400
        %v3999 = vpop.f32.mrf.mxu0
        %v4000 = vadd.f32 %v3976, %v3999
        %v4001 = vpop.f32.mrf.mxu0
        %v4002 = vadd.f32 %v3978, %v4001
        %4003 = vmatmul.bf16.gmra.mxu0 %v2406
        %v4004 = vpop.f32.mrf.mxu0
        %v4005 = vadd.f32 %v3981, %v4004
        %v4006 = vpop.f32.mrf.mxu0
        %v4007 = vadd.f32 %v3983, %v4006
        %4008 = vmatmul.bf16.gmra.mxu0 %v2412
        %v4009 = vpop.f32.mrf.mxu0
        %v4010 = vadd.f32 %v3986, %v4009
        %v4011 = vpop.f32.mrf.mxu0
        %v4012 = vadd.f32 %v3988, %v4011
        %4013 = vdwg.mxu0
        %4014 = vmatpush.bf16.xpose.msra.mxu0 %v3460
        %4015 = vmatpush.bf16.xpose.msra.mxu0 %v3457
        %4016 = vmatpush.bf16.xpose.msra.mxu0 %v3454
        %4017 = vmatpush.bf16.xpose.msra.mxu0 %v3451
        %4018 = vmatpush.bf16.xpose.msra.mxu0 %v3448
        %4019 = vmatpush.bf16.xpose.msra.mxu0 %v3445
        %4020 = vmatpush.bf16.xpose.msra.mxu0 %v3442
        %4021 = vmatpush.bf16.xpose.msra.mxu0 %v3439
        %4022 = vmatmul.bf16.gmra.mxu0 %v3358
        %v4023 = vpop.f32.mrf.mxu0
        %v4024 = vadd.f32 %v4000, %v4023
        %v4025 = vpop.f32.mrf.mxu0
        %v4026 = vadd.f32 %v4002, %v4025
        %4027 = vmatmul.bf16.gmra.mxu0 %v3361
        %v4028 = vpop.f32.mrf.mxu0
        %v4029 = vadd.f32 %v4005, %v4028
        %v4030 = vpop.f32.mrf.mxu0
        %v4031 = vadd.f32 %v4007, %v4030
        %4032 = vmatmul.bf16.gmra.mxu0 %v3364
        %v4033 = vpop.f32.mrf.mxu0
        %v4034 = vadd.f32 %v4010, %v4033
        %v4035 = vpop.f32.mrf.mxu0
        %v4036 = vadd.f32 %v4012, %v4035
        %4037 = vdwg.mxu0
        %s4038 = sadd.s32 %s216, 4
        %s4039 = smul.u32 %s4038, 48
        %s4040 = smul.addr %s4039, 4
        %s4041 = scalar_lea.vmem %s178, %s4040 [#allocation2]
        %v4042 = vld [vmem:[%s4041] sm:$0xff]
        %v4043 = vld [vmem:[%s4041 + $0x8] sm:$0xff]
        %v4044 = vld [vmem:[%s4041 + $0x10] sm:$0xff]
        %v4045 = vld [vmem:[%s4041 + $0x18] sm:$0xff]
        %v4046 = vld [vmem:[%s4041 + $0x20] sm:$0xff]
        %v4047 = vld [vmem:[%s4041 + $0x28] sm:$0xff]
        %v4048 = vld [vmem:[%s4041 + $0x30] sm:$0xff]
        %v4049 = vld [vmem:[%s4041 + $0x38] sm:$0xff]
        %v4050 = vld [vmem:[%s4041 + $0x40] sm:$0xff]
        %v4051 = vld [vmem:[%s4041 + $0x48] sm:$0xff]
        %v4052 = vld [vmem:[%s4041 + $0x50] sm:$0xff]
        %v4053 = vld [vmem:[%s4041 + $0x58] sm:$0xff]
        %v4054 = vld [vmem:[%s4041 + $0x60] sm:$0xff]
        %v4055 = vld [vmem:[%s4041 + $0x68] sm:$0xff]
        %v4056 = vld [vmem:[%s4041 + $0x70] sm:$0xff]
        %v4057 = vld [vmem:[%s4041 + $0x78] sm:$0xff]
        %v4058 = vld [vmem:[%s4041 + $0x80] sm:$0xff]
        %v4059 = vld [vmem:[%s4041 + $0x88] sm:$0xff]
        %v4060 = vld [vmem:[%s4041 + $0x90] sm:$0xff]
        %v4061 = vld [vmem:[%s4041 + $0x98] sm:$0xff]
        %v4062 = vld [vmem:[%s4041 + $0xa0] sm:$0xff]
        %v4063 = vld [vmem:[%s4041 + $0xa8] sm:$0xff]
        %v4064 = vld [vmem:[%s4041 + $0xb0] sm:$0xff]
        %v4065 = vld [vmem:[%s4041 + $0xb8] sm:$0xff]
        %v4066 = vld [vmem:[%s4041 + $0xc0] sm:$0xff]
        %v4067 = vld [vmem:[%s4041 + $0xc8] sm:$0xff]
        %v4068 = vld [vmem:[%s4041 + $0xd0] sm:$0xff]
        %v4069 = vld [vmem:[%s4041 + $0xd8] sm:$0xff]
        %v4070 = vld [vmem:[%s4041 + $0xe0] sm:$0xff]
        %v4071 = vld [vmem:[%s4041 + $0xe8] sm:$0xff]
        %v4072 = vld [vmem:[%s4041 + $0xf0] sm:$0xff]
        %v4073 = vld [vmem:[%s4041 + $0xf8] sm:$0xff]
        %v4074 = vld [vmem:[%s4041 + $0x100] sm:$0xff]
        %v4075 = vld [vmem:[%s4041 + $0x108] sm:$0xff]
        %v4076 = vld [vmem:[%s4041 + $0x110] sm:$0xff]
        %v4077 = vld [vmem:[%s4041 + $0x118] sm:$0xff]
        %v4078 = vld [vmem:[%s4041 + $0x120] sm:$0xff]
        %v4079 = vld [vmem:[%s4041 + $0x128] sm:$0xff]
        %v4080 = vld [vmem:[%s4041 + $0x130] sm:$0xff]
        %v4081 = vld [vmem:[%s4041 + $0x138] sm:$0xff]
        %v4082 = vld [vmem:[%s4041 + $0x140] sm:$0xff]
        %v4083 = vld [vmem:[%s4041 + $0x148] sm:$0xff]
        %v4084 = vld [vmem:[%s4041 + $0x150] sm:$0xff]
        %v4085 = vld [vmem:[%s4041 + $0x158] sm:$0xff]
        %v4086 = vld [vmem:[%s4041 + $0x160] sm:$0xff]
        %v4087 = vld [vmem:[%s4041 + $0x168] sm:$0xff]
        %v4088 = vld [vmem:[%s4041 + $0x170] sm:$0xff]
        %v4089 = vld [vmem:[%s4041 + $0x178] sm:$0xff]
        %v4090 = vld [vmem:[%s4041 + $0x180] sm:$0xff]
        %v4091 = vld [vmem:[%s4041 + $0x188] sm:$0xff]
        %v4092 = vld [vmem:[%s4041 + $0x190] sm:$0xff]
        %v4093 = vld [vmem:[%s4041 + $0x198] sm:$0xff]
        %v4094 = vld [vmem:[%s4041 + $0x1a0] sm:$0xff]
        %v4095 = vld [vmem:[%s4041 + $0x1a8] sm:$0xff]
        %v4096 = vld [vmem:[%s4041 + $0x1b0] sm:$0xff]
        %v4097 = vld [vmem:[%s4041 + $0x1b8] sm:$0xff]
        %v4098 = vld [vmem:[%s4041 + $0x1c0] sm:$0xff]
        %v4099 = vld [vmem:[%s4041 + $0x1c8] sm:$0xff]
        %v4100 = vld [vmem:[%s4041 + $0x1d0] sm:$0xff]
        %v4101 = vld [vmem:[%s4041 + $0x1d8] sm:$0xff]
        %v4102 = vld [vmem:[%s4041 + $0x1e0] sm:$0xff]
        %v4103 = vld [vmem:[%s4041 + $0x1e8] sm:$0xff]
        %v4104 = vld [vmem:[%s4041 + $0x1f0] sm:$0xff]
        %v4105 = vld [vmem:[%s4041 + $0x1f8] sm:$0xff]
        %v4106 = vld [vmem:[%s4041 + $0x200] sm:$0xff]
        %v4107 = vld [vmem:[%s4041 + $0x208] sm:$0xff]
        %v4108 = vld [vmem:[%s4041 + $0x210] sm:$0xff]
        %v4109 = vld [vmem:[%s4041 + $0x218] sm:$0xff]
        %v4110 = vld [vmem:[%s4041 + $0x220] sm:$0xff]
        %v4111 = vld [vmem:[%s4041 + $0x228] sm:$0xff]
        %v4112 = vld [vmem:[%s4041 + $0x230] sm:$0xff]
        %v4113 = vld [vmem:[%s4041 + $0x238] sm:$0xff]
        %v4114 = vld [vmem:[%s4041 + $0x240] sm:$0xff]
        %v4115 = vld [vmem:[%s4041 + $0x248] sm:$0xff]
        %v4116 = vld [vmem:[%s4041 + $0x250] sm:$0xff]
        %v4117 = vld [vmem:[%s4041 + $0x258] sm:$0xff]
        %v4118 = vld [vmem:[%s4041 + $0x260] sm:$0xff]
        %v4119 = vld [vmem:[%s4041 + $0x268] sm:$0xff]
        %v4120 = vld [vmem:[%s4041 + $0x270] sm:$0xff]
        %v4121 = vld [vmem:[%s4041 + $0x278] sm:$0xff]
        %v4122 = vld [vmem:[%s4041 + $0x280] sm:$0xff]
        %v4123 = vld [vmem:[%s4041 + $0x288] sm:$0xff]
        %v4124 = vld [vmem:[%s4041 + $0x290] sm:$0xff]
        %v4125 = vld [vmem:[%s4041 + $0x298] sm:$0xff]
        %v4126 = vld [vmem:[%s4041 + $0x2a0] sm:$0xff]
        %v4127 = vld [vmem:[%s4041 + $0x2a8] sm:$0xff]
        %v4128 = vld [vmem:[%s4041 + $0x2b0] sm:$0xff]
        %v4129 = vld [vmem:[%s4041 + $0x2b8] sm:$0xff]
        %v4130 = vld [vmem:[%s4041 + $0x2c0] sm:$0xff]
        %v4131 = vld [vmem:[%s4041 + $0x2c8] sm:$0xff]
        %v4132 = vld [vmem:[%s4041 + $0x2d0] sm:$0xff]
        %v4133 = vld [vmem:[%s4041 + $0x2d8] sm:$0xff]
        %v4134 = vld [vmem:[%s4041 + $0x2e0] sm:$0xff]
        %v4135 = vld [vmem:[%s4041 + $0x2e8] sm:$0xff]
        %v4136 = vld [vmem:[%s4041 + $0x2f0] sm:$0xff]
        %v4137 = vld [vmem:[%s4041 + $0x2f8] sm:$0xff]
        %v4138 = vld [vmem:[%s4041 + $0x300] sm:$0xff]
        %v4139 = vld [vmem:[%s4041 + $0x308] sm:$0xff]
        %v4140 = vld [vmem:[%s4041 + $0x310] sm:$0xff]
        %v4141 = vld [vmem:[%s4041 + $0x318] sm:$0xff]
        %v4142 = vld [vmem:[%s4041 + $0x320] sm:$0xff]
        %v4143 = vld [vmem:[%s4041 + $0x328] sm:$0xff]
        %v4144 = vld [vmem:[%s4041 + $0x330] sm:$0xff]
        %v4145 = vld [vmem:[%s4041 + $0x338] sm:$0xff]
        %v4146 = vld [vmem:[%s4041 + $0x340] sm:$0xff]
        %v4147 = vld [vmem:[%s4041 + $0x348] sm:$0xff]
        %v4148 = vld [vmem:[%s4041 + $0x350] sm:$0xff]
        %v4149 = vld [vmem:[%s4041 + $0x358] sm:$0xff]
        %v4150 = vld [vmem:[%s4041 + $0x360] sm:$0xff]
        %v4151 = vld [vmem:[%s4041 + $0x368] sm:$0xff]
        %v4152 = vld [vmem:[%s4041 + $0x370] sm:$0xff]
        %v4153 = vld [vmem:[%s4041 + $0x378] sm:$0xff]
        %v4154 = vld [vmem:[%s4041 + $0x380] sm:$0xff]
        %v4155 = vld [vmem:[%s4041 + $0x388] sm:$0xff]
        %v4156 = vld [vmem:[%s4041 + $0x390] sm:$0xff]
        %v4157 = vld [vmem:[%s4041 + $0x398] sm:$0xff]
        %v4158 = vld [vmem:[%s4041 + $0x3a0] sm:$0xff]
        %v4159 = vld [vmem:[%s4041 + $0x3a8] sm:$0xff]
        %v4160 = vld [vmem:[%s4041 + $0x3b0] sm:$0xff]
        %v4161 = vld [vmem:[%s4041 + $0x3b8] sm:$0xff]
        %v4162 = vld [vmem:[%s4041 + $0x3c0] sm:$0xff]
        %v4163 = vld [vmem:[%s4041 + $0x3c8] sm:$0xff]
        %v4164 = vld [vmem:[%s4041 + $0x3d0] sm:$0xff]
        %v4165 = vld [vmem:[%s4041 + $0x3d8] sm:$0xff]
        %v4166 = vld [vmem:[%s4041 + $0x3e0] sm:$0xff]
        %v4167 = vld [vmem:[%s4041 + $0x3e8] sm:$0xff]
        %v4168 = vld [vmem:[%s4041 + $0x3f0] sm:$0xff]
        %v4169 = vld [vmem:[%s4041 + $0x3f8] sm:$0xff]
        %v4170 = vld [vmem:[%s4041 + $0x400] sm:$0xff]
        %v4171 = vld [vmem:[%s4041 + $0x408] sm:$0xff]
        %v4172 = vld [vmem:[%s4041 + $0x410] sm:$0xff]
        %v4173 = vld [vmem:[%s4041 + $0x418] sm:$0xff]
        %v4174 = vld [vmem:[%s4041 + $0x420] sm:$0xff]
        %v4175 = vld [vmem:[%s4041 + $0x428] sm:$0xff]
        %v4176 = vld [vmem:[%s4041 + $0x430] sm:$0xff]
        %v4177 = vld [vmem:[%s4041 + $0x438] sm:$0xff]
        %v4178 = vld [vmem:[%s4041 + $0x440] sm:$0xff]
        %v4179 = vld [vmem:[%s4041 + $0x448] sm:$0xff]
        %v4180 = vld [vmem:[%s4041 + $0x450] sm:$0xff]
        %v4181 = vld [vmem:[%s4041 + $0x458] sm:$0xff]
        %v4182 = vld [vmem:[%s4041 + $0x460] sm:$0xff]
        %v4183 = vld [vmem:[%s4041 + $0x468] sm:$0xff]
        %v4184 = vld [vmem:[%s4041 + $0x470] sm:$0xff]
        %v4185 = vld [vmem:[%s4041 + $0x478] sm:$0xff]
        %v4186 = vld [vmem:[%s4041 + $0x480] sm:$0xff]
        %v4187 = vld [vmem:[%s4041 + $0x488] sm:$0xff]
        %v4188 = vld [vmem:[%s4041 + $0x490] sm:$0xff]
        %v4189 = vld [vmem:[%s4041 + $0x498] sm:$0xff]
        %v4190 = vld [vmem:[%s4041 + $0x4a0] sm:$0xff]
        %v4191 = vld [vmem:[%s4041 + $0x4a8] sm:$0xff]
        %v4192 = vld [vmem:[%s4041 + $0x4b0] sm:$0xff]
        %v4193 = vld [vmem:[%s4041 + $0x4b8] sm:$0xff]
        %v4194 = vld [vmem:[%s4041 + $0x4c0] sm:$0xff]
        %v4195 = vld [vmem:[%s4041 + $0x4c8] sm:$0xff]
        %v4196 = vld [vmem:[%s4041 + $0x4d0] sm:$0xff]
        %v4197 = vld [vmem:[%s4041 + $0x4d8] sm:$0xff]
        %v4198 = vld [vmem:[%s4041 + $0x4e0] sm:$0xff]
        %v4199 = vld [vmem:[%s4041 + $0x4e8] sm:$0xff]
        %v4200 = vld [vmem:[%s4041 + $0x4f0] sm:$0xff]
        %v4201 = vld [vmem:[%s4041 + $0x4f8] sm:$0xff]
        %v4202 = vld [vmem:[%s4041 + $0x500] sm:$0xff]
        %v4203 = vld [vmem:[%s4041 + $0x508] sm:$0xff]
        %v4204 = vld [vmem:[%s4041 + $0x510] sm:$0xff]
        %v4205 = vld [vmem:[%s4041 + $0x518] sm:$0xff]
        %v4206 = vld [vmem:[%s4041 + $0x520] sm:$0xff]
        %v4207 = vld [vmem:[%s4041 + $0x528] sm:$0xff]
        %v4208 = vld [vmem:[%s4041 + $0x530] sm:$0xff]
        %v4209 = vld [vmem:[%s4041 + $0x538] sm:$0xff]
        %v4210 = vld [vmem:[%s4041 + $0x540] sm:$0xff]
        %v4211 = vld [vmem:[%s4041 + $0x548] sm:$0xff]
        %v4212 = vld [vmem:[%s4041 + $0x550] sm:$0xff]
        %v4213 = vld [vmem:[%s4041 + $0x558] sm:$0xff]
        %v4214 = vld [vmem:[%s4041 + $0x560] sm:$0xff]
        %v4215 = vld [vmem:[%s4041 + $0x568] sm:$0xff]
        %v4216 = vld [vmem:[%s4041 + $0x570] sm:$0xff]
        %v4217 = vld [vmem:[%s4041 + $0x578] sm:$0xff]
        %v4218 = vld [vmem:[%s4041 + $0x580] sm:$0xff]
        %v4219 = vld [vmem:[%s4041 + $0x588] sm:$0xff]
        %v4220 = vld [vmem:[%s4041 + $0x590] sm:$0xff]
        %v4221 = vld [vmem:[%s4041 + $0x598] sm:$0xff]
        %v4222 = vld [vmem:[%s4041 + $0x5a0] sm:$0xff]
        %v4223 = vld [vmem:[%s4041 + $0x5a8] sm:$0xff]
        %v4224 = vld [vmem:[%s4041 + $0x5b0] sm:$0xff]
        %v4225 = vld [vmem:[%s4041 + $0x5b8] sm:$0xff]
        %v4226 = vld [vmem:[%s4041 + $0x5c0] sm:$0xff]
        %v4227 = vld [vmem:[%s4041 + $0x5c8] sm:$0xff]
        %v4228 = vld [vmem:[%s4041 + $0x5d0] sm:$0xff]
        %v4229 = vld [vmem:[%s4041 + $0x5d8] sm:$0xff]
        %v4230 = vld [vmem:[%s4041 + $0x5e0] sm:$0xff]
        %v4231 = vld [vmem:[%s4041 + $0x5e8] sm:$0xff]
        %v4232 = vld [vmem:[%s4041 + $0x5f0] sm:$0xff]
        %v4233 = vld [vmem:[%s4041 + $0x5f8] sm:$0xff]
        %s4234 = scalar_lea.vmem %s1, 288
        %v4235 = vld [vmem:[%s4234] sm:$0xff]
        %v4236 = vld [vmem:[%s4234 + $0x8] sm:$0xff]
        %v4237 = vld [vmem:[%s4234 + $0x10] sm:$0xff]
        %v4238 = vld [vmem:[%s4234 + $0x18] sm:$0xff]
        %v4239 = vld [vmem:[%s4234 + $0x20] sm:$0xff]
        %v4240 = vld [vmem:[%s4234 + $0x28] sm:$0xff]
        %v4241 = vld [vmem:[%s4234 + $0x30] sm:$0xff]
        %v4242 = vld [vmem:[%s4234 + $0x38] sm:$0xff]
        %v4243 = vld [vmem:[%s4234 + $0x40] sm:$0xff]
        %v4244 = vld [vmem:[%s4234 + $0x48] sm:$0xff]
        %v4245 = vld [vmem:[%s4234 + $0x50] sm:$0xff]
        %v4246 = vld [vmem:[%s4234 + $0x58] sm:$0xff]
        %v4247 = vld [vmem:[%s4234 + $0x60] sm:$0xff]
        %v4248 = vld [vmem:[%s4234 + $0x68] sm:$0xff]
        %v4249 = vld [vmem:[%s4234 + $0x70] sm:$0xff]
        %v4250 = vld [vmem:[%s4234 + $0x78] sm:$0xff]
        %v4251 = vld [vmem:[%s4234 + $0x80] sm:$0xff]
        %v4252 = vld [vmem:[%s4234 + $0x88] sm:$0xff]
        %v4271 = vunpack.c.l.b16 %v4235
        %v4272 = vunpack.c.h.b16 %v4235
        %v4273 = vunpack.c.l.b16 %v4236
        %v4274 = vunpack.c.h.b16 %v4236
        %v4275 = vunpack.c.l.b16 %v4237
        %v4276 = vunpack.c.h.b16 %v4237
        %v4277 = vunpack.c.l.b16 %v4238
        %v4278 = vunpack.c.h.b16 %v4238
        %v4279 = vunpack.c.l.b16 %v4239
        %v4280 = vunpack.c.h.b16 %v4239
        %v4281 = vunpack.c.l.b16 %v4240
        %v4282 = vunpack.c.h.b16 %v4240
        %v4283 = vunpack.c.l.b16 %v4241
        %v4284 = vunpack.c.h.b16 %v4241
        %v4285 = vunpack.c.l.b16 %v4242
        %v4286 = vunpack.c.h.b16 %v4242
        %v4287 = vunpack.c.l.b16 %v4243
        %v4288 = vunpack.c.h.b16 %v4243
        %v4289 = vunpack.c.l.b16 %v4244
        %v4290 = vunpack.c.h.b16 %v4244
        %v4291 = vunpack.c.l.b16 %v4245
        %v4292 = vunpack.c.h.b16 %v4245
        %v4293 = vunpack.c.l.b16 %v4246
        %v4294 = vunpack.c.h.b16 %v4246
        %v4295 = vunpack.c.l.b16 %v4247
        %v4296 = vunpack.c.h.b16 %v4247
        %v4297 = vunpack.c.l.b16 %v4248
        %v4298 = vunpack.c.h.b16 %v4248
        %v4299 = vunpack.c.l.b16 %v4249
        %v4300 = vunpack.c.h.b16 %v4249
        %v4301 = vunpack.c.l.b16 %v4250
        %v4302 = vunpack.c.h.b16 %v4250
        %v4303 = vunpack.c.l.b16 %v4251
        %v4304 = vunpack.c.h.b16 %v4251
        %v4305 = vunpack.c.l.b16 %v4252
        %v4306 = vunpack.c.h.b16 %v4252
        %v4307 = vpack.c.b16 %v4277, %v4271
        %v4308 = vpack.c.b16 %v4278, %v4272
        %v4309 = vpack.c.b16 %v4279, %v4273
        %v4310 = vpack.c.b16 %v4280, %v4274
        %v4311 = vpack.c.b16 %v4281, %v4275
        %v4312 = vpack.c.b16 %v4282, %v4276
        %v4313 = vpack.c.b16 %v4289, %v4283
        %v4314 = vpack.c.b16 %v4290, %v4284
        %v4315 = vpack.c.b16 %v4291, %v4285
        %v4316 = vpack.c.b16 %v4292, %v4286
        %v4317 = vpack.c.b16 %v4293, %v4287
        %v4318 = vpack.c.b16 %v4294, %v4288
        %v4319 = vpack.c.b16 %v4301, %v4295
        %v4320 = vpack.c.b16 %v4302, %v4296
        %v4321 = vpack.c.b16 %v4303, %v4297
        %v4322 = vpack.c.b16 %v4304, %v4298
        %v4323 = vpack.c.b16 %v4305, %v4299
        %v4324 = vpack.c.b16 %v4306, %v4300
        %v4532 = vunpack.c.l.b16 %v4042
        %v4533 = vunpack.c.h.b16 %v4042
        %v4534 = vunpack.c.l.b16 %v4043
        %v4535 = vunpack.c.h.b16 %v4043
        %v4536 = vunpack.c.l.b16 %v4044
        %v4537 = vunpack.c.h.b16 %v4044
        %v4538 = vunpack.c.l.b16 %v4045
        %v4539 = vunpack.c.h.b16 %v4045
        %v4540 = vunpack.c.l.b16 %v4046
        %v4541 = vunpack.c.h.b16 %v4046
        %v4542 = vunpack.c.l.b16 %v4047
        %v4543 = vunpack.c.h.b16 %v4047
        %v4544 = vunpack.c.l.b16 %v4048
        %v4545 = vunpack.c.h.b16 %v4048
        %v4546 = vunpack.c.l.b16 %v4049
        %v4547 = vunpack.c.h.b16 %v4049
        %v4548 = vunpack.c.l.b16 %v4050
        %v4549 = vunpack.c.h.b16 %v4050
        %v4550 = vunpack.c.l.b16 %v4051
        %v4551 = vunpack.c.h.b16 %v4051
        %v4552 = vunpack.c.l.b16 %v4052
        %v4553 = vunpack.c.h.b16 %v4052
        %v4554 = vunpack.c.l.b16 %v4053
        %v4555 = vunpack.c.h.b16 %v4053
        %v4556 = vunpack.c.l.b16 %v4054
        %v4557 = vunpack.c.h.b16 %v4054
        %v4558 = vunpack.c.l.b16 %v4055
        %v4559 = vunpack.c.h.b16 %v4055
        %v4560 = vunpack.c.l.b16 %v4056
        %v4561 = vunpack.c.h.b16 %v4056
        %v4562 = vunpack.c.l.b16 %v4057
        %v4563 = vunpack.c.h.b16 %v4057
        %v4564 = vunpack.c.l.b16 %v4058
        %v4565 = vunpack.c.h.b16 %v4058
        %v4566 = vunpack.c.l.b16 %v4059
        %v4567 = vunpack.c.h.b16 %v4059
        %v4568 = vunpack.c.l.b16 %v4060
        %v4569 = vunpack.c.h.b16 %v4060
        %v4570 = vunpack.c.l.b16 %v4061
        %v4571 = vunpack.c.h.b16 %v4061
        %v4572 = vunpack.c.l.b16 %v4062
        %v4573 = vunpack.c.h.b16 %v4062
        %v4574 = vunpack.c.l.b16 %v4063
        %v4575 = vunpack.c.h.b16 %v4063
        %v4576 = vunpack.c.l.b16 %v4064
        %v4577 = vunpack.c.h.b16 %v4064
        %v4578 = vunpack.c.l.b16 %v4065
        %v4579 = vunpack.c.h.b16 %v4065
        %v4580 = vunpack.c.l.b16 %v4066
        %v4581 = vunpack.c.h.b16 %v4066
        %v4582 = vunpack.c.l.b16 %v4067
        %v4583 = vunpack.c.h.b16 %v4067
        %v4584 = vunpack.c.l.b16 %v4068
        %v4585 = vunpack.c.h.b16 %v4068
        %v4586 = vunpack.c.l.b16 %v4069
        %v4587 = vunpack.c.h.b16 %v4069
        %v4588 = vunpack.c.l.b16 %v4070
        %v4589 = vunpack.c.h.b16 %v4070
        %v4590 = vunpack.c.l.b16 %v4071
        %v4591 = vunpack.c.h.b16 %v4071
        %v4592 = vunpack.c.l.b16 %v4072
        %v4593 = vunpack.c.h.b16 %v4072
        %v4594 = vunpack.c.l.b16 %v4073
        %v4595 = vunpack.c.h.b16 %v4073
        %v4596 = vunpack.c.l.b16 %v4074
        %v4597 = vunpack.c.h.b16 %v4074
        %v4598 = vunpack.c.l.b16 %v4075
        %v4599 = vunpack.c.h.b16 %v4075
        %v4600 = vunpack.c.l.b16 %v4076
        %v4601 = vunpack.c.h.b16 %v4076
        %v4602 = vunpack.c.l.b16 %v4077
        %v4603 = vunpack.c.h.b16 %v4077
        %v4604 = vunpack.c.l.b16 %v4078
        %v4605 = vunpack.c.h.b16 %v4078
        %v4606 = vunpack.c.l.b16 %v4079
        %v4607 = vunpack.c.h.b16 %v4079
        %v4608 = vunpack.c.l.b16 %v4080
        %v4609 = vunpack.c.h.b16 %v4080
        %v4610 = vunpack.c.l.b16 %v4081
        %v4611 = vunpack.c.h.b16 %v4081
        %v4612 = vunpack.c.l.b16 %v4082
        %v4613 = vunpack.c.h.b16 %v4082
        %v4614 = vunpack.c.l.b16 %v4083
        %v4615 = vunpack.c.h.b16 %v4083
        %v4616 = vunpack.c.l.b16 %v4084
        %v4617 = vunpack.c.h.b16 %v4084
        %v4618 = vunpack.c.l.b16 %v4085
        %v4619 = vunpack.c.h.b16 %v4085
        %v4620 = vunpack.c.l.b16 %v4086
        %v4621 = vunpack.c.h.b16 %v4086
        %v4622 = vunpack.c.l.b16 %v4087
        %v4623 = vunpack.c.h.b16 %v4087
        %v4624 = vunpack.c.l.b16 %v4088
        %v4625 = vunpack.c.h.b16 %v4088
        %v4626 = vunpack.c.l.b16 %v4089
        %v4627 = vunpack.c.h.b16 %v4089
        %v4628 = vunpack.c.l.b16 %v4090
        %v4629 = vunpack.c.h.b16 %v4090
        %v4630 = vunpack.c.l.b16 %v4091
        %v4631 = vunpack.c.h.b16 %v4091
        %v4632 = vunpack.c.l.b16 %v4092
        %v4633 = vunpack.c.h.b16 %v4092
        %v4634 = vunpack.c.l.b16 %v4093
        %v4635 = vunpack.c.h.b16 %v4093
        %v4636 = vunpack.c.l.b16 %v4094
        %v4637 = vunpack.c.h.b16 %v4094
        %v4638 = vunpack.c.l.b16 %v4095
        %v4639 = vunpack.c.h.b16 %v4095
        %v4640 = vunpack.c.l.b16 %v4096
        %v4641 = vunpack.c.h.b16 %v4096
        %v4642 = vunpack.c.l.b16 %v4097
        %v4643 = vunpack.c.h.b16 %v4097
        %v4644 = vunpack.c.l.b16 %v4098
        %v4645 = vunpack.c.h.b16 %v4098
        %v4646 = vunpack.c.l.b16 %v4099
        %v4647 = vunpack.c.h.b16 %v4099
        %v4648 = vunpack.c.l.b16 %v4100
        %v4649 = vunpack.c.h.b16 %v4100
        %v4650 = vunpack.c.l.b16 %v4101
        %v4651 = vunpack.c.h.b16 %v4101
        %v4652 = vunpack.c.l.b16 %v4102
        %v4653 = vunpack.c.h.b16 %v4102
        %v4654 = vunpack.c.l.b16 %v4103
        %v4655 = vunpack.c.h.b16 %v4103
        %v4656 = vunpack.c.l.b16 %v4104
        %v4657 = vunpack.c.h.b16 %v4104
        %v4658 = vunpack.c.l.b16 %v4105
        %v4659 = vunpack.c.h.b16 %v4105
        %v4660 = vunpack.c.l.b16 %v4106
        %v4661 = vunpack.c.h.b16 %v4106
        %v4662 = vunpack.c.l.b16 %v4107
        %v4663 = vunpack.c.h.b16 %v4107
        %v4664 = vunpack.c.l.b16 %v4108
        %v4665 = vunpack.c.h.b16 %v4108
        %v4666 = vunpack.c.l.b16 %v4109
        %v4667 = vunpack.c.h.b16 %v4109
        %v4668 = vunpack.c.l.b16 %v4110
        %v4669 = vunpack.c.h.b16 %v4110
        %v4670 = vunpack.c.l.b16 %v4111
        %v4671 = vunpack.c.h.b16 %v4111
        %v4672 = vunpack.c.l.b16 %v4112
        %v4673 = vunpack.c.h.b16 %v4112
        %v4674 = vunpack.c.l.b16 %v4113
        %v4675 = vunpack.c.h.b16 %v4113
        %v4676 = vunpack.c.l.b16 %v4114
        %v4677 = vunpack.c.h.b16 %v4114
        %v4678 = vunpack.c.l.b16 %v4115
        %v4679 = vunpack.c.h.b16 %v4115
        %v4680 = vunpack.c.l.b16 %v4116
        %v4681 = vunpack.c.h.b16 %v4116
        %v4682 = vunpack.c.l.b16 %v4117
        %v4683 = vunpack.c.h.b16 %v4117
        %v4684 = vunpack.c.l.b16 %v4118
        %v4685 = vunpack.c.h.b16 %v4118
        %v4686 = vunpack.c.l.b16 %v4119
        %v4687 = vunpack.c.h.b16 %v4119
        %v4688 = vunpack.c.l.b16 %v4120
        %v4689 = vunpack.c.h.b16 %v4120
        %v4690 = vunpack.c.l.b16 %v4121
        %v4691 = vunpack.c.h.b16 %v4121
        %v4692 = vunpack.c.l.b16 %v4122
        %v4693 = vunpack.c.h.b16 %v4122
        %v4694 = vunpack.c.l.b16 %v4123
        %v4695 = vunpack.c.h.b16 %v4123
        %v4696 = vunpack.c.l.b16 %v4124
        %v4697 = vunpack.c.h.b16 %v4124
        %v4698 = vunpack.c.l.b16 %v4125
        %v4699 = vunpack.c.h.b16 %v4125
        %v4700 = vunpack.c.l.b16 %v4126
        %v4701 = vunpack.c.h.b16 %v4126
        %v4702 = vunpack.c.l.b16 %v4127
        %v4703 = vunpack.c.h.b16 %v4127
        %v4704 = vunpack.c.l.b16 %v4128
        %v4705 = vunpack.c.h.b16 %v4128
        %v4706 = vunpack.c.l.b16 %v4129
        %v4707 = vunpack.c.h.b16 %v4129
        %v4708 = vunpack.c.l.b16 %v4130
        %v4709 = vunpack.c.h.b16 %v4130
        %v4710 = vunpack.c.l.b16 %v4131
        %v4711 = vunpack.c.h.b16 %v4131
        %v4712 = vunpack.c.l.b16 %v4132
        %v4713 = vunpack.c.h.b16 %v4132
        %v4714 = vunpack.c.l.b16 %v4133
        %v4715 = vunpack.c.h.b16 %v4133
        %v4716 = vunpack.c.l.b16 %v4134
        %v4717 = vunpack.c.h.b16 %v4134
        %v4718 = vunpack.c.l.b16 %v4135
        %v4719 = vunpack.c.h.b16 %v4135
        %v4720 = vunpack.c.l.b16 %v4136
        %v4721 = vunpack.c.h.b16 %v4136
        %v4722 = vunpack.c.l.b16 %v4137
        %v4723 = vunpack.c.h.b16 %v4137
        %v4724 = vunpack.c.l.b16 %v4138
        %v4725 = vunpack.c.h.b16 %v4138
        %v4726 = vunpack.c.l.b16 %v4139
        %v4727 = vunpack.c.h.b16 %v4139
        %v4728 = vunpack.c.l.b16 %v4140
        %v4729 = vunpack.c.h.b16 %v4140
        %v4730 = vunpack.c.l.b16 %v4141
        %v4731 = vunpack.c.h.b16 %v4141
        %v4732 = vunpack.c.l.b16 %v4142
        %v4733 = vunpack.c.h.b16 %v4142
        %v4734 = vunpack.c.l.b16 %v4143
        %v4735 = vunpack.c.h.b16 %v4143
        %v4736 = vunpack.c.l.b16 %v4144
        %v4737 = vunpack.c.h.b16 %v4144
        %v4738 = vunpack.c.l.b16 %v4145
        %v4739 = vunpack.c.h.b16 %v4145
        %v4740 = vunpack.c.l.b16 %v4146
        %v4741 = vunpack.c.h.b16 %v4146
        %v4742 = vunpack.c.l.b16 %v4147
        %v4743 = vunpack.c.h.b16 %v4147
        %v4744 = vunpack.c.l.b16 %v4148
        %v4745 = vunpack.c.h.b16 %v4148
        %v4746 = vunpack.c.l.b16 %v4149
        %v4747 = vunpack.c.h.b16 %v4149
        %v4748 = vunpack.c.l.b16 %v4150
        %v4749 = vunpack.c.h.b16 %v4150
        %v4750 = vunpack.c.l.b16 %v4151
        %v4751 = vunpack.c.h.b16 %v4151
        %v4752 = vunpack.c.l.b16 %v4152
        %v4753 = vunpack.c.h.b16 %v4152
        %v4754 = vunpack.c.l.b16 %v4153
        %v4755 = vunpack.c.h.b16 %v4153
        %v4756 = vunpack.c.l.b16 %v4154
        %v4757 = vunpack.c.h.b16 %v4154
        %v4758 = vunpack.c.l.b16 %v4155
        %v4759 = vunpack.c.h.b16 %v4155
        %v4760 = vunpack.c.l.b16 %v4156
        %v4761 = vunpack.c.h.b16 %v4156
        %v4762 = vunpack.c.l.b16 %v4157
        %v4763 = vunpack.c.h.b16 %v4157
        %v4764 = vunpack.c.l.b16 %v4158
        %v4765 = vunpack.c.h.b16 %v4158
        %v4766 = vunpack.c.l.b16 %v4159
        %v4767 = vunpack.c.h.b16 %v4159
        %v4768 = vunpack.c.l.b16 %v4160
        %v4769 = vunpack.c.h.b16 %v4160
        %v4770 = vunpack.c.l.b16 %v4161
        %v4771 = vunpack.c.h.b16 %v4161
        %v4772 = vunpack.c.l.b16 %v4162
        %v4773 = vunpack.c.h.b16 %v4162
        %v4774 = vunpack.c.l.b16 %v4163
        %v4775 = vunpack.c.h.b16 %v4163
        %v4776 = vunpack.c.l.b16 %v4164
        %v4777 = vunpack.c.h.b16 %v4164
        %v4778 = vunpack.c.l.b16 %v4165
        %v4779 = vunpack.c.h.b16 %v4165
        %v4780 = vunpack.c.l.b16 %v4166
        %v4781 = vunpack.c.h.b16 %v4166
        %v4782 = vunpack.c.l.b16 %v4167
        %v4783 = vunpack.c.h.b16 %v4167
        %v4784 = vunpack.c.l.b16 %v4168
        %v4785 = vunpack.c.h.b16 %v4168
        %v4786 = vunpack.c.l.b16 %v4169
        %v4787 = vunpack.c.h.b16 %v4169
        %v4788 = vunpack.c.l.b16 %v4170
        %v4789 = vunpack.c.h.b16 %v4170
        %v4790 = vunpack.c.l.b16 %v4171
        %v4791 = vunpack.c.h.b16 %v4171
        %v4792 = vunpack.c.l.b16 %v4172
        %v4793 = vunpack.c.h.b16 %v4172
        %v4794 = vunpack.c.l.b16 %v4173
        %v4795 = vunpack.c.h.b16 %v4173
        %v4796 = vunpack.c.l.b16 %v4174
        %v4797 = vunpack.c.h.b16 %v4174
        %v4798 = vunpack.c.l.b16 %v4175
        %v4799 = vunpack.c.h.b16 %v4175
        %v4800 = vunpack.c.l.b16 %v4176
        %v4801 = vunpack.c.h.b16 %v4176
        %v4802 = vunpack.c.l.b16 %v4177
        %v4803 = vunpack.c.h.b16 %v4177
        %v4804 = vunpack.c.l.b16 %v4178
        %v4805 = vunpack.c.h.b16 %v4178
        %v4806 = vunpack.c.l.b16 %v4179
        %v4807 = vunpack.c.h.b16 %v4179
        %v4808 = vunpack.c.l.b16 %v4180
        %v4809 = vunpack.c.h.b16 %v4180
        %v4810 = vunpack.c.l.b16 %v4181
        %v4811 = vunpack.c.h.b16 %v4181
        %v4812 = vunpack.c.l.b16 %v4182
        %v4813 = vunpack.c.h.b16 %v4182
        %v4814 = vunpack.c.l.b16 %v4183
        %v4815 = vunpack.c.h.b16 %v4183
        %v4816 = vunpack.c.l.b16 %v4184
        %v4817 = vunpack.c.h.b16 %v4184
        %v4818 = vunpack.c.l.b16 %v4185
        %v4819 = vunpack.c.h.b16 %v4185
        %v4820 = vunpack.c.l.b16 %v4186
        %v4821 = vunpack.c.h.b16 %v4186
        %v4822 = vunpack.c.l.b16 %v4187
        %v4823 = vunpack.c.h.b16 %v4187
        %v4824 = vunpack.c.l.b16 %v4188
        %v4825 = vunpack.c.h.b16 %v4188
        %v4826 = vunpack.c.l.b16 %v4189
        %v4827 = vunpack.c.h.b16 %v4189
        %v4828 = vunpack.c.l.b16 %v4190
        %v4829 = vunpack.c.h.b16 %v4190
        %v4830 = vunpack.c.l.b16 %v4191
        %v4831 = vunpack.c.h.b16 %v4191
        %v4832 = vunpack.c.l.b16 %v4192
        %v4833 = vunpack.c.h.b16 %v4192
        %v4834 = vunpack.c.l.b16 %v4193
        %v4835 = vunpack.c.h.b16 %v4193
        %v4836 = vunpack.c.l.b16 %v4194
        %v4837 = vunpack.c.h.b16 %v4194
        %v4838 = vunpack.c.l.b16 %v4195
        %v4839 = vunpack.c.h.b16 %v4195
        %v4840 = vunpack.c.l.b16 %v4196
        %v4841 = vunpack.c.h.b16 %v4196
        %v4842 = vunpack.c.l.b16 %v4197
        %v4843 = vunpack.c.h.b16 %v4197
        %v4844 = vunpack.c.l.b16 %v4198
        %v4845 = vunpack.c.h.b16 %v4198
        %v4846 = vunpack.c.l.b16 %v4199
        %v4847 = vunpack.c.h.b16 %v4199
        %v4848 = vunpack.c.l.b16 %v4200
        %v4849 = vunpack.c.h.b16 %v4200
        %v4850 = vunpack.c.l.b16 %v4201
        %v4851 = vunpack.c.h.b16 %v4201
        %v4852 = vunpack.c.l.b16 %v4202
        %v4853 = vunpack.c.h.b16 %v4202
        %v4854 = vunpack.c.l.b16 %v4203
        %v4855 = vunpack.c.h.b16 %v4203
        %v4856 = vunpack.c.l.b16 %v4204
        %v4857 = vunpack.c.h.b16 %v4204
        %v4858 = vunpack.c.l.b16 %v4205
        %v4859 = vunpack.c.h.b16 %v4205
        %v4860 = vunpack.c.l.b16 %v4206
        %v4861 = vunpack.c.h.b16 %v4206
        %v4862 = vunpack.c.l.b16 %v4207
        %v4863 = vunpack.c.h.b16 %v4207
        %v4864 = vunpack.c.l.b16 %v4208
        %v4865 = vunpack.c.h.b16 %v4208
        %v4866 = vunpack.c.l.b16 %v4209
        %v4867 = vunpack.c.h.b16 %v4209
        %v4868 = vunpack.c.l.b16 %v4210
        %v4869 = vunpack.c.h.b16 %v4210
        %v4870 = vunpack.c.l.b16 %v4211
        %v4871 = vunpack.c.h.b16 %v4211
        %v4872 = vunpack.c.l.b16 %v4212
        %v4873 = vunpack.c.h.b16 %v4212
        %v4874 = vunpack.c.l.b16 %v4213
        %v4875 = vunpack.c.h.b16 %v4213
        %v4876 = vunpack.c.l.b16 %v4214
        %v4877 = vunpack.c.h.b16 %v4214
        %v4878 = vunpack.c.l.b16 %v4215
        %v4879 = vunpack.c.h.b16 %v4215
        %v4880 = vunpack.c.l.b16 %v4216
        %v4881 = vunpack.c.h.b16 %v4216
        %v4882 = vunpack.c.l.b16 %v4217
        %v4883 = vunpack.c.h.b16 %v4217
        %v4884 = vunpack.c.l.b16 %v4218
        %v4885 = vunpack.c.h.b16 %v4218
        %v4886 = vunpack.c.l.b16 %v4219
        %v4887 = vunpack.c.h.b16 %v4219
        %v4888 = vunpack.c.l.b16 %v4220
        %v4889 = vunpack.c.h.b16 %v4220
        %v4890 = vunpack.c.l.b16 %v4221
        %v4891 = vunpack.c.h.b16 %v4221
        %v4892 = vunpack.c.l.b16 %v4222
        %v4893 = vunpack.c.h.b16 %v4222
        %v4894 = vunpack.c.l.b16 %v4223
        %v4895 = vunpack.c.h.b16 %v4223
        %v4896 = vunpack.c.l.b16 %v4224
        %v4897 = vunpack.c.h.b16 %v4224
        %v4898 = vunpack.c.l.b16 %v4225
        %v4899 = vunpack.c.h.b16 %v4225
        %v4900 = vunpack.c.l.b16 %v4226
        %v4901 = vunpack.c.h.b16 %v4226
        %v4902 = vunpack.c.l.b16 %v4227
        %v4903 = vunpack.c.h.b16 %v4227
        %v4904 = vunpack.c.l.b16 %v4228
        %v4905 = vunpack.c.h.b16 %v4228
        %v4906 = vunpack.c.l.b16 %v4229
        %v4907 = vunpack.c.h.b16 %v4229
        %v4908 = vunpack.c.l.b16 %v4230
        %v4909 = vunpack.c.h.b16 %v4230
        %v4910 = vunpack.c.l.b16 %v4231
        %v4911 = vunpack.c.h.b16 %v4231
        %v4912 = vunpack.c.l.b16 %v4232
        %v4913 = vunpack.c.h.b16 %v4232
        %v4914 = vunpack.c.l.b16 %v4233
        %v4915 = vunpack.c.h.b16 %v4233
        %v4916 = vpack.c.b16 %v4538, %v4532
        %v4917 = vpack.c.b16 %v4539, %v4533
        %v4918 = vpack.c.b16 %v4540, %v4534
        %v4919 = vpack.c.b16 %v4541, %v4535
        %v4920 = vpack.c.b16 %v4542, %v4536
        %v4921 = vpack.c.b16 %v4543, %v4537
        %v4922 = vpack.c.b16 %v4550, %v4544
        %v4923 = vpack.c.b16 %v4551, %v4545
        %v4924 = vpack.c.b16 %v4552, %v4546
        %v4925 = vpack.c.b16 %v4553, %v4547
        %v4926 = vpack.c.b16 %v4554, %v4548
        %v4927 = vpack.c.b16 %v4555, %v4549
        %v4928 = vpack.c.b16 %v4562, %v4556
        %v4929 = vpack.c.b16 %v4563, %v4557
        %v4930 = vpack.c.b16 %v4564, %v4558
        %v4931 = vpack.c.b16 %v4565, %v4559
        %v4932 = vpack.c.b16 %v4566, %v4560
        %v4933 = vpack.c.b16 %v4567, %v4561
        %v4934 = vpack.c.b16 %v4574, %v4568
        %v4935 = vpack.c.b16 %v4575, %v4569
        %v4936 = vpack.c.b16 %v4576, %v4570
        %v4937 = vpack.c.b16 %v4577, %v4571
        %v4938 = vpack.c.b16 %v4578, %v4572
        %v4939 = vpack.c.b16 %v4579, %v4573
        %v4940 = vpack.c.b16 %v4586, %v4580
        %v4941 = vpack.c.b16 %v4587, %v4581
        %v4942 = vpack.c.b16 %v4588, %v4582
        %v4943 = vpack.c.b16 %v4589, %v4583
        %v4944 = vpack.c.b16 %v4590, %v4584
        %v4945 = vpack.c.b16 %v4591, %v4585
        %v4946 = vpack.c.b16 %v4598, %v4592
        %v4947 = vpack.c.b16 %v4599, %v4593
        %v4948 = vpack.c.b16 %v4600, %v4594
        %v4949 = vpack.c.b16 %v4601, %v4595
        %v4950 = vpack.c.b16 %v4602, %v4596
        %v4951 = vpack.c.b16 %v4603, %v4597
        %v4952 = vpack.c.b16 %v4610, %v4604
        %v4953 = vpack.c.b16 %v4611, %v4605
        %v4954 = vpack.c.b16 %v4612, %v4606
        %v4955 = vpack.c.b16 %v4613, %v4607
        %v4956 = vpack.c.b16 %v4614, %v4608
        %v4957 = vpack.c.b16 %v4615, %v4609
        %v4958 = vpack.c.b16 %v4622, %v4616
        %v4959 = vpack.c.b16 %v4623, %v4617
        %v4960 = vpack.c.b16 %v4624, %v4618
        %v4961 = vpack.c.b16 %v4625, %v4619
        %v4962 = vpack.c.b16 %v4626, %v4620
        %v4963 = vpack.c.b16 %v4627, %v4621
        %v4964 = vpack.c.b16 %v4634, %v4628
        %v4965 = vpack.c.b16 %v4635, %v4629
        %v4966 = vpack.c.b16 %v4636, %v4630
        %v4967 = vpack.c.b16 %v4637, %v4631
        %v4968 = vpack.c.b16 %v4638, %v4632
        %v4969 = vpack.c.b16 %v4639, %v4633
        %v4970 = vpack.c.b16 %v4646, %v4640
        %v4971 = vpack.c.b16 %v4647, %v4641
        %v4972 = vpack.c.b16 %v4648, %v4642
        %v4973 = vpack.c.b16 %v4649, %v4643
        %v4974 = vpack.c.b16 %v4650, %v4644
        %v4975 = vpack.c.b16 %v4651, %v4645
        %v4976 = vpack.c.b16 %v4658, %v4652
        %v4977 = vpack.c.b16 %v4659, %v4653
        %v4978 = vpack.c.b16 %v4660, %v4654
        %v4979 = vpack.c.b16 %v4661, %v4655
        %v4980 = vpack.c.b16 %v4662, %v4656
        %v4981 = vpack.c.b16 %v4663, %v4657
        %v4982 = vpack.c.b16 %v4670, %v4664
        %v4983 = vpack.c.b16 %v4671, %v4665
        %v4984 = vpack.c.b16 %v4672, %v4666
        %v4985 = vpack.c.b16 %v4673, %v4667
        %v4986 = vpack.c.b16 %v4674, %v4668
        %v4987 = vpack.c.b16 %v4675, %v4669
        %v4988 = vpack.c.b16 %v4682, %v4676
        %v4989 = vpack.c.b16 %v4683, %v4677
        %v4990 = vpack.c.b16 %v4684, %v4678
        %v4991 = vpack.c.b16 %v4685, %v4679
        %v4992 = vpack.c.b16 %v4686, %v4680
        %v4993 = vpack.c.b16 %v4687, %v4681
        %v4994 = vpack.c.b16 %v4694, %v4688
        %v4995 = vpack.c.b16 %v4695, %v4689
        %v4996 = vpack.c.b16 %v4696, %v4690
        %v4997 = vpack.c.b16 %v4697, %v4691
        %v4998 = vpack.c.b16 %v4698, %v4692
        %v4999 = vpack.c.b16 %v4699, %v4693
        %v5000 = vpack.c.b16 %v4706, %v4700
        %v5001 = vpack.c.b16 %v4707, %v4701
        %v5002 = vpack.c.b16 %v4708, %v4702
        %v5003 = vpack.c.b16 %v4709, %v4703
        %v5004 = vpack.c.b16 %v4710, %v4704
        %v5005 = vpack.c.b16 %v4711, %v4705
        %v5006 = vpack.c.b16 %v4718, %v4712
        %v5007 = vpack.c.b16 %v4719, %v4713
        %v5008 = vpack.c.b16 %v4720, %v4714
        %v5009 = vpack.c.b16 %v4721, %v4715
        %v5010 = vpack.c.b16 %v4722, %v4716
        %v5011 = vpack.c.b16 %v4723, %v4717
        %v5012 = vpack.c.b16 %v4730, %v4724
        %v5013 = vpack.c.b16 %v4731, %v4725
        %v5014 = vpack.c.b16 %v4732, %v4726
        %v5015 = vpack.c.b16 %v4733, %v4727
        %v5016 = vpack.c.b16 %v4734, %v4728
        %v5017 = vpack.c.b16 %v4735, %v4729
        %v5018 = vpack.c.b16 %v4742, %v4736
        %v5019 = vpack.c.b16 %v4743, %v4737
        %v5020 = vpack.c.b16 %v4744, %v4738
        %v5021 = vpack.c.b16 %v4745, %v4739
        %v5022 = vpack.c.b16 %v4746, %v4740
        %v5023 = vpack.c.b16 %v4747, %v4741
        %v5024 = vpack.c.b16 %v4754, %v4748
        %v5025 = vpack.c.b16 %v4755, %v4749
        %v5026 = vpack.c.b16 %v4756, %v4750
        %v5027 = vpack.c.b16 %v4757, %v4751
        %v5028 = vpack.c.b16 %v4758, %v4752
        %v5029 = vpack.c.b16 %v4759, %v4753
        %v5030 = vpack.c.b16 %v4766, %v4760
        %v5031 = vpack.c.b16 %v4767, %v4761
        %v5032 = vpack.c.b16 %v4768, %v4762
        %v5033 = vpack.c.b16 %v4769, %v4763
        %v5034 = vpack.c.b16 %v4770, %v4764
        %v5035 = vpack.c.b16 %v4771, %v4765
        %v5036 = vpack.c.b16 %v4778, %v4772
        %v5037 = vpack.c.b16 %v4779, %v4773
        %v5038 = vpack.c.b16 %v4780, %v4774
        %v5039 = vpack.c.b16 %v4781, %v4775
        %v5040 = vpack.c.b16 %v4782, %v4776
        %v5041 = vpack.c.b16 %v4783, %v4777
        %v5042 = vpack.c.b16 %v4790, %v4784
        %v5043 = vpack.c.b16 %v4791, %v4785
        %v5044 = vpack.c.b16 %v4792, %v4786
        %v5045 = vpack.c.b16 %v4793, %v4787
        %v5046 = vpack.c.b16 %v4794, %v4788
        %v5047 = vpack.c.b16 %v4795, %v4789
        %v5048 = vpack.c.b16 %v4802, %v4796
        %v5049 = vpack.c.b16 %v4803, %v4797
        %v5050 = vpack.c.b16 %v4804, %v4798
        %v5051 = vpack.c.b16 %v4805, %v4799
        %v5052 = vpack.c.b16 %v4806, %v4800
        %v5053 = vpack.c.b16 %v4807, %v4801
        %v5054 = vpack.c.b16 %v4814, %v4808
        %v5055 = vpack.c.b16 %v4815, %v4809
        %v5056 = vpack.c.b16 %v4816, %v4810
        %v5057 = vpack.c.b16 %v4817, %v4811
        %v5058 = vpack.c.b16 %v4818, %v4812
        %v5059 = vpack.c.b16 %v4819, %v4813
        %v5060 = vpack.c.b16 %v4826, %v4820
        %v5061 = vpack.c.b16 %v4827, %v4821
        %v5062 = vpack.c.b16 %v4828, %v4822
        %v5063 = vpack.c.b16 %v4829, %v4823
        %v5064 = vpack.c.b16 %v4830, %v4824
        %v5065 = vpack.c.b16 %v4831, %v4825
        %v5066 = vpack.c.b16 %v4838, %v4832
        %v5067 = vpack.c.b16 %v4839, %v4833
        %v5068 = vpack.c.b16 %v4840, %v4834
        %v5069 = vpack.c.b16 %v4841, %v4835
        %v5070 = vpack.c.b16 %v4842, %v4836
        %v5071 = vpack.c.b16 %v4843, %v4837
        %v5072 = vpack.c.b16 %v4850, %v4844
        %v5073 = vpack.c.b16 %v4851, %v4845
        %v5074 = vpack.c.b16 %v4852, %v4846
        %v5075 = vpack.c.b16 %v4853, %v4847
        %v5076 = vpack.c.b16 %v4854, %v4848
        %v5077 = vpack.c.b16 %v4855, %v4849
        %v5078 = vpack.c.b16 %v4862, %v4856
        %v5079 = vpack.c.b16 %v4863, %v4857
        %v5080 = vpack.c.b16 %v4864, %v4858
        %v5081 = vpack.c.b16 %v4865, %v4859
        %v5082 = vpack.c.b16 %v4866, %v4860
        %v5083 = vpack.c.b16 %v4867, %v4861
        %v5084 = vpack.c.b16 %v4874, %v4868
        %v5085 = vpack.c.b16 %v4875, %v4869
        %v5086 = vpack.c.b16 %v4876, %v4870
        %v5087 = vpack.c.b16 %v4877, %v4871
        %v5088 = vpack.c.b16 %v4878, %v4872
        %v5089 = vpack.c.b16 %v4879, %v4873
        %v5090 = vpack.c.b16 %v4886, %v4880
        %v5091 = vpack.c.b16 %v4887, %v4881
        %v5092 = vpack.c.b16 %v4888, %v4882
        %v5093 = vpack.c.b16 %v4889, %v4883
        %v5094 = vpack.c.b16 %v4890, %v4884
        %v5095 = vpack.c.b16 %v4891, %v4885
        %v5096 = vpack.c.b16 %v4898, %v4892
        %v5097 = vpack.c.b16 %v4899, %v4893
        %v5098 = vpack.c.b16 %v4900, %v4894
        %v5099 = vpack.c.b16 %v4901, %v4895
        %v5100 = vpack.c.b16 %v4902, %v4896
        %v5101 = vpack.c.b16 %v4903, %v4897
        %v5102 = vpack.c.b16 %v4910, %v4904
        %v5103 = vpack.c.b16 %v4911, %v4905
        %v5104 = vpack.c.b16 %v4912, %v4906
        %v5105 = vpack.c.b16 %v4913, %v4907
        %v5106 = vpack.c.b16 %v4914, %v4908
        %v5107 = vpack.c.b16 %v4915, %v4909
        %v5269 = vsel %vm1660, %v4312, 0
        %v5272 = vsel %vm1660, %v4318, 0
        %v5275 = vsel %vm1660, %v4324, 0
        %v5278 = vsel %vm1660, %v4921, 0
        %v5281 = vsel %vm1660, %v4927, 0
        %v5284 = vsel %vm1660, %v4933, 0
        %v5287 = vsel %vm1660, %v4939, 0
        %v5290 = vsel %vm1660, %v4945, 0
        %v5293 = vsel %vm1660, %v4951, 0
        %v5296 = vsel %vm1660, %v4957, 0
        %v5299 = vsel %vm1660, %v4963, 0
        %v5302 = vsel %vm1660, %v4969, 0
        %v5305 = vsel %vm1660, %v4975, 0
        %v5308 = vsel %vm1660, %v4981, 0
        %v5311 = vsel %vm1660, %v4987, 0
        %v5314 = vsel %vm1660, %v4993, 0
        %v5317 = vsel %vm1660, %v4999, 0
        %v5320 = vsel %vm1660, %v5005, 0
        %v5323 = vsel %vm1660, %v5011, 0
        %v5326 = vsel %vm1660, %v5017, 0
        %v5329 = vsel %vm1660, %v5023, 0
        %v5332 = vsel %vm1660, %v5029, 0
        %v5335 = vsel %vm1660, %v5035, 0
        %v5338 = vsel %vm1660, %v5041, 0
        %v5341 = vsel %vm1660, %v5047, 0
        %v5344 = vsel %vm1660, %v5053, 0
        %v5347 = vsel %vm1660, %v5059, 0
        %v5350 = vsel %vm1660, %v5065, 0
        %v5353 = vsel %vm1660, %v5071, 0
        %v5356 = vsel %vm1660, %v5077, 0
        %v5359 = vsel %vm1660, %v5083, 0
        %v5362 = vsel %vm1660, %v5089, 0
        %v5365 = vsel %vm1660, %v5095, 0
        %v5368 = vsel %vm1660, %v5101, 0
        %v5371 = vsel %vm1660, %v5107, 0
        %5373 = vmatpush.bf16.xpose.msra.mxu0 %v4958
        %5374 = vmatpush.bf16.xpose.msra.mxu0 %v4952
        %5375 = vmatpush.bf16.xpose.msra.mxu0 %v4946
        %5376 = vmatpush.bf16.xpose.msra.mxu0 %v4940
        %5377 = vmatpush.bf16.xpose.msra.mxu0 %v4934
        %5378 = vmatpush.bf16.xpose.msra.mxu0 %v4928
        %5379 = vmatpush.bf16.xpose.msra.mxu0 %v4922
        %5380 = vmatpush.bf16.xpose.msra.mxu0 %v4916
        %5381 = vmatmul.bf16.gmra.mxu0 %v4307
        %v5382 = vpop.f32.mrf.mxu0
        %v5383 = vadd.f32 0.0, %v5382
        %v5384 = vpop.f32.mrf.mxu0
        %v5385 = vadd.f32 0.0, %v5384
        %5386 = vmatmul.bf16.gmra.mxu0 %v4313
        %v5387 = vpop.f32.mrf.mxu0
        %v5388 = vadd.f32 0.0, %v5387
        %v5389 = vpop.f32.mrf.mxu0
        %v5390 = vadd.f32 0.0, %v5389
        %5391 = vmatmul.bf16.gmra.mxu0 %v4319
        %v5392 = vpop.f32.mrf.mxu0
        %v5393 = vadd.f32 0.0, %v5392
        %v5394 = vpop.f32.mrf.mxu0
        %v5395 = vadd.f32 0.0, %v5394
        %5396 = vdwg.mxu0
        %5397 = vmatpush.bf16.xpose.msra.mxu0 %v4959
        %5398 = vmatpush.bf16.xpose.msra.mxu0 %v4953
        %5399 = vmatpush.bf16.xpose.msra.mxu0 %v4947
        %5400 = vmatpush.bf16.xpose.msra.mxu0 %v4941
        %5401 = vmatpush.bf16.xpose.msra.mxu0 %v4935
        %5402 = vmatpush.bf16.xpose.msra.mxu0 %v4929
        %5403 = vmatpush.bf16.xpose.msra.mxu0 %v4923
        %5404 = vmatpush.bf16.xpose.msra.mxu0 %v4917
        %5405 = vmatmul.bf16.gmra.mxu0 %v4308
        %v5406 = vpop.f32.mrf.mxu0
        %v5407 = vadd.f32 %v5383, %v5406
        %v5408 = vpop.f32.mrf.mxu0
        %v5409 = vadd.f32 %v5385, %v5408
        %5410 = vmatmul.bf16.gmra.mxu0 %v4314
        %v5411 = vpop.f32.mrf.mxu0
        %v5412 = vadd.f32 %v5388, %v5411
        %v5413 = vpop.f32.mrf.mxu0
        %v5414 = vadd.f32 %v5390, %v5413
        %5415 = vmatmul.bf16.gmra.mxu0 %v4320
        %v5416 = vpop.f32.mrf.mxu0
        %v5417 = vadd.f32 %v5393, %v5416
        %v5418 = vpop.f32.mrf.mxu0
        %v5419 = vadd.f32 %v5395, %v5418
        %5420 = vdwg.mxu0
        %5421 = vmatpush.bf16.xpose.msra.mxu0 %v4960
        %5422 = vmatpush.bf16.xpose.msra.mxu0 %v4954
        %5423 = vmatpush.bf16.xpose.msra.mxu0 %v4948
        %5424 = vmatpush.bf16.xpose.msra.mxu0 %v4942
        %5425 = vmatpush.bf16.xpose.msra.mxu0 %v4936
        %5426 = vmatpush.bf16.xpose.msra.mxu0 %v4930
        %5427 = vmatpush.bf16.xpose.msra.mxu0 %v4924
        %5428 = vmatpush.bf16.xpose.msra.mxu0 %v4918
        %5429 = vmatmul.bf16.gmra.mxu0 %v4309
        %v5430 = vpop.f32.mrf.mxu0
        %v5431 = vadd.f32 %v5407, %v5430
        %v5432 = vpop.f32.mrf.mxu0
        %v5433 = vadd.f32 %v5409, %v5432
        %5434 = vmatmul.bf16.gmra.mxu0 %v4315
        %v5435 = vpop.f32.mrf.mxu0
        %v5436 = vadd.f32 %v5412, %v5435
        %v5437 = vpop.f32.mrf.mxu0
        %v5438 = vadd.f32 %v5414, %v5437
        %5439 = vmatmul.bf16.gmra.mxu0 %v4321
        %v5440 = vpop.f32.mrf.mxu0
        %v5441 = vadd.f32 %v5417, %v5440
        %v5442 = vpop.f32.mrf.mxu0
        %v5443 = vadd.f32 %v5419, %v5442
        %5444 = vdwg.mxu0
        %5445 = vmatpush.bf16.xpose.msra.mxu0 %v4961
        %5446 = vmatpush.bf16.xpose.msra.mxu0 %v4955
        %5447 = vmatpush.bf16.xpose.msra.mxu0 %v4949
        %5448 = vmatpush.bf16.xpose.msra.mxu0 %v4943
        %5449 = vmatpush.bf16.xpose.msra.mxu0 %v4937
        %5450 = vmatpush.bf16.xpose.msra.mxu0 %v4931
        %5451 = vmatpush.bf16.xpose.msra.mxu0 %v4925
        %5452 = vmatpush.bf16.xpose.msra.mxu0 %v4919
        %5453 = vmatmul.bf16.gmra.mxu0 %v4310
        %v5454 = vpop.f32.mrf.mxu0
        %v5455 = vadd.f32 %v5431, %v5454
        %v5456 = vpop.f32.mrf.mxu0
        %v5457 = vadd.f32 %v5433, %v5456
        %5458 = vmatmul.bf16.gmra.mxu0 %v4316
        %v5459 = vpop.f32.mrf.mxu0
        %v5460 = vadd.f32 %v5436, %v5459
        %v5461 = vpop.f32.mrf.mxu0
        %v5462 = vadd.f32 %v5438, %v5461
        %5463 = vmatmul.bf16.gmra.mxu0 %v4322
        %v5464 = vpop.f32.mrf.mxu0
        %v5465 = vadd.f32 %v5441, %v5464
        %v5466 = vpop.f32.mrf.mxu0
        %v5467 = vadd.f32 %v5443, %v5466
        %5468 = vdwg.mxu0
        %5469 = vmatpush.bf16.xpose.msra.mxu0 %v4962
        %5470 = vmatpush.bf16.xpose.msra.mxu0 %v4956
        %5471 = vmatpush.bf16.xpose.msra.mxu0 %v4950
        %5472 = vmatpush.bf16.xpose.msra.mxu0 %v4944
        %5473 = vmatpush.bf16.xpose.msra.mxu0 %v4938
        %5474 = vmatpush.bf16.xpose.msra.mxu0 %v4932
        %5475 = vmatpush.bf16.xpose.msra.mxu0 %v4926
        %5476 = vmatpush.bf16.xpose.msra.mxu0 %v4920
        %5477 = vmatmul.bf16.gmra.mxu0 %v4311
        %v5478 = vpop.f32.mrf.mxu0
        %v5479 = vadd.f32 %v5455, %v5478
        %v5480 = vpop.f32.mrf.mxu0
        %v5481 = vadd.f32 %v5457, %v5480
        %5482 = vmatmul.bf16.gmra.mxu0 %v4317
        %v5483 = vpop.f32.mrf.mxu0
        %v5484 = vadd.f32 %v5460, %v5483
        %v5485 = vpop.f32.mrf.mxu0
        %v5486 = vadd.f32 %v5462, %v5485
        %5487 = vmatmul.bf16.gmra.mxu0 %v4323
        %v5488 = vpop.f32.mrf.mxu0
        %v5489 = vadd.f32 %v5465, %v5488
        %v5490 = vpop.f32.mrf.mxu0
        %v5491 = vadd.f32 %v5467, %v5490
        %5492 = vdwg.mxu0
        %5493 = vmatpush.bf16.xpose.msra.mxu0 %v5299
        %5494 = vmatpush.bf16.xpose.msra.mxu0 %v5296
        %5495 = vmatpush.bf16.xpose.msra.mxu0 %v5293
        %5496 = vmatpush.bf16.xpose.msra.mxu0 %v5290
        %5497 = vmatpush.bf16.xpose.msra.mxu0 %v5287
        %5498 = vmatpush.bf16.xpose.msra.mxu0 %v5284
        %5499 = vmatpush.bf16.xpose.msra.mxu0 %v5281
        %5500 = vmatpush.bf16.xpose.msra.mxu0 %v5278
        %5501 = vmatmul.bf16.gmra.mxu0 %v5269
        %v5502 = vpop.f32.mrf.mxu0
        %v5503 = vadd.f32 %v5479, %v5502
        %v5504 = vpop.f32.mrf.mxu0
        %v5505 = vadd.f32 %v5481, %v5504
        %5506 = vmatmul.bf16.gmra.mxu0 %v5272
        %v5507 = vpop.f32.mrf.mxu0
        %v5508 = vadd.f32 %v5484, %v5507
        %v5509 = vpop.f32.mrf.mxu0
        %v5510 = vadd.f32 %v5486, %v5509
        %5511 = vmatmul.bf16.gmra.mxu0 %v5275
        %v5512 = vpop.f32.mrf.mxu0
        %v5513 = vadd.f32 %v5489, %v5512
        %v5514 = vpop.f32.mrf.mxu0
        %v5515 = vadd.f32 %v5491, %v5514
        %5516 = vdwg.mxu0
        %5517 = vmatpush.bf16.xpose.msra.mxu0 %v5006
        %5518 = vmatpush.bf16.xpose.msra.mxu0 %v5000
        %5519 = vmatpush.bf16.xpose.msra.mxu0 %v4994
        %5520 = vmatpush.bf16.xpose.msra.mxu0 %v4988
        %5521 = vmatpush.bf16.xpose.msra.mxu0 %v4982
        %5522 = vmatpush.bf16.xpose.msra.mxu0 %v4976
        %5523 = vmatpush.bf16.xpose.msra.mxu0 %v4970
        %5524 = vmatpush.bf16.xpose.msra.mxu0 %v4964
        %5525 = vmatmul.bf16.gmra.mxu0 %v4307
        %v5526 = vpop.f32.mrf.mxu0
        %v5527 = vadd.f32 0.0, %v5526
        %v5528 = vpop.f32.mrf.mxu0
        %v5529 = vadd.f32 0.0, %v5528
        %5530 = vmatmul.bf16.gmra.mxu0 %v4313
        %v5531 = vpop.f32.mrf.mxu0
        %v5532 = vadd.f32 0.0, %v5531
        %v5533 = vpop.f32.mrf.mxu0
        %v5534 = vadd.f32 0.0, %v5533
        %5535 = vmatmul.bf16.gmra.mxu0 %v4319
        %v5536 = vpop.f32.mrf.mxu0
        %v5537 = vadd.f32 0.0, %v5536
        %v5538 = vpop.f32.mrf.mxu0
        %v5539 = vadd.f32 0.0, %v5538
        %5540 = vdwg.mxu0
        %5541 = vmatpush.bf16.xpose.msra.mxu0 %v5007
        %5542 = vmatpush.bf16.xpose.msra.mxu0 %v5001
        %5543 = vmatpush.bf16.xpose.msra.mxu0 %v4995
        %5544 = vmatpush.bf16.xpose.msra.mxu0 %v4989
        %5545 = vmatpush.bf16.xpose.msra.mxu0 %v4983
        %5546 = vmatpush.bf16.xpose.msra.mxu0 %v4977
        %5547 = vmatpush.bf16.xpose.msra.mxu0 %v4971
        %5548 = vmatpush.bf16.xpose.msra.mxu0 %v4965
        %5549 = vmatmul.bf16.gmra.mxu0 %v4308
        %v5550 = vpop.f32.mrf.mxu0
        %v5551 = vadd.f32 %v5527, %v5550
        %v5552 = vpop.f32.mrf.mxu0
        %v5553 = vadd.f32 %v5529, %v5552
        %5554 = vmatmul.bf16.gmra.mxu0 %v4314
        %v5555 = vpop.f32.mrf.mxu0
        %v5556 = vadd.f32 %v5532, %v5555
        %v5557 = vpop.f32.mrf.mxu0
        %v5558 = vadd.f32 %v5534, %v5557
        %5559 = vmatmul.bf16.gmra.mxu0 %v4320
        %v5560 = vpop.f32.mrf.mxu0
        %v5561 = vadd.f32 %v5537, %v5560
        %v5562 = vpop.f32.mrf.mxu0
        %v5563 = vadd.f32 %v5539, %v5562
        %5564 = vdwg.mxu0
        %5565 = vmatpush.bf16.xpose.msra.mxu0 %v5008
        %5566 = vmatpush.bf16.xpose.msra.mxu0 %v5002
        %5567 = vmatpush.bf16.xpose.msra.mxu0 %v4996
        %5568 = vmatpush.bf16.xpose.msra.mxu0 %v4990
        %5569 = vmatpush.bf16.xpose.msra.mxu0 %v4984
        %5570 = vmatpush.bf16.xpose.msra.mxu0 %v4978
        %5571 = vmatpush.bf16.xpose.msra.mxu0 %v4972
        %5572 = vmatpush.bf16.xpose.msra.mxu0 %v4966
        %5573 = vmatmul.bf16.gmra.mxu0 %v4309
        %v5574 = vpop.f32.mrf.mxu0
        %v5575 = vadd.f32 %v5551, %v5574
        %v5576 = vpop.f32.mrf.mxu0
        %v5577 = vadd.f32 %v5553, %v5576
        %5578 = vmatmul.bf16.gmra.mxu0 %v4315
        %v5579 = vpop.f32.mrf.mxu0
        %v5580 = vadd.f32 %v5556, %v5579
        %v5581 = vpop.f32.mrf.mxu0
        %v5582 = vadd.f32 %v5558, %v5581
        %5583 = vmatmul.bf16.gmra.mxu0 %v4321
        %v5584 = vpop.f32.mrf.mxu0
        %v5585 = vadd.f32 %v5561, %v5584
        %v5586 = vpop.f32.mrf.mxu0
        %v5587 = vadd.f32 %v5563, %v5586
        %5588 = vdwg.mxu0
        %5589 = vmatpush.bf16.xpose.msra.mxu0 %v5009
        %5590 = vmatpush.bf16.xpose.msra.mxu0 %v5003
        %5591 = vmatpush.bf16.xpose.msra.mxu0 %v4997
        %5592 = vmatpush.bf16.xpose.msra.mxu0 %v4991
        %5593 = vmatpush.bf16.xpose.msra.mxu0 %v4985
        %5594 = vmatpush.bf16.xpose.msra.mxu0 %v4979
        %5595 = vmatpush.bf16.xpose.msra.mxu0 %v4973
        %5596 = vmatpush.bf16.xpose.msra.mxu0 %v4967
        %5597 = vmatmul.bf16.gmra.mxu0 %v4310
        %v5598 = vpop.f32.mrf.mxu0
        %v5599 = vadd.f32 %v5575, %v5598
        %v5600 = vpop.f32.mrf.mxu0
        %v5601 = vadd.f32 %v5577, %v5600
        %5602 = vmatmul.bf16.gmra.mxu0 %v4316
        %v5603 = vpop.f32.mrf.mxu0
        %v5604 = vadd.f32 %v5580, %v5603
        %v5605 = vpop.f32.mrf.mxu0
        %v5606 = vadd.f32 %v5582, %v5605
        %5607 = vmatmul.bf16.gmra.mxu0 %v4322
        %v5608 = vpop.f32.mrf.mxu0
        %v5609 = vadd.f32 %v5585, %v5608
        %v5610 = vpop.f32.mrf.mxu0
        %v5611 = vadd.f32 %v5587, %v5610
        %5612 = vdwg.mxu0
        %5613 = vmatpush.bf16.xpose.msra.mxu0 %v5010
        %5614 = vmatpush.bf16.xpose.msra.mxu0 %v5004
        %5615 = vmatpush.bf16.xpose.msra.mxu0 %v4998
        %5616 = vmatpush.bf16.xpose.msra.mxu0 %v4992
        %5617 = vmatpush.bf16.xpose.msra.mxu0 %v4986
        %5618 = vmatpush.bf16.xpose.msra.mxu0 %v4980
        %5619 = vmatpush.bf16.xpose.msra.mxu0 %v4974
        %5620 = vmatpush.bf16.xpose.msra.mxu0 %v4968
        %5621 = vmatmul.bf16.gmra.mxu0 %v4311
        %v5622 = vpop.f32.mrf.mxu0
        %v5623 = vadd.f32 %v5599, %v5622
        %v5624 = vpop.f32.mrf.mxu0
        %v5625 = vadd.f32 %v5601, %v5624
        %5626 = vmatmul.bf16.gmra.mxu0 %v4317
        %v5627 = vpop.f32.mrf.mxu0
        %v5628 = vadd.f32 %v5604, %v5627
        %v5629 = vpop.f32.mrf.mxu0
        %v5630 = vadd.f32 %v5606, %v5629
        %5631 = vmatmul.bf16.gmra.mxu0 %v4323
        %v5632 = vpop.f32.mrf.mxu0
        %v5633 = vadd.f32 %v5609, %v5632
        %v5634 = vpop.f32.mrf.mxu0
        %v5635 = vadd.f32 %v5611, %v5634
        %5636 = vdwg.mxu0
        %5637 = vmatpush.bf16.xpose.msra.mxu0 %v5323
        %5638 = vmatpush.bf16.xpose.msra.mxu0 %v5320
        %5639 = vmatpush.bf16.xpose.msra.mxu0 %v5317
        %5640 = vmatpush.bf16.xpose.msra.mxu0 %v5314
        %5641 = vmatpush.bf16.xpose.msra.mxu0 %v5311
        %5642 = vmatpush.bf16.xpose.msra.mxu0 %v5308
        %5643 = vmatpush.bf16.xpose.msra.mxu0 %v5305
        %5644 = vmatpush.bf16.xpose.msra.mxu0 %v5302
        %5645 = vmatmul.bf16.gmra.mxu0 %v5269
        %v5646 = vpop.f32.mrf.mxu0
        %v5647 = vadd.f32 %v5623, %v5646
        %v5648 = vpop.f32.mrf.mxu0
        %v5649 = vadd.f32 %v5625, %v5648
        %5650 = vmatmul.bf16.gmra.mxu0 %v5272
        %v5651 = vpop.f32.mrf.mxu0
        %v5652 = vadd.f32 %v5628, %v5651
        %v5653 = vpop.f32.mrf.mxu0
        %v5654 = vadd.f32 %v5630, %v5653
        %5655 = vmatmul.bf16.gmra.mxu0 %v5275
        %v5656 = vpop.f32.mrf.mxu0
        %v5657 = vadd.f32 %v5633, %v5656
        %v5658 = vpop.f32.mrf.mxu0
        %v5659 = vadd.f32 %v5635, %v5658
        %5660 = vdwg.mxu0
        %5661 = vmatpush.bf16.xpose.msra.mxu0 %v5054
        %5662 = vmatpush.bf16.xpose.msra.mxu0 %v5048
        %5663 = vmatpush.bf16.xpose.msra.mxu0 %v5042
        %5664 = vmatpush.bf16.xpose.msra.mxu0 %v5036
        %5665 = vmatpush.bf16.xpose.msra.mxu0 %v5030
        %5666 = vmatpush.bf16.xpose.msra.mxu0 %v5024
        %5667 = vmatpush.bf16.xpose.msra.mxu0 %v5018
        %5668 = vmatpush.bf16.xpose.msra.mxu0 %v5012
        %5669 = vmatmul.bf16.gmra.mxu0 %v4307
        %v5670 = vpop.f32.mrf.mxu0
        %v5671 = vadd.f32 0.0, %v5670
        %v5672 = vpop.f32.mrf.mxu0
        %v5673 = vadd.f32 0.0, %v5672
        %5674 = vmatmul.bf16.gmra.mxu0 %v4313
        %v5675 = vpop.f32.mrf.mxu0
        %v5676 = vadd.f32 0.0, %v5675
        %v5677 = vpop.f32.mrf.mxu0
        %v5678 = vadd.f32 0.0, %v5677
        %5679 = vmatmul.bf16.gmra.mxu0 %v4319
        %v5680 = vpop.f32.mrf.mxu0
        %v5681 = vadd.f32 0.0, %v5680
        %v5682 = vpop.f32.mrf.mxu0
        %v5683 = vadd.f32 0.0, %v5682
        %5684 = vdwg.mxu0
        %5685 = vmatpush.bf16.xpose.msra.mxu0 %v5055
        %5686 = vmatpush.bf16.xpose.msra.mxu0 %v5049
        %5687 = vmatpush.bf16.xpose.msra.mxu0 %v5043
        %5688 = vmatpush.bf16.xpose.msra.mxu0 %v5037
        %5689 = vmatpush.bf16.xpose.msra.mxu0 %v5031
        %5690 = vmatpush.bf16.xpose.msra.mxu0 %v5025
        %5691 = vmatpush.bf16.xpose.msra.mxu0 %v5019
        %5692 = vmatpush.bf16.xpose.msra.mxu0 %v5013
        %5693 = vmatmul.bf16.gmra.mxu0 %v4308
        %v5694 = vpop.f32.mrf.mxu0
        %v5695 = vadd.f32 %v5671, %v5694
        %v5696 = vpop.f32.mrf.mxu0
        %v5697 = vadd.f32 %v5673, %v5696
        %5698 = vmatmul.bf16.gmra.mxu0 %v4314
        %v5699 = vpop.f32.mrf.mxu0
        %v5700 = vadd.f32 %v5676, %v5699
        %v5701 = vpop.f32.mrf.mxu0
        %v5702 = vadd.f32 %v5678, %v5701
        %5703 = vmatmul.bf16.gmra.mxu0 %v4320
        %v5704 = vpop.f32.mrf.mxu0
        %v5705 = vadd.f32 %v5681, %v5704
        %v5706 = vpop.f32.mrf.mxu0
        %v5707 = vadd.f32 %v5683, %v5706
        %5708 = vdwg.mxu0
        %5709 = vmatpush.bf16.xpose.msra.mxu0 %v5056
        %5710 = vmatpush.bf16.xpose.msra.mxu0 %v5050
        %5711 = vmatpush.bf16.xpose.msra.mxu0 %v5044
        %5712 = vmatpush.bf16.xpose.msra.mxu0 %v5038
        %5713 = vmatpush.bf16.xpose.msra.mxu0 %v5032
        %5714 = vmatpush.bf16.xpose.msra.mxu0 %v5026
        %5715 = vmatpush.bf16.xpose.msra.mxu0 %v5020
        %5716 = vmatpush.bf16.xpose.msra.mxu0 %v5014
        %5717 = vmatmul.bf16.gmra.mxu0 %v4309
        %v5718 = vpop.f32.mrf.mxu0
        %v5719 = vadd.f32 %v5695, %v5718
        %v5720 = vpop.f32.mrf.mxu0
        %v5721 = vadd.f32 %v5697, %v5720
        %5722 = vmatmul.bf16.gmra.mxu0 %v4315
        %v5723 = vpop.f32.mrf.mxu0
        %v5724 = vadd.f32 %v5700, %v5723
        %v5725 = vpop.f32.mrf.mxu0
        %v5726 = vadd.f32 %v5702, %v5725
        %5727 = vmatmul.bf16.gmra.mxu0 %v4321
        %v5728 = vpop.f32.mrf.mxu0
        %v5729 = vadd.f32 %v5705, %v5728
        %v5730 = vpop.f32.mrf.mxu0
        %v5731 = vadd.f32 %v5707, %v5730
        %5732 = vdwg.mxu0
        %5733 = vmatpush.bf16.xpose.msra.mxu0 %v5057
        %5734 = vmatpush.bf16.xpose.msra.mxu0 %v5051
        %5735 = vmatpush.bf16.xpose.msra.mxu0 %v5045
        %5736 = vmatpush.bf16.xpose.msra.mxu0 %v5039
        %5737 = vmatpush.bf16.xpose.msra.mxu0 %v5033
        %5738 = vmatpush.bf16.xpose.msra.mxu0 %v5027
        %5739 = vmatpush.bf16.xpose.msra.mxu0 %v5021
        %5740 = vmatpush.bf16.xpose.msra.mxu0 %v5015
        %5741 = vmatmul.bf16.gmra.mxu0 %v4310
        %v5742 = vpop.f32.mrf.mxu0
        %v5743 = vadd.f32 %v5719, %v5742
        %v5744 = vpop.f32.mrf.mxu0
        %v5745 = vadd.f32 %v5721, %v5744
        %5746 = vmatmul.bf16.gmra.mxu0 %v4316
        %v5747 = vpop.f32.mrf.mxu0
        %v5748 = vadd.f32 %v5724, %v5747
        %v5749 = vpop.f32.mrf.mxu0
        %v5750 = vadd.f32 %v5726, %v5749
        %5751 = vmatmul.bf16.gmra.mxu0 %v4322
        %v5752 = vpop.f32.mrf.mxu0
        %v5753 = vadd.f32 %v5729, %v5752
        %v5754 = vpop.f32.mrf.mxu0
        %v5755 = vadd.f32 %v5731, %v5754
        %5756 = vdwg.mxu0
        %5757 = vmatpush.bf16.xpose.msra.mxu0 %v5058
        %5758 = vmatpush.bf16.xpose.msra.mxu0 %v5052
        %5759 = vmatpush.bf16.xpose.msra.mxu0 %v5046
        %5760 = vmatpush.bf16.xpose.msra.mxu0 %v5040
        %5761 = vmatpush.bf16.xpose.msra.mxu0 %v5034
        %5762 = vmatpush.bf16.xpose.msra.mxu0 %v5028
        %5763 = vmatpush.bf16.xpose.msra.mxu0 %v5022
        %5764 = vmatpush.bf16.xpose.msra.mxu0 %v5016
        %5765 = vmatmul.bf16.gmra.mxu0 %v4311
        %v5766 = vpop.f32.mrf.mxu0
        %v5767 = vadd.f32 %v5743, %v5766
        %v5768 = vpop.f32.mrf.mxu0
        %v5769 = vadd.f32 %v5745, %v5768
        %5770 = vmatmul.bf16.gmra.mxu0 %v4317
        %v5771 = vpop.f32.mrf.mxu0
        %v5772 = vadd.f32 %v5748, %v5771
        %v5773 = vpop.f32.mrf.mxu0
        %v5774 = vadd.f32 %v5750, %v5773
        %5775 = vmatmul.bf16.gmra.mxu0 %v4323
        %v5776 = vpop.f32.mrf.mxu0
        %v5777 = vadd.f32 %v5753, %v5776
        %v5778 = vpop.f32.mrf.mxu0
        %v5779 = vadd.f32 %v5755, %v5778
        %5780 = vdwg.mxu0
        %5781 = vmatpush.bf16.xpose.msra.mxu0 %v5347
        %5782 = vmatpush.bf16.xpose.msra.mxu0 %v5344
        %5783 = vmatpush.bf16.xpose.msra.mxu0 %v5341
        %5784 = vmatpush.bf16.xpose.msra.mxu0 %v5338
        %5785 = vmatpush.bf16.xpose.msra.mxu0 %v5335
        %5786 = vmatpush.bf16.xpose.msra.mxu0 %v5332
        %5787 = vmatpush.bf16.xpose.msra.mxu0 %v5329
        %5788 = vmatpush.bf16.xpose.msra.mxu0 %v5326
        %5789 = vmatmul.bf16.gmra.mxu0 %v5269
        %v5790 = vpop.f32.mrf.mxu0
        %v5791 = vadd.f32 %v5767, %v5790
        %v5792 = vpop.f32.mrf.mxu0
        %v5793 = vadd.f32 %v5769, %v5792
        %5794 = vmatmul.bf16.gmra.mxu0 %v5272
        %v5795 = vpop.f32.mrf.mxu0
        %v5796 = vadd.f32 %v5772, %v5795
        %v5797 = vpop.f32.mrf.mxu0
        %v5798 = vadd.f32 %v5774, %v5797
        %5799 = vmatmul.bf16.gmra.mxu0 %v5275
        %v5800 = vpop.f32.mrf.mxu0
        %v5801 = vadd.f32 %v5777, %v5800
        %v5802 = vpop.f32.mrf.mxu0
        %v5803 = vadd.f32 %v5779, %v5802
        %5804 = vdwg.mxu0
        %5805 = vmatpush.bf16.xpose.msra.mxu0 %v5102
        %5806 = vmatpush.bf16.xpose.msra.mxu0 %v5096
        %5807 = vmatpush.bf16.xpose.msra.mxu0 %v5090
        %5808 = vmatpush.bf16.xpose.msra.mxu0 %v5084
        %5809 = vmatpush.bf16.xpose.msra.mxu0 %v5078
        %5810 = vmatpush.bf16.xpose.msra.mxu0 %v5072
        %5811 = vmatpush.bf16.xpose.msra.mxu0 %v5066
        %5812 = vmatpush.bf16.xpose.msra.mxu0 %v5060
        %5813 = vmatmul.bf16.gmra.mxu0 %v4307
        %v5814 = vpop.f32.mrf.mxu0
        %v5815 = vadd.f32 0.0, %v5814
        %v5816 = vpop.f32.mrf.mxu0
        %v5817 = vadd.f32 0.0, %v5816
        %5818 = vmatmul.bf16.gmra.mxu0 %v4313
        %v5819 = vpop.f32.mrf.mxu0
        %v5820 = vadd.f32 0.0, %v5819
        %v5821 = vpop.f32.mrf.mxu0
        %v5822 = vadd.f32 0.0, %v5821
        %5823 = vmatmul.bf16.gmra.mxu0 %v4319
        %v5824 = vpop.f32.mrf.mxu0
        %v5825 = vadd.f32 0.0, %v5824
        %v5826 = vpop.f32.mrf.mxu0
        %v5827 = vadd.f32 0.0, %v5826
        %5828 = vdwg.mxu0
        %5829 = vmatpush.bf16.xpose.msra.mxu0 %v5103
        %5830 = vmatpush.bf16.xpose.msra.mxu0 %v5097
        %5831 = vmatpush.bf16.xpose.msra.mxu0 %v5091
        %5832 = vmatpush.bf16.xpose.msra.mxu0 %v5085
        %5833 = vmatpush.bf16.xpose.msra.mxu0 %v5079
        %5834 = vmatpush.bf16.xpose.msra.mxu0 %v5073
        %5835 = vmatpush.bf16.xpose.msra.mxu0 %v5067
        %5836 = vmatpush.bf16.xpose.msra.mxu0 %v5061
        %5837 = vmatmul.bf16.gmra.mxu0 %v4308
        %v5838 = vpop.f32.mrf.mxu0
        %v5839 = vadd.f32 %v5815, %v5838
        %v5840 = vpop.f32.mrf.mxu0
        %v5841 = vadd.f32 %v5817, %v5840
        %5842 = vmatmul.bf16.gmra.mxu0 %v4314
        %v5843 = vpop.f32.mrf.mxu0
        %v5844 = vadd.f32 %v5820, %v5843
        %v5845 = vpop.f32.mrf.mxu0
        %v5846 = vadd.f32 %v5822, %v5845
        %5847 = vmatmul.bf16.gmra.mxu0 %v4320
        %v5848 = vpop.f32.mrf.mxu0
        %v5849 = vadd.f32 %v5825, %v5848
        %v5850 = vpop.f32.mrf.mxu0
        %v5851 = vadd.f32 %v5827, %v5850
        %5852 = vdwg.mxu0
        %5853 = vmatpush.bf16.xpose.msra.mxu0 %v5104
        %5854 = vmatpush.bf16.xpose.msra.mxu0 %v5098
        %5855 = vmatpush.bf16.xpose.msra.mxu0 %v5092
        %5856 = vmatpush.bf16.xpose.msra.mxu0 %v5086
        %5857 = vmatpush.bf16.xpose.msra.mxu0 %v5080
        %5858 = vmatpush.bf16.xpose.msra.mxu0 %v5074
        %5859 = vmatpush.bf16.xpose.msra.mxu0 %v5068
        %5860 = vmatpush.bf16.xpose.msra.mxu0 %v5062
        %5861 = vmatmul.bf16.gmra.mxu0 %v4309
        %v5862 = vpop.f32.mrf.mxu0
        %v5863 = vadd.f32 %v5839, %v5862
        %v5864 = vpop.f32.mrf.mxu0
        %v5865 = vadd.f32 %v5841, %v5864
        %5866 = vmatmul.bf16.gmra.mxu0 %v4315
        %v5867 = vpop.f32.mrf.mxu0
        %v5868 = vadd.f32 %v5844, %v5867
        %v5869 = vpop.f32.mrf.mxu0
        %v5870 = vadd.f32 %v5846, %v5869
        %5871 = vmatmul.bf16.gmra.mxu0 %v4321
        %v5872 = vpop.f32.mrf.mxu0
        %v5873 = vadd.f32 %v5849, %v5872
        %v5874 = vpop.f32.mrf.mxu0
        %v5875 = vadd.f32 %v5851, %v5874
        %5876 = vdwg.mxu0
        %5877 = vmatpush.bf16.xpose.msra.mxu0 %v5105
        %5878 = vmatpush.bf16.xpose.msra.mxu0 %v5099
        %5879 = vmatpush.bf16.xpose.msra.mxu0 %v5093
        %5880 = vmatpush.bf16.xpose.msra.mxu0 %v5087
        %5881 = vmatpush.bf16.xpose.msra.mxu0 %v5081
        %5882 = vmatpush.bf16.xpose.msra.mxu0 %v5075
        %5883 = vmatpush.bf16.xpose.msra.mxu0 %v5069
        %5884 = vmatpush.bf16.xpose.msra.mxu0 %v5063
        %5885 = vmatmul.bf16.gmra.mxu0 %v4310
        %v5886 = vpop.f32.mrf.mxu0
        %v5887 = vadd.f32 %v5863, %v5886
        %v5888 = vpop.f32.mrf.mxu0
        %v5889 = vadd.f32 %v5865, %v5888
        %5890 = vmatmul.bf16.gmra.mxu0 %v4316
        %v5891 = vpop.f32.mrf.mxu0
        %v5892 = vadd.f32 %v5868, %v5891
        %v5893 = vpop.f32.mrf.mxu0
        %v5894 = vadd.f32 %v5870, %v5893
        %5895 = vmatmul.bf16.gmra.mxu0 %v4322
        %v5896 = vpop.f32.mrf.mxu0
        %v5897 = vadd.f32 %v5873, %v5896
        %v5898 = vpop.f32.mrf.mxu0
        %v5899 = vadd.f32 %v5875, %v5898
        %5900 = vdwg.mxu0
        %5901 = vmatpush.bf16.xpose.msra.mxu0 %v5106
        %5902 = vmatpush.bf16.xpose.msra.mxu0 %v5100
        %5903 = vmatpush.bf16.xpose.msra.mxu0 %v5094
        %5904 = vmatpush.bf16.xpose.msra.mxu0 %v5088
        %5905 = vmatpush.bf16.xpose.msra.mxu0 %v5082
        %5906 = vmatpush.bf16.xpose.msra.mxu0 %v5076
        %5907 = vmatpush.bf16.xpose.msra.mxu0 %v5070
        %5908 = vmatpush.bf16.xpose.msra.mxu0 %v5064
        %5909 = vmatmul.bf16.gmra.mxu0 %v4311
        %v5910 = vpop.f32.mrf.mxu0
        %v5911 = vadd.f32 %v5887, %v5910
        %v5912 = vpop.f32.mrf.mxu0
        %v5913 = vadd.f32 %v5889, %v5912
        %5914 = vmatmul.bf16.gmra.mxu0 %v4317
        %v5915 = vpop.f32.mrf.mxu0
        %v5916 = vadd.f32 %v5892, %v5915
        %v5917 = vpop.f32.mrf.mxu0
        %v5918 = vadd.f32 %v5894, %v5917
        %5919 = vmatmul.bf16.gmra.mxu0 %v4323
        %v5920 = vpop.f32.mrf.mxu0
        %v5921 = vadd.f32 %v5897, %v5920
        %v5922 = vpop.f32.mrf.mxu0
        %v5923 = vadd.f32 %v5899, %v5922
        %5924 = vdwg.mxu0
        %5925 = vmatpush.bf16.xpose.msra.mxu0 %v5371
        %5926 = vmatpush.bf16.xpose.msra.mxu0 %v5368
        %5927 = vmatpush.bf16.xpose.msra.mxu0 %v5365
        %5928 = vmatpush.bf16.xpose.msra.mxu0 %v5362
        %5929 = vmatpush.bf16.xpose.msra.mxu0 %v5359
        %5930 = vmatpush.bf16.xpose.msra.mxu0 %v5356
        %5931 = vmatpush.bf16.xpose.msra.mxu0 %v5353
        %5932 = vmatpush.bf16.xpose.msra.mxu0 %v5350
        %5933 = vmatmul.bf16.gmra.mxu0 %v5269
        %v5934 = vpop.f32.mrf.mxu0
        %v5935 = vadd.f32 %v5911, %v5934
        %v5936 = vpop.f32.mrf.mxu0
        %v5937 = vadd.f32 %v5913, %v5936
        %5938 = vmatmul.bf16.gmra.mxu0 %v5272
        %v5939 = vpop.f32.mrf.mxu0
        %v5940 = vadd.f32 %v5916, %v5939
        %v5941 = vpop.f32.mrf.mxu0
        %v5942 = vadd.f32 %v5918, %v5941
        %5943 = vmatmul.bf16.gmra.mxu0 %v5275
        %v5944 = vpop.f32.mrf.mxu0
        %v5945 = vadd.f32 %v5921, %v5944
        %v5946 = vpop.f32.mrf.mxu0
        %v5947 = vadd.f32 %v5923, %v5946
        %5948 = vdwg.mxu0
        %v5949 = vadd.f32 %v3592, %v5503
        %v5950 = vadd.f32 %v3736, %v5647
        %v5951 = vadd.f32 %v3880, %v5791
        %v5952 = vadd.f32 %v4024, %v5935
        %v5953 = vadd.f32 %v3594, %v5505
        %v5954 = vadd.f32 %v3738, %v5649
        %v5955 = vadd.f32 %v3882, %v5793
        %v5956 = vadd.f32 %v4026, %v5937
        %v5957 = vadd.f32 %v3597, %v5508
        %v5958 = vadd.f32 %v3741, %v5652
        %v5959 = vadd.f32 %v3885, %v5796
        %v5960 = vadd.f32 %v4029, %v5940
        %v5961 = vadd.f32 %v3599, %v5510
        %v5962 = vadd.f32 %v3743, %v5654
        %v5963 = vadd.f32 %v3887, %v5798
        %v5964 = vadd.f32 %v4031, %v5942
        %v5965 = vadd.f32 %v3602, %v5513
        %v5966 = vadd.f32 %v3746, %v5657
        %v5967 = vadd.f32 %v3890, %v5801
        %v5968 = vadd.f32 %v4034, %v5945
        %v5969 = vadd.f32 %v3604, %v5515
        %v5970 = vadd.f32 %v3748, %v5659
        %v5971 = vadd.f32 %v3892, %v5803
        %v5972 = vadd.f32 %v4036, %v5947
        %s5973 = sadd.s32 %s216, 6
        %s5974 = smul.u32 %s5973, 48
        %s5975 = smul.addr %s5974, 4
        %s5976 = scalar_lea.vmem %s178, %s5975 [#allocation2]
        %v5977 = vld [vmem:[%s5976] sm:$0xff]
        %v5978 = vld [vmem:[%s5976 + $0x8] sm:$0xff]
        %v5979 = vld [vmem:[%s5976 + $0x10] sm:$0xff]
        %v5980 = vld [vmem:[%s5976 + $0x18] sm:$0xff]
        %v5981 = vld [vmem:[%s5976 + $0x20] sm:$0xff]
        %v5982 = vld [vmem:[%s5976 + $0x28] sm:$0xff]
        %v5983 = vld [vmem:[%s5976 + $0x30] sm:$0xff]
        %v5984 = vld [vmem:[%s5976 + $0x38] sm:$0xff]
        %v5985 = vld [vmem:[%s5976 + $0x40] sm:$0xff]
        %v5986 = vld [vmem:[%s5976 + $0x48] sm:$0xff]
        %v5987 = vld [vmem:[%s5976 + $0x50] sm:$0xff]
        %v5988 = vld [vmem:[%s5976 + $0x58] sm:$0xff]
        %v5989 = vld [vmem:[%s5976 + $0x60] sm:$0xff]
        %v5990 = vld [vmem:[%s5976 + $0x68] sm:$0xff]
        %v5991 = vld [vmem:[%s5976 + $0x70] sm:$0xff]
        %v5992 = vld [vmem:[%s5976 + $0x78] sm:$0xff]
        %v5993 = vld [vmem:[%s5976 + $0x80] sm:$0xff]
        %v5994 = vld [vmem:[%s5976 + $0x88] sm:$0xff]
        %v5995 = vld [vmem:[%s5976 + $0x90] sm:$0xff]
        %v5996 = vld [vmem:[%s5976 + $0x98] sm:$0xff]
        %v5997 = vld [vmem:[%s5976 + $0xa0] sm:$0xff]
        %v5998 = vld [vmem:[%s5976 + $0xa8] sm:$0xff]
        %v5999 = vld [vmem:[%s5976 + $0xb0] sm:$0xff]
        %v6000 = vld [vmem:[%s5976 + $0xb8] sm:$0xff]
        %v6001 = vld [vmem:[%s5976 + $0xc0] sm:$0xff]
        %v6002 = vld [vmem:[%s5976 + $0xc8] sm:$0xff]
        %v6003 = vld [vmem:[%s5976 + $0xd0] sm:$0xff]
        %v6004 = vld [vmem:[%s5976 + $0xd8] sm:$0xff]
        %v6005 = vld [vmem:[%s5976 + $0xe0] sm:$0xff]
        %v6006 = vld [vmem:[%s5976 + $0xe8] sm:$0xff]
        %v6007 = vld [vmem:[%s5976 + $0xf0] sm:$0xff]
        %v6008 = vld [vmem:[%s5976 + $0xf8] sm:$0xff]
        %v6009 = vld [vmem:[%s5976 + $0x100] sm:$0xff]
        %v6010 = vld [vmem:[%s5976 + $0x108] sm:$0xff]
        %v6011 = vld [vmem:[%s5976 + $0x110] sm:$0xff]
        %v6012 = vld [vmem:[%s5976 + $0x118] sm:$0xff]
        %v6013 = vld [vmem:[%s5976 + $0x120] sm:$0xff]
        %v6014 = vld [vmem:[%s5976 + $0x128] sm:$0xff]
        %v6015 = vld [vmem:[%s5976 + $0x130] sm:$0xff]
        %v6016 = vld [vmem:[%s5976 + $0x138] sm:$0xff]
        %v6017 = vld [vmem:[%s5976 + $0x140] sm:$0xff]
        %v6018 = vld [vmem:[%s5976 + $0x148] sm:$0xff]
        %v6019 = vld [vmem:[%s5976 + $0x150] sm:$0xff]
        %v6020 = vld [vmem:[%s5976 + $0x158] sm:$0xff]
        %v6021 = vld [vmem:[%s5976 + $0x160] sm:$0xff]
        %v6022 = vld [vmem:[%s5976 + $0x168] sm:$0xff]
        %v6023 = vld [vmem:[%s5976 + $0x170] sm:$0xff]
        %v6024 = vld [vmem:[%s5976 + $0x178] sm:$0xff]
        %v6025 = vld [vmem:[%s5976 + $0x180] sm:$0xff]
        %v6026 = vld [vmem:[%s5976 + $0x188] sm:$0xff]
        %v6027 = vld [vmem:[%s5976 + $0x190] sm:$0xff]
        %v6028 = vld [vmem:[%s5976 + $0x198] sm:$0xff]
        %v6029 = vld [vmem:[%s5976 + $0x1a0] sm:$0xff]
        %v6030 = vld [vmem:[%s5976 + $0x1a8] sm:$0xff]
        %v6031 = vld [vmem:[%s5976 + $0x1b0] sm:$0xff]
        %v6032 = vld [vmem:[%s5976 + $0x1b8] sm:$0xff]
        %v6033 = vld [vmem:[%s5976 + $0x1c0] sm:$0xff]
        %v6034 = vld [vmem:[%s5976 + $0x1c8] sm:$0xff]
        %v6035 = vld [vmem:[%s5976 + $0x1d0] sm:$0xff]
        %v6036 = vld [vmem:[%s5976 + $0x1d8] sm:$0xff]
        %v6037 = vld [vmem:[%s5976 + $0x1e0] sm:$0xff]
        %v6038 = vld [vmem:[%s5976 + $0x1e8] sm:$0xff]
        %v6039 = vld [vmem:[%s5976 + $0x1f0] sm:$0xff]
        %v6040 = vld [vmem:[%s5976 + $0x1f8] sm:$0xff]
        %v6041 = vld [vmem:[%s5976 + $0x200] sm:$0xff]
        %v6042 = vld [vmem:[%s5976 + $0x208] sm:$0xff]
        %v6043 = vld [vmem:[%s5976 + $0x210] sm:$0xff]
        %v6044 = vld [vmem:[%s5976 + $0x218] sm:$0xff]
        %v6045 = vld [vmem:[%s5976 + $0x220] sm:$0xff]
        %v6046 = vld [vmem:[%s5976 + $0x228] sm:$0xff]
        %v6047 = vld [vmem:[%s5976 + $0x230] sm:$0xff]
        %v6048 = vld [vmem:[%s5976 + $0x238] sm:$0xff]
        %v6049 = vld [vmem:[%s5976 + $0x240] sm:$0xff]
        %v6050 = vld [vmem:[%s5976 + $0x248] sm:$0xff]
        %v6051 = vld [vmem:[%s5976 + $0x250] sm:$0xff]
        %v6052 = vld [vmem:[%s5976 + $0x258] sm:$0xff]
        %v6053 = vld [vmem:[%s5976 + $0x260] sm:$0xff]
        %v6054 = vld [vmem:[%s5976 + $0x268] sm:$0xff]
        %v6055 = vld [vmem:[%s5976 + $0x270] sm:$0xff]
        %v6056 = vld [vmem:[%s5976 + $0x278] sm:$0xff]
        %v6057 = vld [vmem:[%s5976 + $0x280] sm:$0xff]
        %v6058 = vld [vmem:[%s5976 + $0x288] sm:$0xff]
        %v6059 = vld [vmem:[%s5976 + $0x290] sm:$0xff]
        %v6060 = vld [vmem:[%s5976 + $0x298] sm:$0xff]
        %v6061 = vld [vmem:[%s5976 + $0x2a0] sm:$0xff]
        %v6062 = vld [vmem:[%s5976 + $0x2a8] sm:$0xff]
        %v6063 = vld [vmem:[%s5976 + $0x2b0] sm:$0xff]
        %v6064 = vld [vmem:[%s5976 + $0x2b8] sm:$0xff]
        %v6065 = vld [vmem:[%s5976 + $0x2c0] sm:$0xff]
        %v6066 = vld [vmem:[%s5976 + $0x2c8] sm:$0xff]
        %v6067 = vld [vmem:[%s5976 + $0x2d0] sm:$0xff]
        %v6068 = vld [vmem:[%s5976 + $0x2d8] sm:$0xff]
        %v6069 = vld [vmem:[%s5976 + $0x2e0] sm:$0xff]
        %v6070 = vld [vmem:[%s5976 + $0x2e8] sm:$0xff]
        %v6071 = vld [vmem:[%s5976 + $0x2f0] sm:$0xff]
        %v6072 = vld [vmem:[%s5976 + $0x2f8] sm:$0xff]
        %v6073 = vld [vmem:[%s5976 + $0x300] sm:$0xff]
        %v6074 = vld [vmem:[%s5976 + $0x308] sm:$0xff]
        %v6075 = vld [vmem:[%s5976 + $0x310] sm:$0xff]
        %v6076 = vld [vmem:[%s5976 + $0x318] sm:$0xff]
        %v6077 = vld [vmem:[%s5976 + $0x320] sm:$0xff]
        %v6078 = vld [vmem:[%s5976 + $0x328] sm:$0xff]
        %v6079 = vld [vmem:[%s5976 + $0x330] sm:$0xff]
        %v6080 = vld [vmem:[%s5976 + $0x338] sm:$0xff]
        %v6081 = vld [vmem:[%s5976 + $0x340] sm:$0xff]
        %v6082 = vld [vmem:[%s5976 + $0x348] sm:$0xff]
        %v6083 = vld [vmem:[%s5976 + $0x350] sm:$0xff]
        %v6084 = vld [vmem:[%s5976 + $0x358] sm:$0xff]
        %v6085 = vld [vmem:[%s5976 + $0x360] sm:$0xff]
        %v6086 = vld [vmem:[%s5976 + $0x368] sm:$0xff]
        %v6087 = vld [vmem:[%s5976 + $0x370] sm:$0xff]
        %v6088 = vld [vmem:[%s5976 + $0x378] sm:$0xff]
        %v6089 = vld [vmem:[%s5976 + $0x380] sm:$0xff]
        %v6090 = vld [vmem:[%s5976 + $0x388] sm:$0xff]
        %v6091 = vld [vmem:[%s5976 + $0x390] sm:$0xff]
        %v6092 = vld [vmem:[%s5976 + $0x398] sm:$0xff]
        %v6093 = vld [vmem:[%s5976 + $0x3a0] sm:$0xff]
        %v6094 = vld [vmem:[%s5976 + $0x3a8] sm:$0xff]
        %v6095 = vld [vmem:[%s5976 + $0x3b0] sm:$0xff]
        %v6096 = vld [vmem:[%s5976 + $0x3b8] sm:$0xff]
        %v6097 = vld [vmem:[%s5976 + $0x3c0] sm:$0xff]
        %v6098 = vld [vmem:[%s5976 + $0x3c8] sm:$0xff]
        %v6099 = vld [vmem:[%s5976 + $0x3d0] sm:$0xff]
        %v6100 = vld [vmem:[%s5976 + $0x3d8] sm:$0xff]
        %v6101 = vld [vmem:[%s5976 + $0x3e0] sm:$0xff]
        %v6102 = vld [vmem:[%s5976 + $0x3e8] sm:$0xff]
        %v6103 = vld [vmem:[%s5976 + $0x3f0] sm:$0xff]
        %v6104 = vld [vmem:[%s5976 + $0x3f8] sm:$0xff]
        %v6105 = vld [vmem:[%s5976 + $0x400] sm:$0xff]
        %v6106 = vld [vmem:[%s5976 + $0x408] sm:$0xff]
        %v6107 = vld [vmem:[%s5976 + $0x410] sm:$0xff]
        %v6108 = vld [vmem:[%s5976 + $0x418] sm:$0xff]
        %v6109 = vld [vmem:[%s5976 + $0x420] sm:$0xff]
        %v6110 = vld [vmem:[%s5976 + $0x428] sm:$0xff]
        %v6111 = vld [vmem:[%s5976 + $0x430] sm:$0xff]
        %v6112 = vld [vmem:[%s5976 + $0x438] sm:$0xff]
        %v6113 = vld [vmem:[%s5976 + $0x440] sm:$0xff]
        %v6114 = vld [vmem:[%s5976 + $0x448] sm:$0xff]
        %v6115 = vld [vmem:[%s5976 + $0x450] sm:$0xff]
        %v6116 = vld [vmem:[%s5976 + $0x458] sm:$0xff]
        %v6117 = vld [vmem:[%s5976 + $0x460] sm:$0xff]
        %v6118 = vld [vmem:[%s5976 + $0x468] sm:$0xff]
        %v6119 = vld [vmem:[%s5976 + $0x470] sm:$0xff]
        %v6120 = vld [vmem:[%s5976 + $0x478] sm:$0xff]
        %v6121 = vld [vmem:[%s5976 + $0x480] sm:$0xff]
        %v6122 = vld [vmem:[%s5976 + $0x488] sm:$0xff]
        %v6123 = vld [vmem:[%s5976 + $0x490] sm:$0xff]
        %v6124 = vld [vmem:[%s5976 + $0x498] sm:$0xff]
        %v6125 = vld [vmem:[%s5976 + $0x4a0] sm:$0xff]
        %v6126 = vld [vmem:[%s5976 + $0x4a8] sm:$0xff]
        %v6127 = vld [vmem:[%s5976 + $0x4b0] sm:$0xff]
        %v6128 = vld [vmem:[%s5976 + $0x4b8] sm:$0xff]
        %v6129 = vld [vmem:[%s5976 + $0x4c0] sm:$0xff]
        %v6130 = vld [vmem:[%s5976 + $0x4c8] sm:$0xff]
        %v6131 = vld [vmem:[%s5976 + $0x4d0] sm:$0xff]
        %v6132 = vld [vmem:[%s5976 + $0x4d8] sm:$0xff]
        %v6133 = vld [vmem:[%s5976 + $0x4e0] sm:$0xff]
        %v6134 = vld [vmem:[%s5976 + $0x4e8] sm:$0xff]
        %v6135 = vld [vmem:[%s5976 + $0x4f0] sm:$0xff]
        %v6136 = vld [vmem:[%s5976 + $0x4f8] sm:$0xff]
        %v6137 = vld [vmem:[%s5976 + $0x500] sm:$0xff]
        %v6138 = vld [vmem:[%s5976 + $0x508] sm:$0xff]
        %v6139 = vld [vmem:[%s5976 + $0x510] sm:$0xff]
        %v6140 = vld [vmem:[%s5976 + $0x518] sm:$0xff]
        %v6141 = vld [vmem:[%s5976 + $0x520] sm:$0xff]
        %v6142 = vld [vmem:[%s5976 + $0x528] sm:$0xff]
        %v6143 = vld [vmem:[%s5976 + $0x530] sm:$0xff]
        %v6144 = vld [vmem:[%s5976 + $0x538] sm:$0xff]
        %v6145 = vld [vmem:[%s5976 + $0x540] sm:$0xff]
        %v6146 = vld [vmem:[%s5976 + $0x548] sm:$0xff]
        %v6147 = vld [vmem:[%s5976 + $0x550] sm:$0xff]
        %v6148 = vld [vmem:[%s5976 + $0x558] sm:$0xff]
        %v6149 = vld [vmem:[%s5976 + $0x560] sm:$0xff]
        %v6150 = vld [vmem:[%s5976 + $0x568] sm:$0xff]
        %v6151 = vld [vmem:[%s5976 + $0x570] sm:$0xff]
        %v6152 = vld [vmem:[%s5976 + $0x578] sm:$0xff]
        %v6153 = vld [vmem:[%s5976 + $0x580] sm:$0xff]
        %v6154 = vld [vmem:[%s5976 + $0x588] sm:$0xff]
        %v6155 = vld [vmem:[%s5976 + $0x590] sm:$0xff]
        %v6156 = vld [vmem:[%s5976 + $0x598] sm:$0xff]
        %v6157 = vld [vmem:[%s5976 + $0x5a0] sm:$0xff]
        %v6158 = vld [vmem:[%s5976 + $0x5a8] sm:$0xff]
        %v6159 = vld [vmem:[%s5976 + $0x5b0] sm:$0xff]
        %v6160 = vld [vmem:[%s5976 + $0x5b8] sm:$0xff]
        %v6161 = vld [vmem:[%s5976 + $0x5c0] sm:$0xff]
        %v6162 = vld [vmem:[%s5976 + $0x5c8] sm:$0xff]
        %v6163 = vld [vmem:[%s5976 + $0x5d0] sm:$0xff]
        %v6164 = vld [vmem:[%s5976 + $0x5d8] sm:$0xff]
        %v6165 = vld [vmem:[%s5976 + $0x5e0] sm:$0xff]
        %v6166 = vld [vmem:[%s5976 + $0x5e8] sm:$0xff]
        %v6167 = vld [vmem:[%s5976 + $0x5f0] sm:$0xff]
        %v6168 = vld [vmem:[%s5976 + $0x5f8] sm:$0xff]
        %s6169 = scalar_lea.vmem %s1, 432
        %v6170 = vld [vmem:[%s6169] sm:$0xff]
        %v6171 = vld [vmem:[%s6169 + $0x8] sm:$0xff]
        %v6172 = vld [vmem:[%s6169 + $0x10] sm:$0xff]
        %v6173 = vld [vmem:[%s6169 + $0x18] sm:$0xff]
        %v6174 = vld [vmem:[%s6169 + $0x20] sm:$0xff]
        %v6175 = vld [vmem:[%s6169 + $0x28] sm:$0xff]
        %v6176 = vld [vmem:[%s6169 + $0x30] sm:$0xff]
        %v6177 = vld [vmem:[%s6169 + $0x38] sm:$0xff]
        %v6178 = vld [vmem:[%s6169 + $0x40] sm:$0xff]
        %v6179 = vld [vmem:[%s6169 + $0x48] sm:$0xff]
        %v6180 = vld [vmem:[%s6169 + $0x50] sm:$0xff]
        %v6181 = vld [vmem:[%s6169 + $0x58] sm:$0xff]
        %v6182 = vld [vmem:[%s6169 + $0x60] sm:$0xff]
        %v6183 = vld [vmem:[%s6169 + $0x68] sm:$0xff]
        %v6184 = vld [vmem:[%s6169 + $0x70] sm:$0xff]
        %v6185 = vld [vmem:[%s6169 + $0x78] sm:$0xff]
        %v6186 = vld [vmem:[%s6169 + $0x80] sm:$0xff]
        %v6187 = vld [vmem:[%s6169 + $0x88] sm:$0xff]
        %v6206 = vunpack.c.l.b16 %v6170
        %v6207 = vunpack.c.h.b16 %v6170
        %v6208 = vunpack.c.l.b16 %v6171
        %v6209 = vunpack.c.h.b16 %v6171
        %v6210 = vunpack.c.l.b16 %v6172
        %v6211 = vunpack.c.h.b16 %v6172
        %v6212 = vunpack.c.l.b16 %v6173
        %v6213 = vunpack.c.h.b16 %v6173
        %v6214 = vunpack.c.l.b16 %v6174
        %v6215 = vunpack.c.h.b16 %v6174
        %v6216 = vunpack.c.l.b16 %v6175
        %v6217 = vunpack.c.h.b16 %v6175
        %v6218 = vunpack.c.l.b16 %v6176
        %v6219 = vunpack.c.h.b16 %v6176
        %v6220 = vunpack.c.l.b16 %v6177
        %v6221 = vunpack.c.h.b16 %v6177
        %v6222 = vunpack.c.l.b16 %v6178
        %v6223 = vunpack.c.h.b16 %v6178
        %v6224 = vunpack.c.l.b16 %v6179
        %v6225 = vunpack.c.h.b16 %v6179
        %v6226 = vunpack.c.l.b16 %v6180
        %v6227 = vunpack.c.h.b16 %v6180
        %v6228 = vunpack.c.l.b16 %v6181
        %v6229 = vunpack.c.h.b16 %v6181
        %v6230 = vunpack.c.l.b16 %v6182
        %v6231 = vunpack.c.h.b16 %v6182
        %v6232 = vunpack.c.l.b16 %v6183
        %v6233 = vunpack.c.h.b16 %v6183
        %v6234 = vunpack.c.l.b16 %v6184
        %v6235 = vunpack.c.h.b16 %v6184
        %v6236 = vunpack.c.l.b16 %v6185
        %v6237 = vunpack.c.h.b16 %v6185
        %v6238 = vunpack.c.l.b16 %v6186
        %v6239 = vunpack.c.h.b16 %v6186
        %v6240 = vunpack.c.l.b16 %v6187
        %v6241 = vunpack.c.h.b16 %v6187
        %v6242 = vpack.c.b16 %v6212, %v6206
        %v6243 = vpack.c.b16 %v6213, %v6207
        %v6244 = vpack.c.b16 %v6214, %v6208
        %v6245 = vpack.c.b16 %v6215, %v6209
        %v6246 = vpack.c.b16 %v6216, %v6210
        %v6247 = vpack.c.b16 %v6217, %v6211
        %v6248 = vpack.c.b16 %v6224, %v6218
        %v6249 = vpack.c.b16 %v6225, %v6219
        %v6250 = vpack.c.b16 %v6226, %v6220
        %v6251 = vpack.c.b16 %v6227, %v6221
        %v6252 = vpack.c.b16 %v6228, %v6222
        %v6253 = vpack.c.b16 %v6229, %v6223
        %v6254 = vpack.c.b16 %v6236, %v6230
        %v6255 = vpack.c.b16 %v6237, %v6231
        %v6256 = vpack.c.b16 %v6238, %v6232
        %v6257 = vpack.c.b16 %v6239, %v6233
        %v6258 = vpack.c.b16 %v6240, %v6234
        %v6259 = vpack.c.b16 %v6241, %v6235
        %v6467 = vunpack.c.l.b16 %v5977
        %v6468 = vunpack.c.h.b16 %v5977
        %v6469 = vunpack.c.l.b16 %v5978
        %v6470 = vunpack.c.h.b16 %v5978
        %v6471 = vunpack.c.l.b16 %v5979
        %v6472 = vunpack.c.h.b16 %v5979
        %v6473 = vunpack.c.l.b16 %v5980
        %v6474 = vunpack.c.h.b16 %v5980
        %v6475 = vunpack.c.l.b16 %v5981
        %v6476 = vunpack.c.h.b16 %v5981
        %v6477 = vunpack.c.l.b16 %v5982
        %v6478 = vunpack.c.h.b16 %v5982
        %v6479 = vunpack.c.l.b16 %v5983
        %v6480 = vunpack.c.h.b16 %v5983
        %v6481 = vunpack.c.l.b16 %v5984
        %v6482 = vunpack.c.h.b16 %v5984
        %v6483 = vunpack.c.l.b16 %v5985
        %v6484 = vunpack.c.h.b16 %v5985
        %v6485 = vunpack.c.l.b16 %v5986
        %v6486 = vunpack.c.h.b16 %v5986
        %v6487 = vunpack.c.l.b16 %v5987
        %v6488 = vunpack.c.h.b16 %v5987
        %v6489 = vunpack.c.l.b16 %v5988
        %v6490 = vunpack.c.h.b16 %v5988
        %v6491 = vunpack.c.l.b16 %v5989
        %v6492 = vunpack.c.h.b16 %v5989
        %v6493 = vunpack.c.l.b16 %v5990
        %v6494 = vunpack.c.h.b16 %v5990
        %v6495 = vunpack.c.l.b16 %v5991
        %v6496 = vunpack.c.h.b16 %v5991
        %v6497 = vunpack.c.l.b16 %v5992
        %v6498 = vunpack.c.h.b16 %v5992
        %v6499 = vunpack.c.l.b16 %v5993
        %v6500 = vunpack.c.h.b16 %v5993
        %v6501 = vunpack.c.l.b16 %v5994
        %v6502 = vunpack.c.h.b16 %v5994
        %v6503 = vunpack.c.l.b16 %v5995
        %v6504 = vunpack.c.h.b16 %v5995
        %v6505 = vunpack.c.l.b16 %v5996
        %v6506 = vunpack.c.h.b16 %v5996
        %v6507 = vunpack.c.l.b16 %v5997
        %v6508 = vunpack.c.h.b16 %v5997
        %v6509 = vunpack.c.l.b16 %v5998
        %v6510 = vunpack.c.h.b16 %v5998
        %v6511 = vunpack.c.l.b16 %v5999
        %v6512 = vunpack.c.h.b16 %v5999
        %v6513 = vunpack.c.l.b16 %v6000
        %v6514 = vunpack.c.h.b16 %v6000
        %v6515 = vunpack.c.l.b16 %v6001
        %v6516 = vunpack.c.h.b16 %v6001
        %v6517 = vunpack.c.l.b16 %v6002
        %v6518 = vunpack.c.h.b16 %v6002
        %v6519 = vunpack.c.l.b16 %v6003
        %v6520 = vunpack.c.h.b16 %v6003
        %v6521 = vunpack.c.l.b16 %v6004
        %v6522 = vunpack.c.h.b16 %v6004
        %v6523 = vunpack.c.l.b16 %v6005
        %v6524 = vunpack.c.h.b16 %v6005
        %v6525 = vunpack.c.l.b16 %v6006
        %v6526 = vunpack.c.h.b16 %v6006
        %v6527 = vunpack.c.l.b16 %v6007
        %v6528 = vunpack.c.h.b16 %v6007
        %v6529 = vunpack.c.l.b16 %v6008
        %v6530 = vunpack.c.h.b16 %v6008
        %v6531 = vunpack.c.l.b16 %v6009
        %v6532 = vunpack.c.h.b16 %v6009
        %v6533 = vunpack.c.l.b16 %v6010
        %v6534 = vunpack.c.h.b16 %v6010
        %v6535 = vunpack.c.l.b16 %v6011
        %v6536 = vunpack.c.h.b16 %v6011
        %v6537 = vunpack.c.l.b16 %v6012
        %v6538 = vunpack.c.h.b16 %v6012
        %v6539 = vunpack.c.l.b16 %v6013
        %v6540 = vunpack.c.h.b16 %v6013
        %v6541 = vunpack.c.l.b16 %v6014
        %v6542 = vunpack.c.h.b16 %v6014
        %v6543 = vunpack.c.l.b16 %v6015
        %v6544 = vunpack.c.h.b16 %v6015
        %v6545 = vunpack.c.l.b16 %v6016
        %v6546 = vunpack.c.h.b16 %v6016
        %v6547 = vunpack.c.l.b16 %v6017
        %v6548 = vunpack.c.h.b16 %v6017
        %v6549 = vunpack.c.l.b16 %v6018
        %v6550 = vunpack.c.h.b16 %v6018
        %v6551 = vunpack.c.l.b16 %v6019
        %v6552 = vunpack.c.h.b16 %v6019
        %v6553 = vunpack.c.l.b16 %v6020
        %v6554 = vunpack.c.h.b16 %v6020
        %v6555 = vunpack.c.l.b16 %v6021
        %v6556 = vunpack.c.h.b16 %v6021
        %v6557 = vunpack.c.l.b16 %v6022
        %v6558 = vunpack.c.h.b16 %v6022
        %v6559 = vunpack.c.l.b16 %v6023
        %v6560 = vunpack.c.h.b16 %v6023
        %v6561 = vunpack.c.l.b16 %v6024
        %v6562 = vunpack.c.h.b16 %v6024
        %v6563 = vunpack.c.l.b16 %v6025
        %v6564 = vunpack.c.h.b16 %v6025
        %v6565 = vunpack.c.l.b16 %v6026
        %v6566 = vunpack.c.h.b16 %v6026
        %v6567 = vunpack.c.l.b16 %v6027
        %v6568 = vunpack.c.h.b16 %v6027
        %v6569 = vunpack.c.l.b16 %v6028
        %v6570 = vunpack.c.h.b16 %v6028
        %v6571 = vunpack.c.l.b16 %v6029
        %v6572 = vunpack.c.h.b16 %v6029
        %v6573 = vunpack.c.l.b16 %v6030
        %v6574 = vunpack.c.h.b16 %v6030
        %v6575 = vunpack.c.l.b16 %v6031
        %v6576 = vunpack.c.h.b16 %v6031
        %v6577 = vunpack.c.l.b16 %v6032
        %v6578 = vunpack.c.h.b16 %v6032
        %v6579 = vunpack.c.l.b16 %v6033
        %v6580 = vunpack.c.h.b16 %v6033
        %v6581 = vunpack.c.l.b16 %v6034
        %v6582 = vunpack.c.h.b16 %v6034
        %v6583 = vunpack.c.l.b16 %v6035
        %v6584 = vunpack.c.h.b16 %v6035
        %v6585 = vunpack.c.l.b16 %v6036
        %v6586 = vunpack.c.h.b16 %v6036
        %v6587 = vunpack.c.l.b16 %v6037
        %v6588 = vunpack.c.h.b16 %v6037
        %v6589 = vunpack.c.l.b16 %v6038
        %v6590 = vunpack.c.h.b16 %v6038
        %v6591 = vunpack.c.l.b16 %v6039
        %v6592 = vunpack.c.h.b16 %v6039
        %v6593 = vunpack.c.l.b16 %v6040
        %v6594 = vunpack.c.h.b16 %v6040
        %v6595 = vunpack.c.l.b16 %v6041
        %v6596 = vunpack.c.h.b16 %v6041
        %v6597 = vunpack.c.l.b16 %v6042
        %v6598 = vunpack.c.h.b16 %v6042
        %v6599 = vunpack.c.l.b16 %v6043
        %v6600 = vunpack.c.h.b16 %v6043
        %v6601 = vunpack.c.l.b16 %v6044
        %v6602 = vunpack.c.h.b16 %v6044
        %v6603 = vunpack.c.l.b16 %v6045
        %v6604 = vunpack.c.h.b16 %v6045
        %v6605 = vunpack.c.l.b16 %v6046
        %v6606 = vunpack.c.h.b16 %v6046
        %v6607 = vunpack.c.l.b16 %v6047
        %v6608 = vunpack.c.h.b16 %v6047
        %v6609 = vunpack.c.l.b16 %v6048
        %v6610 = vunpack.c.h.b16 %v6048
        %v6611 = vunpack.c.l.b16 %v6049
        %v6612 = vunpack.c.h.b16 %v6049
        %v6613 = vunpack.c.l.b16 %v6050
        %v6614 = vunpack.c.h.b16 %v6050
        %v6615 = vunpack.c.l.b16 %v6051
        %v6616 = vunpack.c.h.b16 %v6051
        %v6617 = vunpack.c.l.b16 %v6052
        %v6618 = vunpack.c.h.b16 %v6052
        %v6619 = vunpack.c.l.b16 %v6053
        %v6620 = vunpack.c.h.b16 %v6053
        %v6621 = vunpack.c.l.b16 %v6054
        %v6622 = vunpack.c.h.b16 %v6054
        %v6623 = vunpack.c.l.b16 %v6055
        %v6624 = vunpack.c.h.b16 %v6055
        %v6625 = vunpack.c.l.b16 %v6056
        %v6626 = vunpack.c.h.b16 %v6056
        %v6627 = vunpack.c.l.b16 %v6057
        %v6628 = vunpack.c.h.b16 %v6057
        %v6629 = vunpack.c.l.b16 %v6058
        %v6630 = vunpack.c.h.b16 %v6058
        %v6631 = vunpack.c.l.b16 %v6059
        %v6632 = vunpack.c.h.b16 %v6059
        %v6633 = vunpack.c.l.b16 %v6060
        %v6634 = vunpack.c.h.b16 %v6060
        %v6635 = vunpack.c.l.b16 %v6061
        %v6636 = vunpack.c.h.b16 %v6061
        %v6637 = vunpack.c.l.b16 %v6062
        %v6638 = vunpack.c.h.b16 %v6062
        %v6639 = vunpack.c.l.b16 %v6063
        %v6640 = vunpack.c.h.b16 %v6063
        %v6641 = vunpack.c.l.b16 %v6064
        %v6642 = vunpack.c.h.b16 %v6064
        %v6643 = vunpack.c.l.b16 %v6065
        %v6644 = vunpack.c.h.b16 %v6065
        %v6645 = vunpack.c.l.b16 %v6066
        %v6646 = vunpack.c.h.b16 %v6066
        %v6647 = vunpack.c.l.b16 %v6067
        %v6648 = vunpack.c.h.b16 %v6067
        %v6649 = vunpack.c.l.b16 %v6068
        %v6650 = vunpack.c.h.b16 %v6068
        %v6651 = vunpack.c.l.b16 %v6069
        %v6652 = vunpack.c.h.b16 %v6069
        %v6653 = vunpack.c.l.b16 %v6070
        %v6654 = vunpack.c.h.b16 %v6070
        %v6655 = vunpack.c.l.b16 %v6071
        %v6656 = vunpack.c.h.b16 %v6071
        %v6657 = vunpack.c.l.b16 %v6072
        %v6658 = vunpack.c.h.b16 %v6072
        %v6659 = vunpack.c.l.b16 %v6073
        %v6660 = vunpack.c.h.b16 %v6073
        %v6661 = vunpack.c.l.b16 %v6074
        %v6662 = vunpack.c.h.b16 %v6074
        %v6663 = vunpack.c.l.b16 %v6075
        %v6664 = vunpack.c.h.b16 %v6075
        %v6665 = vunpack.c.l.b16 %v6076
        %v6666 = vunpack.c.h.b16 %v6076
        %v6667 = vunpack.c.l.b16 %v6077
        %v6668 = vunpack.c.h.b16 %v6077
        %v6669 = vunpack.c.l.b16 %v6078
        %v6670 = vunpack.c.h.b16 %v6078
        %v6671 = vunpack.c.l.b16 %v6079
        %v6672 = vunpack.c.h.b16 %v6079
        %v6673 = vunpack.c.l.b16 %v6080
        %v6674 = vunpack.c.h.b16 %v6080
        %v6675 = vunpack.c.l.b16 %v6081
        %v6676 = vunpack.c.h.b16 %v6081
        %v6677 = vunpack.c.l.b16 %v6082
        %v6678 = vunpack.c.h.b16 %v6082
        %v6679 = vunpack.c.l.b16 %v6083
        %v6680 = vunpack.c.h.b16 %v6083
        %v6681 = vunpack.c.l.b16 %v6084
        %v6682 = vunpack.c.h.b16 %v6084
        %v6683 = vunpack.c.l.b16 %v6085
        %v6684 = vunpack.c.h.b16 %v6085
        %v6685 = vunpack.c.l.b16 %v6086
        %v6686 = vunpack.c.h.b16 %v6086
        %v6687 = vunpack.c.l.b16 %v6087
        %v6688 = vunpack.c.h.b16 %v6087
        %v6689 = vunpack.c.l.b16 %v6088
        %v6690 = vunpack.c.h.b16 %v6088
        %v6691 = vunpack.c.l.b16 %v6089
        %v6692 = vunpack.c.h.b16 %v6089
        %v6693 = vunpack.c.l.b16 %v6090
        %v6694 = vunpack.c.h.b16 %v6090
        %v6695 = vunpack.c.l.b16 %v6091
        %v6696 = vunpack.c.h.b16 %v6091
        %v6697 = vunpack.c.l.b16 %v6092
        %v6698 = vunpack.c.h.b16 %v6092
        %v6699 = vunpack.c.l.b16 %v6093
        %v6700 = vunpack.c.h.b16 %v6093
        %v6701 = vunpack.c.l.b16 %v6094
        %v6702 = vunpack.c.h.b16 %v6094
        %v6703 = vunpack.c.l.b16 %v6095
        %v6704 = vunpack.c.h.b16 %v6095
        %v6705 = vunpack.c.l.b16 %v6096
        %v6706 = vunpack.c.h.b16 %v6096
        %v6707 = vunpack.c.l.b16 %v6097
        %v6708 = vunpack.c.h.b16 %v6097
        %v6709 = vunpack.c.l.b16 %v6098
        %v6710 = vunpack.c.h.b16 %v6098
        %v6711 = vunpack.c.l.b16 %v6099
        %v6712 = vunpack.c.h.b16 %v6099
        %v6713 = vunpack.c.l.b16 %v6100
        %v6714 = vunpack.c.h.b16 %v6100
        %v6715 = vunpack.c.l.b16 %v6101
        %v6716 = vunpack.c.h.b16 %v6101
        %v6717 = vunpack.c.l.b16 %v6102
        %v6718 = vunpack.c.h.b16 %v6102
        %v6719 = vunpack.c.l.b16 %v6103
        %v6720 = vunpack.c.h.b16 %v6103
        %v6721 = vunpack.c.l.b16 %v6104
        %v6722 = vunpack.c.h.b16 %v6104
        %v6723 = vunpack.c.l.b16 %v6105
        %v6724 = vunpack.c.h.b16 %v6105
        %v6725 = vunpack.c.l.b16 %v6106
        %v6726 = vunpack.c.h.b16 %v6106
        %v6727 = vunpack.c.l.b16 %v6107
        %v6728 = vunpack.c.h.b16 %v6107
        %v6729 = vunpack.c.l.b16 %v6108
        %v6730 = vunpack.c.h.b16 %v6108
        %v6731 = vunpack.c.l.b16 %v6109
        %v6732 = vunpack.c.h.b16 %v6109
        %v6733 = vunpack.c.l.b16 %v6110
        %v6734 = vunpack.c.h.b16 %v6110
        %v6735 = vunpack.c.l.b16 %v6111
        %v6736 = vunpack.c.h.b16 %v6111
        %v6737 = vunpack.c.l.b16 %v6112
        %v6738 = vunpack.c.h.b16 %v6112
        %v6739 = vunpack.c.l.b16 %v6113
        %v6740 = vunpack.c.h.b16 %v6113
        %v6741 = vunpack.c.l.b16 %v6114
        %v6742 = vunpack.c.h.b16 %v6114
        %v6743 = vunpack.c.l.b16 %v6115
        %v6744 = vunpack.c.h.b16 %v6115
        %v6745 = vunpack.c.l.b16 %v6116
        %v6746 = vunpack.c.h.b16 %v6116
        %v6747 = vunpack.c.l.b16 %v6117
        %v6748 = vunpack.c.h.b16 %v6117
        %v6749 = vunpack.c.l.b16 %v6118
        %v6750 = vunpack.c.h.b16 %v6118
        %v6751 = vunpack.c.l.b16 %v6119
        %v6752 = vunpack.c.h.b16 %v6119
        %v6753 = vunpack.c.l.b16 %v6120
        %v6754 = vunpack.c.h.b16 %v6120
        %v6755 = vunpack.c.l.b16 %v6121
        %v6756 = vunpack.c.h.b16 %v6121
        %v6757 = vunpack.c.l.b16 %v6122
        %v6758 = vunpack.c.h.b16 %v6122
        %v6759 = vunpack.c.l.b16 %v6123
        %v6760 = vunpack.c.h.b16 %v6123
        %v6761 = vunpack.c.l.b16 %v6124
        %v6762 = vunpack.c.h.b16 %v6124
        %v6763 = vunpack.c.l.b16 %v6125
        %v6764 = vunpack.c.h.b16 %v6125
        %v6765 = vunpack.c.l.b16 %v6126
        %v6766 = vunpack.c.h.b16 %v6126
        %v6767 = vunpack.c.l.b16 %v6127
        %v6768 = vunpack.c.h.b16 %v6127
        %v6769 = vunpack.c.l.b16 %v6128
        %v6770 = vunpack.c.h.b16 %v6128
        %v6771 = vunpack.c.l.b16 %v6129
        %v6772 = vunpack.c.h.b16 %v6129
        %v6773 = vunpack.c.l.b16 %v6130
        %v6774 = vunpack.c.h.b16 %v6130
        %v6775 = vunpack.c.l.b16 %v6131
        %v6776 = vunpack.c.h.b16 %v6131
        %v6777 = vunpack.c.l.b16 %v6132
        %v6778 = vunpack.c.h.b16 %v6132
        %v6779 = vunpack.c.l.b16 %v6133
        %v6780 = vunpack.c.h.b16 %v6133
        %v6781 = vunpack.c.l.b16 %v6134
        %v6782 = vunpack.c.h.b16 %v6134
        %v6783 = vunpack.c.l.b16 %v6135
        %v6784 = vunpack.c.h.b16 %v6135
        %v6785 = vunpack.c.l.b16 %v6136
        %v6786 = vunpack.c.h.b16 %v6136
        %v6787 = vunpack.c.l.b16 %v6137
        %v6788 = vunpack.c.h.b16 %v6137
        %v6789 = vunpack.c.l.b16 %v6138
        %v6790 = vunpack.c.h.b16 %v6138
        %v6791 = vunpack.c.l.b16 %v6139
        %v6792 = vunpack.c.h.b16 %v6139
        %v6793 = vunpack.c.l.b16 %v6140
        %v6794 = vunpack.c.h.b16 %v6140
        %v6795 = vunpack.c.l.b16 %v6141
        %v6796 = vunpack.c.h.b16 %v6141
        %v6797 = vunpack.c.l.b16 %v6142
        %v6798 = vunpack.c.h.b16 %v6142
        %v6799 = vunpack.c.l.b16 %v6143
        %v6800 = vunpack.c.h.b16 %v6143
        %v6801 = vunpack.c.l.b16 %v6144
        %v6802 = vunpack.c.h.b16 %v6144
        %v6803 = vunpack.c.l.b16 %v6145
        %v6804 = vunpack.c.h.b16 %v6145
        %v6805 = vunpack.c.l.b16 %v6146
        %v6806 = vunpack.c.h.b16 %v6146
        %v6807 = vunpack.c.l.b16 %v6147
        %v6808 = vunpack.c.h.b16 %v6147
        %v6809 = vunpack.c.l.b16 %v6148
        %v6810 = vunpack.c.h.b16 %v6148
        %v6811 = vunpack.c.l.b16 %v6149
        %v6812 = vunpack.c.h.b16 %v6149
        %v6813 = vunpack.c.l.b16 %v6150
        %v6814 = vunpack.c.h.b16 %v6150
        %v6815 = vunpack.c.l.b16 %v6151
        %v6816 = vunpack.c.h.b16 %v6151
        %v6817 = vunpack.c.l.b16 %v6152
        %v6818 = vunpack.c.h.b16 %v6152
        %v6819 = vunpack.c.l.b16 %v6153
        %v6820 = vunpack.c.h.b16 %v6153
        %v6821 = vunpack.c.l.b16 %v6154
        %v6822 = vunpack.c.h.b16 %v6154
        %v6823 = vunpack.c.l.b16 %v6155
        %v6824 = vunpack.c.h.b16 %v6155
        %v6825 = vunpack.c.l.b16 %v6156
        %v6826 = vunpack.c.h.b16 %v6156
        %v6827 = vunpack.c.l.b16 %v6157
        %v6828 = vunpack.c.h.b16 %v6157
        %v6829 = vunpack.c.l.b16 %v6158
        %v6830 = vunpack.c.h.b16 %v6158
        %v6831 = vunpack.c.l.b16 %v6159
        %v6832 = vunpack.c.h.b16 %v6159
        %v6833 = vunpack.c.l.b16 %v6160
        %v6834 = vunpack.c.h.b16 %v6160
        %v6835 = vunpack.c.l.b16 %v6161
        %v6836 = vunpack.c.h.b16 %v6161
        %v6837 = vunpack.c.l.b16 %v6162
        %v6838 = vunpack.c.h.b16 %v6162
        %v6839 = vunpack.c.l.b16 %v6163
        %v6840 = vunpack.c.h.b16 %v6163
        %v6841 = vunpack.c.l.b16 %v6164
        %v6842 = vunpack.c.h.b16 %v6164
        %v6843 = vunpack.c.l.b16 %v6165
        %v6844 = vunpack.c.h.b16 %v6165
        %v6845 = vunpack.c.l.b16 %v6166
        %v6846 = vunpack.c.h.b16 %v6166
        %v6847 = vunpack.c.l.b16 %v6167
        %v6848 = vunpack.c.h.b16 %v6167
        %v6849 = vunpack.c.l.b16 %v6168
        %v6850 = vunpack.c.h.b16 %v6168
        %v6851 = vpack.c.b16 %v6473, %v6467
        %v6852 = vpack.c.b16 %v6474, %v6468
        %v6853 = vpack.c.b16 %v6475, %v6469
        %v6854 = vpack.c.b16 %v6476, %v6470
        %v6855 = vpack.c.b16 %v6477, %v6471
        %v6856 = vpack.c.b16 %v6478, %v6472
        %v6857 = vpack.c.b16 %v6485, %v6479
        %v6858 = vpack.c.b16 %v6486, %v6480
        %v6859 = vpack.c.b16 %v6487, %v6481
        %v6860 = vpack.c.b16 %v6488, %v6482
        %v6861 = vpack.c.b16 %v6489, %v6483
        %v6862 = vpack.c.b16 %v6490, %v6484
        %v6863 = vpack.c.b16 %v6497, %v6491
        %v6864 = vpack.c.b16 %v6498, %v6492
        %v6865 = vpack.c.b16 %v6499, %v6493
        %v6866 = vpack.c.b16 %v6500, %v6494
        %v6867 = vpack.c.b16 %v6501, %v6495
        %v6868 = vpack.c.b16 %v6502, %v6496
        %v6869 = vpack.c.b16 %v6509, %v6503
        %v6870 = vpack.c.b16 %v6510, %v6504
        %v6871 = vpack.c.b16 %v6511, %v6505
        %v6872 = vpack.c.b16 %v6512, %v6506
        %v6873 = vpack.c.b16 %v6513, %v6507
        %v6874 = vpack.c.b16 %v6514, %v6508
        %v6875 = vpack.c.b16 %v6521, %v6515
        %v6876 = vpack.c.b16 %v6522, %v6516
        %v6877 = vpack.c.b16 %v6523, %v6517
        %v6878 = vpack.c.b16 %v6524, %v6518
        %v6879 = vpack.c.b16 %v6525, %v6519
        %v6880 = vpack.c.b16 %v6526, %v6520
        %v6881 = vpack.c.b16 %v6533, %v6527
        %v6882 = vpack.c.b16 %v6534, %v6528
        %v6883 = vpack.c.b16 %v6535, %v6529
        %v6884 = vpack.c.b16 %v6536, %v6530
        %v6885 = vpack.c.b16 %v6537, %v6531
        %v6886 = vpack.c.b16 %v6538, %v6532
        %v6887 = vpack.c.b16 %v6545, %v6539
        %v6888 = vpack.c.b16 %v6546, %v6540
        %v6889 = vpack.c.b16 %v6547, %v6541
        %v6890 = vpack.c.b16 %v6548, %v6542
        %v6891 = vpack.c.b16 %v6549, %v6543
        %v6892 = vpack.c.b16 %v6550, %v6544
        %v6893 = vpack.c.b16 %v6557, %v6551
        %v6894 = vpack.c.b16 %v6558, %v6552
        %v6895 = vpack.c.b16 %v6559, %v6553
        %v6896 = vpack.c.b16 %v6560, %v6554
        %v6897 = vpack.c.b16 %v6561, %v6555
        %v6898 = vpack.c.b16 %v6562, %v6556
        %v6899 = vpack.c.b16 %v6569, %v6563
        %v6900 = vpack.c.b16 %v6570, %v6564
        %v6901 = vpack.c.b16 %v6571, %v6565
        %v6902 = vpack.c.b16 %v6572, %v6566
        %v6903 = vpack.c.b16 %v6573, %v6567
        %v6904 = vpack.c.b16 %v6574, %v6568
        %v6905 = vpack.c.b16 %v6581, %v6575
        %v6906 = vpack.c.b16 %v6582, %v6576
        %v6907 = vpack.c.b16 %v6583, %v6577
        %v6908 = vpack.c.b16 %v6584, %v6578
        %v6909 = vpack.c.b16 %v6585, %v6579
        %v6910 = vpack.c.b16 %v6586, %v6580
        %v6911 = vpack.c.b16 %v6593, %v6587
        %v6912 = vpack.c.b16 %v6594, %v6588
        %v6913 = vpack.c.b16 %v6595, %v6589
        %v6914 = vpack.c.b16 %v6596, %v6590
        %v6915 = vpack.c.b16 %v6597, %v6591
        %v6916 = vpack.c.b16 %v6598, %v6592
        %v6917 = vpack.c.b16 %v6605, %v6599
        %v6918 = vpack.c.b16 %v6606, %v6600
        %v6919 = vpack.c.b16 %v6607, %v6601
        %v6920 = vpack.c.b16 %v6608, %v6602
        %v6921 = vpack.c.b16 %v6609, %v6603
        %v6922 = vpack.c.b16 %v6610, %v6604
        %v6923 = vpack.c.b16 %v6617, %v6611
        %v6924 = vpack.c.b16 %v6618, %v6612
        %v6925 = vpack.c.b16 %v6619, %v6613
        %v6926 = vpack.c.b16 %v6620, %v6614
        %v6927 = vpack.c.b16 %v6621, %v6615
        %v6928 = vpack.c.b16 %v6622, %v6616
        %v6929 = vpack.c.b16 %v6629, %v6623
        %v6930 = vpack.c.b16 %v6630, %v6624
        %v6931 = vpack.c.b16 %v6631, %v6625
        %v6932 = vpack.c.b16 %v6632, %v6626
        %v6933 = vpack.c.b16 %v6633, %v6627
        %v6934 = vpack.c.b16 %v6634, %v6628
        %v6935 = vpack.c.b16 %v6641, %v6635
        %v6936 = vpack.c.b16 %v6642, %v6636
        %v6937 = vpack.c.b16 %v6643, %v6637
        %v6938 = vpack.c.b16 %v6644, %v6638
        %v6939 = vpack.c.b16 %v6645, %v6639
        %v6940 = vpack.c.b16 %v6646, %v6640
        %v6941 = vpack.c.b16 %v6653, %v6647
        %v6942 = vpack.c.b16 %v6654, %v6648
        %v6943 = vpack.c.b16 %v6655, %v6649
        %v6944 = vpack.c.b16 %v6656, %v6650
        %v6945 = vpack.c.b16 %v6657, %v6651
        %v6946 = vpack.c.b16 %v6658, %v6652
        %v6947 = vpack.c.b16 %v6665, %v6659
        %v6948 = vpack.c.b16 %v6666, %v6660
        %v6949 = vpack.c.b16 %v6667, %v6661
        %v6950 = vpack.c.b16 %v6668, %v6662
        %v6951 = vpack.c.b16 %v6669, %v6663
        %v6952 = vpack.c.b16 %v6670, %v6664
        %v6953 = vpack.c.b16 %v6677, %v6671
        %v6954 = vpack.c.b16 %v6678, %v6672
        %v6955 = vpack.c.b16 %v6679, %v6673
        %v6956 = vpack.c.b16 %v6680, %v6674
        %v6957 = vpack.c.b16 %v6681, %v6675
        %v6958 = vpack.c.b16 %v6682, %v6676
        %v6959 = vpack.c.b16 %v6689, %v6683
        %v6960 = vpack.c.b16 %v6690, %v6684
        %v6961 = vpack.c.b16 %v6691, %v6685
        %v6962 = vpack.c.b16 %v6692, %v6686
        %v6963 = vpack.c.b16 %v6693, %v6687
        %v6964 = vpack.c.b16 %v6694, %v6688
        %v6965 = vpack.c.b16 %v6701, %v6695
        %v6966 = vpack.c.b16 %v6702, %v6696
        %v6967 = vpack.c.b16 %v6703, %v6697
        %v6968 = vpack.c.b16 %v6704, %v6698
        %v6969 = vpack.c.b16 %v6705, %v6699
        %v6970 = vpack.c.b16 %v6706, %v6700
        %v6971 = vpack.c.b16 %v6713, %v6707
        %v6972 = vpack.c.b16 %v6714, %v6708
        %v6973 = vpack.c.b16 %v6715, %v6709
        %v6974 = vpack.c.b16 %v6716, %v6710
        %v6975 = vpack.c.b16 %v6717, %v6711
        %v6976 = vpack.c.b16 %v6718, %v6712
        %v6977 = vpack.c.b16 %v6725, %v6719
        %v6978 = vpack.c.b16 %v6726, %v6720
        %v6979 = vpack.c.b16 %v6727, %v6721
        %v6980 = vpack.c.b16 %v6728, %v6722
        %v6981 = vpack.c.b16 %v6729, %v6723
        %v6982 = vpack.c.b16 %v6730, %v6724
        %v6983 = vpack.c.b16 %v6737, %v6731
        %v6984 = vpack.c.b16 %v6738, %v6732
        %v6985 = vpack.c.b16 %v6739, %v6733
        %v6986 = vpack.c.b16 %v6740, %v6734
        %v6987 = vpack.c.b16 %v6741, %v6735
        %v6988 = vpack.c.b16 %v6742, %v6736
        %v6989 = vpack.c.b16 %v6749, %v6743
        %v6990 = vpack.c.b16 %v6750, %v6744
        %v6991 = vpack.c.b16 %v6751, %v6745
        %v6992 = vpack.c.b16 %v6752, %v6746
        %v6993 = vpack.c.b16 %v6753, %v6747
        %v6994 = vpack.c.b16 %v6754, %v6748
        %v6995 = vpack.c.b16 %v6761, %v6755
        %v6996 = vpack.c.b16 %v6762, %v6756
        %v6997 = vpack.c.b16 %v6763, %v6757
        %v6998 = vpack.c.b16 %v6764, %v6758
        %v6999 = vpack.c.b16 %v6765, %v6759
        %v7000 = vpack.c.b16 %v6766, %v6760
        %v7001 = vpack.c.b16 %v6773, %v6767
        %v7002 = vpack.c.b16 %v6774, %v6768
        %v7003 = vpack.c.b16 %v6775, %v6769
        %v7004 = vpack.c.b16 %v6776, %v6770
        %v7005 = vpack.c.b16 %v6777, %v6771
        %v7006 = vpack.c.b16 %v6778, %v6772
        %v7007 = vpack.c.b16 %v6785, %v6779
        %v7008 = vpack.c.b16 %v6786, %v6780
        %v7009 = vpack.c.b16 %v6787, %v6781
        %v7010 = vpack.c.b16 %v6788, %v6782
        %v7011 = vpack.c.b16 %v6789, %v6783
        %v7012 = vpack.c.b16 %v6790, %v6784
        %v7013 = vpack.c.b16 %v6797, %v6791
        %v7014 = vpack.c.b16 %v6798, %v6792
        %v7015 = vpack.c.b16 %v6799, %v6793
        %v7016 = vpack.c.b16 %v6800, %v6794
        %v7017 = vpack.c.b16 %v6801, %v6795
        %v7018 = vpack.c.b16 %v6802, %v6796
        %v7019 = vpack.c.b16 %v6809, %v6803
        %v7020 = vpack.c.b16 %v6810, %v6804
        %v7021 = vpack.c.b16 %v6811, %v6805
        %v7022 = vpack.c.b16 %v6812, %v6806
        %v7023 = vpack.c.b16 %v6813, %v6807
        %v7024 = vpack.c.b16 %v6814, %v6808
        %v7025 = vpack.c.b16 %v6821, %v6815
        %v7026 = vpack.c.b16 %v6822, %v6816
        %v7027 = vpack.c.b16 %v6823, %v6817
        %v7028 = vpack.c.b16 %v6824, %v6818
        %v7029 = vpack.c.b16 %v6825, %v6819
        %v7030 = vpack.c.b16 %v6826, %v6820
        %v7031 = vpack.c.b16 %v6833, %v6827
        %v7032 = vpack.c.b16 %v6834, %v6828
        %v7033 = vpack.c.b16 %v6835, %v6829
        %v7034 = vpack.c.b16 %v6836, %v6830
        %v7035 = vpack.c.b16 %v6837, %v6831
        %v7036 = vpack.c.b16 %v6838, %v6832
        %v7037 = vpack.c.b16 %v6845, %v6839
        %v7038 = vpack.c.b16 %v6846, %v6840
        %v7039 = vpack.c.b16 %v6847, %v6841
        %v7040 = vpack.c.b16 %v6848, %v6842
        %v7041 = vpack.c.b16 %v6849, %v6843
        %v7042 = vpack.c.b16 %v6850, %v6844
        %v7204 = vsel %vm1660, %v6247, 0
        %v7207 = vsel %vm1660, %v6253, 0
        %v7210 = vsel %vm1660, %v6259, 0
        %v7213 = vsel %vm1660, %v6856, 0
        %v7216 = vsel %vm1660, %v6862, 0
        %v7219 = vsel %vm1660, %v6868, 0
        %v7222 = vsel %vm1660, %v6874, 0
        %v7225 = vsel %vm1660, %v6880, 0
        %v7228 = vsel %vm1660, %v6886, 0
        %v7231 = vsel %vm1660, %v6892, 0
        %v7234 = vsel %vm1660, %v6898, 0
        %v7237 = vsel %vm1660, %v6904, 0
        %v7240 = vsel %vm1660, %v6910, 0
        %v7243 = vsel %vm1660, %v6916, 0
        %v7246 = vsel %vm1660, %v6922, 0
        %v7249 = vsel %vm1660, %v6928, 0
        %v7252 = vsel %vm1660, %v6934, 0
        %v7255 = vsel %vm1660, %v6940, 0
        %v7258 = vsel %vm1660, %v6946, 0
        %v7261 = vsel %vm1660, %v6952, 0
        %v7264 = vsel %vm1660, %v6958, 0
        %v7267 = vsel %vm1660, %v6964, 0
        %v7270 = vsel %vm1660, %v6970, 0
        %v7273 = vsel %vm1660, %v6976, 0
        %v7276 = vsel %vm1660, %v6982, 0
        %v7279 = vsel %vm1660, %v6988, 0
        %v7282 = vsel %vm1660, %v6994, 0
        %v7285 = vsel %vm1660, %v7000, 0
        %v7288 = vsel %vm1660, %v7006, 0
        %v7291 = vsel %vm1660, %v7012, 0
        %v7294 = vsel %vm1660, %v7018, 0
        %v7297 = vsel %vm1660, %v7024, 0
        %v7300 = vsel %vm1660, %v7030, 0
        %v7303 = vsel %vm1660, %v7036, 0
        %v7306 = vsel %vm1660, %v7042, 0
        %7308 = vmatpush.bf16.xpose.msra.mxu0 %v6893
        %7309 = vmatpush.bf16.xpose.msra.mxu0 %v6887
        %7310 = vmatpush.bf16.xpose.msra.mxu0 %v6881
        %7311 = vmatpush.bf16.xpose.msra.mxu0 %v6875
        %7312 = vmatpush.bf16.xpose.msra.mxu0 %v6869
        %7313 = vmatpush.bf16.xpose.msra.mxu0 %v6863
        %7314 = vmatpush.bf16.xpose.msra.mxu0 %v6857
        %7315 = vmatpush.bf16.xpose.msra.mxu0 %v6851
        %7316 = vmatmul.bf16.gmra.mxu0 %v6242
        %v7317 = vpop.f32.mrf.mxu0
        %v7318 = vadd.f32 0.0, %v7317
        %v7319 = vpop.f32.mrf.mxu0
        %v7320 = vadd.f32 0.0, %v7319
        %7321 = vmatmul.bf16.gmra.mxu0 %v6248
        %v7322 = vpop.f32.mrf.mxu0
        %v7323 = vadd.f32 0.0, %v7322
        %v7324 = vpop.f32.mrf.mxu0
        %v7325 = vadd.f32 0.0, %v7324
        %7326 = vmatmul.bf16.gmra.mxu0 %v6254
        %v7327 = vpop.f32.mrf.mxu0
        %v7328 = vadd.f32 0.0, %v7327
        %v7329 = vpop.f32.mrf.mxu0
        %v7330 = vadd.f32 0.0, %v7329
        %7331 = vdwg.mxu0
        %7332 = vmatpush.bf16.xpose.msra.mxu0 %v6894
        %7333 = vmatpush.bf16.xpose.msra.mxu0 %v6888
        %7334 = vmatpush.bf16.xpose.msra.mxu0 %v6882
        %7335 = vmatpush.bf16.xpose.msra.mxu0 %v6876
        %7336 = vmatpush.bf16.xpose.msra.mxu0 %v6870
        %7337 = vmatpush.bf16.xpose.msra.mxu0 %v6864
        %7338 = vmatpush.bf16.xpose.msra.mxu0 %v6858
        %7339 = vmatpush.bf16.xpose.msra.mxu0 %v6852
        %7340 = vmatmul.bf16.gmra.mxu0 %v6243
        %v7341 = vpop.f32.mrf.mxu0
        %v7342 = vadd.f32 %v7318, %v7341
        %v7343 = vpop.f32.mrf.mxu0
        %v7344 = vadd.f32 %v7320, %v7343
        %7345 = vmatmul.bf16.gmra.mxu0 %v6249
        %v7346 = vpop.f32.mrf.mxu0
        %v7347 = vadd.f32 %v7323, %v7346
        %v7348 = vpop.f32.mrf.mxu0
        %v7349 = vadd.f32 %v7325, %v7348
        %7350 = vmatmul.bf16.gmra.mxu0 %v6255
        %v7351 = vpop.f32.mrf.mxu0
        %v7352 = vadd.f32 %v7328, %v7351
        %v7353 = vpop.f32.mrf.mxu0
        %v7354 = vadd.f32 %v7330, %v7353
        %7355 = vdwg.mxu0
        %7356 = vmatpush.bf16.xpose.msra.mxu0 %v6895
        %7357 = vmatpush.bf16.xpose.msra.mxu0 %v6889
        %7358 = vmatpush.bf16.xpose.msra.mxu0 %v6883
        %7359 = vmatpush.bf16.xpose.msra.mxu0 %v6877
        %7360 = vmatpush.bf16.xpose.msra.mxu0 %v6871
        %7361 = vmatpush.bf16.xpose.msra.mxu0 %v6865
        %7362 = vmatpush.bf16.xpose.msra.mxu0 %v6859
        %7363 = vmatpush.bf16.xpose.msra.mxu0 %v6853
        %7364 = vmatmul.bf16.gmra.mxu0 %v6244
        %v7365 = vpop.f32.mrf.mxu0
        %v7366 = vadd.f32 %v7342, %v7365
        %v7367 = vpop.f32.mrf.mxu0
        %v7368 = vadd.f32 %v7344, %v7367
        %7369 = vmatmul.bf16.gmra.mxu0 %v6250
        %v7370 = vpop.f32.mrf.mxu0
        %v7371 = vadd.f32 %v7347, %v7370
        %v7372 = vpop.f32.mrf.mxu0
        %v7373 = vadd.f32 %v7349, %v7372
        %7374 = vmatmul.bf16.gmra.mxu0 %v6256
        %v7375 = vpop.f32.mrf.mxu0
        %v7376 = vadd.f32 %v7352, %v7375
        %v7377 = vpop.f32.mrf.mxu0
        %v7378 = vadd.f32 %v7354, %v7377
        %7379 = vdwg.mxu0
        %7380 = vmatpush.bf16.xpose.msra.mxu0 %v6896
        %7381 = vmatpush.bf16.xpose.msra.mxu0 %v6890
        %7382 = vmatpush.bf16.xpose.msra.mxu0 %v6884
        %7383 = vmatpush.bf16.xpose.msra.mxu0 %v6878
        %7384 = vmatpush.bf16.xpose.msra.mxu0 %v6872
        %7385 = vmatpush.bf16.xpose.msra.mxu0 %v6866
        %7386 = vmatpush.bf16.xpose.msra.mxu0 %v6860
        %7387 = vmatpush.bf16.xpose.msra.mxu0 %v6854
        %7388 = vmatmul.bf16.gmra.mxu0 %v6245
        %v7389 = vpop.f32.mrf.mxu0
        %v7390 = vadd.f32 %v7366, %v7389
        %v7391 = vpop.f32.mrf.mxu0
        %v7392 = vadd.f32 %v7368, %v7391
        %7393 = vmatmul.bf16.gmra.mxu0 %v6251
        %v7394 = vpop.f32.mrf.mxu0
        %v7395 = vadd.f32 %v7371, %v7394
        %v7396 = vpop.f32.mrf.mxu0
        %v7397 = vadd.f32 %v7373, %v7396
        %7398 = vmatmul.bf16.gmra.mxu0 %v6257
        %v7399 = vpop.f32.mrf.mxu0
        %v7400 = vadd.f32 %v7376, %v7399
        %v7401 = vpop.f32.mrf.mxu0
        %v7402 = vadd.f32 %v7378, %v7401
        %7403 = vdwg.mxu0
        %7404 = vmatpush.bf16.xpose.msra.mxu0 %v6897
        %7405 = vmatpush.bf16.xpose.msra.mxu0 %v6891
        %7406 = vmatpush.bf16.xpose.msra.mxu0 %v6885
        %7407 = vmatpush.bf16.xpose.msra.mxu0 %v6879
        %7408 = vmatpush.bf16.xpose.msra.mxu0 %v6873
        %7409 = vmatpush.bf16.xpose.msra.mxu0 %v6867
        %7410 = vmatpush.bf16.xpose.msra.mxu0 %v6861
        %7411 = vmatpush.bf16.xpose.msra.mxu0 %v6855
        %7412 = vmatmul.bf16.gmra.mxu0 %v6246
        %v7413 = vpop.f32.mrf.mxu0
        %v7414 = vadd.f32 %v7390, %v7413
        %v7415 = vpop.f32.mrf.mxu0
        %v7416 = vadd.f32 %v7392, %v7415
        %7417 = vmatmul.bf16.gmra.mxu0 %v6252
        %v7418 = vpop.f32.mrf.mxu0
        %v7419 = vadd.f32 %v7395, %v7418
        %v7420 = vpop.f32.mrf.mxu0
        %v7421 = vadd.f32 %v7397, %v7420
        %7422 = vmatmul.bf16.gmra.mxu0 %v6258
        %v7423 = vpop.f32.mrf.mxu0
        %v7424 = vadd.f32 %v7400, %v7423
        %v7425 = vpop.f32.mrf.mxu0
        %v7426 = vadd.f32 %v7402, %v7425
        %7427 = vdwg.mxu0
        %7428 = vmatpush.bf16.xpose.msra.mxu0 %v7234
        %7429 = vmatpush.bf16.xpose.msra.mxu0 %v7231
        %7430 = vmatpush.bf16.xpose.msra.mxu0 %v7228
        %7431 = vmatpush.bf16.xpose.msra.mxu0 %v7225
        %7432 = vmatpush.bf16.xpose.msra.mxu0 %v7222
        %7433 = vmatpush.bf16.xpose.msra.mxu0 %v7219
        %7434 = vmatpush.bf16.xpose.msra.mxu0 %v7216
        %7435 = vmatpush.bf16.xpose.msra.mxu0 %v7213
        %7436 = vmatmul.bf16.gmra.mxu0 %v7204
        %v7437 = vpop.f32.mrf.mxu0
        %v7438 = vadd.f32 %v7414, %v7437
        %v7439 = vpop.f32.mrf.mxu0
        %v7440 = vadd.f32 %v7416, %v7439
        %7441 = vmatmul.bf16.gmra.mxu0 %v7207
        %v7442 = vpop.f32.mrf.mxu0
        %v7443 = vadd.f32 %v7419, %v7442
        %v7444 = vpop.f32.mrf.mxu0
        %v7445 = vadd.f32 %v7421, %v7444
        %7446 = vmatmul.bf16.gmra.mxu0 %v7210
        %v7447 = vpop.f32.mrf.mxu0
        %v7448 = vadd.f32 %v7424, %v7447
        %v7449 = vpop.f32.mrf.mxu0
        %v7450 = vadd.f32 %v7426, %v7449
        %7451 = vdwg.mxu0
        %7452 = vmatpush.bf16.xpose.msra.mxu0 %v6941
        %7453 = vmatpush.bf16.xpose.msra.mxu0 %v6935
        %7454 = vmatpush.bf16.xpose.msra.mxu0 %v6929
        %7455 = vmatpush.bf16.xpose.msra.mxu0 %v6923
        %7456 = vmatpush.bf16.xpose.msra.mxu0 %v6917
        %7457 = vmatpush.bf16.xpose.msra.mxu0 %v6911
        %7458 = vmatpush.bf16.xpose.msra.mxu0 %v6905
        %7459 = vmatpush.bf16.xpose.msra.mxu0 %v6899
        %7460 = vmatmul.bf16.gmra.mxu0 %v6242
        %v7461 = vpop.f32.mrf.mxu0
        %v7462 = vadd.f32 0.0, %v7461
        %v7463 = vpop.f32.mrf.mxu0
        %v7464 = vadd.f32 0.0, %v7463
        %7465 = vmatmul.bf16.gmra.mxu0 %v6248
        %v7466 = vpop.f32.mrf.mxu0
        %v7467 = vadd.f32 0.0, %v7466
        %v7468 = vpop.f32.mrf.mxu0
        %v7469 = vadd.f32 0.0, %v7468
        %7470 = vmatmul.bf16.gmra.mxu0 %v6254
        %v7471 = vpop.f32.mrf.mxu0
        %v7472 = vadd.f32 0.0, %v7471
        %v7473 = vpop.f32.mrf.mxu0
        %v7474 = vadd.f32 0.0, %v7473
        %7475 = vdwg.mxu0
        %7476 = vmatpush.bf16.xpose.msra.mxu0 %v6942
        %7477 = vmatpush.bf16.xpose.msra.mxu0 %v6936
        %7478 = vmatpush.bf16.xpose.msra.mxu0 %v6930
        %7479 = vmatpush.bf16.xpose.msra.mxu0 %v6924
        %7480 = vmatpush.bf16.xpose.msra.mxu0 %v6918
        %7481 = vmatpush.bf16.xpose.msra.mxu0 %v6912
        %7482 = vmatpush.bf16.xpose.msra.mxu0 %v6906
        %7483 = vmatpush.bf16.xpose.msra.mxu0 %v6900
        %7484 = vmatmul.bf16.gmra.mxu0 %v6243
        %v7485 = vpop.f32.mrf.mxu0
        %v7486 = vadd.f32 %v7462, %v7485
        %v7487 = vpop.f32.mrf.mxu0
        %v7488 = vadd.f32 %v7464, %v7487
        %7489 = vmatmul.bf16.gmra.mxu0 %v6249
        %v7490 = vpop.f32.mrf.mxu0
        %v7491 = vadd.f32 %v7467, %v7490
        %v7492 = vpop.f32.mrf.mxu0
        %v7493 = vadd.f32 %v7469, %v7492
        %7494 = vmatmul.bf16.gmra.mxu0 %v6255
        %v7495 = vpop.f32.mrf.mxu0
        %v7496 = vadd.f32 %v7472, %v7495
        %v7497 = vpop.f32.mrf.mxu0
        %v7498 = vadd.f32 %v7474, %v7497
        %7499 = vdwg.mxu0
        %7500 = vmatpush.bf16.xpose.msra.mxu0 %v6943
        %7501 = vmatpush.bf16.xpose.msra.mxu0 %v6937
        %7502 = vmatpush.bf16.xpose.msra.mxu0 %v6931
        %7503 = vmatpush.bf16.xpose.msra.mxu0 %v6925
        %7504 = vmatpush.bf16.xpose.msra.mxu0 %v6919
        %7505 = vmatpush.bf16.xpose.msra.mxu0 %v6913
        %7506 = vmatpush.bf16.xpose.msra.mxu0 %v6907
        %7507 = vmatpush.bf16.xpose.msra.mxu0 %v6901
        %7508 = vmatmul.bf16.gmra.mxu0 %v6244
        %v7509 = vpop.f32.mrf.mxu0
        %v7510 = vadd.f32 %v7486, %v7509
        %v7511 = vpop.f32.mrf.mxu0
        %v7512 = vadd.f32 %v7488, %v7511
        %7513 = vmatmul.bf16.gmra.mxu0 %v6250
        %v7514 = vpop.f32.mrf.mxu0
        %v7515 = vadd.f32 %v7491, %v7514
        %v7516 = vpop.f32.mrf.mxu0
        %v7517 = vadd.f32 %v7493, %v7516
        %7518 = vmatmul.bf16.gmra.mxu0 %v6256
        %v7519 = vpop.f32.mrf.mxu0
        %v7520 = vadd.f32 %v7496, %v7519
        %v7521 = vpop.f32.mrf.mxu0
        %v7522 = vadd.f32 %v7498, %v7521
        %7523 = vdwg.mxu0
        %7524 = vmatpush.bf16.xpose.msra.mxu0 %v6944
        %7525 = vmatpush.bf16.xpose.msra.mxu0 %v6938
        %7526 = vmatpush.bf16.xpose.msra.mxu0 %v6932
        %7527 = vmatpush.bf16.xpose.msra.mxu0 %v6926
        %7528 = vmatpush.bf16.xpose.msra.mxu0 %v6920
        %7529 = vmatpush.bf16.xpose.msra.mxu0 %v6914
        %7530 = vmatpush.bf16.xpose.msra.mxu0 %v6908
        %7531 = vmatpush.bf16.xpose.msra.mxu0 %v6902
        %7532 = vmatmul.bf16.gmra.mxu0 %v6245
        %v7533 = vpop.f32.mrf.mxu0
        %v7534 = vadd.f32 %v7510, %v7533
        %v7535 = vpop.f32.mrf.mxu0
        %v7536 = vadd.f32 %v7512, %v7535
        %7537 = vmatmul.bf16.gmra.mxu0 %v6251
        %v7538 = vpop.f32.mrf.mxu0
        %v7539 = vadd.f32 %v7515, %v7538
        %v7540 = vpop.f32.mrf.mxu0
        %v7541 = vadd.f32 %v7517, %v7540
        %7542 = vmatmul.bf16.gmra.mxu0 %v6257
        %v7543 = vpop.f32.mrf.mxu0
        %v7544 = vadd.f32 %v7520, %v7543
        %v7545 = vpop.f32.mrf.mxu0
        %v7546 = vadd.f32 %v7522, %v7545
        %7547 = vdwg.mxu0
        %7548 = vmatpush.bf16.xpose.msra.mxu0 %v6945
        %7549 = vmatpush.bf16.xpose.msra.mxu0 %v6939
        %7550 = vmatpush.bf16.xpose.msra.mxu0 %v6933
        %7551 = vmatpush.bf16.xpose.msra.mxu0 %v6927
        %7552 = vmatpush.bf16.xpose.msra.mxu0 %v6921
        %7553 = vmatpush.bf16.xpose.msra.mxu0 %v6915
        %7554 = vmatpush.bf16.xpose.msra.mxu0 %v6909
        %7555 = vmatpush.bf16.xpose.msra.mxu0 %v6903
        %7556 = vmatmul.bf16.gmra.mxu0 %v6246
        %v7557 = vpop.f32.mrf.mxu0
        %v7558 = vadd.f32 %v7534, %v7557
        %v7559 = vpop.f32.mrf.mxu0
        %v7560 = vadd.f32 %v7536, %v7559
        %7561 = vmatmul.bf16.gmra.mxu0 %v6252
        %v7562 = vpop.f32.mrf.mxu0
        %v7563 = vadd.f32 %v7539, %v7562
        %v7564 = vpop.f32.mrf.mxu0
        %v7565 = vadd.f32 %v7541, %v7564
        %7566 = vmatmul.bf16.gmra.mxu0 %v6258
        %v7567 = vpop.f32.mrf.mxu0
        %v7568 = vadd.f32 %v7544, %v7567
        %v7569 = vpop.f32.mrf.mxu0
        %v7570 = vadd.f32 %v7546, %v7569
        %7571 = vdwg.mxu0
        %7572 = vmatpush.bf16.xpose.msra.mxu0 %v7258
        %7573 = vmatpush.bf16.xpose.msra.mxu0 %v7255
        %7574 = vmatpush.bf16.xpose.msra.mxu0 %v7252
        %7575 = vmatpush.bf16.xpose.msra.mxu0 %v7249
        %7576 = vmatpush.bf16.xpose.msra.mxu0 %v7246
        %7577 = vmatpush.bf16.xpose.msra.mxu0 %v7243
        %7578 = vmatpush.bf16.xpose.msra.mxu0 %v7240
        %7579 = vmatpush.bf16.xpose.msra.mxu0 %v7237
        %7580 = vmatmul.bf16.gmra.mxu0 %v7204
        %v7581 = vpop.f32.mrf.mxu0
        %v7582 = vadd.f32 %v7558, %v7581
        %v7583 = vpop.f32.mrf.mxu0
        %v7584 = vadd.f32 %v7560, %v7583
        %7585 = vmatmul.bf16.gmra.mxu0 %v7207
        %v7586 = vpop.f32.mrf.mxu0
        %v7587 = vadd.f32 %v7563, %v7586
        %v7588 = vpop.f32.mrf.mxu0
        %v7589 = vadd.f32 %v7565, %v7588
        %7590 = vmatmul.bf16.gmra.mxu0 %v7210
        %v7591 = vpop.f32.mrf.mxu0
        %v7592 = vadd.f32 %v7568, %v7591
        %v7593 = vpop.f32.mrf.mxu0
        %v7594 = vadd.f32 %v7570, %v7593
        %7595 = vdwg.mxu0
        %7596 = vmatpush.bf16.xpose.msra.mxu0 %v6989
        %7597 = vmatpush.bf16.xpose.msra.mxu0 %v6983
        %7598 = vmatpush.bf16.xpose.msra.mxu0 %v6977
        %7599 = vmatpush.bf16.xpose.msra.mxu0 %v6971
        %7600 = vmatpush.bf16.xpose.msra.mxu0 %v6965
        %7601 = vmatpush.bf16.xpose.msra.mxu0 %v6959
        %7602 = vmatpush.bf16.xpose.msra.mxu0 %v6953
        %7603 = vmatpush.bf16.xpose.msra.mxu0 %v6947
        %7604 = vmatmul.bf16.gmra.mxu0 %v6242
        %v7605 = vpop.f32.mrf.mxu0
        %v7606 = vadd.f32 0.0, %v7605
        %v7607 = vpop.f32.mrf.mxu0
        %v7608 = vadd.f32 0.0, %v7607
        %7609 = vmatmul.bf16.gmra.mxu0 %v6248
        %v7610 = vpop.f32.mrf.mxu0
        %v7611 = vadd.f32 0.0, %v7610
        %v7612 = vpop.f32.mrf.mxu0
        %v7613 = vadd.f32 0.0, %v7612
        %7614 = vmatmul.bf16.gmra.mxu0 %v6254
        %v7615 = vpop.f32.mrf.mxu0
        %v7616 = vadd.f32 0.0, %v7615
        %v7617 = vpop.f32.mrf.mxu0
        %v7618 = vadd.f32 0.0, %v7617
        %7619 = vdwg.mxu0
        %7620 = vmatpush.bf16.xpose.msra.mxu0 %v6990
        %7621 = vmatpush.bf16.xpose.msra.mxu0 %v6984
        %7622 = vmatpush.bf16.xpose.msra.mxu0 %v6978
        %7623 = vmatpush.bf16.xpose.msra.mxu0 %v6972
        %7624 = vmatpush.bf16.xpose.msra.mxu0 %v6966
        %7625 = vmatpush.bf16.xpose.msra.mxu0 %v6960
        %7626 = vmatpush.bf16.xpose.msra.mxu0 %v6954
        %7627 = vmatpush.bf16.xpose.msra.mxu0 %v6948
        %7628 = vmatmul.bf16.gmra.mxu0 %v6243
        %v7629 = vpop.f32.mrf.mxu0
        %v7630 = vadd.f32 %v7606, %v7629
        %v7631 = vpop.f32.mrf.mxu0
        %v7632 = vadd.f32 %v7608, %v7631
        %7633 = vmatmul.bf16.gmra.mxu0 %v6249
        %v7634 = vpop.f32.mrf.mxu0
        %v7635 = vadd.f32 %v7611, %v7634
        %v7636 = vpop.f32.mrf.mxu0
        %v7637 = vadd.f32 %v7613, %v7636
        %7638 = vmatmul.bf16.gmra.mxu0 %v6255
        %v7639 = vpop.f32.mrf.mxu0
        %v7640 = vadd.f32 %v7616, %v7639
        %v7641 = vpop.f32.mrf.mxu0
        %v7642 = vadd.f32 %v7618, %v7641
        %7643 = vdwg.mxu0
        %7644 = vmatpush.bf16.xpose.msra.mxu0 %v6991
        %7645 = vmatpush.bf16.xpose.msra.mxu0 %v6985
        %7646 = vmatpush.bf16.xpose.msra.mxu0 %v6979
        %7647 = vmatpush.bf16.xpose.msra.mxu0 %v6973
        %7648 = vmatpush.bf16.xpose.msra.mxu0 %v6967
        %7649 = vmatpush.bf16.xpose.msra.mxu0 %v6961
        %7650 = vmatpush.bf16.xpose.msra.mxu0 %v6955
        %7651 = vmatpush.bf16.xpose.msra.mxu0 %v6949
        %7652 = vmatmul.bf16.gmra.mxu0 %v6244
        %v7653 = vpop.f32.mrf.mxu0
        %v7654 = vadd.f32 %v7630, %v7653
        %v7655 = vpop.f32.mrf.mxu0
        %v7656 = vadd.f32 %v7632, %v7655
        %7657 = vmatmul.bf16.gmra.mxu0 %v6250
        %v7658 = vpop.f32.mrf.mxu0
        %v7659 = vadd.f32 %v7635, %v7658
        %v7660 = vpop.f32.mrf.mxu0
        %v7661 = vadd.f32 %v7637, %v7660
        %7662 = vmatmul.bf16.gmra.mxu0 %v6256
        %v7663 = vpop.f32.mrf.mxu0
        %v7664 = vadd.f32 %v7640, %v7663
        %v7665 = vpop.f32.mrf.mxu0
        %v7666 = vadd.f32 %v7642, %v7665
        %7667 = vdwg.mxu0
        %7668 = vmatpush.bf16.xpose.msra.mxu0 %v6992
        %7669 = vmatpush.bf16.xpose.msra.mxu0 %v6986
        %7670 = vmatpush.bf16.xpose.msra.mxu0 %v6980
        %7671 = vmatpush.bf16.xpose.msra.mxu0 %v6974
        %7672 = vmatpush.bf16.xpose.msra.mxu0 %v6968
        %7673 = vmatpush.bf16.xpose.msra.mxu0 %v6962
        %7674 = vmatpush.bf16.xpose.msra.mxu0 %v6956
        %7675 = vmatpush.bf16.xpose.msra.mxu0 %v6950
        %7676 = vmatmul.bf16.gmra.mxu0 %v6245
        %v7677 = vpop.f32.mrf.mxu0
        %v7678 = vadd.f32 %v7654, %v7677
        %v7679 = vpop.f32.mrf.mxu0
        %v7680 = vadd.f32 %v7656, %v7679
        %7681 = vmatmul.bf16.gmra.mxu0 %v6251
        %v7682 = vpop.f32.mrf.mxu0
        %v7683 = vadd.f32 %v7659, %v7682
        %v7684 = vpop.f32.mrf.mxu0
        %v7685 = vadd.f32 %v7661, %v7684
        %7686 = vmatmul.bf16.gmra.mxu0 %v6257
        %v7687 = vpop.f32.mrf.mxu0
        %v7688 = vadd.f32 %v7664, %v7687
        %v7689 = vpop.f32.mrf.mxu0
        %v7690 = vadd.f32 %v7666, %v7689
        %7691 = vdwg.mxu0
        %7692 = vmatpush.bf16.xpose.msra.mxu0 %v6993
        %7693 = vmatpush.bf16.xpose.msra.mxu0 %v6987
        %7694 = vmatpush.bf16.xpose.msra.mxu0 %v6981
        %7695 = vmatpush.bf16.xpose.msra.mxu0 %v6975
        %7696 = vmatpush.bf16.xpose.msra.mxu0 %v6969
        %7697 = vmatpush.bf16.xpose.msra.mxu0 %v6963
        %7698 = vmatpush.bf16.xpose.msra.mxu0 %v6957
        %7699 = vmatpush.bf16.xpose.msra.mxu0 %v6951
        %7700 = vmatmul.bf16.gmra.mxu0 %v6246
        %v7701 = vpop.f32.mrf.mxu0
        %v7702 = vadd.f32 %v7678, %v7701
        %v7703 = vpop.f32.mrf.mxu0
        %v7704 = vadd.f32 %v7680, %v7703
        %7705 = vmatmul.bf16.gmra.mxu0 %v6252
        %v7706 = vpop.f32.mrf.mxu0
        %v7707 = vadd.f32 %v7683, %v7706
        %v7708 = vpop.f32.mrf.mxu0
        %v7709 = vadd.f32 %v7685, %v7708
        %7710 = vmatmul.bf16.gmra.mxu0 %v6258
        %v7711 = vpop.f32.mrf.mxu0
        %v7712 = vadd.f32 %v7688, %v7711
        %v7713 = vpop.f32.mrf.mxu0
        %v7714 = vadd.f32 %v7690, %v7713
        %7715 = vdwg.mxu0
        %7716 = vmatpush.bf16.xpose.msra.mxu0 %v7282
        %7717 = vmatpush.bf16.xpose.msra.mxu0 %v7279
        %7718 = vmatpush.bf16.xpose.msra.mxu0 %v7276
        %7719 = vmatpush.bf16.xpose.msra.mxu0 %v7273
        %7720 = vmatpush.bf16.xpose.msra.mxu0 %v7270
        %7721 = vmatpush.bf16.xpose.msra.mxu0 %v7267
        %7722 = vmatpush.bf16.xpose.msra.mxu0 %v7264
        %7723 = vmatpush.bf16.xpose.msra.mxu0 %v7261
        %7724 = vmatmul.bf16.gmra.mxu0 %v7204
        %v7725 = vpop.f32.mrf.mxu0
        %v7726 = vadd.f32 %v7702, %v7725
        %v7727 = vpop.f32.mrf.mxu0
        %v7728 = vadd.f32 %v7704, %v7727
        %7729 = vmatmul.bf16.gmra.mxu0 %v7207
        %v7730 = vpop.f32.mrf.mxu0
        %v7731 = vadd.f32 %v7707, %v7730
        %v7732 = vpop.f32.mrf.mxu0
        %v7733 = vadd.f32 %v7709, %v7732
        %7734 = vmatmul.bf16.gmra.mxu0 %v7210
        %v7735 = vpop.f32.mrf.mxu0
        %v7736 = vadd.f32 %v7712, %v7735
        %v7737 = vpop.f32.mrf.mxu0
        %v7738 = vadd.f32 %v7714, %v7737
        %7739 = vdwg.mxu0
        %7740 = vmatpush.bf16.xpose.msra.mxu0 %v7037
        %7741 = vmatpush.bf16.xpose.msra.mxu0 %v7031
        %7742 = vmatpush.bf16.xpose.msra.mxu0 %v7025
        %7743 = vmatpush.bf16.xpose.msra.mxu0 %v7019
        %7744 = vmatpush.bf16.xpose.msra.mxu0 %v7013
        %7745 = vmatpush.bf16.xpose.msra.mxu0 %v7007
        %7746 = vmatpush.bf16.xpose.msra.mxu0 %v7001
        %7747 = vmatpush.bf16.xpose.msra.mxu0 %v6995
        %7748 = vmatmul.bf16.gmra.mxu0 %v6242
        %v7749 = vpop.f32.mrf.mxu0
        %v7750 = vadd.f32 0.0, %v7749
        %v7751 = vpop.f32.mrf.mxu0
        %v7752 = vadd.f32 0.0, %v7751
        %7753 = vmatmul.bf16.gmra.mxu0 %v6248
        %v7754 = vpop.f32.mrf.mxu0
        %v7755 = vadd.f32 0.0, %v7754
        %v7756 = vpop.f32.mrf.mxu0
        %v7757 = vadd.f32 0.0, %v7756
        %7758 = vmatmul.bf16.gmra.mxu0 %v6254
        %v7759 = vpop.f32.mrf.mxu0
        %v7760 = vadd.f32 0.0, %v7759
        %v7761 = vpop.f32.mrf.mxu0
        %v7762 = vadd.f32 0.0, %v7761
        %7763 = vdwg.mxu0
        %7764 = vmatpush.bf16.xpose.msra.mxu0 %v7038
        %7765 = vmatpush.bf16.xpose.msra.mxu0 %v7032
        %7766 = vmatpush.bf16.xpose.msra.mxu0 %v7026
        %7767 = vmatpush.bf16.xpose.msra.mxu0 %v7020
        %7768 = vmatpush.bf16.xpose.msra.mxu0 %v7014
        %7769 = vmatpush.bf16.xpose.msra.mxu0 %v7008
        %7770 = vmatpush.bf16.xpose.msra.mxu0 %v7002
        %7771 = vmatpush.bf16.xpose.msra.mxu0 %v6996
        %7772 = vmatmul.bf16.gmra.mxu0 %v6243
        %v7773 = vpop.f32.mrf.mxu0
        %v7774 = vadd.f32 %v7750, %v7773
        %v7775 = vpop.f32.mrf.mxu0
        %v7776 = vadd.f32 %v7752, %v7775
        %7777 = vmatmul.bf16.gmra.mxu0 %v6249
        %v7778 = vpop.f32.mrf.mxu0
        %v7779 = vadd.f32 %v7755, %v7778
        %v7780 = vpop.f32.mrf.mxu0
        %v7781 = vadd.f32 %v7757, %v7780
        %7782 = vmatmul.bf16.gmra.mxu0 %v6255
        %v7783 = vpop.f32.mrf.mxu0
        %v7784 = vadd.f32 %v7760, %v7783
        %v7785 = vpop.f32.mrf.mxu0
        %v7786 = vadd.f32 %v7762, %v7785
        %7787 = vdwg.mxu0
        %7788 = vmatpush.bf16.xpose.msra.mxu0 %v7039
        %7789 = vmatpush.bf16.xpose.msra.mxu0 %v7033
        %7790 = vmatpush.bf16.xpose.msra.mxu0 %v7027
        %7791 = vmatpush.bf16.xpose.msra.mxu0 %v7021
        %7792 = vmatpush.bf16.xpose.msra.mxu0 %v7015
        %7793 = vmatpush.bf16.xpose.msra.mxu0 %v7009
        %7794 = vmatpush.bf16.xpose.msra.mxu0 %v7003
        %7795 = vmatpush.bf16.xpose.msra.mxu0 %v6997
        %7796 = vmatmul.bf16.gmra.mxu0 %v6244
        %v7797 = vpop.f32.mrf.mxu0
        %v7798 = vadd.f32 %v7774, %v7797
        %v7799 = vpop.f32.mrf.mxu0
        %v7800 = vadd.f32 %v7776, %v7799
        %7801 = vmatmul.bf16.gmra.mxu0 %v6250
        %v7802 = vpop.f32.mrf.mxu0
        %v7803 = vadd.f32 %v7779, %v7802
        %v7804 = vpop.f32.mrf.mxu0
        %v7805 = vadd.f32 %v7781, %v7804
        %7806 = vmatmul.bf16.gmra.mxu0 %v6256
        %v7807 = vpop.f32.mrf.mxu0
        %v7808 = vadd.f32 %v7784, %v7807
        %v7809 = vpop.f32.mrf.mxu0
        %v7810 = vadd.f32 %v7786, %v7809
        %7811 = vdwg.mxu0
        %7812 = vmatpush.bf16.xpose.msra.mxu0 %v7040
        %7813 = vmatpush.bf16.xpose.msra.mxu0 %v7034
        %7814 = vmatpush.bf16.xpose.msra.mxu0 %v7028
        %7815 = vmatpush.bf16.xpose.msra.mxu0 %v7022
        %7816 = vmatpush.bf16.xpose.msra.mxu0 %v7016
        %7817 = vmatpush.bf16.xpose.msra.mxu0 %v7010
        %7818 = vmatpush.bf16.xpose.msra.mxu0 %v7004
        %7819 = vmatpush.bf16.xpose.msra.mxu0 %v6998
        %7820 = vmatmul.bf16.gmra.mxu0 %v6245
        %v7821 = vpop.f32.mrf.mxu0
        %v7822 = vadd.f32 %v7798, %v7821
        %v7823 = vpop.f32.mrf.mxu0
        %v7824 = vadd.f32 %v7800, %v7823
        %7825 = vmatmul.bf16.gmra.mxu0 %v6251
        %v7826 = vpop.f32.mrf.mxu0
        %v7827 = vadd.f32 %v7803, %v7826
        %v7828 = vpop.f32.mrf.mxu0
        %v7829 = vadd.f32 %v7805, %v7828
        %7830 = vmatmul.bf16.gmra.mxu0 %v6257
        %v7831 = vpop.f32.mrf.mxu0
        %v7832 = vadd.f32 %v7808, %v7831
        %v7833 = vpop.f32.mrf.mxu0
        %v7834 = vadd.f32 %v7810, %v7833
        %7835 = vdwg.mxu0
        %7836 = vmatpush.bf16.xpose.msra.mxu0 %v7041
        %7837 = vmatpush.bf16.xpose.msra.mxu0 %v7035
        %7838 = vmatpush.bf16.xpose.msra.mxu0 %v7029
        %7839 = vmatpush.bf16.xpose.msra.mxu0 %v7023
        %7840 = vmatpush.bf16.xpose.msra.mxu0 %v7017
        %7841 = vmatpush.bf16.xpose.msra.mxu0 %v7011
        %7842 = vmatpush.bf16.xpose.msra.mxu0 %v7005
        %7843 = vmatpush.bf16.xpose.msra.mxu0 %v6999
        %7844 = vmatmul.bf16.gmra.mxu0 %v6246
        %v7845 = vpop.f32.mrf.mxu0
        %v7846 = vadd.f32 %v7822, %v7845
        %v7847 = vpop.f32.mrf.mxu0
        %v7848 = vadd.f32 %v7824, %v7847
        %7849 = vmatmul.bf16.gmra.mxu0 %v6252
        %v7850 = vpop.f32.mrf.mxu0
        %v7851 = vadd.f32 %v7827, %v7850
        %v7852 = vpop.f32.mrf.mxu0
        %v7853 = vadd.f32 %v7829, %v7852
        %7854 = vmatmul.bf16.gmra.mxu0 %v6258
        %v7855 = vpop.f32.mrf.mxu0
        %v7856 = vadd.f32 %v7832, %v7855
        %v7857 = vpop.f32.mrf.mxu0
        %v7858 = vadd.f32 %v7834, %v7857
        %7859 = vdwg.mxu0
        %7860 = vmatpush.bf16.xpose.msra.mxu0 %v7306
        %7861 = vmatpush.bf16.xpose.msra.mxu0 %v7303
        %7862 = vmatpush.bf16.xpose.msra.mxu0 %v7300
        %7863 = vmatpush.bf16.xpose.msra.mxu0 %v7297
        %7864 = vmatpush.bf16.xpose.msra.mxu0 %v7294
        %7865 = vmatpush.bf16.xpose.msra.mxu0 %v7291
        %7866 = vmatpush.bf16.xpose.msra.mxu0 %v7288
        %7867 = vmatpush.bf16.xpose.msra.mxu0 %v7285
        %7868 = vmatmul.bf16.gmra.mxu0 %v7204
        %v7869 = vpop.f32.mrf.mxu0
        %v7870 = vadd.f32 %v7846, %v7869
        %v7871 = vpop.f32.mrf.mxu0
        %v7872 = vadd.f32 %v7848, %v7871
        %7873 = vmatmul.bf16.gmra.mxu0 %v7207
        %v7874 = vpop.f32.mrf.mxu0
        %v7875 = vadd.f32 %v7851, %v7874
        %v7876 = vpop.f32.mrf.mxu0
        %v7877 = vadd.f32 %v7853, %v7876
        %7878 = vmatmul.bf16.gmra.mxu0 %v7210
        %v7879 = vpop.f32.mrf.mxu0
        %v7880 = vadd.f32 %v7856, %v7879
        %v7881 = vpop.f32.mrf.mxu0
        %v7882 = vadd.f32 %v7858, %v7881
        %7883 = vdwg.mxu0
        %v7884 = vadd.f32 %v5949, %v7438
        %v7885 = vadd.f32 %v5950, %v7582
        %v7886 = vadd.f32 %v5951, %v7726
        %v7887 = vadd.f32 %v5952, %v7870
        %v7888 = vadd.f32 %v5953, %v7440
        %v7889 = vadd.f32 %v5954, %v7584
        %v7890 = vadd.f32 %v5955, %v7728
        %v7891 = vadd.f32 %v5956, %v7872
        %v7892 = vadd.f32 %v5957, %v7443
        %v7893 = vadd.f32 %v5958, %v7587
        %v7894 = vadd.f32 %v5959, %v7731
        %v7895 = vadd.f32 %v5960, %v7875
        %v7896 = vadd.f32 %v5961, %v7445
        %v7897 = vadd.f32 %v5962, %v7589
        %v7898 = vadd.f32 %v5963, %v7733
        %v7899 = vadd.f32 %v5964, %v7877
        %v7900 = vadd.f32 %v5965, %v7448
        %v7901 = vadd.f32 %v5966, %v7592
        %v7902 = vadd.f32 %v5967, %v7736
        %v7903 = vadd.f32 %v5968, %v7880
        %v7904 = vadd.f32 %v5969, %v7450
        %v7905 = vadd.f32 %v5970, %v7594
        %v7906 = vadd.f32 %v5971, %v7738
        %v7907 = vadd.f32 %v5972, %v7882
        %v7908 = vld [vmem:[%s2] sm:$0xff]
        %v7909 = vld [vmem:[%s2 + $0x8] sm:$0xff]
        %v7910 = vld [vmem:[%s2 + $0x10] sm:$0xff]
        %v7911 = vld [vmem:[%s2 + $0x18] sm:$0xff]
        %v7912 = vld [vmem:[%s2 + $0x20] sm:$0xff]
        %v7913 = vld [vmem:[%s2 + $0x28] sm:$0x7f]
        %7915 = vset.pattern.permute.xlu0 0
        %7916 = vperm.xlu0 %7915, %v7908
        %v7917 = vpop.permute.xlu0 %7916
        %7920 = vset.pattern.permute.xlu0 0
        %7921 = vperm.xlu0 %7920, %v7909
        %v7922 = vpop.permute.xlu0 %7921
        %7925 = vset.pattern.permute.xlu0 0
        %7926 = vperm.xlu0 %7925, %v7910
        %v7927 = vpop.permute.xlu0 %7926
        %7930 = vset.pattern.permute.xlu0 0
        %7931 = vperm.xlu0 %7930, %v7911
        %v7932 = vpop.permute.xlu0 %7931
        %7935 = vset.pattern.permute.xlu0 0
        %7936 = vperm.xlu0 %7935, %v7912
        %v7937 = vpop.permute.xlu0 %7936
        %7940 = vset.pattern.permute.xlu0 0
        %7941 = vperm.xlu0 %7940, %v7913
        %v7942 = vpop.permute.xlu0 %7941
        %v7944 = vadd.f32 %v7884, %v7917
        %v7945 = vadd.f32 %v7885, %v7917
        %v7946 = vadd.f32 %v7886, %v7917
        %v7947 = vadd.f32 %v7887, %v7917
        %v7948 = vadd.f32 %v7888, %v7922
        %v7949 = vadd.f32 %v7889, %v7922
        %v7950 = vadd.f32 %v7890, %v7922
        %v7951 = vadd.f32 %v7891, %v7922
        %v7952 = vadd.f32 %v7892, %v7927
        %v7953 = vadd.f32 %v7893, %v7927
        %v7954 = vadd.f32 %v7894, %v7927
        %v7955 = vadd.f32 %v7895, %v7927
        %v7956 = vadd.f32 %v7896, %v7932
        %v7957 = vadd.f32 %v7897, %v7932
        %v7958 = vadd.f32 %v7898, %v7932
        %v7959 = vadd.f32 %v7899, %v7932
        %v7960 = vadd.f32 %v7900, %v7937
        %v7961 = vadd.f32 %v7901, %v7937
        %v7962 = vadd.f32 %v7902, %v7937
        %v7963 = vadd.f32 %v7903, %v7937
        %v7964 = vadd.f32 %v7904, %v7942
        %v7965 = vadd.f32 %v7905, %v7942
        %v7966 = vadd.f32 %v7906, %v7942
        %v7967 = vadd.f32 %v7907, %v7942
        %vm7968 = vcmp.gt.f32.partialorder %v7944, 0.0
        %vm7969 = vcmp.gt.f32.partialorder %v7945, 0.0
        %vm7970 = vcmp.gt.f32.partialorder %v7946, 0.0
        %vm7971 = vcmp.gt.f32.partialorder %v7947, 0.0
        %vm7972 = vcmp.gt.f32.partialorder %v7948, 0.0
        %vm7973 = vcmp.gt.f32.partialorder %v7949, 0.0
        %vm7974 = vcmp.gt.f32.partialorder %v7950, 0.0
        %vm7975 = vcmp.gt.f32.partialorder %v7951, 0.0
        %vm7976 = vcmp.gt.f32.partialorder %v7952, 0.0
        %vm7977 = vcmp.gt.f32.partialorder %v7953, 0.0
        %vm7978 = vcmp.gt.f32.partialorder %v7954, 0.0
        %vm7979 = vcmp.gt.f32.partialorder %v7955, 0.0
        %vm7980 = vcmp.gt.f32.partialorder %v7956, 0.0
        %vm7981 = vcmp.gt.f32.partialorder %v7957, 0.0
        %vm7982 = vcmp.gt.f32.partialorder %v7958, 0.0
        %vm7983 = vcmp.gt.f32.partialorder %v7959, 0.0
        %vm7984 = vcmp.gt.f32.partialorder %v7960, 0.0
        %vm7985 = vcmp.gt.f32.partialorder %v7961, 0.0
        %vm7986 = vcmp.gt.f32.partialorder %v7962, 0.0
        %vm7987 = vcmp.gt.f32.partialorder %v7963, 0.0
        %vm7988 = vcmp.gt.f32.partialorder %v7964, 0.0
        %vm7989 = vcmp.gt.f32.partialorder %v7965, 0.0
        %vm7990 = vcmp.gt.f32.partialorder %v7966, 0.0
        %vm7991 = vcmp.gt.f32.partialorder %v7967, 0.0
        %v7992 = vmul.f32 %v7944, 0.4
        %v7993 = vmul.f32 %v7945, 0.4
        %v7994 = vmul.f32 %v7946, 0.4
        %v7995 = vmul.f32 %v7947, 0.4
        %v7996 = vmul.f32 %v7948, 0.4
        %v7997 = vmul.f32 %v7949, 0.4
        %v7998 = vmul.f32 %v7950, 0.4
        %v7999 = vmul.f32 %v7951, 0.4
        %v8000 = vmul.f32 %v7952, 0.4
        %v8001 = vmul.f32 %v7953, 0.4
        %v8002 = vmul.f32 %v7954, 0.4
        %v8003 = vmul.f32 %v7955, 0.4
        %v8004 = vmul.f32 %v7956, 0.4
        %v8005 = vmul.f32 %v7957, 0.4
        %v8006 = vmul.f32 %v7958, 0.4
        %v8007 = vmul.f32 %v7959, 0.4
        %v8008 = vmul.f32 %v7960, 0.4
        %v8009 = vmul.f32 %v7961, 0.4
        %v8010 = vmul.f32 %v7962, 0.4
        %v8011 = vmul.f32 %v7963, 0.4
        %v8012 = vmul.f32 %v7964, 0.4
        %v8013 = vmul.f32 %v7965, 0.4
        %v8014 = vmul.f32 %v7966, 0.4
        %v8015 = vmul.f32 %v7967, 0.4
        %v8016 = vsel %vm7968, %v7944, %v7992
        %v8017 = vsel %vm7969, %v7945, %v7993
        %v8018 = vsel %vm7970, %v7946, %v7994
        %v8019 = vsel %vm7971, %v7947, %v7995
        %v8020 = vsel %vm7972, %v7948, %v7996
        %v8021 = vsel %vm7973, %v7949, %v7997
        %v8022 = vsel %vm7974, %v7950, %v7998
        %v8023 = vsel %vm7975, %v7951, %v7999
        %v8024 = vsel %vm7976, %v7952, %v8000
        %v8025 = vsel %vm7977, %v7953, %v8001
        %v8026 = vsel %vm7978, %v7954, %v8002
        %v8027 = vsel %vm7979, %v7955, %v8003
        %v8028 = vsel %vm7980, %v7956, %v8004
        %v8029 = vsel %vm7981, %v7957, %v8005
        %v8030 = vsel %vm7982, %v7958, %v8006
        %v8031 = vsel %vm7983, %v7959, %v8007
        %v8032 = vsel %vm7984, %v7960, %v8008
        %v8033 = vsel %vm7985, %v7961, %v8009
        %v8034 = vsel %vm7986, %v7962, %v8010
        %v8035 = vsel %vm7987, %v7963, %v8011
        %v8036 = vsel %vm7988, %v7964, %v8012
        %v8037 = vsel %vm7989, %v7965, %v8013
        %v8038 = vsel %vm7990, %v7966, %v8014
        %v8039 = vsel %vm7991, %v7967, %v8015
        %8040 = vst [vmem:[%s214] sm:$0xff] %v8016
        %8041 = vst [vmem:[%s214 + $0x8] sm:$0xff] %v8017
        %8042 = vst [vmem:[%s214 + $0x10] sm:$0xff] %v8018
        %8043 = vst [vmem:[%s214 + $0x18] sm:$0xff] %v8019
        %8044 = vst [vmem:[%s214 + $0x20] sm:$0xff] %v8020
        %8045 = vst [vmem:[%s214 + $0x28] sm:$0xff] %v8021
        %8046 = vst [vmem:[%s214 + $0x30] sm:$0xff] %v8022
        %8047 = vst [vmem:[%s214 + $0x38] sm:$0xff] %v8023
        %8048 = vst [vmem:[%s214 + $0x40] sm:$0xff] %v8024
        %8049 = vst [vmem:[%s214 + $0x48] sm:$0xff] %v8025
        %8050 = vst [vmem:[%s214 + $0x50] sm:$0xff] %v8026
        %8051 = vst [vmem:[%s214 + $0x58] sm:$0xff] %v8027
        %8052 = vst [vmem:[%s214 + $0x60] sm:$0xff] %v8028
        %8053 = vst [vmem:[%s214 + $0x68] sm:$0xff] %v8029
        %8054 = vst [vmem:[%s214 + $0x70] sm:$0xff] %v8030
        %8055 = vst [vmem:[%s214 + $0x78] sm:$0xff] %v8031
        %8056 = vst [vmem:[%s214 + $0x80] sm:$0xff] %v8032
        %8057 = vst [vmem:[%s214 + $0x88] sm:$0xff] %v8033
        %8058 = vst [vmem:[%s214 + $0x90] sm:$0xff] %v8034
        %8059 = vst [vmem:[%s214 + $0x98] sm:$0xff] %v8035
        %8060 = vst [vmem:[%s214 + $0xa0] sm:$0x7f] %v8036
        %8061 = vst [vmem:[%s214 + $0xa8] sm:$0x7f] %v8037
        %8062 = vst [vmem:[%s214 + $0xb0] sm:$0x7f] %v8038
        %8063 = vst [vmem:[%s214 + $0xb8] sm:$0x7f] %v8039
        %s8064 = smul.u32 4, %s22
        %p8065 = scmp.lt.s32.totalorder %s21, 1
        %s8066 = scalar_select %p8065, %s21, 1
        %p8067 = scmp.lt.s32.totalorder %s8064, 3
        %s8068 = scalar_select %p8067, %s8064, 3
        %s8069 = smul.addr %s8066, 24
        %s8070 = sadd.s32 %s8068, %s8069
        %s8071 = smul.addr %s8070, 8
        %s8072 = scalar_lea.vmem %s3, %s8071
        // Predicated region
        $region37: #{tpu_custom_call.1} parent=31 // pred_check
          %p8073 = pneg %p117
        $region38: #{tpu_custom_call.1} parent=31 // pred_check_branch
          %8075 = sbr.rel (%p8073) target = $region40
        $region39: #{tpu_custom_call.1} parent=31 // pred_region
          %s8076 = smul.u32 4, %s22
        $region40: #{tpu_custom_call.1} parent=31 // pred_fallthru
          _
      $region32: #{tpu_custom_call.1} parent=5 // pred_fallthru
        _
      %p8077 = scmp.le.s32.totalorder 2, %s12
      // Predicated region
      $region41: #{tpu_custom_call.1} parent=5 // pred_check
        %p8078 = pneg %p8077
      $region42: #{tpu_custom_call.1} parent=5 // pred_check_branch
        %8080 = sbr.rel (%p8078) target = $region44
      $region43: #{tpu_custom_call.1} parent=5 // pred_region
        %s8081 = ssub.s32 %s12, 2
        // Predicated region
        $region45: #{tpu_custom_call.1} parent=43 // pred_check
          %p8082 = pneg %p123
        $region46: #{tpu_custom_call.1} parent=43 // pred_check_branch
          %8084 = sbr.rel (%p8082) target = $region48
        $region47: #{tpu_custom_call.1} parent=43 // pred_region
          %s8085 = smul.u32 4, %s24
          %p8086 = scmp.lt.s32.totalorder %s23, 1
          %s8087 = scalar_select %p8086, %s23, 1
          %p8088 = scmp.lt.s32.totalorder %s8085, 3
          %s8089 = scalar_select %p8088, %s8085, 3
          %s8090 = smul.addr %s8087, 24
          %s8091 = sadd.s32 %s8089, %s8090
          %s8092 = smul.addr %s8091, 8
          %s8093 = scalar_lea.vmem %s3, %s8092
        $region48: #{tpu_custom_call.1} parent=43 // pred_fallthru
          _
      $region44: #{tpu_custom_call.1} parent=5 // pred_fallthru
        _
    $region6: #{tpu_custom_call.1} parent=1 // loop_footer
      %s16 = sadd.s32 1, %s12
    $region7: #{tpu_custom_call.1} parent=1 // loop_footer_branch
      %11 = sbr.rel target = $region3
    $region8: #{tpu_custom_call.1} parent=1 // loop_exit
      _
    %8094 = vsyncpa [#allocation3], 1
    %s8095 = scalar_lea.sflag [#allocation3], 1
    %8096 = vsyncpa %s8095, 1

</llo_original>
